<compile_context>
chip_gen: v5e
topology: v5e:2x2
jax: 0.10.0
libtpu: 0.0.40
codegen_flags: <defaults>
</compile_context>

<pallas_src>
import math
from functools import partial

import jax
import jax.numpy as jnp
from jax import lax
from jax.experimental import pallas as pl
from jax.experimental.pallas import tpu as pltpu

PAD = 0
NEG_INF = -1e30
VMEM_LIMIT = 32 * 1024 * 1024   # safe on all generations (v7x physical VMEM is 64 MiB)


def _layer_norm(x, gamma, beta, eps=1e-5):
    mean = jnp.mean(x, axis=-1, keepdims=True)
    var = jnp.mean(jnp.square(x - mean), axis=-1, keepdims=True)
    return (x - mean) * lax.rsqrt(var + eps) * gamma + beta


# ---------------------------------------------------------------------------
# Fused transformer stack kernel: grid=(L,), one grid step = one layer.
# Activation (B*S, D) lives in VMEM scratch across layers; per-layer weights are
# streamed (and double-buffered -> next layer's weights prefetch under compute).
# Weights are bf16 MXU operands, LayerNorm/softmax math stays f32.
# ---------------------------------------------------------------------------
def stack_kernel(x_ref, mask_ref, w_qkv_ref, b_qkv_ref, w_o_ref,
                 w1_ref, b1_ref, w2_ref, vecd_ref,
                 dec_ref, h_sc, *, n_heads, batch, seq):
    l = pl.program_id(0)

    @pl.when(l == 0)
    def _():
        h_sc[...] = x_ref[...].astype(jnp.float32)

    x = h_sc[...]                                   # (M, D) f32, M = B*S
    M, D = x.shape
    B, S, H = batch, seq, n_heads
    dh = D // H
    x_bf = x.astype(jnp.bfloat16)

    # fused QKV projection on all B*S rows (MXU sees M rows, not S).
    # NOTE: 1/sqrt(dh) is baked into Wq / bq at init time (no in-kernel scale).
    qkv = jnp.dot(x_bf, w_qkv_ref[0],
                  preferred_element_type=jnp.float32) + b_qkv_ref[0]   # (M, 3D) f32
    q = qkv[:, 0 * D:1 * D].astype(jnp.bfloat16)    # lane-group aligned slices (D % 128 == 0)
    k = qkv[:, 1 * D:2 * D].astype(jnp.bfloat16)
    v = qkv[:, 2 * D:3 * D].astype(jnp.bfloat16)

    def heads(t):
        # (M, D) -> (B*H, S, dh).  With dh == 128 and S % 8 == 0 every slice is a full
        # lane group on 8-aligned sublanes, so no cross-lane relayout is required.
        return jnp.stack([t[b * S:(b + 1) * S, h * dh:(h + 1) * dh]
                          for b in range(B) for h in range(H)], axis=0)

    qh, kh, vh = heads(q), heads(k), heads(v)       # (B*H, S, dh) bf16

    # batched-(batch,head) attention scores; causal mask is a precomputed additive input
    scores = jnp.einsum('nqd,nkd->nqk', qh, kh,
                        preferred_element_type=jnp.float32)            # (B*H, S, S)
    scores = scores + mask_ref[...][None, :, :]

    m = jnp.max(scores, axis=-1, keepdims=True)
    e = jnp.exp(scores - m)
    denom = jnp.sum(e, axis=-1, keepdims=True)
    attn = e * pl.reciprocal(denom, approx=True)    # EUP reciprocal (free slot)

    ctx_h = jnp.einsum('nqk,nkd->nqd', attn.astype(jnp.bfloat16), vh,
                       preferred_element_type=jnp.float32)             # (B*H, S, dh)
    # merge heads (128-lane-aligned concat) then batches (row concat) -> (M, D)
    ctx = jnp.concatenate(
        [jnp.concatenate([ctx_h[b * H + h] for h in range(H)], axis=-1)
         for b in range(B)], axis=0)
    # TODO(synk): for production S this whole-sequence (B*H,S,S) score tensor should be
    # replaced by a flash-style KV-tiled online softmax (VMEM blow-up at large S).

    vecd = vecd_ref[0]                              # (6, D) f32: bo, ln1_g, ln1_b, b2, ln2_g, ln2_b
    bo, ln1_g, ln1_b = vecd[0:1], vecd[1:2], vecd[2:3]
    b2, ln2_g, ln2_b = vecd[3:4], vecd[4:5], vecd[5:6]

    attn_out = jnp.dot(ctx.astype(jnp.bfloat16), w_o_ref[0],
                       preferred_element_type=jnp.float32) + bo
    # post-LN (normalize_before=False): residual then LayerNorm, f32 math
    x1 = _layer_norm(x + attn_out, ln1_g, ln1_b)

    hid = jnp.dot(x1.astype(jnp.bfloat16), w1_ref[0],
                  preferred_element_type=jnp.float32) + b1_ref[0]
    half = hid.shape[-1] // 2
    glu = hid[:, :half] * jax.nn.sigmoid(hid[:, half:])                # F.glu(dim=-1)
    ffn_out = jnp.dot(glu.astype(jnp.bfloat16), w2_ref[0],
                      preferred_element_type=jnp.float32) + b2
    x2 = _layer_norm(x1 + ffn_out, ln2_g, ln2_b)

    h_sc[...] = x2                                  # carry to next layer (VMEM-resident)

    @pl.when(l == pl.num_programs(0) - 1)
    def _():
        dec_ref[...] = x2.astype(dec_ref.dtype)     # single HBM writeback after last layer


def transformer_stack(x2, mask_add, params, *, n_heads, batch, seq):
    M, D = x2.shape
    L = params['w_qkv'].shape[0]
    F2 = params['w1'].shape[2]
    F = params['w2'].shape[1]

    in_specs = [
        pl.BlockSpec((M, D), lambda l: (0, 0)),            # x: block index constant -> DMA'd once
        pl.BlockSpec((seq, seq), lambda l: (0, 0)),        # additive causal mask: DMA'd once
        pl.BlockSpec((1, D, 3 * D), lambda l: (l, 0, 0)),  # per-layer weight slabs stream over l
        pl.BlockSpec((1, 1, 3 * D), lambda l: (l, 0, 0)),
        pl.BlockSpec((1, D, D), lambda l: (l, 0, 0)),
        pl.BlockSpec((1, D, F2), lambda l: (l, 0, 0)),
        pl.BlockSpec((1, 1, F2), lambda l: (l, 0, 0)),
        pl.BlockSpec((1, F, D), lambda l: (l, 0, 0)),
        pl.BlockSpec((1, 6, D), lambda l: (l, 0, 0)),
    ]
    # Layer axis is a sequential dependency -> "arbitrary".
    # TODO(synk): for v7x megacore, split the B*S rows across a leading "parallel" axis
    # once B*S is large enough to matter (demo B*S=32).
    return pl.pallas_call(
        partial(stack_kernel, n_heads=n_heads, batch=batch, seq=seq),
        out_shape=jax.ShapeDtypeStruct((M, D), jnp.bfloat16),
        grid=(L,),
        in_specs=in_specs,
        out_specs=pl.BlockSpec((M, D), lambda l: (0, 0)),
        scratch_shapes=[pltpu.VMEM((M, D), jnp.float32)],
        compiler_params=pltpu.CompilerParams(
            dimension_semantics=("arbitrary",),
            vmem_limit_bytes=VMEM_LIMIT),
    )(x2, mask_add, params['w_qkv'], params['b_qkv'], params['w_o'],
      params['w1'], params['b1'], params['w2'], params['vecd'])


# ---------------------------------------------------------------------------
# Output projection + LabelSmoothingLoss, tiled over (row tiles, vocab tiles).
# Vocab is the reduction axis (last, "arbitrary"); online logsumexp + running
# sum(logits) + logit[target] accumulators in VMEM scratch; analytic KL, no
# (B,S,V) auxiliary tensors.  Output is a lane-dense (1, tm) row per row tile.
# ---------------------------------------------------------------------------
def lm_loss_kernel(dec_ref, w_ref, b_ref, tgt_ref, kl_ref,
                   m_sc, l_sc, slog_sc, ltgt_sc,
                   *, vocab_size, tv, smoothing, padding_idx):
    v_idx = pl.program_id(1)

    @pl.when(v_idx == 0)
    def _():
        m_sc[...] = jnp.full_like(m_sc, -jnp.inf)
        l_sc[...] = jnp.zeros_like(l_sc)
        slog_sc[...] = jnp.zeros_like(slog_sc)
        ltgt_sc[...] = jnp.zeros_like(ltgt_sc)

    # (TM, D) bf16 @ (D, TV) bf16 -> (TM, TV) f32 logits tile
    logits = jnp.dot(dec_ref[...], w_ref[...],
                     preferred_element_type=jnp.float32) + b_ref[...]

    tgt = tgt_ref[...]                                     # (TM, 1) int32
    col = lax.broadcasted_iota(jnp.int32, logits.shape, 1) + v_idx * tv
    is_tgt = col == tgt                                    # exactly one match over all V tiles
    ltgt_sc[...] += jnp.sum(jnp.where(is_tgt, logits, 0.0), axis=-1, keepdims=True)
    slog_sc[...] += jnp.sum(logits, axis=-1, keepdims=True)

    # online logsumexp over vocab tiles
    m_prev = m_sc[...]
    m_new = jnp.maximum(m_prev, jnp.max(logits, axis=-1, keepdims=True))
    l_sc[...] = l_sc[...] * jnp.exp(m_prev - m_new) + \
        jnp.sum(jnp.exp(logits - m_new), axis=-1, keepdims=True)
    m_sc[...] = m_new

    @pl.when(v_idx == pl.num_programs(1) - 1)
    def _():
        V = vocab_size
        confidence = 1.0 - smoothing
        smooth_val = smoothing / (V - 1)
        const = 0.0
        if confidence > 0.0:
            const += confidence * math.log(confidence)
        if smoothing > 0.0:
            const += smoothing * math.log(smooth_val)      # == (V-1)*smooth_val*log(smooth_val)
        # TODO(synk): some LabelSmoothingLoss variants use smoothing/(V-2) and zero the
        # PAD column of true_dist; adjust smooth_val/const if matching such a reference.

        lse = m_sc[...] + jnp.log(l_sc[...])               # (TM, 1)
        logp_tgt = ltgt_sc[...] - lse
        sum_logp = slog_sc[...] - V * lse
        # KL(true_dist || softmax(logits)) per token, analytic form
        kl = const - confidence * logp_tgt - smooth_val * (sum_logp - logp_tgt)
        kl = jnp.where(tgt != padding_idx, kl, 0.0)        # (TM, 1)

        # lane-dense store: turn the (TM,1) column into a (1,TM) row via a diagonal
        # select+reduce (cheap, avoids a degenerate-shape transpose lowering).
        tm = kl.shape[0]
        rr = lax.broadcasted_iota(jnp.int32, (tm, tm), 0)
        cc = lax.broadcasted_iota(jnp.int32, (tm, tm), 1)
        kl_ref[...] = jnp.sum(jnp.where(rr == cc, kl, 0.0), axis=0, keepdims=True)


def lm_loss(dec2, w_out, b_out, targets, smoothing, vocab_size):
    N, D = dec2.shape
    V = vocab_size
    tgt2 = targets.reshape(N, 1).astype(jnp.int32)

    # Row tile: per-generation guidance (>=512 v6e, 320-512 v7x, 256 v5e); lane-dense
    # output requires tm % 128 == 0 or tm == N.
    tm = N
    for cand in (512, 256):
        if N % cand == 0:
            tm = cand
            break
    # Vocab tile: as large as divides V while keeping >=2 tiles (reduction axis last).
    tv = V
    for cand in (2048, 1024, 512, 256, 128):
        if V % cand == 0 and V // cand >= 2:
            tv = cand
            break
    assert N % tm == 0 and V % tv == 0

    kl_row = pl.pallas_call(
        partial(lm_loss_kernel, vocab_size=V, tv=tv,
                smoothing=smoothing, padding_idx=PAD),
        out_shape=jax.ShapeDtypeStruct((1, N), jnp.float32),
        grid=(N // tm, V // tv),
        in_specs=[pl.BlockSpec((tm, D), lambda r, v: (r, 0)),
                  pl.BlockSpec((D, tv), lambda r, v: (0, v)),
                  pl.BlockSpec((1, tv), lambda r, v: (0, v)),
                  pl.BlockSpec((tm, 1), lambda r, v: (r, 0))],
        out_specs=pl.BlockSpec((1, tm), lambda r, v: (0, r)),
        scratch_shapes=[pltpu.VMEM((tm, 1), jnp.float32)] * 4,
        compiler_params=pltpu.CompilerParams(
            dimension_semantics=("parallel", "arbitrary"),
            vmem_limit_bytes=VMEM_LIMIT),
    )(dec2, w_out, b_out, tgt2)

    total = jnp.sum((targets != PAD).astype(jnp.float32))  # normalize by non-PAD tokens
    return jnp.sum(kl_row) / jnp.maximum(total, 1.0)


# ---------------------------------------------------------------------------
# Glue: embedding gather, sinusoidal positional encoding, parameter init.
# ---------------------------------------------------------------------------
def positional_encoding(seq_len, d_model):
    pos = jnp.arange(seq_len, dtype=jnp.float32)[:, None]
    div = jnp.exp(jnp.arange(0, d_model, 2, dtype=jnp.float32)
                  * (-math.log(10000.0) / d_model))
    pe = jnp.zeros((seq_len, d_model), jnp.float32)
    pe = pe.at[:, 0::2].set(jnp.sin(pos * div))
    pe = pe.at[:, 1::2].set(jnp.cos(pos * div))
    return pe


def init_params(key, cfg):
    D, V = cfg['d_model'], cfg['vocab_size']
    F, L, H = cfg['d_ff'], cfg['num_blocks'], cfg['n_heads']
    dh = D // H
    qscale = 1.0 / math.sqrt(dh)                            # baked into Wq / bq
    keys = jax.random.split(key, 1 + L)

    def dense(k, i, o, scale=0.02):
        return jax.random.normal(k, (i, o), jnp.float32) * scale

    emb = jax.random.normal(keys[0], (V, D), jnp.float32) * 0.02
    params = {
        'embedding': emb.astype(jnp.bfloat16),
        # TODO(synk): tied weight is a materialized transpose; gradients are not shared.
        'out_w': emb.T.astype(jnp.bfloat16),                # share_embedding=True
        'out_b': jnp.zeros((1, V), jnp.float32),
    }
    # TODO(synk): out_w could be stored int8 (v6e) / fp8 (v7x) to halve loss-kernel
    # weight streaming; left in bf16 pending a quality evaluation.

    w_qkv, b_qkv, w_o, w1, b1, w2, vecd = [], [], [], [], [], [], []
    for l in range(L):
        ks = jax.random.split(keys[1 + l], 6)
        wq = dense(ks[0], D, D) * qscale                    # attention scale folded in
        wk = dense(ks[1], D, D)
        wv = dense(ks[2], D, D)
        w_qkv.append(jnp.concatenate([wq, wk, wv], axis=1))         # (D, 3D)
        b_qkv.append(jnp.concatenate([jnp.zeros((1, D)) * qscale,   # bq scaled too
                                      jnp.zeros((1, D)), jnp.zeros((1, D))], axis=1))
        w_o.append(dense(ks[3], D, D))
        w1.append(dense(ks[4], D, 2 * F))
        b1.append(jnp.zeros((1, 2 * F)))
        w2.append(dense(ks[5], F, D))
        # packed vector params, rows: bo, ln1_g, ln1_b, b2, ln2_g, ln2_b
        vecd.append(jnp.stack([jnp.zeros(D), jnp.ones(D), jnp.zeros(D),
                               jnp.zeros(D), jnp.ones(D), jnp.zeros(D)], axis=0))

    params['w_qkv'] = jnp.stack(w_qkv).astype(jnp.bfloat16)   # (L, D, 3D)
    params['b_qkv'] = jnp.stack(b_qkv).astype(jnp.float32)    # (L, 1, 3D)
    params['w_o'] = jnp.stack(w_o).astype(jnp.bfloat16)       # (L, D, D)
    params['w1'] = jnp.stack(w1).astype(jnp.bfloat16)         # (L, D, 2F)
    params['b1'] = jnp.stack(b1).astype(jnp.float32)          # (L, 1, 2F)
    params['w2'] = jnp.stack(w2).astype(jnp.bfloat16)         # (L, F, D)
    params['vecd'] = jnp.stack(vecd).astype(jnp.float32)      # (L, 6, D)
    return params


@partial(jax.jit, static_argnames=('n_heads', 'vocab_size', 'smoothing'))
def transformer_lm_forward(params, inputs, targets, *, n_heads, vocab_size, smoothing):
    emb = params['embedding']                               # (V, D) bf16
    D = emb.shape[1]
    B, S = inputs.shape
    x = emb[inputs].astype(jnp.float32)                     # embedding gather (glue)
    x = x * math.sqrt(D) + positional_encoding(S, D)[None]  # PositionalEncoding, dropout=0
    x2 = x.reshape(B * S, D).astype(jnp.bfloat16)           # bf16 activations, B*S rows fused

    # causal mask precomputed once (additive), reused by every layer of the stack kernel
    row = lax.broadcasted_iota(jnp.int32, (S, S), 0)
    col = lax.broadcasted_iota(jnp.int32, (S, S), 1)
    mask_add = jnp.where(row >= col, 0.0, NEG_INF).astype(jnp.float32)

    dec = transformer_stack(x2, mask_add, params, n_heads=n_heads, batch=B, seq=S)
    # normalize_before=False -> no after_norm
    # TODO(synk): dropout layers are identity here (p=0.0 / eval-mode forward).
    return lm_loss(dec, params['out_w'], params['out_b'], targets, smoothing, vocab_size)


if __name__ == "__main__":
    # lane-dense small config: dh = d_model/n_heads = 128, 2*d_ff and vocab multiples of 128
    cfg = dict(vocab_size=1024, d_model=512, n_heads=4, d_ff=512, num_blocks=2,
               smoothing=0.1, residual_dropout=0.0, share_embedding=True)
    B, S = 2, 16

    key = jax.random.PRNGKey(0)
    pkey, ikey, tkey = jax.random.split(key, 3)
    params = init_params(pkey, cfg)

    inputs = jax.random.randint(ikey, (B, S), 1, cfg['vocab_size'], dtype=jnp.int32)
    targets = jax.random.randint(tkey, (B, S), 1, cfg['vocab_size'], dtype=jnp.int32)
    targets = targets.at[:, -2:].set(PAD)                   # some PAD positions to ignore

    loss = transformer_lm_forward(params, inputs, targets,
                                  n_heads=cfg['n_heads'],
                                  vocab_size=cfg['vocab_size'],
                                  smoothing=cfg['smoothing'])
    jax.block_until_ready(loss)
    assert jnp.isfinite(loss)
    print("KERNEL_OK")
</pallas_src>

<mosaic_0001>
module attributes {stable_mosaic.version = 11 : i64} {
  func.func @stack_kernel(%arg0: i32, %arg1: memref<32x512xbf16, #tpu.memory_space<vmem>>, %arg2: memref<16x16xf32, #tpu.memory_space<vmem>>, %arg3: memref<1x512x1536xbf16, #tpu.memory_space<vmem>>, %arg4: memref<1x1x1536xf32, #tpu.memory_space<vmem>>, %arg5: memref<1x512x512xbf16, #tpu.memory_space<vmem>>, %arg6: memref<1x512x1024xbf16, #tpu.memory_space<vmem>>, %arg7: memref<1x1x1024xf32, #tpu.memory_space<vmem>>, %arg8: memref<1x512x512xbf16, #tpu.memory_space<vmem>>, %arg9: memref<1x6x512xf32, #tpu.memory_space<vmem>>, %arg10: memref<32x512xbf16, #tpu.memory_space<vmem>>, %arg11: memref<32x512xf32, #tpu.memory_space<vmem>>) attributes {dimension_semantics = [#tpu.dimension_semantics<arbitrary>], iteration_bounds = array<i64: 2>, scalar_prefetch = 0 : i64, scratch_operands = 1 : i64, tpu.core_type = #tpu.core_type<tc>, window_params = [{pipeline_mode = #tpu.pipeline_mode<synchronous>, transform_indices = @transform_0, window_bounds = array<i64: 32, 512>}, {pipeline_mode = #tpu.pipeline_mode<synchronous>, transform_indices = @transform_1, window_bounds = array<i64: 16, 16>}, {transform_indices = @transform_2, window_bounds = array<i64: 1, 512, 1536>}, {transform_indices = @transform_3, window_bounds = array<i64: 1, 1, 1536>}, {transform_indices = @transform_4, window_bounds = array<i64: 1, 512, 512>}, {transform_indices = @transform_5, window_bounds = array<i64: 1, 512, 1024>}, {transform_indices = @transform_6, window_bounds = array<i64: 1, 1, 1024>}, {transform_indices = @transform_7, window_bounds = array<i64: 1, 512, 512>}, {transform_indices = @transform_8, window_bounds = array<i64: 1, 6, 512>}, {pipeline_mode = #tpu.pipeline_mode<synchronous>, transform_indices = @transform_9, window_bounds = array<i64: 32, 512>}]} {
    %c0_i32 = arith.constant 0 : i32
    %0 = arith.cmpi eq, %arg0, %c0_i32 : i32
    %1 = arith.extui %0 : i1 to i32
    %c0_i32_0 = arith.constant 0 : i32
    %2 = arith.cmpi ne, %1, %c0_i32_0 : i32
    scf.if %2 {
      %c0_46 = arith.constant 0 : index
      %c0_47 = arith.constant 0 : index
      %191 = vector.load %arg1[%c0_46, %c0_47] : memref<32x512xbf16, #tpu.memory_space<vmem>>, vector<32x512xbf16>
      %192 = arith.extf %191 : vector<32x512xbf16> to vector<32x512xf32>
      %c0_48 = arith.constant 0 : index
      %c0_49 = arith.constant 0 : index
      %193 = vector.load %arg11[%c0_48, %c0_49] : memref<32x512xf32, #tpu.memory_space<vmem>>, vector<32x512xf32>
      tpu.vector_store %arg11[%c0_48, %c0_49], %192 {strides = array<i32>} : memref<32x512xf32, #tpu.memory_space<vmem>>, vector<32x512xf32>,
    } else {
    }
    %c0 = arith.constant 0 : index
    %c0_1 = arith.constant 0 : index
    %3 = vector.load %arg11[%c0, %c0_1] : memref<32x512xf32, #tpu.memory_space<vmem>>, vector<32x512xf32>
    %4 = arith.truncf %3 : vector<32x512xf32> to vector<32x512xbf16>
    %c0_2 = arith.constant 0 : index
    %c0_3 = arith.constant 0 : index
    %c0_4 = arith.constant 0 : index
    %5 = vector.load %arg3[%c0_2, %c0_3, %c0_4] : memref<1x512x1536xbf16, #tpu.memory_space<vmem>>, vector<1x512x1536xbf16>
    %6 = vector.shape_cast %5 : vector<1x512x1536xbf16> to vector<512x1536xbf16>
    %cst = arith.constant dense<0.000000e+00> : vector<32x1536xf32>
    %7 = tpu.matmul %4, %6, %cst {dimension_numbers = #tpu.dot_dimension_numbers<[1], [0], [0], [1], [0, 0, 1, 1], [], []>} : vector<32x512xbf16>, vector<512x1536xbf16>, vector<32x1536xf32> -> vector<32x1536xf32>
    %c0_5 = arith.constant 0 : index
    %c0_6 = arith.constant 0 : index
    %c0_7 = arith.constant 0 : index
    %8 = vector.load %arg4[%c0_5, %c0_6, %c0_7] : memref<1x1x1536xf32, #tpu.memory_space<vmem>>, vector<1x1x1536xf32>
    %9 = vector.shape_cast %8 : vector<1x1x1536xf32> to vector<1x1536xf32>
    %10 = vector.broadcast %9 : vector<1x1536xf32> to vector<32x1536xf32>
    %11 = arith.addf %7, %10 : vector<32x1536xf32>
    %12 = vector.extract_strided_slice %11 {offsets = [0, 0], sizes = [32, 512], strides = [1, 1]} : vector<32x1536xf32> to vector<32x512xf32>
    %13 = arith.truncf %12 : vector<32x512xf32> to vector<32x512xbf16>
    %14 = vector.extract_strided_slice %11 {offsets = [0, 512], sizes = [32, 512], strides = [1, 1]} : vector<32x1536xf32> to vector<32x512xf32>
    %15 = arith.truncf %14 : vector<32x512xf32> to vector<32x512xbf16>
    %16 = vector.extract_strided_slice %11 {offsets = [0, 1024], sizes = [32, 512], strides = [1, 1]} : vector<32x1536xf32> to vector<32x512xf32>
    %17 = arith.truncf %16 : vector<32x512xf32> to vector<32x512xbf16>
    %18 = vector.extract_strided_slice %13 {offsets = [0, 0], sizes = [16, 128], strides = [1, 1]} : vector<32x512xbf16> to vector<16x128xbf16>
    %19 = vector.extract_strided_slice %13 {offsets = [0, 128], sizes = [16, 128], strides = [1, 1]} : vector<32x512xbf16> to vector<16x128xbf16>
    %20 = vector.extract_strided_slice %13 {offsets = [0, 256], sizes = [16, 128], strides = [1, 1]} : vector<32x512xbf16> to vector<16x128xbf16>
    %21 = vector.extract_strided_slice %13 {offsets = [0, 384], sizes = [16, 128], strides = [1, 1]} : vector<32x512xbf16> to vector<16x128xbf16>
    %22 = vector.extract_strided_slice %13 {offsets = [16, 0], sizes = [16, 128], strides = [1, 1]} : vector<32x512xbf16> to vector<16x128xbf16>
    %23 = vector.extract_strided_slice %13 {offsets = [16, 128], sizes = [16, 128], strides = [1, 1]} : vector<32x512xbf16> to vector<16x128xbf16>
    %24 = vector.extract_strided_slice %13 {offsets = [16, 256], sizes = [16, 128], strides = [1, 1]} : vector<32x512xbf16> to vector<16x128xbf16>
    %25 = vector.extract_strided_slice %13 {offsets = [16, 384], sizes = [16, 128], strides = [1, 1]} : vector<32x512xbf16> to vector<16x128xbf16>
    %26 = vector.shape_cast %18 : vector<16x128xbf16> to vector<1x16x128xbf16>
    %27 = vector.shape_cast %19 : vector<16x128xbf16> to vector<1x16x128xbf16>
    %28 = vector.shape_cast %20 : vector<16x128xbf16> to vector<1x16x128xbf16>
    %29 = vector.shape_cast %21 : vector<16x128xbf16> to vector<1x16x128xbf16>
    %30 = vector.shape_cast %22 : vector<16x128xbf16> to vector<1x16x128xbf16>
    %31 = vector.shape_cast %23 : vector<16x128xbf16> to vector<1x16x128xbf16>
    %32 = vector.shape_cast %24 : vector<16x128xbf16> to vector<1x16x128xbf16>
    %33 = vector.shape_cast %25 : vector<16x128xbf16> to vector<1x16x128xbf16>
    %34 = tpu.concatenate %26, %27, %28, %29, %30, %31, %32, %33 in 0 : vector<1x16x128xbf16>, vector<1x16x128xbf16>, vector<1x16x128xbf16>, vector<1x16x128xbf16>, vector<1x16x128xbf16>, vector<1x16x128xbf16>, vector<1x16x128xbf16>, vector<1x16x128xbf16> -> vector<8x16x128xbf16>
    %35 = vector.extract_strided_slice %15 {offsets = [0, 0], sizes = [16, 128], strides = [1, 1]} : vector<32x512xbf16> to vector<16x128xbf16>
    %36 = vector.extract_strided_slice %15 {offsets = [0, 128], sizes = [16, 128], strides = [1, 1]} : vector<32x512xbf16> to vector<16x128xbf16>
    %37 = vector.extract_strided_slice %15 {offsets = [0, 256], sizes = [16, 128], strides = [1, 1]} : vector<32x512xbf16> to vector<16x128xbf16>
    %38 = vector.extract_strided_slice %15 {offsets = [0, 384], sizes = [16, 128], strides = [1, 1]} : vector<32x512xbf16> to vector<16x128xbf16>
    %39 = vector.extract_strided_slice %15 {offsets = [16, 0], sizes = [16, 128], strides = [1, 1]} : vector<32x512xbf16> to vector<16x128xbf16>
    %40 = vector.extract_strided_slice %15 {offsets = [16, 128], sizes = [16, 128], strides = [1, 1]} : vector<32x512xbf16> to vector<16x128xbf16>
    %41 = vector.extract_strided_slice %15 {offsets = [16, 256], sizes = [16, 128], strides = [1, 1]} : vector<32x512xbf16> to vector<16x128xbf16>
    %42 = vector.extract_strided_slice %15 {offsets = [16, 384], sizes = [16, 128], strides = [1, 1]} : vector<32x512xbf16> to vector<16x128xbf16>
    %43 = vector.shape_cast %35 : vector<16x128xbf16> to vector<1x16x128xbf16>
    %44 = vector.shape_cast %36 : vector<16x128xbf16> to vector<1x16x128xbf16>
    %45 = vector.shape_cast %37 : vector<16x128xbf16> to vector<1x16x128xbf16>
    %46 = vector.shape_cast %38 : vector<16x128xbf16> to vector<1x16x128xbf16>
    %47 = vector.shape_cast %39 : vector<16x128xbf16> to vector<1x16x128xbf16>
    %48 = vector.shape_cast %40 : vector<16x128xbf16> to vector<1x16x128xbf16>
    %49 = vector.shape_cast %41 : vector<16x128xbf16> to vector<1x16x128xbf16>
    %50 = vector.shape_cast %42 : vector<16x128xbf16> to vector<1x16x128xbf16>
    %51 = tpu.concatenate %43, %44, %45, %46, %47, %48, %49, %50 in 0 : vector<1x16x128xbf16>, vector<1x16x128xbf16>, vector<1x16x128xbf16>, vector<1x16x128xbf16>, vector<1x16x128xbf16>, vector<1x16x128xbf16>, vector<1x16x128xbf16>, vector<1x16x128xbf16> -> vector<8x16x128xbf16>
    %52 = vector.extract_strided_slice %17 {offsets = [0, 0], sizes = [16, 128], strides = [1, 1]} : vector<32x512xbf16> to vector<16x128xbf16>
    %53 = vector.extract_strided_slice %17 {offsets = [0, 128], sizes = [16, 128], strides = [1, 1]} : vector<32x512xbf16> to vector<16x128xbf16>
    %54 = vector.extract_strided_slice %17 {offsets = [0, 256], sizes = [16, 128], strides = [1, 1]} : vector<32x512xbf16> to vector<16x128xbf16>
    %55 = vector.extract_strided_slice %17 {offsets = [0, 384], sizes = [16, 128], strides = [1, 1]} : vector<32x512xbf16> to vector<16x128xbf16>
    %56 = vector.extract_strided_slice %17 {offsets = [16, 0], sizes = [16, 128], strides = [1, 1]} : vector<32x512xbf16> to vector<16x128xbf16>
    %57 = vector.extract_strided_slice %17 {offsets = [16, 128], sizes = [16, 128], strides = [1, 1]} : vector<32x512xbf16> to vector<16x128xbf16>
    %58 = vector.extract_strided_slice %17 {offsets = [16, 256], sizes = [16, 128], strides = [1, 1]} : vector<32x512xbf16> to vector<16x128xbf16>
    %59 = vector.extract_strided_slice %17 {offsets = [16, 384], sizes = [16, 128], strides = [1, 1]} : vector<32x512xbf16> to vector<16x128xbf16>
    %60 = vector.shape_cast %52 : vector<16x128xbf16> to vector<1x16x128xbf16>
    %61 = vector.shape_cast %53 : vector<16x128xbf16> to vector<1x16x128xbf16>
    %62 = vector.shape_cast %54 : vector<16x128xbf16> to vector<1x16x128xbf16>
    %63 = vector.shape_cast %55 : vector<16x128xbf16> to vector<1x16x128xbf16>
    %64 = vector.shape_cast %56 : vector<16x128xbf16> to vector<1x16x128xbf16>
    %65 = vector.shape_cast %57 : vector<16x128xbf16> to vector<1x16x128xbf16>
    %66 = vector.shape_cast %58 : vector<16x128xbf16> to vector<1x16x128xbf16>
    %67 = vector.shape_cast %59 : vector<16x128xbf16> to vector<1x16x128xbf16>
    %68 = tpu.concatenate %60, %61, %62, %63, %64, %65, %66, %67 in 0 : vector<1x16x128xbf16>, vector<1x16x128xbf16>, vector<1x16x128xbf16>, vector<1x16x128xbf16>, vector<1x16x128xbf16>, vector<1x16x128xbf16>, vector<1x16x128xbf16>, vector<1x16x128xbf16> -> vector<8x16x128xbf16>
    "tpu.trace_start"() <{level = 10 : i32, message = "nqd,nkd->nqk"}> : () -> ()
    %cst_8 = arith.constant dense<0.000000e+00> : vector<8x16x16xf32>
    %69 = tpu.matmul %34, %51, %cst_8 {dimension_numbers = #tpu.dot_dimension_numbers<[2], [2], [1], [1], [0, 0, 0, 1, 1, 1], [0], [0]>} : vector<8x16x128xbf16>, vector<8x16x128xbf16>, vector<8x16x16xf32> -> vector<8x16x16xf32>
    "tpu.trace_stop"() : () -> ()
    %c0_9 = arith.constant 0 : index
    %c0_10 = arith.constant 0 : index
    %70 = vector.load %arg2[%c0_9, %c0_10] : memref<16x16xf32, #tpu.memory_space<vmem>>, vector<16x16xf32>
    %71 = vector.shape_cast %70 : vector<16x16xf32> to vector<1x16x16xf32>
    %72 = vector.broadcast %71 : vector<1x16x16xf32> to vector<8x16x16xf32>
    %73 = arith.addf %69, %72 : vector<8x16x16xf32>
    %cst_11 = arith.constant dense<0xFF800000> : vector<8x16xf32>
    %74 = vector.multi_reduction <maximumf>, %73, %cst_11 [2] : vector<8x16x16xf32> to vector<8x16xf32>
    %75 = vector.shape_cast %74 : vector<8x16xf32> to vector<8x16x1xf32>
    %76 = vector.broadcast %75 : vector<8x16x1xf32> to vector<8x16x16xf32>
    %77 = arith.subf %73, %76 : vector<8x16x16xf32>
    %78 = math.exp %77 : vector<8x16x16xf32>
    %cst_12 = arith.constant dense<0.000000e+00> : vector<8x16xf32>
    %79 = vector.multi_reduction <add>, %78, %cst_12 [2] : vector<8x16x16xf32> to vector<8x16xf32>
    %80 = vector.shape_cast %79 : vector<8x16xf32> to vector<8x16x1xf32>
    %81 = tpu.reciprocal %80 {approx = true} : vector<8x16x1xf32> -> vector<8x16x1xf32>
    %82 = vector.broadcast %81 : vector<8x16x1xf32> to vector<8x16x16xf32>
    %83 = arith.mulf %78, %82 : vector<8x16x16xf32>
    %84 = arith.truncf %83 : vector<8x16x16xf32> to vector<8x16x16xbf16>
    "tpu.trace_start"() <{level = 10 : i32, message = "nqk,nkd->nqd"}> : () -> ()
    %cst_13 = arith.constant dense<0.000000e+00> : vector<8x16x128xf32>
    %85 = tpu.matmul %84, %68, %cst_13 {dimension_numbers = #tpu.dot_dimension_numbers<[2], [1], [1], [2], [0, 0, 0, 1, 1, 2], [0], [0]>} : vector<8x16x16xbf16>, vector<8x16x128xbf16>, vector<8x16x128xf32> -> vector<8x16x128xf32>
    "tpu.trace_stop"() : () -> ()
    %86 = vector.extract_strided_slice %85 {offsets = [0, 0, 0], sizes = [1, 16, 128], strides = [1, 1, 1]} : vector<8x16x128xf32> to vector<1x16x128xf32>
    %87 = vector.shape_cast %86 : vector<1x16x128xf32> to vector<16x128xf32>
    %88 = vector.extract_strided_slice %85 {offsets = [1, 0, 0], sizes = [1, 16, 128], strides = [1, 1, 1]} : vector<8x16x128xf32> to vector<1x16x128xf32>
    %89 = vector.shape_cast %88 : vector<1x16x128xf32> to vector<16x128xf32>
    %90 = vector.extract_strided_slice %85 {offsets = [2, 0, 0], sizes = [1, 16, 128], strides = [1, 1, 1]} : vector<8x16x128xf32> to vector<1x16x128xf32>
    %91 = vector.shape_cast %90 : vector<1x16x128xf32> to vector<16x128xf32>
    %92 = vector.extract_strided_slice %85 {offsets = [3, 0, 0], sizes = [1, 16, 128], strides = [1, 1, 1]} : vector<8x16x128xf32> to vector<1x16x128xf32>
    %93 = vector.shape_cast %92 : vector<1x16x128xf32> to vector<16x128xf32>
    %94 = tpu.concatenate %87, %89, %91, %93 in 1 : vector<16x128xf32>, vector<16x128xf32>, vector<16x128xf32>, vector<16x128xf32> -> vector<16x512xf32>
    %95 = vector.extract_strided_slice %85 {offsets = [4, 0, 0], sizes = [1, 16, 128], strides = [1, 1, 1]} : vector<8x16x128xf32> to vector<1x16x128xf32>
    %96 = vector.shape_cast %95 : vector<1x16x128xf32> to vector<16x128xf32>
    %97 = vector.extract_strided_slice %85 {offsets = [5, 0, 0], sizes = [1, 16, 128], strides = [1, 1, 1]} : vector<8x16x128xf32> to vector<1x16x128xf32>
    %98 = vector.shape_cast %97 : vector<1x16x128xf32> to vector<16x128xf32>
    %99 = vector.extract_strided_slice %85 {offsets = [6, 0, 0], sizes = [1, 16, 128], strides = [1, 1, 1]} : vector<8x16x128xf32> to vector<1x16x128xf32>
    %100 = vector.shape_cast %99 : vector<1x16x128xf32> to vector<16x128xf32>
    %101 = vector.extract_strided_slice %85 {offsets = [7, 0, 0], sizes = [1, 16, 128], strides = [1, 1, 1]} : vector<8x16x128xf32> to vector<1x16x128xf32>
    %102 = vector.shape_cast %101 : vector<1x16x128xf32> to vector<16x128xf32>
    %103 = tpu.concatenate %96, %98, %100, %102 in 1 : vector<16x128xf32>, vector<16x128xf32>, vector<16x128xf32>, vector<16x128xf32> -> vector<16x512xf32>
    %104 = tpu.concatenate %94, %103 in 0 : vector<16x512xf32>, vector<16x512xf32> -> vector<32x512xf32>
    %c0_14 = arith.constant 0 : index
    %c0_15 = arith.constant 0 : index
    %c0_16 = arith.constant 0 : index
    %105 = vector.load %arg9[%c0_14, %c0_15, %c0_16] : memref<1x6x512xf32, #tpu.memory_space<vmem>>, vector<1x6x512xf32>
    %106 = vector.shape_cast %105 : vector<1x6x512xf32> to vector<6x512xf32>
    %107 = vector.extract_strided_slice %106 {offsets = [0, 0], sizes = [1, 512], strides = [1, 1]} : vector<6x512xf32> to vector<1x512xf32>
    %108 = vector.extract_strided_slice %106 {offsets = [1, 0], sizes = [1, 512], strides = [1, 1]} : vector<6x512xf32> to vector<1x512xf32>
    %109 = vector.extract_strided_slice %106 {offsets = [2, 0], sizes = [1, 512], strides = [1, 1]} : vector<6x512xf32> to vector<1x512xf32>
    %110 = vector.extract_strided_slice %106 {offsets = [3, 0], sizes = [1, 512], strides = [1, 1]} : vector<6x512xf32> to vector<1x512xf32>
    %111 = vector.extract_strided_slice %106 {offsets = [4, 0], sizes = [1, 512], strides = [1, 1]} : vector<6x512xf32> to vector<1x512xf32>
    %112 = vector.extract_strided_slice %106 {offsets = [5, 0], sizes = [1, 512], strides = [1, 1]} : vector<6x512xf32> to vector<1x512xf32>
    %113 = arith.truncf %104 : vector<32x512xf32> to vector<32x512xbf16>
    %c0_17 = arith.constant 0 : index
    %c0_18 = arith.constant 0 : index
    %c0_19 = arith.constant 0 : index
    %114 = vector.load %arg5[%c0_17, %c0_18, %c0_19] : memref<1x512x512xbf16, #tpu.memory_space<vmem>>, vector<1x512x512xbf16>
    %115 = vector.shape_cast %114 : vector<1x512x512xbf16> to vector<512x512xbf16>
    %cst_20 = arith.constant dense<0.000000e+00> : vector<32x512xf32>
    %116 = tpu.matmul %113, %115, %cst_20 {dimension_numbers = #tpu.dot_dimension_numbers<[1], [0], [0], [1], [0, 0, 1, 1], [], []>} : vector<32x512xbf16>, vector<512x512xbf16>, vector<32x512xf32> -> vector<32x512xf32>
    %117 = vector.broadcast %107 : vector<1x512xf32> to vector<32x512xf32>
    %118 = arith.addf %116, %117 : vector<32x512xf32>
    %119 = arith.addf %3, %118 : vector<32x512xf32>
    %cst_21 = arith.constant dense<0.000000e+00> : vector<32xf32>
    %120 = vector.multi_reduction <add>, %119, %cst_21 [1] : vector<32x512xf32> to vector<32xf32>
    %121 = vector.shape_cast %120 : vector<32xf32> to vector<32x1xf32>
    %cst_22 = arith.constant 5.120000e+02 : f32
    %122 = vector.broadcast %cst_22 : f32 to vector<32x1xf32>
    %123 = arith.divf %121, %122 : vector<32x1xf32>
    %124 = vector.broadcast %123 : vector<32x1xf32> to vector<32x512xf32>
    %125 = arith.subf %119, %124 : vector<32x512xf32>
    %126 = arith.mulf %125, %125 : vector<32x512xf32>
    %cst_23 = arith.constant dense<0.000000e+00> : vector<32xf32>
    %127 = vector.multi_reduction <add>, %126, %cst_23 [1] : vector<32x512xf32> to vector<32xf32>
    %128 = vector.shape_cast %127 : vector<32xf32> to vector<32x1xf32>
    %cst_24 = arith.constant 5.120000e+02 : f32
    %129 = vector.broadcast %cst_24 : f32 to vector<32x1xf32>
    %130 = arith.divf %128, %129 : vector<32x1xf32>
    %131 = vector.broadcast %123 : vector<32x1xf32> to vector<32x512xf32>
    %132 = arith.subf %119, %131 : vector<32x512xf32>
    %cst_25 = arith.constant 9.99999974E-6 : f32
    %133 = vector.broadcast %cst_25 : f32 to vector<32x1xf32>
    %134 = arith.addf %130, %133 : vector<32x1xf32>
    %135 = math.rsqrt %134 : vector<32x1xf32>
    %136 = vector.broadcast %135 : vector<32x1xf32> to vector<32x512xf32>
    %137 = arith.mulf %132, %136 : vector<32x512xf32>
    %138 = vector.broadcast %108 : vector<1x512xf32> to vector<32x512xf32>
    %139 = arith.mulf %137, %138 : vector<32x512xf32>
    %140 = vector.broadcast %109 : vector<1x512xf32> to vector<32x512xf32>
    %141 = arith.addf %139, %140 : vector<32x512xf32>
    %142 = arith.truncf %141 : vector<32x512xf32> to vector<32x512xbf16>
    %c0_26 = arith.constant 0 : index
    %c0_27 = arith.constant 0 : index
    %c0_28 = arith.constant 0 : index
    %143 = vector.load %arg6[%c0_26, %c0_27, %c0_28] : memref<1x512x1024xbf16, #tpu.memory_space<vmem>>, vector<1x512x1024xbf16>
    %144 = vector.shape_cast %143 : vector<1x512x1024xbf16> to vector<512x1024xbf16>
    %cst_29 = arith.constant dense<0.000000e+00> : vector<32x1024xf32>
    %145 = tpu.matmul %142, %144, %cst_29 {dimension_numbers = #tpu.dot_dimension_numbers<[1], [0], [0], [1], [0, 0, 1, 1], [], []>} : vector<32x512xbf16>, vector<512x1024xbf16>, vector<32x1024xf32> -> vector<32x1024xf32>
    %c0_30 = arith.constant 0 : index
    %c0_31 = arith.constant 0 : index
    %c0_32 = arith.constant 0 : index
    %146 = vector.load %arg7[%c0_30, %c0_31, %c0_32] : memref<1x1x1024xf32, #tpu.memory_space<vmem>>, vector<1x1x1024xf32>
    %147 = vector.shape_cast %146 : vector<1x1x1024xf32> to vector<1x1024xf32>
    %148 = vector.broadcast %147 : vector<1x1024xf32> to vector<32x1024xf32>
    %149 = arith.addf %145, %148 : vector<32x1024xf32>
    %150 = vector.extract_strided_slice %149 {offsets = [0, 0], sizes = [32, 512], strides = [1, 1]} : vector<32x1024xf32> to vector<32x512xf32>
    %151 = vector.extract_strided_slice %149 {offsets = [0, 512], sizes = [32, 512], strides = [1, 1]} : vector<32x1024xf32> to vector<32x512xf32>
    %152 = arith.negf %151 : vector<32x512xf32>
    %153 = math.exp %152 : vector<32x512xf32>
    %cst_33 = arith.constant 1.000000e+00 : f32
    %154 = vector.broadcast %cst_33 : f32 to vector<32x512xf32>
    %155 = arith.addf %154, %153 : vector<32x512xf32>
    %156 = arith.divf %154, %155 : vector<32x512xf32>
    %157 = arith.mulf %150, %156 : vector<32x512xf32>
    %158 = arith.truncf %157 : vector<32x512xf32> to vector<32x512xbf16>
    %c0_34 = arith.constant 0 : index
    %c0_35 = arith.constant 0 : index
    %c0_36 = arith.constant 0 : index
    %159 = vector.load %arg8[%c0_34, %c0_35, %c0_36] : memref<1x512x512xbf16, #tpu.memory_space<vmem>>, vector<1x512x512xbf16>
    %160 = vector.shape_cast %159 : vector<1x512x512xbf16> to vector<512x512xbf16>
    %cst_37 = arith.constant dense<0.000000e+00> : vector<32x512xf32>
    %161 = tpu.matmul %158, %160, %cst_37 {dimension_numbers = #tpu.dot_dimension_numbers<[1], [0], [0], [1], [0, 0, 1, 1], [], []>} : vector<32x512xbf16>, vector<512x512xbf16>, vector<32x512xf32> -> vector<32x512xf32>
    %162 = vector.broadcast %110 : vector<1x512xf32> to vector<32x512xf32>
    %163 = arith.addf %161, %162 : vector<32x512xf32>
    %164 = arith.addf %141, %163 : vector<32x512xf32>
    %cst_38 = arith.constant dense<0.000000e+00> : vector<32xf32>
    %165 = vector.multi_reduction <add>, %164, %cst_38 [1] : vector<32x512xf32> to vector<32xf32>
    %166 = vector.shape_cast %165 : vector<32xf32> to vector<32x1xf32>
    %cst_39 = arith.constant 5.120000e+02 : f32
    %167 = vector.broadcast %cst_39 : f32 to vector<32x1xf32>
    %168 = arith.divf %166, %167 : vector<32x1xf32>
    %169 = vector.broadcast %168 : vector<32x1xf32> to vector<32x512xf32>
    %170 = arith.subf %164, %169 : vector<32x512xf32>
    %171 = arith.mulf %170, %170 : vector<32x512xf32>
    %cst_40 = arith.constant dense<0.000000e+00> : vector<32xf32>
    %172 = vector.multi_reduction <add>, %171, %cst_40 [1] : vector<32x512xf32> to vector<32xf32>
    %173 = vector.shape_cast %172 : vector<32xf32> to vector<32x1xf32>
    %cst_41 = arith.constant 5.120000e+02 : f32
    %174 = vector.broadcast %cst_41 : f32 to vector<32x1xf32>
    %175 = arith.divf %173, %174 : vector<32x1xf32>
    %176 = vector.broadcast %168 : vector<32x1xf32> to vector<32x512xf32>
    %177 = arith.subf %164, %176 : vector<32x512xf32>
    %cst_42 = arith.constant 9.99999974E-6 : f32
    %178 = vector.broadcast %cst_42 : f32 to vector<32x1xf32>
    %179 = arith.addf %175, %178 : vector<32x1xf32>
    %180 = math.rsqrt %179 : vector<32x1xf32>
    %181 = vector.broadcast %180 : vector<32x1xf32> to vector<32x512xf32>
    %182 = arith.mulf %177, %181 : vector<32x512xf32>
    %183 = vector.broadcast %111 : vector<1x512xf32> to vector<32x512xf32>
    %184 = arith.mulf %182, %183 : vector<32x512xf32>
    %185 = vector.broadcast %112 : vector<1x512xf32> to vector<32x512xf32>
    %186 = arith.addf %184, %185 : vector<32x512xf32>
    %c0_43 = arith.constant 0 : index
    %c0_44 = arith.constant 0 : index
    %187 = vector.load %arg11[%c0_43, %c0_44] : memref<32x512xf32, #tpu.memory_space<vmem>>, vector<32x512xf32>
    tpu.vector_store %arg11[%c0_43, %c0_44], %186 {strides = array<i32>} : memref<32x512xf32, #tpu.memory_space<vmem>>, vector<32x512xf32>,
    %c1_i32 = arith.constant 1 : i32
    %188 = arith.cmpi eq, %arg0, %c1_i32 : i32
    %189 = arith.extui %188 : i1 to i32
    %c0_i32_45 = arith.constant 0 : i32
    %190 = arith.cmpi ne, %189, %c0_i32_45 : i32
    scf.if %190 {
      %191 = arith.truncf %186 : vector<32x512xf32> to vector<32x512xbf16>
      %c0_46 = arith.constant 0 : index
      %c0_47 = arith.constant 0 : index
      %192 = vector.load %arg10[%c0_46, %c0_47] : memref<32x512xbf16, #tpu.memory_space<vmem>>, vector<32x512xbf16>
      tpu.vector_store %arg10[%c0_46, %c0_47], %191 {strides = array<i32>} : memref<32x512xbf16, #tpu.memory_space<vmem>>, vector<32x512xbf16>,
    } else {
    }
    return
  }
  func.func @transform_0(%arg0: i32) -> (i32, i32) {
    %c0_i32 = arith.constant 0 : i32
    %c0_i32_0 = arith.constant 0 : i32
    %c0_i32_1 = arith.constant 0 : i32
    return %c0_i32, %c0_i32_0 : i32, i32
  }
  func.func @transform_1(%arg0: i32) -> (i32, i32) {
    %c0_i32 = arith.constant 0 : i32
    %c0_i32_0 = arith.constant 0 : i32
    %c0_i32_1 = arith.constant 0 : i32
    return %c0_i32, %c0_i32_0 : i32, i32
  }
  func.func @transform_2(%arg0: i32) -> (i32, i32, i32) {
    %c0_i32 = arith.constant 0 : i32
    %c0_i32_0 = arith.constant 0 : i32
    %c0_i32_1 = arith.constant 0 : i32
    return %arg0, %c0_i32, %c0_i32_0 : i32, i32, i32
  }
  func.func @transform_3(%arg0: i32) -> (i32, i32, i32) {
    %c0_i32 = arith.constant 0 : i32
    %c0_i32_0 = arith.constant 0 : i32
    %c0_i32_1 = arith.constant 0 : i32
    return %arg0, %c0_i32, %c0_i32_0 : i32, i32, i32
  }
  func.func @transform_4(%arg0: i32) -> (i32, i32, i32) {
    %c0_i32 = arith.constant 0 : i32
    %c0_i32_0 = arith.constant 0 : i32
    %c0_i32_1 = arith.constant 0 : i32
    return %arg0, %c0_i32, %c0_i32_0 : i32, i32, i32
  }
  func.func @transform_5(%arg0: i32) -> (i32, i32, i32) {
    %c0_i32 = arith.constant 0 : i32
    %c0_i32_0 = arith.constant 0 : i32
    %c0_i32_1 = arith.constant 0 : i32
    return %arg0, %c0_i32, %c0_i32_0 : i32, i32, i32
  }
  func.func @transform_6(%arg0: i32) -> (i32, i32, i32) {
    %c0_i32 = arith.constant 0 : i32
    %c0_i32_0 = arith.constant 0 : i32
    %c0_i32_1 = arith.constant 0 : i32
    return %arg0, %c0_i32, %c0_i32_0 : i32, i32, i32
  }
  func.func @transform_7(%arg0: i32) -> (i32, i32, i32) {
    %c0_i32 = arith.constant 0 : i32
    %c0_i32_0 = arith.constant 0 : i32
    %c0_i32_1 = arith.constant 0 : i32
    return %arg0, %c0_i32, %c0_i32_0 : i32, i32, i32
  }
  func.func @transform_8(%arg0: i32) -> (i32, i32, i32) {
    %c0_i32 = arith.constant 0 : i32
    %c0_i32_0 = arith.constant 0 : i32
    %c0_i32_1 = arith.constant 0 : i32
    return %arg0, %c0_i32, %c0_i32_0 : i32, i32, i32
  }
  func.func @transform_9(%arg0: i32) -> (i32, i32) {
    %c0_i32 = arith.constant 0 : i32
    %c0_i32_0 = arith.constant 0 : i32
    %c0_i32_1 = arith.constant 0 : i32
    return %c0_i32, %c0_i32_0 : i32, i32
  }
}

module attributes {stable_mosaic.version = 11 : i64} {
  func.func @lm_loss_kernel(%arg0: i32, %arg1: i32, %arg2: memref<32x512xbf16, #tpu.memory_space<vmem>>, %arg3: memref<512x512xbf16, #tpu.memory_space<vmem>>, %arg4: memref<1x512xf32, #tpu.memory_space<vmem>>, %arg5: memref<32x1xi32, #tpu.memory_space<vmem>>, %arg6: memref<1x32xf32, #tpu.memory_space<vmem>>, %arg7: memref<32x1xf32, #tpu.memory_space<vmem>>, %arg8: memref<32x1xf32, #tpu.memory_space<vmem>>, %arg9: memref<32x1xf32, #tpu.memory_space<vmem>>, %arg10: memref<32x1xf32, #tpu.memory_space<vmem>>) attributes {dimension_semantics = [#tpu.dimension_semantics<parallel>, #tpu.dimension_semantics<arbitrary>], iteration_bounds = array<i64: 1, 2>, scalar_prefetch = 0 : i64, scratch_operands = 4 : i64, tpu.core_type = #tpu.core_type<tc>, window_params = [{transform_indices = @transform_0, window_bounds = array<i64: 32, 512>}, {transform_indices = @transform_1, window_bounds = array<i64: 512, 512>}, {transform_indices = @transform_2, window_bounds = array<i64: 1, 512>}, {transform_indices = @transform_3, window_bounds = array<i64: 32, 1>}, {transform_indices = @transform_4, window_bounds = array<i64: 1, 32>}]} {
    %c0_i32 = arith.constant 0 : i32
    %0 = arith.cmpi eq, %arg1, %c0_i32 : i32
    %1 = arith.extui %0 : i1 to i32
    %c0_i32_0 = arith.constant 0 : i32
    %2 = arith.cmpi ne, %1, %c0_i32_0 : i32
    scf.if %2 {
      %cst_30 = arith.constant 0xFF800000 : f32
      %47 = vector.broadcast %cst_30 : f32 to vector<32x1xf32>
      %c0_31 = arith.constant 0 : index
      %c0_32 = arith.constant 0 : index
      %48 = vector.load %arg7[%c0_31, %c0_32] : memref<32x1xf32, #tpu.memory_space<vmem>>, vector<32x1xf32>
      tpu.vector_store %arg7[%c0_31, %c0_32], %47 {strides = array<i32>} : memref<32x1xf32, #tpu.memory_space<vmem>>, vector<32x1xf32>,
      %cst_33 = arith.constant 0.000000e+00 : f32
      %49 = vector.broadcast %cst_33 : f32 to vector<32x1xf32>
      %c0_34 = arith.constant 0 : index
      %c0_35 = arith.constant 0 : index
      %50 = vector.load %arg8[%c0_34, %c0_35] : memref<32x1xf32, #tpu.memory_space<vmem>>, vector<32x1xf32>
      tpu.vector_store %arg8[%c0_34, %c0_35], %49 {strides = array<i32>} : memref<32x1xf32, #tpu.memory_space<vmem>>, vector<32x1xf32>,
      %cst_36 = arith.constant 0.000000e+00 : f32
      %51 = vector.broadcast %cst_36 : f32 to vector<32x1xf32>
      %c0_37 = arith.constant 0 : index
      %c0_38 = arith.constant 0 : index
      %52 = vector.load %arg9[%c0_37, %c0_38] : memref<32x1xf32, #tpu.memory_space<vmem>>, vector<32x1xf32>
      tpu.vector_store %arg9[%c0_37, %c0_38], %51 {strides = array<i32>} : memref<32x1xf32, #tpu.memory_space<vmem>>, vector<32x1xf32>,
      %cst_39 = arith.constant 0.000000e+00 : f32
      %53 = vector.broadcast %cst_39 : f32 to vector<32x1xf32>
      %c0_40 = arith.constant 0 : index
      %c0_41 = arith.constant 0 : index
      %54 = vector.load %arg10[%c0_40, %c0_41] : memref<32x1xf32, #tpu.memory_space<vmem>>, vector<32x1xf32>
      tpu.vector_store %arg10[%c0_40, %c0_41], %53 {strides = array<i32>} : memref<32x1xf32, #tpu.memory_space<vmem>>, vector<32x1xf32>,
    } else {
    }
    %c0 = arith.constant 0 : index
    %c0_1 = arith.constant 0 : index
    %3 = vector.load %arg2[%c0, %c0_1] : memref<32x512xbf16, #tpu.memory_space<vmem>>, vector<32x512xbf16>
    %c0_2 = arith.constant 0 : index
    %c0_3 = arith.constant 0 : index
    %4 = vector.load %arg3[%c0_2, %c0_3] : memref<512x512xbf16, #tpu.memory_space<vmem>>, vector<512x512xbf16>
    %cst = arith.constant dense<0.000000e+00> : vector<32x512xf32>
    %5 = tpu.matmul %3, %4, %cst {dimension_numbers = #tpu.dot_dimension_numbers<[1], [0], [0], [1], [0, 0, 1, 1], [], []>} : vector<32x512xbf16>, vector<512x512xbf16>, vector<32x512xf32> -> vector<32x512xf32>
    %c0_4 = arith.constant 0 : index
    %c0_5 = arith.constant 0 : index
    %6 = vector.load %arg4[%c0_4, %c0_5] : memref<1x512xf32, #tpu.memory_space<vmem>>, vector<1x512xf32>
    %7 = vector.broadcast %6 : vector<1x512xf32> to vector<32x512xf32>
    %8 = arith.addf %5, %7 : vector<32x512xf32>
    %c0_6 = arith.constant 0 : index
    %c0_7 = arith.constant 0 : index
    %9 = vector.load %arg5[%c0_6, %c0_7] : memref<32x1xi32, #tpu.memory_space<vmem>>, vector<32x1xi32>
    %10 = tpu.iota {dimensions = array<i32: 1>} : vector<32x512xi32>
    %c512_i32 = arith.constant 512 : i32
    %11 = arith.muli %arg1, %c512_i32 : i32
    %12 = vector.broadcast %11 : i32 to vector<32x512xi32>
    %13 = arith.addi %10, %12 : vector<32x512xi32>
    %14 = vector.broadcast %9 : vector<32x1xi32> to vector<32x512xi32>
    %15 = arith.cmpi eq, %13, %14 : vector<32x512xi32>
    %c0_8 = arith.constant 0 : index
    %c0_9 = arith.constant 0 : index
    %16 = vector.load %arg10[%c0_8, %c0_9] : memref<32x1xf32, #tpu.memory_space<vmem>>, vector<32x1xf32>
    %cst_10 = arith.constant 0.000000e+00 : f32
    %17 = vector.broadcast %cst_10 : f32 to vector<32x512xf32>
    %18 = arith.select %15, %8, %17 : vector<32x512xi1>, vector<32x512xf32>
    %cst_11 = arith.constant dense<0.000000e+00> : vector<32xf32>
    %19 = vector.multi_reduction <add>, %18, %cst_11 [1] : vector<32x512xf32> to vector<32xf32>
    %20 = vector.shape_cast %19 : vector<32xf32> to vector<32x1xf32>
    %21 = arith.addf %16, %20 : vector<32x1xf32>
    %c0_12 = arith.constant 0 : index
    %c0_13 = arith.constant 0 : index
    %22 = vector.load %arg10[%c0_12, %c0_13] : memref<32x1xf32, #tpu.memory_space<vmem>>, vector<32x1xf32>
    tpu.vector_store %arg10[%c0_12, %c0_13], %21 {strides = array<i32>} : memref<32x1xf32, #tpu.memory_space<vmem>>, vector<32x1xf32>,
    %c0_14 = arith.constant 0 : index
    %c0_15 = arith.constant 0 : index
    %23 = vector.load %arg9[%c0_14, %c0_15] : memref<32x1xf32, #tpu.memory_space<vmem>>, vector<32x1xf32>
    %cst_16 = arith.constant dense<0.000000e+00> : vector<32xf32>
    %24 = vector.multi_reduction <add>, %8, %cst_16 [1] : vector<32x512xf32> to vector<32xf32>
    %25 = vector.shape_cast %24 : vector<32xf32> to vector<32x1xf32>
    %26 = arith.addf %23, %25 : vector<32x1xf32>
    %c0_17 = arith.constant 0 : index
    %c0_18 = arith.constant 0 : index
    %27 = vector.load %arg9[%c0_17, %c0_18] : memref<32x1xf32, #tpu.memory_space<vmem>>, vector<32x1xf32>
    tpu.vector_store %arg9[%c0_17, %c0_18], %26 {strides = array<i32>} : memref<32x1xf32, #tpu.memory_space<vmem>>, vector<32x1xf32>,
    %c0_19 = arith.constant 0 : index
    %c0_20 = arith.constant 0 : index
    %28 = vector.load %arg7[%c0_19, %c0_20] : memref<32x1xf32, #tpu.memory_space<vmem>>, vector<32x1xf32>
    %cst_21 = arith.constant dense<0xFF800000> : vector<32xf32>
    %29 = vector.multi_reduction <maximumf>, %8, %cst_21 [1] : vector<32x512xf32> to vector<32xf32>
    %30 = vector.shape_cast %29 : vector<32xf32> to vector<32x1xf32>
    %31 = arith.maximumf %28, %30 : vector<32x1xf32>
    %c0_22 = arith.constant 0 : index
    %c0_23 = arith.constant 0 : index
    %32 = vector.load %arg8[%c0_22, %c0_23] : memref<32x1xf32, #tpu.memory_space<vmem>>, vector<32x1xf32>
    %33 = arith.subf %28, %31 : vector<32x1xf32>
    %34 = math.exp %33 : vector<32x1xf32>
    %35 = arith.mulf %32, %34 : vector<32x1xf32>
    %36 = vector.broadcast %31 : vector<32x1xf32> to vector<32x512xf32>
    %37 = arith.subf %8, %36 : vector<32x512xf32>
    %38 = math.exp %37 : vector<32x512xf32>
    %cst_24 = arith.constant dense<0.000000e+00> : vector<32xf32>
    %39 = vector.multi_reduction <add>, %38, %cst_24 [1] : vector<32x512xf32> to vector<32xf32>
    %40 = vector.shape_cast %39 : vector<32xf32> to vector<32x1xf32>
    %41 = arith.addf %35, %40 : vector<32x1xf32>
    %c0_25 = arith.constant 0 : index
    %c0_26 = arith.constant 0 : index
    %42 = vector.load %arg8[%c0_25, %c0_26] : memref<32x1xf32, #tpu.memory_space<vmem>>, vector<32x1xf32>
    tpu.vector_store %arg8[%c0_25, %c0_26], %41 {strides = array<i32>} : memref<32x1xf32, #tpu.memory_space<vmem>>, vector<32x1xf32>,
    %c0_27 = arith.constant 0 : index
    %c0_28 = arith.constant 0 : index
    %43 = vector.load %arg7[%c0_27, %c0_28] : memref<32x1xf32, #tpu.memory_space<vmem>>, vector<32x1xf32>
    tpu.vector_store %arg7[%c0_27, %c0_28], %31 {strides = array<i32>} : memref<32x1xf32, #tpu.memory_space<vmem>>, vector<32x1xf32>,
    %c1_i32 = arith.constant 1 : i32
    %44 = arith.cmpi eq, %arg1, %c1_i32 : i32
    %45 = arith.extui %44 : i1 to i32
    %c0_i32_29 = arith.constant 0 : i32
    %46 = arith.cmpi ne, %45, %c0_i32_29 : i32
    scf.if %46 {
      %c0_30 = arith.constant 0 : index
      %c0_31 = arith.constant 0 : index
      %47 = vector.load %arg7[%c0_30, %c0_31] : memref<32x1xf32, #tpu.memory_space<vmem>>, vector<32x1xf32>
      %c0_32 = arith.constant 0 : index
      %c0_33 = arith.constant 0 : index
      %48 = vector.load %arg8[%c0_32, %c0_33] : memref<32x1xf32, #tpu.memory_space<vmem>>, vector<32x1xf32>
      %49 = math.log %48 : vector<32x1xf32>
      %50 = arith.addf %47, %49 : vector<32x1xf32>
      %c0_34 = arith.constant 0 : index
      %c0_35 = arith.constant 0 : index
      %51 = vector.load %arg10[%c0_34, %c0_35] : memref<32x1xf32, #tpu.memory_space<vmem>>, vector<32x1xf32>
      %52 = arith.subf %51, %50 : vector<32x1xf32>
      %c0_36 = arith.constant 0 : index
      %c0_37 = arith.constant 0 : index
      %53 = vector.load %arg9[%c0_36, %c0_37] : memref<32x1xf32, #tpu.memory_space<vmem>>, vector<32x1xf32>
      %cst_38 = arith.constant 1.024000e+03 : f32
      %54 = vector.broadcast %cst_38 : f32 to vector<32x1xf32>
      %55 = arith.mulf %54, %50 : vector<32x1xf32>
      %56 = arith.subf %53, %55 : vector<32x1xf32>
      %cst_39 = arith.constant 0.899999976 : f32
      %57 = vector.broadcast %cst_39 : f32 to vector<32x1xf32>
      %58 = arith.mulf %57, %52 : vector<32x1xf32>
      %cst_40 = arith.constant -1.01813245 : f32
      %59 = vector.broadcast %cst_40 : f32 to vector<32x1xf32>
      %60 = arith.subf %59, %58 : vector<32x1xf32>
      %61 = arith.subf %56, %52 : vector<32x1xf32>
      %cst_41 = arith.constant 9.7751712E-5 : f32
      %62 = vector.broadcast %cst_41 : f32 to vector<32x1xf32>
      %63 = arith.mulf %62, %61 : vector<32x1xf32>
      %64 = arith.subf %60, %63 : vector<32x1xf32>
      %c0_i32_42 = arith.constant 0 : i32
      %65 = vector.broadcast %c0_i32_42 : i32 to vector<32x1xi32>
      %66 = arith.cmpi ne, %9, %65 : vector<32x1xi32>
      %cst_43 = arith.constant 0.000000e+00 : f32
      %67 = vector.broadcast %cst_43 : f32 to vector<32x1xf32>
      %68 = arith.select %66, %64, %67 : vector<32x1xi1>, vector<32x1xf32>
      %69 = tpu.iota {dimensions = array<i32: 0>} : vector<32x32xi32>
      %70 = tpu.iota {dimensions = array<i32: 1>} : vector<32x32xi32>
      %71 = arith.cmpi eq, %69, %70 : vector<32x32xi32>
      %cst_44 = arith.constant 0.000000e+00 : f32
      %72 = vector.shape_cast %68 : vector<32x1xf32> to vector<32x1xf32>
      %73 = vector.broadcast %72 : vector<32x1xf32> to vector<32x32xf32>
      %74 = vector.broadcast %cst_44 : f32 to vector<32x32xf32>
      %75 = arith.select %71, %73, %74 : vector<32x32xi1>, vector<32x32xf32>
      %cst_45 = arith.constant dense<0.000000e+00> : vector<32xf32>
      %76 = vector.multi_reduction <add>, %75, %cst_45 [0] : vector<32x32xf32> to vector<32xf32>
      %77 = vector.shape_cast %76 : vector<32xf32> to vector<1x32xf32>
      %c0_46 = arith.constant 0 : index
      %c0_47 = arith.constant 0 : index
      %78 = vector.load %arg6[%c0_46, %c0_47] : memref<1x32xf32, #tpu.memory_space<vmem>>, vector<1x32xf32>
      tpu.vector_store %arg6[%c0_46, %c0_47], %77 {strides = array<i32>} : memref<1x32xf32, #tpu.memory_space<vmem>>, vector<1x32xf32>,
    } else {
    }
    return
  }
  func.func @transform_0(%arg0: i32, %arg1: i32) -> (i32, i32) {
    %c0_i32 = arith.constant 0 : i32
    %c0_i32_0 = arith.constant 0 : i32
    return %arg0, %c0_i32 : i32, i32
  }
  func.func @transform_1(%arg0: i32, %arg1: i32) -> (i32, i32) {
    %c0_i32 = arith.constant 0 : i32
    %c0_i32_0 = arith.constant 0 : i32
    return %c0_i32, %arg1 : i32, i32
  }
  func.func @transform_2(%arg0: i32, %arg1: i32) -> (i32, i32) {
    %c0_i32 = arith.constant 0 : i32
    %c0_i32_0 = arith.constant 0 : i32
    return %c0_i32, %arg1 : i32, i32
  }
  func.func @transform_3(%arg0: i32, %arg1: i32) -> (i32, i32) {
    %c0_i32 = arith.constant 0 : i32
    %c0_i32_0 = arith.constant 0 : i32
    return %arg0, %c0_i32 : i32, i32
  }
  func.func @transform_4(%arg0: i32, %arg1: i32) -> (i32, i32) {
    %c0_i32 = arith.constant 0 : i32
    %c0_i32_0 = arith.constant 0 : i32
    return %c0_i32, %arg0 : i32, i32
  }
}

</mosaic_0001>

<llo_original>
// kernel: transformer_lm_forward.3
$region0: #{transformer_lm_forward.3}
  #allocation0 [shape = 'u32[]', space=smem, size = 0x4, offset = 0x4, fixed_abs, tag = 'smem constant byte address 0x4 - core index']
  #allocation1 [shape = 'u32[72,128]{1,0:T(1,128)}', space=vmem, size = 0x9000, scoped, tag = 'internal scratch']
  #allocation2 [shape = 'f32[32,1]{1,0:T(8,128)}', space=vmem, size = 0x4000, scoped, tag = 'scratch operand']
  #allocation3 [shape = 'f32[32,1]{1,0:T(8,128)}', space=vmem, size = 0x4000, scoped, tag = 'scratch operand']
  #allocation4 [shape = 'f32[32,1]{1,0:T(8,128)}', space=vmem, size = 0x4000, scoped, tag = 'scratch operand']
  #allocation5 [shape = 'f32[32,1]{1,0:T(8,128)}', space=vmem, size = 0x4000, scoped, tag = 'scratch operand']
  %s0 = inlined_call_operand.vmem [shape: bf16[32,512], index: 0, kind: input, shape index: {}]
  %s1 = inlined_call_operand.hbm [shape: bf16[512,1024], index: 1, kind: input, shape index: {}]
  %s2 = inlined_call_operand.hbm [shape: f32[1,1024], index: 2, kind: input, shape index: {}]
  %s3 = inlined_call_operand.vmem [shape: s32[32,1], index: 3, kind: input, shape index: {}]
  %s4 = inlined_call_operand.vmem [shape: f32[1,32], index: 4, kind: output, shape index: {}]
  %s5 = sld [smem:[#allocation0]]
  $region65: #{transformer_lm_forward.3} parent=0
    _
  %s7 = ssub.s32 1, %s5
  %s8 = scalar_select 0, %s7, %s5
  $region1: #{transformer_lm_forward.3} parent=0
    #allocation6 [shape = 'u8[1048576]{0}', space=vmem, size = 0x100000, scoped, tag = 'input window, operand 1']
    #allocation7 [shape = 's32[2]{0}', space=sflag, size = 0x8, scoped, tag = 'scoped memory for transformer_lm_forward.3']
    #allocation8 [shape = 'u8[4096]{0}', space=vmem, size = 0x1000, scoped, tag = 'input window, operand 2']
    #allocation9 [shape = 's32[2]{0}', space=sflag, size = 0x8, scoped, tag = 'scoped memory for transformer_lm_forward.3']
    %9 = vsyncpa [#allocation7], 0
    %s10 = scalar_lea.sflag [#allocation7], 1
    %11 = vsyncpa %s10, 0
    %12 = vsyncpa [#allocation9], 0
    %s13 = scalar_lea.sflag [#allocation9], 1
    %14 = vsyncpa %s13, 0
    loop: start=0, step=1, limit=4
    $region2: #{transformer_lm_forward.3} parent=1 // loop_pre_header
      _
    $region3: #{transformer_lm_forward.3} parent=1 // loop_header
      %s16 = sphi 0, %s20
      %p17 = scmp.ge.s32.totalorder %s16, 4
      %s23 = sphi 0, %s35
      %s24 = sphi 0, %s31
      %s25 = sphi 0, %s23
      %s26 = sphi 0, %s24
      %s27 = sphi 0, %s25
      %s28 = sphi 0, %s26
      %s38 = sphi 0, %s40
      %s41 = sphi 0, %s38
      %s42 = sphi 0, %s41
      %s58 = sphi 0, %s42
      %s64 = sphi 0, %s66
      %s67 = sphi 0, %s64
      %s68 = sphi 0, %s67
      %s84 = sphi 0, %s68
      %s90 = sphi 0, %s92
      %s93 = sphi 0, %s90
      %s94 = sphi 0, %s93
      %s110 = sphi 0, %s94
      %s116 = sphi 0, %s118
      %s119 = sphi 0, %s116
      %s120 = sphi 0, %s119
      %s136 = sphi 0, %s120
      %s142 = sphi 0, %s144
      %s145 = sphi 0, %s142
      %s146 = sphi 0, %s145
      %s162 = sphi 0, %s146
    $region4: #{transformer_lm_forward.3} parent=1 // loop_header_branch
      %19 = sbr.rel (%p17) target = $region8
    $region5: #{transformer_lm_forward.3} parent=1 // loop_body
      %s21 = ssub.s32 %s16, 1
      %s22 = ssub.s32 %s16, 2
      %s29 = sadd.s32 1, %s24
      %p30 = scmp.ge.s32.totalorder %s29, 2
      %s31 = scalar_select %p30, 0, %s29
      %s32 = sadd.s32 1, %s23
      %s33 = scalar_select %p30, %s32, %s23
      %p34 = scmp.ge.s32.totalorder %s33, 1
      %s35 = scalar_select %p34, 0, %s33
      %s36 = ssub.s32 %s23, %s35
      %p37 = scmp.eq.s32.totalorder %s36, 0
      %s39 = sadd.s32 %s38, 1
      %s40 = scalar_select %p37, %s38, %s39
      %p43 = pneg %p37
      %p44 = scmp.eq.s32.totalorder %s16, 1
      %p45 = por %p43, %p44
      %p46 = scmp.ne.s32.totalorder %s38, %s41
      %p47 = scmp.eq.s32.totalorder %s16, 0
      %p48 = por %p46, %p47
      %p49 = scmp.ne.s32.totalorder %s38, %s41
      %p50 = scmp.eq.s32.totalorder %s21, 1
      %p51 = por %p49, %p50
      %p52 = scmp.ne.s32.totalorder %s41, %s42
      %p53 = scmp.eq.s32.totalorder %s21, 0
      %p54 = por %p52, %p53
      %p55 = scmp.ne.s32.totalorder %s41, %s42
      %p56 = scmp.eq.s32.totalorder %s22, 1
      %p57 = por %p55, %p56
      %p59 = scmp.ne.s32.totalorder %s42, %s58
      %p60 = scmp.eq.s32.totalorder %s22, 0
      %p61 = por %p59, %p60
      %s62 = ssub.s32 %s24, %s31
      %p63 = scmp.eq.s32.totalorder %s62, 0
      %s65 = sadd.s32 %s64, 1
      %s66 = scalar_select %p63, %s64, %s65
      %p69 = pneg %p63
      %p70 = scmp.eq.s32.totalorder %s16, 1
      %p71 = por %p69, %p70
      %p72 = scmp.ne.s32.totalorder %s64, %s67
      %p73 = scmp.eq.s32.totalorder %s16, 0
      %p74 = por %p72, %p73
      %p75 = scmp.ne.s32.totalorder %s64, %s67
      %p76 = scmp.eq.s32.totalorder %s21, 1
      %p77 = por %p75, %p76
      %p78 = scmp.ne.s32.totalorder %s67, %s68
      %p79 = scmp.eq.s32.totalorder %s21, 0
      %p80 = por %p78, %p79
      %p81 = scmp.ne.s32.totalorder %s67, %s68
      %p82 = scmp.eq.s32.totalorder %s22, 1
      %p83 = por %p81, %p82
      %p85 = scmp.ne.s32.totalorder %s68, %s84
      %p86 = scmp.eq.s32.totalorder %s22, 0
      %p87 = por %p85, %p86
      %s88 = ssub.s32 %s24, %s31
      %p89 = scmp.eq.s32.totalorder %s88, 0
      %s91 = sadd.s32 %s90, 1
      %s92 = scalar_select %p89, %s90, %s91
      %p95 = pneg %p89
      %p96 = scmp.eq.s32.totalorder %s16, 1
      %p97 = por %p95, %p96
      %p98 = scmp.ne.s32.totalorder %s90, %s93
      %p99 = scmp.eq.s32.totalorder %s16, 0
      %p100 = por %p98, %p99
      %p101 = scmp.ne.s32.totalorder %s90, %s93
      %p102 = scmp.eq.s32.totalorder %s21, 1
      %p103 = por %p101, %p102
      %p104 = scmp.ne.s32.totalorder %s93, %s94
      %p105 = scmp.eq.s32.totalorder %s21, 0
      %p106 = por %p104, %p105
      %p107 = scmp.ne.s32.totalorder %s93, %s94
      %p108 = scmp.eq.s32.totalorder %s22, 1
      %p109 = por %p107, %p108
      %p111 = scmp.ne.s32.totalorder %s94, %s110
      %p112 = scmp.eq.s32.totalorder %s22, 0
      %p113 = por %p111, %p112
      %s114 = ssub.s32 %s23, %s35
      %p115 = scmp.eq.s32.totalorder %s114, 0
      %s117 = sadd.s32 %s116, 1
      %s118 = scalar_select %p115, %s116, %s117
      %p121 = pneg %p115
      %p122 = scmp.eq.s32.totalorder %s16, 1
      %p123 = por %p121, %p122
      %p124 = scmp.ne.s32.totalorder %s116, %s119
      %p125 = scmp.eq.s32.totalorder %s16, 0
      %p126 = por %p124, %p125
      %p127 = scmp.ne.s32.totalorder %s116, %s119
      %p128 = scmp.eq.s32.totalorder %s21, 1
      %p129 = por %p127, %p128
      %p130 = scmp.ne.s32.totalorder %s119, %s120
      %p131 = scmp.eq.s32.totalorder %s21, 0
      %p132 = por %p130, %p131
      %p133 = scmp.ne.s32.totalorder %s119, %s120
      %p134 = scmp.eq.s32.totalorder %s22, 1
      %p135 = por %p133, %p134
      %p137 = scmp.ne.s32.totalorder %s120, %s136
      %p138 = scmp.eq.s32.totalorder %s22, 0
      %p139 = por %p137, %p138
      %s140 = ssub.s32 %s23, %s35
      %p141 = scmp.eq.s32.totalorder %s140, 0
      %s143 = sadd.s32 %s142, 1
      %s144 = scalar_select %p141, %s142, %s143
      %p147 = pneg %p141
      %p148 = scmp.eq.s32.totalorder %s16, 1
      %p149 = por %p147, %p148
      %p150 = scmp.ne.s32.totalorder %s142, %s145
      %p151 = scmp.eq.s32.totalorder %s16, 0
      %p152 = por %p150, %p151
      %p153 = scmp.ne.s32.totalorder %s142, %s145
      %p154 = scmp.eq.s32.totalorder %s21, 1
      %p155 = por %p153, %p154
      %p156 = scmp.ne.s32.totalorder %s145, %s146
      %p157 = scmp.eq.s32.totalorder %s21, 0
      %p158 = por %p156, %p157
      %p159 = scmp.ne.s32.totalorder %s145, %s146
      %p160 = scmp.eq.s32.totalorder %s22, 1
      %p161 = por %p159, %p160
      %p163 = scmp.ne.s32.totalorder %s146, %s162
      %p164 = scmp.eq.s32.totalorder %s22, 0
      %p165 = por %p163, %p164
      %p166 = scmp.le.s32.totalorder 1, %s16
      %p167 = scmp.lt.s32.totalorder %s16, 3
      %p168 = pnand %p166, %p167
      %p169 = pneg %p168
      // Predicated region
      $region9: #{transformer_lm_forward.3} parent=5 // pred_check
        _
      $region10: #{transformer_lm_forward.3} parent=5 // pred_check_branch
        %171 = sbr.rel (%p168) target = $region12
      $region11: #{transformer_lm_forward.3} parent=5 // pred_region
        %s172 = ssub.s32 %s16, 1
        // Predicated region
        $region13: #{transformer_lm_forward.3} parent=11 // pred_check
          %p173 = pneg %p54
        $region14: #{transformer_lm_forward.3} parent=11 // pred_check_branch
          %175 = sbr.rel (%p173) target = $region16
        $region15: #{transformer_lm_forward.3} parent=11 // pred_region
          %s176 = smul.u32 4, %s25
          %p177 = scmp.lt.s32.totalorder %s176, 3
          %s178 = scalar_select %p177, %s176, 3
          %s179 = smul.addr %s178, 4
          %s180 = smul.addr %s179, 4
          %s181 = scalar_lea.vmem %s0, %s180
          %s182 = smul.u32 4, %s25
        $region16: #{transformer_lm_forward.3} parent=11 // pred_fallthru
          _
        // Predicated region
        $region17: #{transformer_lm_forward.3} parent=11 // pred_check
          %p183 = pneg %p132
        $region18: #{transformer_lm_forward.3} parent=11 // pred_check_branch
          %185 = sbr.rel (%p183) target = $region20
        $region19: #{transformer_lm_forward.3} parent=11 // pred_region
          %s186 = smul.u32 4, %s25
          %p187 = scmp.lt.s32.totalorder %s186, 3
          %s188 = scalar_select %p187, %s186, 3
          %s189 = smul.addr %s188, 8
          %s190 = scalar_lea.vmem %s3, %s189
          %s191 = smul.u32 4, %s25
        $region20: #{transformer_lm_forward.3} parent=11 // pred_fallthru
          _
      $region12: #{transformer_lm_forward.3} parent=5 // pred_fallthru
        _
      %p192 = scmp.lt.s32.totalorder %s16, 2
      // Predicated region
      $region21: #{transformer_lm_forward.3} parent=5 // pred_check
        %p193 = pneg %p192
      $region22: #{transformer_lm_forward.3} parent=5 // pred_check_branch
        %195 = sbr.rel (%p193) target = $region24
      $region23: #{transformer_lm_forward.3} parent=5 // pred_region
        // Predicated region
        $region25: #{transformer_lm_forward.3} parent=23 // pred_check
          %p196 = pneg %p74
        $region26: #{transformer_lm_forward.3} parent=23 // pred_check_branch
          %198 = sbr.rel (%p196) target = $region28
        $region27: #{transformer_lm_forward.3} parent=23 // pred_region
          %s199 = sand.u32 %s64, 1
          %s200 = scalar_lea.sflag [#allocation7], %s199
          %s201 = sand.u32 %s64, 1
          %s202 = smul.addr %s201, 1024
          %s203 = scalar_lea.vmem [#allocation6], %s202
          %s204 = smul.u32 4, %s24
          %206 = vsyncadd %s200, 0
          %s207 = smul.addr %s204, 4
          %s208 = scalar_lea.hbm %s1, %s207
          %s209 = sshll.u32 %s208, 4
          %s210 = int_to_ptr.hbm [resolvable:$true] %s209
          %s211 = sshll.u32 %s203, 4
          %s212 = int_to_ptr.vmem [resolvable:$true] %s211
          %217 = dma.hbm_to_vmem [thread:$0]  %s210, 16384, %s212, %s200, 512, 256, 16
        $region28: #{transformer_lm_forward.3} parent=23 // pred_fallthru
          _
        // Predicated region
        $region29: #{transformer_lm_forward.3} parent=23 // pred_check
          %p218 = pneg %p100
        $region30: #{transformer_lm_forward.3} parent=23 // pred_check_branch
          %220 = sbr.rel (%p218) target = $region32
        $region31: #{transformer_lm_forward.3} parent=23 // pred_region
          %s221 = sand.u32 %s90, 1
          %s222 = scalar_lea.sflag [#allocation9], %s221
          %s223 = sand.u32 %s90, 1
          %s224 = smul.addr %s223, 4
          %s225 = scalar_lea.vmem [#allocation8], %s224
          %s226 = smul.u32 4, %s24
          %228 = vsyncadd %s222, 0
          %s229 = scalar_lea.hbm %s2, %s226
          %s231 = sshll.u32 %s229, 4
          %s232 = int_to_ptr.hbm [resolvable:$true] %s231
          %s233 = sshll.u32 %s225, 4
          %s234 = int_to_ptr.vmem [resolvable:$true] %s233
          %236 = dma.hbm_to_vmem [thread:$0]  %s232, 64, %s234, %s222
        $region32: #{transformer_lm_forward.3} parent=23 // pred_fallthru
          _
      $region24: #{transformer_lm_forward.3} parent=5 // pred_fallthru
        _
      %p237 = scmp.le.s32.totalorder 1, %s16
      %p238 = scmp.lt.s32.totalorder %s16, 3
      %p239 = pnand %p237, %p238
      %p240 = pneg %p239
      // Predicated region
      $region33: #{transformer_lm_forward.3} parent=5 // pred_check
        _
      $region34: #{transformer_lm_forward.3} parent=5 // pred_check_branch
        %242 = sbr.rel (%p239) target = $region36
      $region35: #{transformer_lm_forward.3} parent=5 // pred_region
        %s243 = ssub.s32 %s16, 1
        %s244 = sand.u32 %s67, 1
        %s245 = scalar_lea.sflag [#allocation7], %s244
        %s246 = sand.u32 %s67, 1
        %s247 = smul.addr %s246, 1024
        %s248 = scalar_lea.vmem [#allocation6], %s247
        // Predicated region
        $region37: #{transformer_lm_forward.3} parent=35 // pred_check
          %p249 = pneg %p80
        $region38: #{transformer_lm_forward.3} parent=35 // pred_check_branch
          %251 = sbr.rel (%p249) target = $region40
        $region39: #{transformer_lm_forward.3} parent=35 // pred_region
          %253 = dma.done %s245, 16384
        $region40: #{transformer_lm_forward.3} parent=35 // pred_fallthru
          _
        %s254 = sand.u32 %s93, 1
        %s255 = scalar_lea.sflag [#allocation9], %s254
        %s256 = sand.u32 %s93, 1
        %s257 = smul.addr %s256, 4
        %s258 = scalar_lea.vmem [#allocation8], %s257
        // Predicated region
        $region41: #{transformer_lm_forward.3} parent=35 // pred_check
          %p259 = pneg %p106
        $region42: #{transformer_lm_forward.3} parent=35 // pred_check_branch
          %261 = sbr.rel (%p259) target = $region44
        $region43: #{transformer_lm_forward.3} parent=35 // pred_region
          %263 = dma.done %s255, 64
        $region44: #{transformer_lm_forward.3} parent=35 // pred_fallthru
          _
        %s264 = smul.u32 4, %s25
        %p265 = scmp.lt.s32.totalorder %s264, 3
        %s266 = scalar_select %p265, %s264, 3
        %s267 = smul.addr %s266, 4
        %s268 = smul.addr %s267, 4
        %s269 = scalar_lea.vmem %s0, %s268
        %p270 = pneg %p54
        %p271 = pneg %p51
        %s272 = sand.u32 %s67, 1
        %s273 = scalar_lea.sflag [#allocation7], %s272
        %s274 = sand.u32 %s67, 1
        %s275 = smul.addr %s274, 1024
        %s276 = scalar_lea.vmem [#allocation6], %s275
        %p277 = pneg %p80
        %p278 = pneg %p77
        %s279 = sand.u32 %s93, 1
        %s280 = scalar_lea.sflag [#allocation9], %s279
        %s281 = sand.u32 %s93, 1
        %s282 = smul.addr %s281, 4
        %s283 = scalar_lea.vmem [#allocation8], %s282
        %p284 = pneg %p106
        %p285 = pneg %p103
        %s286 = smul.u32 4, %s25
        %p287 = scmp.lt.s32.totalorder %s286, 3
        %s288 = scalar_select %p287, %s286, 3
        %s289 = smul.addr %s288, 8
        %s290 = scalar_lea.vmem %s3, %s289
        %p291 = pneg %p132
        %p292 = pneg %p129
        %p293 = pneg %p158
        %p294 = pneg %p155
        %p295 = scmp.lt.s32.totalorder %s25, 0
        %s296 = scalar_select %p295, %s25, 0
        %s297 = scalar_lea.vmem %s4, %s296
        %s298 = smul.u32 4, %s25
        %p299 = scmp.lt.s32.totalorder %s298, 3
        %s300 = scalar_select %p299, %s298, 3
        %s301 = smul.addr %s300, 4
        %s302 = smul.addr %s301, 4
        %s303 = scalar_lea.vmem %s0, %s302
        %s304 = smul.u32 4, %s25
        %s305 = smul.u32 4, %s26
        %s306 = smul.u32 4, %s26
        %s307 = smul.u32 4, %s25
        %p308 = scmp.lt.s32.totalorder %s307, 3
        %s309 = scalar_select %p308, %s307, 3
        %s310 = smul.addr %s309, 8
        %s311 = scalar_lea.vmem %s3, %s310
        %s312 = smul.u32 4, %s25
        %p313 = scmp.lt.s32.totalorder %s25, 0
        %s314 = scalar_select %p313, %s25, 0
        %s315 = scalar_lea.vmem %s4, %s314
        %p316 = scmp.eq.s32.totalorder %s26, 0
        // Predicated region
        $region45: #{transformer_lm_forward.3} parent=35 // pred_check
          %p317 = pneg %p316
        $region46: #{transformer_lm_forward.3} parent=35 // pred_check_branch
          %319 = sbr.rel (%p317) target = $region48
        $region47: #{transformer_lm_forward.3} parent=35 // pred_region
          %vm320 = vcmask 7168
          %321 = vst.msk [vmem:[#allocation2] sm:$0xff] %vm320, -inf
          %322 = vst.msk [vmem:[#allocation2 + $0x8] sm:$0xff] %vm320, -inf
          %323 = vst.msk [vmem:[#allocation2 + $0x10] sm:$0xff] %vm320, -inf
          %324 = vst.msk [vmem:[#allocation2 + $0x18] sm:$0xff] %vm320, -inf
          %325 = vst.msk [vmem:[#allocation3] sm:$0xff] %vm320, 0.0
          %326 = vst.msk [vmem:[#allocation3 + $0x8] sm:$0xff] %vm320, 0.0
          %327 = vst.msk [vmem:[#allocation3 + $0x10] sm:$0xff] %vm320, 0.0
          %328 = vst.msk [vmem:[#allocation3 + $0x18] sm:$0xff] %vm320, 0.0
          %329 = vst.msk [vmem:[#allocation4] sm:$0xff] %vm320, 0.0
          %330 = vst.msk [vmem:[#allocation4 + $0x8] sm:$0xff] %vm320, 0.0
          %331 = vst.msk [vmem:[#allocation4 + $0x10] sm:$0xff] %vm320, 0.0
          %332 = vst.msk [vmem:[#allocation4 + $0x18] sm:$0xff] %vm320, 0.0
          %333 = vst.msk [vmem:[#allocation5] sm:$0xff] %vm320, 0.0
          %334 = vst.msk [vmem:[#allocation5 + $0x8] sm:$0xff] %vm320, 0.0
          %335 = vst.msk [vmem:[#allocation5 + $0x10] sm:$0xff] %vm320, 0.0
          %336 = vst.msk [vmem:[#allocation5 + $0x18] sm:$0xff] %vm320, 0.0
        $region48: #{transformer_lm_forward.3} parent=35 // pred_fallthru
          _
        %v337 = vld [vmem:[%s303] sm:$0xff]
        %v338 = vld [vmem:[%s303 + $0x8] sm:$0xff]
        %v339 = vld [vmem:[%s303 + $0x10] sm:$0xff]
        %v340 = vld [vmem:[%s303 + $0x18] sm:$0xff]
        %v341 = vld [vmem:[%s303 + $0x20] sm:$0xff]
        %v342 = vld [vmem:[%s303 + $0x28] sm:$0xff]
        %v343 = vld [vmem:[%s303 + $0x30] sm:$0xff]
        %v344 = vld [vmem:[%s303 + $0x38] sm:$0xff]
        %v345 = vld [vmem:[%s248] sm:$0xff]
        %v346 = vld [vmem:[%s248 + $0x8] sm:$0xff]
        %v347 = vld [vmem:[%s248 + $0x10] sm:$0xff]
        %v348 = vld [vmem:[%s248 + $0x18] sm:$0xff]
        %v349 = vld [vmem:[%s248 + $0x20] sm:$0xff]
        %v350 = vld [vmem:[%s248 + $0x28] sm:$0xff]
        %v351 = vld [vmem:[%s248 + $0x30] sm:$0xff]
        %v352 = vld [vmem:[%s248 + $0x38] sm:$0xff]
        %v353 = vld [vmem:[%s248 + $0x40] sm:$0xff]
        %v354 = vld [vmem:[%s248 + $0x48] sm:$0xff]
        %v355 = vld [vmem:[%s248 + $0x50] sm:$0xff]
        %v356 = vld [vmem:[%s248 + $0x58] sm:$0xff]
        %v357 = vld [vmem:[%s248 + $0x60] sm:$0xff]
        %v358 = vld [vmem:[%s248 + $0x68] sm:$0xff]
        %v359 = vld [vmem:[%s248 + $0x70] sm:$0xff]
        %v360 = vld [vmem:[%s248 + $0x78] sm:$0xff]
        %v361 = vld [vmem:[%s248 + $0x80] sm:$0xff]
        %v362 = vld [vmem:[%s248 + $0x88] sm:$0xff]
        %v363 = vld [vmem:[%s248 + $0x90] sm:$0xff]
        %v364 = vld [vmem:[%s248 + $0x98] sm:$0xff]
        %v365 = vld [vmem:[%s248 + $0xa0] sm:$0xff]
        %v366 = vld [vmem:[%s248 + $0xa8] sm:$0xff]
        %v367 = vld [vmem:[%s248 + $0xb0] sm:$0xff]
        %v368 = vld [vmem:[%s248 + $0xb8] sm:$0xff]
        %v369 = vld [vmem:[%s248 + $0xc0] sm:$0xff]
        %v370 = vld [vmem:[%s248 + $0xc8] sm:$0xff]
        %v371 = vld [vmem:[%s248 + $0xd0] sm:$0xff]
        %v372 = vld [vmem:[%s248 + $0xd8] sm:$0xff]
        %v373 = vld [vmem:[%s248 + $0xe0] sm:$0xff]
        %v374 = vld [vmem:[%s248 + $0xe8] sm:$0xff]
        %v375 = vld [vmem:[%s248 + $0xf0] sm:$0xff]
        %v376 = vld [vmem:[%s248 + $0xf8] sm:$0xff]
        %v377 = vld [vmem:[%s248 + $0x100] sm:$0xff]
        %v378 = vld [vmem:[%s248 + $0x108] sm:$0xff]
        %v379 = vld [vmem:[%s248 + $0x110] sm:$0xff]
        %v380 = vld [vmem:[%s248 + $0x118] sm:$0xff]
        %v381 = vld [vmem:[%s248 + $0x120] sm:$0xff]
        %v382 = vld [vmem:[%s248 + $0x128] sm:$0xff]
        %v383 = vld [vmem:[%s248 + $0x130] sm:$0xff]
        %v384 = vld [vmem:[%s248 + $0x138] sm:$0xff]
        %v385 = vld [vmem:[%s248 + $0x140] sm:$0xff]
        %v386 = vld [vmem:[%s248 + $0x148] sm:$0xff]
        %v387 = vld [vmem:[%s248 + $0x150] sm:$0xff]
        %v388 = vld [vmem:[%s248 + $0x158] sm:$0xff]
        %v389 = vld [vmem:[%s248 + $0x160] sm:$0xff]
        %v390 = vld [vmem:[%s248 + $0x168] sm:$0xff]
        %v391 = vld [vmem:[%s248 + $0x170] sm:$0xff]
        %v392 = vld [vmem:[%s248 + $0x178] sm:$0xff]
        %v393 = vld [vmem:[%s248 + $0x180] sm:$0xff]
        %v394 = vld [vmem:[%s248 + $0x188] sm:$0xff]
        %v395 = vld [vmem:[%s248 + $0x190] sm:$0xff]
        %v396 = vld [vmem:[%s248 + $0x198] sm:$0xff]
        %v397 = vld [vmem:[%s248 + $0x1a0] sm:$0xff]
        %v398 = vld [vmem:[%s248 + $0x1a8] sm:$0xff]
        %v399 = vld [vmem:[%s248 + $0x1b0] sm:$0xff]
        %v400 = vld [vmem:[%s248 + $0x1b8] sm:$0xff]
        %v401 = vld [vmem:[%s248 + $0x1c0] sm:$0xff]
        %v402 = vld [vmem:[%s248 + $0x1c8] sm:$0xff]
        %v403 = vld [vmem:[%s248 + $0x1d0] sm:$0xff]
        %v404 = vld [vmem:[%s248 + $0x1d8] sm:$0xff]
        %v405 = vld [vmem:[%s248 + $0x1e0] sm:$0xff]
        %v406 = vld [vmem:[%s248 + $0x1e8] sm:$0xff]
        %v407 = vld [vmem:[%s248 + $0x1f0] sm:$0xff]
        %v408 = vld [vmem:[%s248 + $0x1f8] sm:$0xff]
        %v409 = vld [vmem:[%s248 + $0x200] sm:$0xff]
        %v410 = vld [vmem:[%s248 + $0x208] sm:$0xff]
        %v411 = vld [vmem:[%s248 + $0x210] sm:$0xff]
        %v412 = vld [vmem:[%s248 + $0x218] sm:$0xff]
        %v413 = vld [vmem:[%s248 + $0x220] sm:$0xff]
        %v414 = vld [vmem:[%s248 + $0x228] sm:$0xff]
        %v415 = vld [vmem:[%s248 + $0x230] sm:$0xff]
        %v416 = vld [vmem:[%s248 + $0x238] sm:$0xff]
        %v417 = vld [vmem:[%s248 + $0x240] sm:$0xff]
        %v418 = vld [vmem:[%s248 + $0x248] sm:$0xff]
        %v419 = vld [vmem:[%s248 + $0x250] sm:$0xff]
        %v420 = vld [vmem:[%s248 + $0x258] sm:$0xff]
        %v421 = vld [vmem:[%s248 + $0x260] sm:$0xff]
        %v422 = vld [vmem:[%s248 + $0x268] sm:$0xff]
        %v423 = vld [vmem:[%s248 + $0x270] sm:$0xff]
        %v424 = vld [vmem:[%s248 + $0x278] sm:$0xff]
        %v425 = vld [vmem:[%s248 + $0x280] sm:$0xff]
        %v426 = vld [vmem:[%s248 + $0x288] sm:$0xff]
        %v427 = vld [vmem:[%s248 + $0x290] sm:$0xff]
        %v428 = vld [vmem:[%s248 + $0x298] sm:$0xff]
        %v429 = vld [vmem:[%s248 + $0x2a0] sm:$0xff]
        %v430 = vld [vmem:[%s248 + $0x2a8] sm:$0xff]
        %v431 = vld [vmem:[%s248 + $0x2b0] sm:$0xff]
        %v432 = vld [vmem:[%s248 + $0x2b8] sm:$0xff]
        %v433 = vld [vmem:[%s248 + $0x2c0] sm:$0xff]
        %v434 = vld [vmem:[%s248 + $0x2c8] sm:$0xff]
        %v435 = vld [vmem:[%s248 + $0x2d0] sm:$0xff]
        %v436 = vld [vmem:[%s248 + $0x2d8] sm:$0xff]
        %v437 = vld [vmem:[%s248 + $0x2e0] sm:$0xff]
        %v438 = vld [vmem:[%s248 + $0x2e8] sm:$0xff]
        %v439 = vld [vmem:[%s248 + $0x2f0] sm:$0xff]
        %v440 = vld [vmem:[%s248 + $0x2f8] sm:$0xff]
        %v441 = vld [vmem:[%s248 + $0x300] sm:$0xff]
        %v442 = vld [vmem:[%s248 + $0x308] sm:$0xff]
        %v443 = vld [vmem:[%s248 + $0x310] sm:$0xff]
        %v444 = vld [vmem:[%s248 + $0x318] sm:$0xff]
        %v445 = vld [vmem:[%s248 + $0x320] sm:$0xff]
        %v446 = vld [vmem:[%s248 + $0x328] sm:$0xff]
        %v447 = vld [vmem:[%s248 + $0x330] sm:$0xff]
        %v448 = vld [vmem:[%s248 + $0x338] sm:$0xff]
        %v449 = vld [vmem:[%s248 + $0x340] sm:$0xff]
        %v450 = vld [vmem:[%s248 + $0x348] sm:$0xff]
        %v451 = vld [vmem:[%s248 + $0x350] sm:$0xff]
        %v452 = vld [vmem:[%s248 + $0x358] sm:$0xff]
        %v453 = vld [vmem:[%s248 + $0x360] sm:$0xff]
        %v454 = vld [vmem:[%s248 + $0x368] sm:$0xff]
        %v455 = vld [vmem:[%s248 + $0x370] sm:$0xff]
        %v456 = vld [vmem:[%s248 + $0x378] sm:$0xff]
        %v457 = vld [vmem:[%s248 + $0x380] sm:$0xff]
        %v458 = vld [vmem:[%s248 + $0x388] sm:$0xff]
        %v459 = vld [vmem:[%s248 + $0x390] sm:$0xff]
        %v460 = vld [vmem:[%s248 + $0x398] sm:$0xff]
        %v461 = vld [vmem:[%s248 + $0x3a0] sm:$0xff]
        %v462 = vld [vmem:[%s248 + $0x3a8] sm:$0xff]
        %v463 = vld [vmem:[%s248 + $0x3b0] sm:$0xff]
        %v464 = vld [vmem:[%s248 + $0x3b8] sm:$0xff]
        %v465 = vld [vmem:[%s248 + $0x3c0] sm:$0xff]
        %v466 = vld [vmem:[%s248 + $0x3c8] sm:$0xff]
        %v467 = vld [vmem:[%s248 + $0x3d0] sm:$0xff]
        %v468 = vld [vmem:[%s248 + $0x3d8] sm:$0xff]
        %v469 = vld [vmem:[%s248 + $0x3e0] sm:$0xff]
        %v470 = vld [vmem:[%s248 + $0x3e8] sm:$0xff]
        %v471 = vld [vmem:[%s248 + $0x3f0] sm:$0xff]
        %v472 = vld [vmem:[%s248 + $0x3f8] sm:$0xff]
        %v473 = vld [vmem:[%s258] sm:$0xf]
        %v475 = vperm.slane %v473, 0
        %v476 = vperm.slane %v473, 1
        %v477 = vperm.slane %v473, 2
        %v478 = vperm.slane %v473, 3
        %v491 = vunpack.c.l.b16 %v337
        %v492 = vunpack.c.h.b16 %v337
        %v493 = vunpack.c.l.b16 %v338
        %v494 = vunpack.c.h.b16 %v338
        %v495 = vunpack.c.l.b16 %v339
        %v496 = vunpack.c.h.b16 %v339
        %v497 = vunpack.c.l.b16 %v340
        %v498 = vunpack.c.h.b16 %v340
        %v499 = vunpack.c.l.b16 %v341
        %v500 = vunpack.c.h.b16 %v341
        %v501 = vunpack.c.l.b16 %v342
        %v502 = vunpack.c.h.b16 %v342
        %v503 = vunpack.c.l.b16 %v343
        %v504 = vunpack.c.h.b16 %v343
        %v505 = vunpack.c.l.b16 %v344
        %v506 = vunpack.c.h.b16 %v344
        %v507 = vpack.c.b16 %v495, %v491
        %v508 = vpack.c.b16 %v496, %v492
        %v509 = vpack.c.b16 %v497, %v493
        %v510 = vpack.c.b16 %v498, %v494
        %v511 = vpack.c.b16 %v503, %v499
        %v512 = vpack.c.b16 %v504, %v500
        %v513 = vpack.c.b16 %v505, %v501
        %v514 = vpack.c.b16 %v506, %v502
        %v651 = vunpack.c.l.b16 %v345
        %v652 = vunpack.c.h.b16 %v345
        %v653 = vunpack.c.l.b16 %v346
        %v654 = vunpack.c.h.b16 %v346
        %v655 = vunpack.c.l.b16 %v347
        %v656 = vunpack.c.h.b16 %v347
        %v657 = vunpack.c.l.b16 %v348
        %v658 = vunpack.c.h.b16 %v348
        %v659 = vunpack.c.l.b16 %v349
        %v660 = vunpack.c.h.b16 %v349
        %v661 = vunpack.c.l.b16 %v350
        %v662 = vunpack.c.h.b16 %v350
        %v663 = vunpack.c.l.b16 %v351
        %v664 = vunpack.c.h.b16 %v351
        %v665 = vunpack.c.l.b16 %v352
        %v666 = vunpack.c.h.b16 %v352
        %v667 = vunpack.c.l.b16 %v353
        %v668 = vunpack.c.h.b16 %v353
        %v669 = vunpack.c.l.b16 %v354
        %v670 = vunpack.c.h.b16 %v354
        %v671 = vunpack.c.l.b16 %v355
        %v672 = vunpack.c.h.b16 %v355
        %v673 = vunpack.c.l.b16 %v356
        %v674 = vunpack.c.h.b16 %v356
        %v675 = vunpack.c.l.b16 %v357
        %v676 = vunpack.c.h.b16 %v357
        %v677 = vunpack.c.l.b16 %v358
        %v678 = vunpack.c.h.b16 %v358
        %v679 = vunpack.c.l.b16 %v359
        %v680 = vunpack.c.h.b16 %v359
        %v681 = vunpack.c.l.b16 %v360
        %v682 = vunpack.c.h.b16 %v360
        %v683 = vunpack.c.l.b16 %v361
        %v684 = vunpack.c.h.b16 %v361
        %v685 = vunpack.c.l.b16 %v362
        %v686 = vunpack.c.h.b16 %v362
        %v687 = vunpack.c.l.b16 %v363
        %v688 = vunpack.c.h.b16 %v363
        %v689 = vunpack.c.l.b16 %v364
        %v690 = vunpack.c.h.b16 %v364
        %v691 = vunpack.c.l.b16 %v365
        %v692 = vunpack.c.h.b16 %v365
        %v693 = vunpack.c.l.b16 %v366
        %v694 = vunpack.c.h.b16 %v366
        %v695 = vunpack.c.l.b16 %v367
        %v696 = vunpack.c.h.b16 %v367
        %v697 = vunpack.c.l.b16 %v368
        %v698 = vunpack.c.h.b16 %v368
        %v699 = vunpack.c.l.b16 %v369
        %v700 = vunpack.c.h.b16 %v369
        %v701 = vunpack.c.l.b16 %v370
        %v702 = vunpack.c.h.b16 %v370
        %v703 = vunpack.c.l.b16 %v371
        %v704 = vunpack.c.h.b16 %v371
        %v705 = vunpack.c.l.b16 %v372
        %v706 = vunpack.c.h.b16 %v372
        %v707 = vunpack.c.l.b16 %v373
        %v708 = vunpack.c.h.b16 %v373
        %v709 = vunpack.c.l.b16 %v374
        %v710 = vunpack.c.h.b16 %v374
        %v711 = vunpack.c.l.b16 %v375
        %v712 = vunpack.c.h.b16 %v375
        %v713 = vunpack.c.l.b16 %v376
        %v714 = vunpack.c.h.b16 %v376
        %v715 = vunpack.c.l.b16 %v377
        %v716 = vunpack.c.h.b16 %v377
        %v717 = vunpack.c.l.b16 %v378
        %v718 = vunpack.c.h.b16 %v378
        %v719 = vunpack.c.l.b16 %v379
        %v720 = vunpack.c.h.b16 %v379
        %v721 = vunpack.c.l.b16 %v380
        %v722 = vunpack.c.h.b16 %v380
        %v723 = vunpack.c.l.b16 %v381
        %v724 = vunpack.c.h.b16 %v381
        %v725 = vunpack.c.l.b16 %v382
        %v726 = vunpack.c.h.b16 %v382
        %v727 = vunpack.c.l.b16 %v383
        %v728 = vunpack.c.h.b16 %v383
        %v729 = vunpack.c.l.b16 %v384
        %v730 = vunpack.c.h.b16 %v384
        %v731 = vunpack.c.l.b16 %v385
        %v732 = vunpack.c.h.b16 %v385
        %v733 = vunpack.c.l.b16 %v386
        %v734 = vunpack.c.h.b16 %v386
        %v735 = vunpack.c.l.b16 %v387
        %v736 = vunpack.c.h.b16 %v387
        %v737 = vunpack.c.l.b16 %v388
        %v738 = vunpack.c.h.b16 %v388
        %v739 = vunpack.c.l.b16 %v389
        %v740 = vunpack.c.h.b16 %v389
        %v741 = vunpack.c.l.b16 %v390
        %v742 = vunpack.c.h.b16 %v390
        %v743 = vunpack.c.l.b16 %v391
        %v744 = vunpack.c.h.b16 %v391
        %v745 = vunpack.c.l.b16 %v392
        %v746 = vunpack.c.h.b16 %v392
        %v747 = vunpack.c.l.b16 %v393
        %v748 = vunpack.c.h.b16 %v393
        %v749 = vunpack.c.l.b16 %v394
        %v750 = vunpack.c.h.b16 %v394
        %v751 = vunpack.c.l.b16 %v395
        %v752 = vunpack.c.h.b16 %v395
        %v753 = vunpack.c.l.b16 %v396
        %v754 = vunpack.c.h.b16 %v396
        %v755 = vunpack.c.l.b16 %v397
        %v756 = vunpack.c.h.b16 %v397
        %v757 = vunpack.c.l.b16 %v398
        %v758 = vunpack.c.h.b16 %v398
        %v759 = vunpack.c.l.b16 %v399
        %v760 = vunpack.c.h.b16 %v399
        %v761 = vunpack.c.l.b16 %v400
        %v762 = vunpack.c.h.b16 %v400
        %v763 = vunpack.c.l.b16 %v401
        %v764 = vunpack.c.h.b16 %v401
        %v765 = vunpack.c.l.b16 %v402
        %v766 = vunpack.c.h.b16 %v402
        %v767 = vunpack.c.l.b16 %v403
        %v768 = vunpack.c.h.b16 %v403
        %v769 = vunpack.c.l.b16 %v404
        %v770 = vunpack.c.h.b16 %v404
        %v771 = vunpack.c.l.b16 %v405
        %v772 = vunpack.c.h.b16 %v405
        %v773 = vunpack.c.l.b16 %v406
        %v774 = vunpack.c.h.b16 %v406
        %v775 = vunpack.c.l.b16 %v407
        %v776 = vunpack.c.h.b16 %v407
        %v777 = vunpack.c.l.b16 %v408
        %v778 = vunpack.c.h.b16 %v408
        %v779 = vunpack.c.l.b16 %v409
        %v780 = vunpack.c.h.b16 %v409
        %v781 = vunpack.c.l.b16 %v410
        %v782 = vunpack.c.h.b16 %v410
        %v783 = vunpack.c.l.b16 %v411
        %v784 = vunpack.c.h.b16 %v411
        %v785 = vunpack.c.l.b16 %v412
        %v786 = vunpack.c.h.b16 %v412
        %v787 = vunpack.c.l.b16 %v413
        %v788 = vunpack.c.h.b16 %v413
        %v789 = vunpack.c.l.b16 %v414
        %v790 = vunpack.c.h.b16 %v414
        %v791 = vunpack.c.l.b16 %v415
        %v792 = vunpack.c.h.b16 %v415
        %v793 = vunpack.c.l.b16 %v416
        %v794 = vunpack.c.h.b16 %v416
        %v795 = vunpack.c.l.b16 %v417
        %v796 = vunpack.c.h.b16 %v417
        %v797 = vunpack.c.l.b16 %v418
        %v798 = vunpack.c.h.b16 %v418
        %v799 = vunpack.c.l.b16 %v419
        %v800 = vunpack.c.h.b16 %v419
        %v801 = vunpack.c.l.b16 %v420
        %v802 = vunpack.c.h.b16 %v420
        %v803 = vunpack.c.l.b16 %v421
        %v804 = vunpack.c.h.b16 %v421
        %v805 = vunpack.c.l.b16 %v422
        %v806 = vunpack.c.h.b16 %v422
        %v807 = vunpack.c.l.b16 %v423
        %v808 = vunpack.c.h.b16 %v423
        %v809 = vunpack.c.l.b16 %v424
        %v810 = vunpack.c.h.b16 %v424
        %v811 = vunpack.c.l.b16 %v425
        %v812 = vunpack.c.h.b16 %v425
        %v813 = vunpack.c.l.b16 %v426
        %v814 = vunpack.c.h.b16 %v426
        %v815 = vunpack.c.l.b16 %v427
        %v816 = vunpack.c.h.b16 %v427
        %v817 = vunpack.c.l.b16 %v428
        %v818 = vunpack.c.h.b16 %v428
        %v819 = vunpack.c.l.b16 %v429
        %v820 = vunpack.c.h.b16 %v429
        %v821 = vunpack.c.l.b16 %v430
        %v822 = vunpack.c.h.b16 %v430
        %v823 = vunpack.c.l.b16 %v431
        %v824 = vunpack.c.h.b16 %v431
        %v825 = vunpack.c.l.b16 %v432
        %v826 = vunpack.c.h.b16 %v432
        %v827 = vunpack.c.l.b16 %v433
        %v828 = vunpack.c.h.b16 %v433
        %v829 = vunpack.c.l.b16 %v434
        %v830 = vunpack.c.h.b16 %v434
        %v831 = vunpack.c.l.b16 %v435
        %v832 = vunpack.c.h.b16 %v435
        %v833 = vunpack.c.l.b16 %v436
        %v834 = vunpack.c.h.b16 %v436
        %v835 = vunpack.c.l.b16 %v437
        %v836 = vunpack.c.h.b16 %v437
        %v837 = vunpack.c.l.b16 %v438
        %v838 = vunpack.c.h.b16 %v438
        %v839 = vunpack.c.l.b16 %v439
        %v840 = vunpack.c.h.b16 %v439
        %v841 = vunpack.c.l.b16 %v440
        %v842 = vunpack.c.h.b16 %v440
        %v843 = vunpack.c.l.b16 %v441
        %v844 = vunpack.c.h.b16 %v441
        %v845 = vunpack.c.l.b16 %v442
        %v846 = vunpack.c.h.b16 %v442
        %v847 = vunpack.c.l.b16 %v443
        %v848 = vunpack.c.h.b16 %v443
        %v849 = vunpack.c.l.b16 %v444
        %v850 = vunpack.c.h.b16 %v444
        %v851 = vunpack.c.l.b16 %v445
        %v852 = vunpack.c.h.b16 %v445
        %v853 = vunpack.c.l.b16 %v446
        %v854 = vunpack.c.h.b16 %v446
        %v855 = vunpack.c.l.b16 %v447
        %v856 = vunpack.c.h.b16 %v447
        %v857 = vunpack.c.l.b16 %v448
        %v858 = vunpack.c.h.b16 %v448
        %v859 = vunpack.c.l.b16 %v449
        %v860 = vunpack.c.h.b16 %v449
        %v861 = vunpack.c.l.b16 %v450
        %v862 = vunpack.c.h.b16 %v450
        %v863 = vunpack.c.l.b16 %v451
        %v864 = vunpack.c.h.b16 %v451
        %v865 = vunpack.c.l.b16 %v452
        %v866 = vunpack.c.h.b16 %v452
        %v867 = vunpack.c.l.b16 %v453
        %v868 = vunpack.c.h.b16 %v453
        %v869 = vunpack.c.l.b16 %v454
        %v870 = vunpack.c.h.b16 %v454
        %v871 = vunpack.c.l.b16 %v455
        %v872 = vunpack.c.h.b16 %v455
        %v873 = vunpack.c.l.b16 %v456
        %v874 = vunpack.c.h.b16 %v456
        %v875 = vunpack.c.l.b16 %v457
        %v876 = vunpack.c.h.b16 %v457
        %v877 = vunpack.c.l.b16 %v458
        %v878 = vunpack.c.h.b16 %v458
        %v879 = vunpack.c.l.b16 %v459
        %v880 = vunpack.c.h.b16 %v459
        %v881 = vunpack.c.l.b16 %v460
        %v882 = vunpack.c.h.b16 %v460
        %v883 = vunpack.c.l.b16 %v461
        %v884 = vunpack.c.h.b16 %v461
        %v885 = vunpack.c.l.b16 %v462
        %v886 = vunpack.c.h.b16 %v462
        %v887 = vunpack.c.l.b16 %v463
        %v888 = vunpack.c.h.b16 %v463
        %v889 = vunpack.c.l.b16 %v464
        %v890 = vunpack.c.h.b16 %v464
        %v891 = vunpack.c.l.b16 %v465
        %v892 = vunpack.c.h.b16 %v465
        %v893 = vunpack.c.l.b16 %v466
        %v894 = vunpack.c.h.b16 %v466
        %v895 = vunpack.c.l.b16 %v467
        %v896 = vunpack.c.h.b16 %v467
        %v897 = vunpack.c.l.b16 %v468
        %v898 = vunpack.c.h.b16 %v468
        %v899 = vunpack.c.l.b16 %v469
        %v900 = vunpack.c.h.b16 %v469
        %v901 = vunpack.c.l.b16 %v470
        %v902 = vunpack.c.h.b16 %v470
        %v903 = vunpack.c.l.b16 %v471
        %v904 = vunpack.c.h.b16 %v471
        %v905 = vunpack.c.l.b16 %v472
        %v906 = vunpack.c.h.b16 %v472
        %v907 = vpack.c.b16 %v655, %v651
        %v908 = vpack.c.b16 %v656, %v652
        %v909 = vpack.c.b16 %v657, %v653
        %v910 = vpack.c.b16 %v658, %v654
        %v911 = vpack.c.b16 %v663, %v659
        %v912 = vpack.c.b16 %v664, %v660
        %v913 = vpack.c.b16 %v665, %v661
        %v914 = vpack.c.b16 %v666, %v662
        %v915 = vpack.c.b16 %v671, %v667
        %v916 = vpack.c.b16 %v672, %v668
        %v917 = vpack.c.b16 %v673, %v669
        %v918 = vpack.c.b16 %v674, %v670
        %v919 = vpack.c.b16 %v679, %v675
        %v920 = vpack.c.b16 %v680, %v676
        %v921 = vpack.c.b16 %v681, %v677
        %v922 = vpack.c.b16 %v682, %v678
        %v923 = vpack.c.b16 %v687, %v683
        %v924 = vpack.c.b16 %v688, %v684
        %v925 = vpack.c.b16 %v689, %v685
        %v926 = vpack.c.b16 %v690, %v686
        %v927 = vpack.c.b16 %v695, %v691
        %v928 = vpack.c.b16 %v696, %v692
        %v929 = vpack.c.b16 %v697, %v693
        %v930 = vpack.c.b16 %v698, %v694
        %v931 = vpack.c.b16 %v703, %v699
        %v932 = vpack.c.b16 %v704, %v700
        %v933 = vpack.c.b16 %v705, %v701
        %v934 = vpack.c.b16 %v706, %v702
        %v935 = vpack.c.b16 %v711, %v707
        %v936 = vpack.c.b16 %v712, %v708
        %v937 = vpack.c.b16 %v713, %v709
        %v938 = vpack.c.b16 %v714, %v710
        %v939 = vpack.c.b16 %v719, %v715
        %v940 = vpack.c.b16 %v720, %v716
        %v941 = vpack.c.b16 %v721, %v717
        %v942 = vpack.c.b16 %v722, %v718
        %v943 = vpack.c.b16 %v727, %v723
        %v944 = vpack.c.b16 %v728, %v724
        %v945 = vpack.c.b16 %v729, %v725
        %v946 = vpack.c.b16 %v730, %v726
        %v947 = vpack.c.b16 %v735, %v731
        %v948 = vpack.c.b16 %v736, %v732
        %v949 = vpack.c.b16 %v737, %v733
        %v950 = vpack.c.b16 %v738, %v734
        %v951 = vpack.c.b16 %v743, %v739
        %v952 = vpack.c.b16 %v744, %v740
        %v953 = vpack.c.b16 %v745, %v741
        %v954 = vpack.c.b16 %v746, %v742
        %v955 = vpack.c.b16 %v751, %v747
        %v956 = vpack.c.b16 %v752, %v748
        %v957 = vpack.c.b16 %v753, %v749
        %v958 = vpack.c.b16 %v754, %v750
        %v959 = vpack.c.b16 %v759, %v755
        %v960 = vpack.c.b16 %v760, %v756
        %v961 = vpack.c.b16 %v761, %v757
        %v962 = vpack.c.b16 %v762, %v758
        %v963 = vpack.c.b16 %v767, %v763
        %v964 = vpack.c.b16 %v768, %v764
        %v965 = vpack.c.b16 %v769, %v765
        %v966 = vpack.c.b16 %v770, %v766
        %v967 = vpack.c.b16 %v775, %v771
        %v968 = vpack.c.b16 %v776, %v772
        %v969 = vpack.c.b16 %v777, %v773
        %v970 = vpack.c.b16 %v778, %v774
        %v971 = vpack.c.b16 %v783, %v779
        %v972 = vpack.c.b16 %v784, %v780
        %v973 = vpack.c.b16 %v785, %v781
        %v974 = vpack.c.b16 %v786, %v782
        %v975 = vpack.c.b16 %v791, %v787
        %v976 = vpack.c.b16 %v792, %v788
        %v977 = vpack.c.b16 %v793, %v789
        %v978 = vpack.c.b16 %v794, %v790
        %v979 = vpack.c.b16 %v799, %v795
        %v980 = vpack.c.b16 %v800, %v796
        %v981 = vpack.c.b16 %v801, %v797
        %v982 = vpack.c.b16 %v802, %v798
        %v983 = vpack.c.b16 %v807, %v803
        %v984 = vpack.c.b16 %v808, %v804
        %v985 = vpack.c.b16 %v809, %v805
        %v986 = vpack.c.b16 %v810, %v806
        %v987 = vpack.c.b16 %v815, %v811
        %v988 = vpack.c.b16 %v816, %v812
        %v989 = vpack.c.b16 %v817, %v813
        %v990 = vpack.c.b16 %v818, %v814
        %v991 = vpack.c.b16 %v823, %v819
        %v992 = vpack.c.b16 %v824, %v820
        %v993 = vpack.c.b16 %v825, %v821
        %v994 = vpack.c.b16 %v826, %v822
        %v995 = vpack.c.b16 %v831, %v827
        %v996 = vpack.c.b16 %v832, %v828
        %v997 = vpack.c.b16 %v833, %v829
        %v998 = vpack.c.b16 %v834, %v830
        %v999 = vpack.c.b16 %v839, %v835
        %v1000 = vpack.c.b16 %v840, %v836
        %v1001 = vpack.c.b16 %v841, %v837
        %v1002 = vpack.c.b16 %v842, %v838
        %v1003 = vpack.c.b16 %v847, %v843
        %v1004 = vpack.c.b16 %v848, %v844
        %v1005 = vpack.c.b16 %v849, %v845
        %v1006 = vpack.c.b16 %v850, %v846
        %v1007 = vpack.c.b16 %v855, %v851
        %v1008 = vpack.c.b16 %v856, %v852
        %v1009 = vpack.c.b16 %v857, %v853
        %v1010 = vpack.c.b16 %v858, %v854
        %v1011 = vpack.c.b16 %v863, %v859
        %v1012 = vpack.c.b16 %v864, %v860
        %v1013 = vpack.c.b16 %v865, %v861
        %v1014 = vpack.c.b16 %v866, %v862
        %v1015 = vpack.c.b16 %v871, %v867
        %v1016 = vpack.c.b16 %v872, %v868
        %v1017 = vpack.c.b16 %v873, %v869
        %v1018 = vpack.c.b16 %v874, %v870
        %v1019 = vpack.c.b16 %v879, %v875
        %v1020 = vpack.c.b16 %v880, %v876
        %v1021 = vpack.c.b16 %v881, %v877
        %v1022 = vpack.c.b16 %v882, %v878
        %v1023 = vpack.c.b16 %v887, %v883
        %v1024 = vpack.c.b16 %v888, %v884
        %v1025 = vpack.c.b16 %v889, %v885
        %v1026 = vpack.c.b16 %v890, %v886
        %v1027 = vpack.c.b16 %v895, %v891
        %v1028 = vpack.c.b16 %v896, %v892
        %v1029 = vpack.c.b16 %v897, %v893
        %v1030 = vpack.c.b16 %v898, %v894
        %v1031 = vpack.c.b16 %v903, %v899
        %v1032 = vpack.c.b16 %v904, %v900
        %v1033 = vpack.c.b16 %v905, %v901
        %v1034 = vpack.c.b16 %v906, %v902
        %1163 = vmatpush.bf16.msra.mxu0 %v935
        %1164 = vmatpush.bf16.msra.mxu0 %v931
        %1165 = vmatpush.bf16.msra.mxu0 %v927
        %1166 = vmatpush.bf16.msra.mxu0 %v923
        %1167 = vmatpush.bf16.msra.mxu0 %v919
        %1168 = vmatpush.bf16.msra.mxu0 %v915
        %1169 = vmatpush.bf16.msra.mxu0 %v911
        %1170 = vmatpush.bf16.msra.mxu0 %v907
        %1171 = vmatmul.bf16.gmra.mxu0 %v507
        %v1172 = vpop.f32.mrf.mxu0
        %v1173 = vadd.f32 %v475, %v1172
        %v1174 = vpop.f32.mrf.mxu0
        %v1175 = vadd.f32 %v475, %v1174
        %1176 = vmatmul.bf16.gmra.mxu0 %v511
        %v1177 = vpop.f32.mrf.mxu0
        %v1178 = vadd.f32 %v475, %v1177
        %v1179 = vpop.f32.mrf.mxu0
        %v1180 = vadd.f32 %v475, %v1179
        %1181 = vdwg.mxu0
        %1182 = vmatpush.bf16.msra.mxu0 %v967
        %1183 = vmatpush.bf16.msra.mxu0 %v963
        %1184 = vmatpush.bf16.msra.mxu0 %v959
        %1185 = vmatpush.bf16.msra.mxu0 %v955
        %1186 = vmatpush.bf16.msra.mxu0 %v951
        %1187 = vmatpush.bf16.msra.mxu0 %v947
        %1188 = vmatpush.bf16.msra.mxu0 %v943
        %1189 = vmatpush.bf16.msra.mxu0 %v939
        %1190 = vmatmul.bf16.gmra.mxu0 %v508
        %v1191 = vpop.f32.mrf.mxu0
        %v1192 = vadd.f32 %v1173, %v1191
        %v1193 = vpop.f32.mrf.mxu0
        %v1194 = vadd.f32 %v1175, %v1193
        %1195 = vmatmul.bf16.gmra.mxu0 %v512
        %v1196 = vpop.f32.mrf.mxu0
        %v1197 = vadd.f32 %v1178, %v1196
        %v1198 = vpop.f32.mrf.mxu0
        %v1199 = vadd.f32 %v1180, %v1198
        %1200 = vdwg.mxu0
        %1201 = vmatpush.bf16.msra.mxu0 %v999
        %1202 = vmatpush.bf16.msra.mxu0 %v995
        %1203 = vmatpush.bf16.msra.mxu0 %v991
        %1204 = vmatpush.bf16.msra.mxu0 %v987
        %1205 = vmatpush.bf16.msra.mxu0 %v983
        %1206 = vmatpush.bf16.msra.mxu0 %v979
        %1207 = vmatpush.bf16.msra.mxu0 %v975
        %1208 = vmatpush.bf16.msra.mxu0 %v971
        %1209 = vmatmul.bf16.gmra.mxu0 %v509
        %v1210 = vpop.f32.mrf.mxu0
        %v1211 = vadd.f32 %v1192, %v1210
        %v1212 = vpop.f32.mrf.mxu0
        %v1213 = vadd.f32 %v1194, %v1212
        %1214 = vmatmul.bf16.gmra.mxu0 %v513
        %v1215 = vpop.f32.mrf.mxu0
        %v1216 = vadd.f32 %v1197, %v1215
        %v1217 = vpop.f32.mrf.mxu0
        %v1218 = vadd.f32 %v1199, %v1217
        %1219 = vdwg.mxu0
        %1220 = vmatpush.bf16.msra.mxu0 %v1031
        %1221 = vmatpush.bf16.msra.mxu0 %v1027
        %1222 = vmatpush.bf16.msra.mxu0 %v1023
        %1223 = vmatpush.bf16.msra.mxu0 %v1019
        %1224 = vmatpush.bf16.msra.mxu0 %v1015
        %1225 = vmatpush.bf16.msra.mxu0 %v1011
        %1226 = vmatpush.bf16.msra.mxu0 %v1007
        %1227 = vmatpush.bf16.msra.mxu0 %v1003
        %1228 = vmatmul.bf16.gmra.mxu0 %v510
        %v1229 = vpop.f32.mrf.mxu0
        %v1230 = vadd.f32 %v1211, %v1229
        %v1231 = vpop.f32.mrf.mxu0
        %v1232 = vadd.f32 %v1213, %v1231
        %1233 = vmatmul.bf16.gmra.mxu0 %v514
        %v1234 = vpop.f32.mrf.mxu0
        %v1235 = vadd.f32 %v1216, %v1234
        %v1236 = vpop.f32.mrf.mxu0
        %v1237 = vadd.f32 %v1218, %v1236
        %1238 = vdwg.mxu0
        %1239 = vmatpush.bf16.msra.mxu0 %v936
        %1240 = vmatpush.bf16.msra.mxu0 %v932
        %1241 = vmatpush.bf16.msra.mxu0 %v928
        %1242 = vmatpush.bf16.msra.mxu0 %v924
        %1243 = vmatpush.bf16.msra.mxu0 %v920
        %1244 = vmatpush.bf16.msra.mxu0 %v916
        %1245 = vmatpush.bf16.msra.mxu0 %v912
        %1246 = vmatpush.bf16.msra.mxu0 %v908
        %1247 = vmatmul.bf16.gmra.mxu0 %v507
        %v1248 = vpop.f32.mrf.mxu0
        %v1249 = vadd.f32 %v476, %v1248
        %v1250 = vpop.f32.mrf.mxu0
        %v1251 = vadd.f32 %v476, %v1250
        %1252 = vmatmul.bf16.gmra.mxu0 %v511
        %v1253 = vpop.f32.mrf.mxu0
        %v1254 = vadd.f32 %v476, %v1253
        %v1255 = vpop.f32.mrf.mxu0
        %v1256 = vadd.f32 %v476, %v1255
        %1257 = vdwg.mxu0
        %1258 = vmatpush.bf16.msra.mxu0 %v968
        %1259 = vmatpush.bf16.msra.mxu0 %v964
        %1260 = vmatpush.bf16.msra.mxu0 %v960
        %1261 = vmatpush.bf16.msra.mxu0 %v956
        %1262 = vmatpush.bf16.msra.mxu0 %v952
        %1263 = vmatpush.bf16.msra.mxu0 %v948
        %1264 = vmatpush.bf16.msra.mxu0 %v944
        %1265 = vmatpush.bf16.msra.mxu0 %v940
        %1266 = vmatmul.bf16.gmra.mxu0 %v508
        %v1267 = vpop.f32.mrf.mxu0
        %v1268 = vadd.f32 %v1249, %v1267
        %v1269 = vpop.f32.mrf.mxu0
        %v1270 = vadd.f32 %v1251, %v1269
        %1271 = vmatmul.bf16.gmra.mxu0 %v512
        %v1272 = vpop.f32.mrf.mxu0
        %v1273 = vadd.f32 %v1254, %v1272
        %v1274 = vpop.f32.mrf.mxu0
        %v1275 = vadd.f32 %v1256, %v1274
        %1276 = vdwg.mxu0
        %1277 = vmatpush.bf16.msra.mxu0 %v1000
        %1278 = vmatpush.bf16.msra.mxu0 %v996
        %1279 = vmatpush.bf16.msra.mxu0 %v992
        %1280 = vmatpush.bf16.msra.mxu0 %v988
        %1281 = vmatpush.bf16.msra.mxu0 %v984
        %1282 = vmatpush.bf16.msra.mxu0 %v980
        %1283 = vmatpush.bf16.msra.mxu0 %v976
        %1284 = vmatpush.bf16.msra.mxu0 %v972
        %1285 = vmatmul.bf16.gmra.mxu0 %v509
        %v1286 = vpop.f32.mrf.mxu0
        %v1287 = vadd.f32 %v1268, %v1286
        %v1288 = vpop.f32.mrf.mxu0
        %v1289 = vadd.f32 %v1270, %v1288
        %1290 = vmatmul.bf16.gmra.mxu0 %v513
        %v1291 = vpop.f32.mrf.mxu0
        %v1292 = vadd.f32 %v1273, %v1291
        %v1293 = vpop.f32.mrf.mxu0
        %v1294 = vadd.f32 %v1275, %v1293
        %1295 = vdwg.mxu0
        %1296 = vmatpush.bf16.msra.mxu0 %v1032
        %1297 = vmatpush.bf16.msra.mxu0 %v1028
        %1298 = vmatpush.bf16.msra.mxu0 %v1024
        %1299 = vmatpush.bf16.msra.mxu0 %v1020
        %1300 = vmatpush.bf16.msra.mxu0 %v1016
        %1301 = vmatpush.bf16.msra.mxu0 %v1012
        %1302 = vmatpush.bf16.msra.mxu0 %v1008
        %1303 = vmatpush.bf16.msra.mxu0 %v1004
        %1304 = vmatmul.bf16.gmra.mxu0 %v510
        %v1305 = vpop.f32.mrf.mxu0
        %v1306 = vadd.f32 %v1287, %v1305
        %v1307 = vpop.f32.mrf.mxu0
        %v1308 = vadd.f32 %v1289, %v1307
        %1309 = vmatmul.bf16.gmra.mxu0 %v514
        %v1310 = vpop.f32.mrf.mxu0
        %v1311 = vadd.f32 %v1292, %v1310
        %v1312 = vpop.f32.mrf.mxu0
        %v1313 = vadd.f32 %v1294, %v1312
        %1314 = vdwg.mxu0
        %1315 = vmatpush.bf16.msra.mxu0 %v937
        %1316 = vmatpush.bf16.msra.mxu0 %v933
        %1317 = vmatpush.bf16.msra.mxu0 %v929
        %1318 = vmatpush.bf16.msra.mxu0 %v925
        %1319 = vmatpush.bf16.msra.mxu0 %v921
        %1320 = vmatpush.bf16.msra.mxu0 %v917
        %1321 = vmatpush.bf16.msra.mxu0 %v913
        %1322 = vmatpush.bf16.msra.mxu0 %v909
        %1323 = vmatmul.bf16.gmra.mxu0 %v507
        %v1324 = vpop.f32.mrf.mxu0
        %v1325 = vadd.f32 %v477, %v1324
        %v1326 = vpop.f32.mrf.mxu0
        %v1327 = vadd.f32 %v477, %v1326
        %1328 = vmatmul.bf16.gmra.mxu0 %v511
        %v1329 = vpop.f32.mrf.mxu0
        %v1330 = vadd.f32 %v477, %v1329
        %v1331 = vpop.f32.mrf.mxu0
        %v1332 = vadd.f32 %v477, %v1331
        %1333 = vdwg.mxu0
        %1334 = vmatpush.bf16.msra.mxu0 %v969
        %1335 = vmatpush.bf16.msra.mxu0 %v965
        %1336 = vmatpush.bf16.msra.mxu0 %v961
        %1337 = vmatpush.bf16.msra.mxu0 %v957
        %1338 = vmatpush.bf16.msra.mxu0 %v953
        %1339 = vmatpush.bf16.msra.mxu0 %v949
        %1340 = vmatpush.bf16.msra.mxu0 %v945
        %1341 = vmatpush.bf16.msra.mxu0 %v941
        %1342 = vmatmul.bf16.gmra.mxu0 %v508
        %v1343 = vpop.f32.mrf.mxu0
        %v1344 = vadd.f32 %v1325, %v1343
        %v1345 = vpop.f32.mrf.mxu0
        %v1346 = vadd.f32 %v1327, %v1345
        %1347 = vmatmul.bf16.gmra.mxu0 %v512
        %v1348 = vpop.f32.mrf.mxu0
        %v1349 = vadd.f32 %v1330, %v1348
        %v1350 = vpop.f32.mrf.mxu0
        %v1351 = vadd.f32 %v1332, %v1350
        %1352 = vdwg.mxu0
        %1353 = vmatpush.bf16.msra.mxu0 %v1001
        %1354 = vmatpush.bf16.msra.mxu0 %v997
        %1355 = vmatpush.bf16.msra.mxu0 %v993
        %1356 = vmatpush.bf16.msra.mxu0 %v989
        %1357 = vmatpush.bf16.msra.mxu0 %v985
        %1358 = vmatpush.bf16.msra.mxu0 %v981
        %1359 = vmatpush.bf16.msra.mxu0 %v977
        %1360 = vmatpush.bf16.msra.mxu0 %v973
        %1361 = vmatmul.bf16.gmra.mxu0 %v509
        %v1362 = vpop.f32.mrf.mxu0
        %v1363 = vadd.f32 %v1344, %v1362
        %v1364 = vpop.f32.mrf.mxu0
        %v1365 = vadd.f32 %v1346, %v1364
        %1366 = vmatmul.bf16.gmra.mxu0 %v513
        %v1367 = vpop.f32.mrf.mxu0
        %v1368 = vadd.f32 %v1349, %v1367
        %v1369 = vpop.f32.mrf.mxu0
        %v1370 = vadd.f32 %v1351, %v1369
        %1371 = vdwg.mxu0
        %1372 = vmatpush.bf16.msra.mxu0 %v1033
        %1373 = vmatpush.bf16.msra.mxu0 %v1029
        %1374 = vmatpush.bf16.msra.mxu0 %v1025
        %1375 = vmatpush.bf16.msra.mxu0 %v1021
        %1376 = vmatpush.bf16.msra.mxu0 %v1017
        %1377 = vmatpush.bf16.msra.mxu0 %v1013
        %1378 = vmatpush.bf16.msra.mxu0 %v1009
        %1379 = vmatpush.bf16.msra.mxu0 %v1005
        %1380 = vmatmul.bf16.gmra.mxu0 %v510
        %v1381 = vpop.f32.mrf.mxu0
        %v1382 = vadd.f32 %v1363, %v1381
        %v1383 = vpop.f32.mrf.mxu0
        %v1384 = vadd.f32 %v1365, %v1383
        %1385 = vmatmul.bf16.gmra.mxu0 %v514
        %v1386 = vpop.f32.mrf.mxu0
        %v1387 = vadd.f32 %v1368, %v1386
        %v1388 = vpop.f32.mrf.mxu0
        %v1389 = vadd.f32 %v1370, %v1388
        %1390 = vdwg.mxu0
        %1391 = vmatpush.bf16.msra.mxu0 %v938
        %1392 = vmatpush.bf16.msra.mxu0 %v934
        %1393 = vmatpush.bf16.msra.mxu0 %v930
        %1394 = vmatpush.bf16.msra.mxu0 %v926
        %1395 = vmatpush.bf16.msra.mxu0 %v922
        %1396 = vmatpush.bf16.msra.mxu0 %v918
        %1397 = vmatpush.bf16.msra.mxu0 %v914
        %1398 = vmatpush.bf16.msra.mxu0 %v910
        %1399 = vmatmul.bf16.gmra.mxu0 %v507
        %v1400 = vpop.f32.mrf.mxu0
        %v1401 = vadd.f32 %v478, %v1400
        %v1402 = vpop.f32.mrf.mxu0
        %v1403 = vadd.f32 %v478, %v1402
        %1404 = vmatmul.bf16.gmra.mxu0 %v511
        %v1405 = vpop.f32.mrf.mxu0
        %v1406 = vadd.f32 %v478, %v1405
        %v1407 = vpop.f32.mrf.mxu0
        %v1408 = vadd.f32 %v478, %v1407
        %1409 = vdwg.mxu0
        %1410 = vmatpush.bf16.msra.mxu0 %v970
        %1411 = vmatpush.bf16.msra.mxu0 %v966
        %1412 = vmatpush.bf16.msra.mxu0 %v962
        %1413 = vmatpush.bf16.msra.mxu0 %v958
        %1414 = vmatpush.bf16.msra.mxu0 %v954
        %1415 = vmatpush.bf16.msra.mxu0 %v950
        %1416 = vmatpush.bf16.msra.mxu0 %v946
        %1417 = vmatpush.bf16.msra.mxu0 %v942
        %1418 = vmatmul.bf16.gmra.mxu0 %v508
        %v1419 = vpop.f32.mrf.mxu0
        %v1420 = vadd.f32 %v1401, %v1419
        %v1421 = vpop.f32.mrf.mxu0
        %v1422 = vadd.f32 %v1403, %v1421
        %1423 = vmatmul.bf16.gmra.mxu0 %v512
        %v1424 = vpop.f32.mrf.mxu0
        %v1425 = vadd.f32 %v1406, %v1424
        %v1426 = vpop.f32.mrf.mxu0
        %v1427 = vadd.f32 %v1408, %v1426
        %1428 = vdwg.mxu0
        %1429 = vmatpush.bf16.msra.mxu0 %v1002
        %1430 = vmatpush.bf16.msra.mxu0 %v998
        %1431 = vmatpush.bf16.msra.mxu0 %v994
        %1432 = vmatpush.bf16.msra.mxu0 %v990
        %1433 = vmatpush.bf16.msra.mxu0 %v986
        %1434 = vmatpush.bf16.msra.mxu0 %v982
        %1435 = vmatpush.bf16.msra.mxu0 %v978
        %1436 = vmatpush.bf16.msra.mxu0 %v974
        %1437 = vmatmul.bf16.gmra.mxu0 %v509
        %v1438 = vpop.f32.mrf.mxu0
        %v1439 = vadd.f32 %v1420, %v1438
        %v1440 = vpop.f32.mrf.mxu0
        %v1441 = vadd.f32 %v1422, %v1440
        %1442 = vmatmul.bf16.gmra.mxu0 %v513
        %v1443 = vpop.f32.mrf.mxu0
        %v1444 = vadd.f32 %v1425, %v1443
        %v1445 = vpop.f32.mrf.mxu0
        %v1446 = vadd.f32 %v1427, %v1445
        %1447 = vdwg.mxu0
        %1448 = vmatpush.bf16.msra.mxu0 %v1034
        %1449 = vmatpush.bf16.msra.mxu0 %v1030
        %1450 = vmatpush.bf16.msra.mxu0 %v1026
        %1451 = vmatpush.bf16.msra.mxu0 %v1022
        %1452 = vmatpush.bf16.msra.mxu0 %v1018
        %1453 = vmatpush.bf16.msra.mxu0 %v1014
        %1454 = vmatpush.bf16.msra.mxu0 %v1010
        %1455 = vmatpush.bf16.msra.mxu0 %v1006
        %1456 = vmatmul.bf16.gmra.mxu0 %v510
        %v1457 = vpop.f32.mrf.mxu0
        %v1458 = vadd.f32 %v1439, %v1457
        %v1459 = vpop.f32.mrf.mxu0
        %v1460 = vadd.f32 %v1441, %v1459
        %1461 = vmatmul.bf16.gmra.mxu0 %v514
        %v1462 = vpop.f32.mrf.mxu0
        %v1463 = vadd.f32 %v1444, %v1462
        %v1464 = vpop.f32.mrf.mxu0
        %v1465 = vadd.f32 %v1446, %v1464
        %1466 = vdwg.mxu0
        %v1467 = vld [vmem:[%s311] sm:$0xff]
        %v1468 = vld [vmem:[%s311 + $0x8] sm:$0xff]
        %v1469 = vld [vmem:[%s311 + $0x10] sm:$0xff]
        %v1470 = vld [vmem:[%s311 + $0x18] sm:$0xff]
        %v1471 = vlaneseq
        %v1472 = vand.u32 %v1471, 127
        %v1473 = vadd.s32 %v1472, 128
        %v1474 = vadd.s32 %v1472, 256
        %v1475 = vadd.s32 %v1472, 384
        %s1476 = smul.u32 %s26, 512
        %v1477 = vstv %s1476
        %v1478 = vadd.s32 %v1472, %v1477
        %v1479 = vadd.s32 %v1473, %v1477
        %v1480 = vadd.s32 %v1474, %v1477
        %v1481 = vadd.s32 %v1475, %v1477
        %1482 = vset.pattern.permute.xlu0 0
        %1483 = vperm.xlu0 %1482, %v1467
        %v1484 = vpop.permute.xlu0 %1483
        %1485 = vset.pattern.permute.xlu0 0
        %1486 = vperm.xlu0 %1485, %v1468
        %v1487 = vpop.permute.xlu0 %1486
        %1488 = vset.pattern.permute.xlu0 0
        %1489 = vperm.xlu0 %1488, %v1469
        %v1490 = vpop.permute.xlu0 %1489
        %1491 = vset.pattern.permute.xlu0 0
        %1492 = vperm.xlu0 %1491, %v1470
        %v1493 = vpop.permute.xlu0 %1492
        %vm1494 = vcmp.eq.s32.totalorder %v1478, %v1484
        %vm1495 = vcmp.eq.s32.totalorder %v1479, %v1484
        %vm1496 = vcmp.eq.s32.totalorder %v1480, %v1484
        %vm1497 = vcmp.eq.s32.totalorder %v1481, %v1484
        %vm1498 = vcmp.eq.s32.totalorder %v1478, %v1487
        %vm1499 = vcmp.eq.s32.totalorder %v1479, %v1487
        %vm1500 = vcmp.eq.s32.totalorder %v1480, %v1487
        %vm1501 = vcmp.eq.s32.totalorder %v1481, %v1487
        %vm1502 = vcmp.eq.s32.totalorder %v1478, %v1490
        %vm1503 = vcmp.eq.s32.totalorder %v1479, %v1490
        %vm1504 = vcmp.eq.s32.totalorder %v1480, %v1490
        %vm1505 = vcmp.eq.s32.totalorder %v1481, %v1490
        %vm1506 = vcmp.eq.s32.totalorder %v1478, %v1493
        %vm1507 = vcmp.eq.s32.totalorder %v1479, %v1493
        %vm1508 = vcmp.eq.s32.totalorder %v1480, %v1493
        %vm1509 = vcmp.eq.s32.totalorder %v1481, %v1493
        %v1510 = vld [vmem:[#allocation5] sm:$0xff]
        %v1511 = vld [vmem:[#allocation5 + $0x8] sm:$0xff]
        %v1512 = vld [vmem:[#allocation5 + $0x10] sm:$0xff]
        %v1513 = vld [vmem:[#allocation5 + $0x18] sm:$0xff]
        %v1514 = vsel %vm1494, %v1230, 0.0
        %v1515 = vsel %vm1495, %v1306, 0.0
        %v1516 = vsel %vm1496, %v1382, 0.0
        %v1517 = vsel %vm1497, %v1458, 0.0
        %v1518 = vsel %vm1498, %v1232, 0.0
        %v1519 = vsel %vm1499, %v1308, 0.0
        %v1520 = vsel %vm1500, %v1384, 0.0
        %v1521 = vsel %vm1501, %v1460, 0.0
        %v1522 = vsel %vm1502, %v1235, 0.0
        %v1523 = vsel %vm1503, %v1311, 0.0
        %v1524 = vsel %vm1504, %v1387, 0.0
        %v1525 = vsel %vm1505, %v1463, 0.0
        %v1526 = vsel %vm1506, %v1237, 0.0
        %v1527 = vsel %vm1507, %v1313, 0.0
        %v1528 = vsel %vm1508, %v1389, 0.0
        %v1529 = vsel %vm1509, %v1465, 0.0
        %v1530 = vadd.f32 %v1514, %v1515
        %v1531 = vadd.f32 %v1530, %v1516
        %v1532 = vadd.f32 %v1531, %v1517
        %1533 = vadd.xlane.f32.xlu0 %v1532
        %v1534 = vpop.xlane.xlu0 %1533
        %v1535 = vadd.f32 %v1518, %v1519
        %v1536 = vadd.f32 %v1535, %v1520
        %v1537 = vadd.f32 %v1536, %v1521
        %1538 = vadd.xlane.f32.xlu0 %v1537
        %v1539 = vpop.xlane.xlu0 %1538
        %v1540 = vadd.f32 %v1522, %v1523
        %v1541 = vadd.f32 %v1540, %v1524
        %v1542 = vadd.f32 %v1541, %v1525
        %1543 = vadd.xlane.f32.xlu0 %v1542
        %v1544 = vpop.xlane.xlu0 %1543
        %v1545 = vadd.f32 %v1526, %v1527
        %v1546 = vadd.f32 %v1545, %v1528
        %v1547 = vadd.f32 %v1546, %v1529
        %1548 = vadd.xlane.f32.xlu0 %v1547
        %v1549 = vpop.xlane.xlu0 %1548
        %v1550 = vadd.f32 %v1510, %v1534
        %v1551 = vadd.f32 %v1511, %v1539
        %v1552 = vadd.f32 %v1512, %v1544
        %v1553 = vadd.f32 %v1513, %v1549
        %vm1554 = vcmask 7168
        %1555 = vst.msk [vmem:[#allocation5] sm:$0xff] %vm1554, %v1550
        %1556 = vst.msk [vmem:[#allocation5 + $0x8] sm:$0xff] %vm1554, %v1551
        %1557 = vst.msk [vmem:[#allocation5 + $0x10] sm:$0xff] %vm1554, %v1552
        %1558 = vst.msk [vmem:[#allocation5 + $0x18] sm:$0xff] %vm1554, %v1553
        %v1559 = vld [vmem:[#allocation4] sm:$0xff]
        %v1560 = vld [vmem:[#allocation4 + $0x8] sm:$0xff]
        %v1561 = vld [vmem:[#allocation4 + $0x10] sm:$0xff]
        %v1562 = vld [vmem:[#allocation4 + $0x18] sm:$0xff]
        %v1563 = vadd.f32 %v1230, %v1306
        %v1564 = vadd.f32 %v1563, %v1382
        %v1565 = vadd.f32 %v1564, %v1458
        %1566 = vadd.xlane.f32.xlu0 %v1565
        %v1567 = vpop.xlane.xlu0 %1566
        %v1568 = vadd.f32 %v1232, %v1308
        %v1569 = vadd.f32 %v1568, %v1384
        %v1570 = vadd.f32 %v1569, %v1460
        %1571 = vadd.xlane.f32.xlu0 %v1570
        %v1572 = vpop.xlane.xlu0 %1571
        %v1573 = vadd.f32 %v1235, %v1311
        %v1574 = vadd.f32 %v1573, %v1387
        %v1575 = vadd.f32 %v1574, %v1463
        %1576 = vadd.xlane.f32.xlu0 %v1575
        %v1577 = vpop.xlane.xlu0 %1576
        %v1578 = vadd.f32 %v1237, %v1313
        %v1579 = vadd.f32 %v1578, %v1389
        %v1580 = vadd.f32 %v1579, %v1465
        %1581 = vadd.xlane.f32.xlu0 %v1580
        %v1582 = vpop.xlane.xlu0 %1581
        %v1583 = vadd.f32 %v1559, %v1567
        %v1584 = vadd.f32 %v1560, %v1572
        %v1585 = vadd.f32 %v1561, %v1577
        %v1586 = vadd.f32 %v1562, %v1582
        %1587 = vst.msk [vmem:[#allocation4] sm:$0xff] %vm1554, %v1583
        %1588 = vst.msk [vmem:[#allocation4 + $0x8] sm:$0xff] %vm1554, %v1584
        %1589 = vst.msk [vmem:[#allocation4 + $0x10] sm:$0xff] %vm1554, %v1585
        %1590 = vst.msk [vmem:[#allocation4 + $0x18] sm:$0xff] %vm1554, %v1586
        %v1591 = vld [vmem:[#allocation2] sm:$0xff]
        %v1592 = vld [vmem:[#allocation2 + $0x8] sm:$0xff]
        %v1593 = vld [vmem:[#allocation2 + $0x10] sm:$0xff]
        %v1594 = vld [vmem:[#allocation2 + $0x18] sm:$0xff]
        %v1595 = vmax.f32 %v1230, %v1306
        %v1596 = vmax.f32 %v1595, %v1382
        %v1597 = vmax.f32 %v1596, %v1458
        %1598 = vmax.xlane.f32.xlu0 %v1597
        %v1599 = vpop.xlane.xlu0 %1598
        %v1600 = vmax.f32 %v1232, %v1308
        %v1601 = vmax.f32 %v1600, %v1384
        %v1602 = vmax.f32 %v1601, %v1460
        %1603 = vmax.xlane.f32.xlu0 %v1602
        %v1604 = vpop.xlane.xlu0 %1603
        %v1605 = vmax.f32 %v1235, %v1311
        %v1606 = vmax.f32 %v1605, %v1387
        %v1607 = vmax.f32 %v1606, %v1463
        %1608 = vmax.xlane.f32.xlu0 %v1607
        %v1609 = vpop.xlane.xlu0 %1608
        %v1610 = vmax.f32 %v1237, %v1313
        %v1611 = vmax.f32 %v1610, %v1389
        %v1612 = vmax.f32 %v1611, %v1465
        %1613 = vmax.xlane.f32.xlu0 %v1612
        %v1614 = vpop.xlane.xlu0 %1613
        %v1615 = vmax.f32 %v1591, %v1599
        %v1616 = vmax.f32 %v1592, %v1604
        %v1617 = vmax.f32 %v1593, %v1609
        %v1618 = vmax.f32 %v1594, %v1614
        %v1619 = vld [vmem:[#allocation3] sm:$0xff]
        %v1620 = vld [vmem:[#allocation3 + $0x8] sm:$0xff]
        %v1621 = vld [vmem:[#allocation3 + $0x10] sm:$0xff]
        %v1622 = vld [vmem:[#allocation3 + $0x18] sm:$0xff]
        %v1623 = vsub.f32 %v1591, %v1615
        %v1624 = vsub.f32 %v1592, %v1616
        %v1625 = vsub.f32 %v1593, %v1617
        %v1626 = vsub.f32 %v1594, %v1618
        %v1627 = vmul.f32 %v1623, 1.442695
        %v1628 = vpow.pop %v1627
        %v1629 = vmul.f32 %v1624, 1.442695
        %v1630 = vpow.pop %v1629
        %v1631 = vmul.f32 %v1625, 1.442695
        %v1632 = vpow.pop %v1631
        %v1633 = vmul.f32 %v1626, 1.442695
        %v1634 = vpow.pop %v1633
        %v1635 = vmul.f32 %v1619, %v1628
        %v1636 = vmul.f32 %v1620, %v1630
        %v1637 = vmul.f32 %v1621, %v1632
        %v1638 = vmul.f32 %v1622, %v1634
        %1640 = vset.pattern.permute.xlu0 0
        %1641 = vperm.xlu0 %1640, %v1615
        %v1642 = vpop.permute.xlu0 %1641
        %1645 = vset.pattern.permute.xlu0 0
        %1646 = vperm.xlu0 %1645, %v1616
        %v1647 = vpop.permute.xlu0 %1646
        %1650 = vset.pattern.permute.xlu0 0
        %1651 = vperm.xlu0 %1650, %v1617
        %v1652 = vpop.permute.xlu0 %1651
        %1655 = vset.pattern.permute.xlu0 0
        %1656 = vperm.xlu0 %1655, %v1618
        %v1657 = vpop.permute.xlu0 %1656
        %v1659 = vsub.f32 %v1230, %v1642
        %v1660 = vsub.f32 %v1306, %v1642
        %v1661 = vsub.f32 %v1382, %v1642
        %v1662 = vsub.f32 %v1458, %v1642
        %v1663 = vsub.f32 %v1232, %v1647
        %v1664 = vsub.f32 %v1308, %v1647
        %v1665 = vsub.f32 %v1384, %v1647
        %v1666 = vsub.f32 %v1460, %v1647
        %v1667 = vsub.f32 %v1235, %v1652
        %v1668 = vsub.f32 %v1311, %v1652
        %v1669 = vsub.f32 %v1387, %v1652
        %v1670 = vsub.f32 %v1463, %v1652
        %v1671 = vsub.f32 %v1237, %v1657
        %v1672 = vsub.f32 %v1313, %v1657
        %v1673 = vsub.f32 %v1389, %v1657
        %v1674 = vsub.f32 %v1465, %v1657
        %v1675 = vmul.f32 %v1659, 1.442695
        %v1676 = vpow.pop %v1675
        %v1677 = vmul.f32 %v1660, 1.442695
        %v1678 = vpow.pop %v1677
        %v1679 = vmul.f32 %v1661, 1.442695
        %v1680 = vpow.pop %v1679
        %v1681 = vmul.f32 %v1662, 1.442695
        %v1682 = vpow.pop %v1681
        %v1683 = vmul.f32 %v1663, 1.442695
        %v1684 = vpow.pop %v1683
        %v1685 = vmul.f32 %v1664, 1.442695
        %v1686 = vpow.pop %v1685
        %v1687 = vmul.f32 %v1665, 1.442695
        %v1688 = vpow.pop %v1687
        %v1689 = vmul.f32 %v1666, 1.442695
        %v1690 = vpow.pop %v1689
        %v1691 = vmul.f32 %v1667, 1.442695
        %v1692 = vpow.pop %v1691
        %v1693 = vmul.f32 %v1668, 1.442695
        %v1694 = vpow.pop %v1693
        %v1695 = vmul.f32 %v1669, 1.442695
        %v1696 = vpow.pop %v1695
        %v1697 = vmul.f32 %v1670, 1.442695
        %v1698 = vpow.pop %v1697
        %v1699 = vmul.f32 %v1671, 1.442695
        %v1700 = vpow.pop %v1699
        %v1701 = vmul.f32 %v1672, 1.442695
        %v1702 = vpow.pop %v1701
        %v1703 = vmul.f32 %v1673, 1.442695
        %v1704 = vpow.pop %v1703
        %v1705 = vmul.f32 %v1674, 1.442695
        %v1706 = vpow.pop %v1705
        %v1707 = vadd.f32 %v1676, %v1678
        %v1708 = vadd.f32 %v1707, %v1680
        %v1709 = vadd.f32 %v1708, %v1682
        %1710 = vadd.xlane.f32.xlu0 %v1709
        %v1711 = vpop.xlane.xlu0 %1710
        %v1712 = vadd.f32 %v1684, %v1686
        %v1713 = vadd.f32 %v1712, %v1688
        %v1714 = vadd.f32 %v1713, %v1690
        %1715 = vadd.xlane.f32.xlu0 %v1714
        %v1716 = vpop.xlane.xlu0 %1715
        %v1717 = vadd.f32 %v1692, %v1694
        %v1718 = vadd.f32 %v1717, %v1696
        %v1719 = vadd.f32 %v1718, %v1698
        %1720 = vadd.xlane.f32.xlu0 %v1719
        %v1721 = vpop.xlane.xlu0 %1720
        %v1722 = vadd.f32 %v1700, %v1702
        %v1723 = vadd.f32 %v1722, %v1704
        %v1724 = vadd.f32 %v1723, %v1706
        %1725 = vadd.xlane.f32.xlu0 %v1724
        %v1726 = vpop.xlane.xlu0 %1725
        %v1727 = vadd.f32 %v1635, %v1711
        %v1728 = vadd.f32 %v1636, %v1716
        %v1729 = vadd.f32 %v1637, %v1721
        %v1730 = vadd.f32 %v1638, %v1726
        %1731 = vst.msk [vmem:[#allocation3] sm:$0xff] %vm1554, %v1727
        %1732 = vst.msk [vmem:[#allocation3 + $0x8] sm:$0xff] %vm1554, %v1728
        %1733 = vst.msk [vmem:[#allocation3 + $0x10] sm:$0xff] %vm1554, %v1729
        %1734 = vst.msk [vmem:[#allocation3 + $0x18] sm:$0xff] %vm1554, %v1730
        %1735 = vst.msk [vmem:[#allocation2] sm:$0xff] %vm1554, %v1615
        %1736 = vst.msk [vmem:[#allocation2 + $0x8] sm:$0xff] %vm1554, %v1616
        %1737 = vst.msk [vmem:[#allocation2 + $0x10] sm:$0xff] %vm1554, %v1617
        %1738 = vst.msk [vmem:[#allocation2 + $0x18] sm:$0xff] %vm1554, %v1618
        %p1739 = scmp.eq.s32.totalorder %s26, 1
        // Predicated region
        $region49: #{transformer_lm_forward.3} parent=35 // pred_check
          %p1740 = pneg %p1739
        $region50: #{transformer_lm_forward.3} parent=35 // pred_check_branch
          %1742 = sbr.rel (%p1740) target = $region52
        $region51: #{transformer_lm_forward.3} parent=35 // pred_region
          %v1743 = vld [vmem:[#allocation2] sm:$0xff]
          %v1744 = vld [vmem:[#allocation2 + $0x8] sm:$0xff]
          %v1745 = vld [vmem:[#allocation2 + $0x10] sm:$0xff]
          %v1746 = vld [vmem:[#allocation2 + $0x18] sm:$0xff]
          %v1747 = vld [vmem:[#allocation3] sm:$0xff]
          %v1748 = vld [vmem:[#allocation3 + $0x8] sm:$0xff]
          %v1749 = vld [vmem:[#allocation3 + $0x10] sm:$0xff]
          %v1750 = vld [vmem:[#allocation3 + $0x18] sm:$0xff]
          %v1751 = vlog2.pop %v1747
          %v1752 = vmul.f32 %v1751, 0.6931472
          %v1753 = vlog2.pop %v1748
          %v1754 = vmul.f32 %v1753, 0.6931472
          %v1755 = vlog2.pop %v1749
          %v1756 = vmul.f32 %v1755, 0.6931472
          %v1757 = vlog2.pop %v1750
          %v1758 = vmul.f32 %v1757, 0.6931472
          %v1759 = vadd.f32 %v1743, %v1752
          %v1760 = vadd.f32 %v1744, %v1754
          %v1761 = vadd.f32 %v1745, %v1756
          %v1762 = vadd.f32 %v1746, %v1758
          %v1763 = vld [vmem:[#allocation5] sm:$0xff]
          %v1764 = vld [vmem:[#allocation5 + $0x8] sm:$0xff]
          %v1765 = vld [vmem:[#allocation5 + $0x10] sm:$0xff]
          %v1766 = vld [vmem:[#allocation5 + $0x18] sm:$0xff]
          %v1767 = vsub.f32 %v1763, %v1759
          %v1768 = vsub.f32 %v1764, %v1760
          %v1769 = vsub.f32 %v1765, %v1761
          %v1770 = vsub.f32 %v1766, %v1762
          %v1771 = vld [vmem:[#allocation4] sm:$0xff]
          %v1772 = vld [vmem:[#allocation4 + $0x8] sm:$0xff]
          %v1773 = vld [vmem:[#allocation4 + $0x10] sm:$0xff]
          %v1774 = vld [vmem:[#allocation4 + $0x18] sm:$0xff]
          %v1775 = vmul.f32 %v1759, 1024.0
          %v1776 = vmul.f32 %v1760, 1024.0
          %v1777 = vmul.f32 %v1761, 1024.0
          %v1778 = vmul.f32 %v1762, 1024.0
          %v1779 = vsub.f32 %v1771, %v1775
          %v1780 = vsub.f32 %v1772, %v1776
          %v1781 = vsub.f32 %v1773, %v1777
          %v1782 = vsub.f32 %v1774, %v1778
          %v1783 = vmul.f32 %v1767, 0.9
          %v1784 = vmul.f32 %v1768, 0.9
          %v1785 = vmul.f32 %v1769, 0.9
          %v1786 = vmul.f32 %v1770, 0.9
          %v1787 = vsub.f32 -1.0181324, %v1783
          %v1788 = vsub.f32 -1.0181324, %v1784
          %v1789 = vsub.f32 -1.0181324, %v1785
          %v1790 = vsub.f32 -1.0181324, %v1786
          %v1791 = vsub.f32 %v1779, %v1767
          %v1792 = vsub.f32 %v1780, %v1768
          %v1793 = vsub.f32 %v1781, %v1769
          %v1794 = vsub.f32 %v1782, %v1770
          %v1795 = vmul.f32 %v1791, 9.775171e-05
          %v1796 = vmul.f32 %v1792, 9.775171e-05
          %v1797 = vmul.f32 %v1793, 9.775171e-05
          %v1798 = vmul.f32 %v1794, 9.775171e-05
          %v1799 = vsub.f32 %v1787, %v1795
          %v1800 = vsub.f32 %v1788, %v1796
          %v1801 = vsub.f32 %v1789, %v1797
          %v1802 = vsub.f32 %v1790, %v1798
          %vm1803 = vcmp.ne.s32.totalorder %v1467, 0
          %vm1804 = vcmp.ne.s32.totalorder %v1468, 0
          %vm1805 = vcmp.ne.s32.totalorder %v1469, 0
          %vm1806 = vcmp.ne.s32.totalorder %v1470, 0
          %v1807 = vsel %vm1803, %v1799, 0.0
          %v1808 = vsel %vm1804, %v1800, 0.0
          %v1809 = vsel %vm1805, %v1801, 0.0
          %v1810 = vsel %vm1806, %v1802, 0.0
          %v1811 = vlaneseq
          %v1812 = vshrl.u32 %v1811, 7
          %v1813 = vadd.s32 %v1812, 8
          %v1814 = vadd.s32 %v1812, 16
          %v1815 = vadd.s32 %v1812, 24
          %vm1816 = vcmp.eq.s32.totalorder %v1812, %v1472
          %vm1817 = vcmp.eq.s32.totalorder %v1813, %v1472
          %vm1818 = vcmp.eq.s32.totalorder %v1814, %v1472
          %vm1819 = vcmp.eq.s32.totalorder %v1815, %v1472
          %1821 = vset.pattern.permute.xlu0 0
          %1822 = vperm.xlu0 %1821, %v1807
          %v1823 = vpop.permute.xlu0 %1822
          %1826 = vset.pattern.permute.xlu0 0
          %1827 = vperm.xlu0 %1826, %v1808
          %v1828 = vpop.permute.xlu0 %1827
          %1831 = vset.pattern.permute.xlu0 0
          %1832 = vperm.xlu0 %1831, %v1809
          %v1833 = vpop.permute.xlu0 %1832
          %1836 = vset.pattern.permute.xlu0 0
          %1837 = vperm.xlu0 %1836, %v1810
          %v1838 = vpop.permute.xlu0 %1837
          %v1840 = vsel %vm1816, %v1823, 0.0
          %v1841 = vsel %vm1817, %v1828, 0.0
          %v1842 = vsel %vm1818, %v1833, 0.0
          %v1843 = vsel %vm1819, %v1838, 0.0
          %vm1844 = vcmask 261120
          %v1845 = vsel %vm1844, %v1840, 0.0
          %v1846 = vsel %vm1844, %v1841, 0.0
          %v1847 = vadd.f32 %v1845, %v1846
          %v1848 = vsel %vm1844, %v1842, 0.0
          %v1849 = vadd.f32 %v1847, %v1848
          %v1850 = vsel %vm1844, %v1843, 0.0
          %v1851 = vadd.f32 %v1849, %v1850
          %v1852 = vrot.slane %v1851, 4
          %v1853 = vadd.f32 %v1851, %v1852
          %v1854 = vrot.slane %v1853, 2
          %v1855 = vadd.f32 %v1853, %v1854
          %v1856 = vrot.slane %v1855, 1
          %v1857 = vadd.f32 %v1855, %v1856
          %vm1858 = vcmask 253952
          %1859 = vst.msk [vmem:[%s315] sm:$0x1] %vm1858, %v1857
        $region52: #{transformer_lm_forward.3} parent=35 // pred_fallthru
          _
        %p1860 = scmp.lt.s32.totalorder %s25, 0
        %s1861 = scalar_select %p1860, %s25, 0
        %s1862 = scalar_lea.vmem %s4, %s1861
        // Predicated region
        $region53: #{transformer_lm_forward.3} parent=35 // pred_check
          %p1863 = pneg %p155
        $region54: #{transformer_lm_forward.3} parent=35 // pred_check_branch
          %1865 = sbr.rel (%p1863) target = $region56
        $region55: #{transformer_lm_forward.3} parent=35 // pred_region
          _
        $region56: #{transformer_lm_forward.3} parent=35 // pred_fallthru
          _
        // Predicated region
        $region57: #{transformer_lm_forward.3} parent=35 // pred_check
          %p1866 = pneg %p155
        $region58: #{transformer_lm_forward.3} parent=35 // pred_check_branch
          %1868 = sbr.rel (%p1866) target = $region60
        $region59: #{transformer_lm_forward.3} parent=35 // pred_region
          %p1869 = scmp.lt.s32.totalorder %s25, 0
          %s1870 = scalar_select %p1869, %s25, 0
          %s1871 = scalar_lea.vmem %s4, %s1870
        $region60: #{transformer_lm_forward.3} parent=35 // pred_fallthru
          _
      $region36: #{transformer_lm_forward.3} parent=5 // pred_fallthru
        _
      %p1872 = scmp.le.s32.totalorder 2, %s16
      // Predicated region
      $region61: #{transformer_lm_forward.3} parent=5 // pred_check
        %p1873 = pneg %p1872
      $region62: #{transformer_lm_forward.3} parent=5 // pred_check_branch
        %1875 = sbr.rel (%p1873) target = $region64
      $region63: #{transformer_lm_forward.3} parent=5 // pred_region
        %s1876 = ssub.s32 %s16, 2
      $region64: #{transformer_lm_forward.3} parent=5 // pred_fallthru
        _
    $region6: #{transformer_lm_forward.3} parent=1 // loop_footer
      %s20 = sadd.s32 1, %s16
    $region7: #{transformer_lm_forward.3} parent=1 // loop_footer_branch
      %15 = sbr.rel target = $region3
    $region8: #{transformer_lm_forward.3} parent=1 // loop_exit
      _
    %1877 = vsyncpa [#allocation7], 1
    %s1878 = scalar_lea.sflag [#allocation7], 1
    %1879 = vsyncpa %s1878, 1
    %1880 = vsyncpa [#allocation9], 1
    %s1881 = scalar_lea.sflag [#allocation9], 1
    %1882 = vsyncpa %s1881, 1

// kernel: transformer_lm_forward.2
$region0: #{transformer_lm_forward.2}
  #allocation0 [shape = 'u32[]', space=smem, size = 0x4, offset = 0x4, fixed_abs, tag = 'smem constant byte address 0x4 - core index']
  #allocation1 [shape = 'u32[72,128]{1,0:T(1,128)}', space=vmem, size = 0x9000, scoped, tag = 'internal scratch']
  #allocation2 [shape = 'f32[32,512]{1,0:T(8,128)}', space=vmem, size = 0x10000, scoped, tag = 'scratch operand']
  %s0 = inlined_call_operand.vmem [shape: bf16[32,512], index: 0, kind: input, shape index: {}]
  %s1 = inlined_call_operand.vmem [shape: f32[16,16], index: 1, kind: input, shape index: {}]
  %s2 = inlined_call_operand.hbm [shape: bf16[2,512,1536], index: 2, kind: input, shape index: {}]
  %s3 = inlined_call_operand.hbm [shape: f32[2,1,1536], index: 3, kind: input, shape index: {}]
  %s4 = inlined_call_operand.hbm [shape: bf16[2,512,512], index: 4, kind: input, shape index: {}]
  %s5 = inlined_call_operand.hbm [shape: bf16[2,512,1024], index: 5, kind: input, shape index: {}]
  %s6 = inlined_call_operand.hbm [shape: f32[2,1,1024], index: 6, kind: input, shape index: {}]
  %s7 = inlined_call_operand.hbm [shape: bf16[2,512,512], index: 7, kind: input, shape index: {}]
  %s8 = inlined_call_operand.vmem [shape: f32[2,6,512], index: 8, kind: input, shape index: {}]
  %s9 = inlined_call_operand.vmem [shape: bf16[32,512], index: 9, kind: output, shape index: {}]
  %s10 = sld [smem:[#allocation0]]
  $region101: #{transformer_lm_forward.2} parent=0
    _
  %s12 = ssub.s32 1, %s10
  %s13 = scalar_select 0, %s12, %s10
  $region1: #{transformer_lm_forward.2} parent=0
    #allocation3 [shape = 'u8[3145728]{0}', space=vmem, size = 0x300000, scoped, tag = 'input window, operand 2']
    #allocation4 [shape = 's32[2]{0}', space=sflag, size = 0x8, scoped, tag = 'scoped memory for transformer_lm_forward.2']
    #allocation5 [shape = 'u8[12288]{0}', space=vmem, size = 0x3000, scoped, tag = 'input window, operand 3']
    #allocation6 [shape = 's32[2]{0}', space=sflag, size = 0x8, scoped, tag = 'scoped memory for transformer_lm_forward.2']
    #allocation7 [shape = 'u8[1048576]{0}', space=vmem, size = 0x100000, scoped, tag = 'input window, operand 4']
    #allocation8 [shape = 'u8[2097152]{0}', space=vmem, size = 0x200000, scoped, tag = 'input window, operand 5']
    #allocation9 [shape = 's32[2]{0}', space=sflag, size = 0x8, scoped, tag = 'scoped memory for transformer_lm_forward.2']
    #allocation10 [shape = 'u8[8192]{0}', space=vmem, size = 0x2000, scoped, tag = 'input window, operand 6']
    #allocation11 [shape = 'u8[1048576]{0}', space=vmem, size = 0x100000, scoped, tag = 'input window, operand 7']
    #allocation12 [shape = 's32[2]{0}', space=sflag, size = 0x8, scoped, tag = 'scoped memory for transformer_lm_forward.2']
    %14 = vsyncpa [#allocation4], 0
    %s15 = scalar_lea.sflag [#allocation4], 1
    %16 = vsyncpa %s15, 0
    %17 = vsyncpa [#allocation6], 0
    %s18 = scalar_lea.sflag [#allocation6], 1
    %19 = vsyncpa %s18, 0
    %20 = vsyncpa [#allocation9], 0
    %s21 = scalar_lea.sflag [#allocation9], 1
    %22 = vsyncpa %s21, 0
    %23 = vsyncpa [#allocation12], 0
    %s24 = scalar_lea.sflag [#allocation12], 1
    %25 = vsyncpa %s24, 0
    loop: start=0, step=1, limit=4
    $region2: #{transformer_lm_forward.2} parent=1 // loop_pre_header
      _
    $region3: #{transformer_lm_forward.2} parent=1 // loop_header
      %s27 = sphi 0, %s31
      %p28 = scmp.ge.s32.totalorder %s27, 4
      %s35 = sphi 0, %s35
      %s37 = sphi 0, %s35
      %s38 = sphi 0, %s37
      %s52 = sphi 0, %s38
      %s56 = sphi 0, %s56
      %s58 = sphi 0, %s56
      %s59 = sphi 0, %s58
      %s73 = sphi 0, %s59
      %s79 = sphi 0, %s81
      %s82 = sphi 0, %s79
      %s83 = sphi 0, %s82
      %s99 = sphi 0, %s83
      %s105 = sphi 0, %s107
      %s108 = sphi 0, %s105
      %s109 = sphi 0, %s108
      %s125 = sphi 0, %s109
      %s131 = sphi 0, %s133
      %s134 = sphi 0, %s131
      %s135 = sphi 0, %s134
      %s151 = sphi 0, %s135
      %s157 = sphi 0, %s159
      %s160 = sphi 0, %s157
      %s161 = sphi 0, %s160
      %s177 = sphi 0, %s161
      %s183 = sphi 0, %s185
      %s186 = sphi 0, %s183
      %s187 = sphi 0, %s186
      %s203 = sphi 0, %s187
      %s209 = sphi 0, %s211
      %s212 = sphi 0, %s209
      %s213 = sphi 0, %s212
      %s229 = sphi 0, %s213
      %s235 = sphi 0, %s237
      %s238 = sphi 0, %s235
      %s239 = sphi 0, %s238
      %s255 = sphi 0, %s239
      %s259 = sphi 0, %s259
      %s261 = sphi 0, %s259
      %s262 = sphi 0, %s261
      %s276 = sphi 0, %s262
    $region4: #{transformer_lm_forward.2} parent=1 // loop_header_branch
      %30 = sbr.rel (%p28) target = $region8
    $region5: #{transformer_lm_forward.2} parent=1 // loop_body
      %s32 = ssub.s32 %s27, 1
      %s33 = ssub.s32 %s27, 2
      %s34 = sadd.s32 %s27, 1
      %s36 = sadd.s32 %s35, 1
      %p39 = scmp.eq.s32.totalorder %s27, 1
      %p40 = scmp.ne.s32.totalorder %s35, %s37
      %p41 = scmp.eq.s32.totalorder %s27, 0
      %p42 = por %p40, %p41
      %p43 = scmp.ne.s32.totalorder %s35, %s37
      %p44 = scmp.eq.s32.totalorder %s32, 1
      %p45 = por %p43, %p44
      %p46 = scmp.ne.s32.totalorder %s37, %s38
      %p47 = scmp.eq.s32.totalorder %s32, 0
      %p48 = por %p46, %p47
      %p49 = scmp.ne.s32.totalorder %s37, %s38
      %p50 = scmp.eq.s32.totalorder %s33, 1
      %p51 = por %p49, %p50
      %p53 = scmp.ne.s32.totalorder %s38, %s52
      %p54 = scmp.eq.s32.totalorder %s33, 0
      %p55 = por %p53, %p54
      %s57 = sadd.s32 %s56, 1
      %p60 = scmp.eq.s32.totalorder %s27, 1
      %p61 = scmp.ne.s32.totalorder %s56, %s58
      %p62 = scmp.eq.s32.totalorder %s27, 0
      %p63 = por %p61, %p62
      %p64 = scmp.ne.s32.totalorder %s56, %s58
      %p65 = scmp.eq.s32.totalorder %s32, 1
      %p66 = por %p64, %p65
      %p67 = scmp.ne.s32.totalorder %s58, %s59
      %p68 = scmp.eq.s32.totalorder %s32, 0
      %p69 = por %p67, %p68
      %p70 = scmp.ne.s32.totalorder %s58, %s59
      %p71 = scmp.eq.s32.totalorder %s33, 1
      %p72 = por %p70, %p71
      %p74 = scmp.ne.s32.totalorder %s59, %s73
      %p75 = scmp.eq.s32.totalorder %s33, 0
      %p76 = por %p74, %p75
      %s77 = ssub.s32 %s27, %s34
      %p78 = scmp.eq.s32.totalorder %s77, 0
      %s80 = sadd.s32 %s79, 1
      %s81 = scalar_select %p78, %s79, %s80
      %p84 = pneg %p78
      %p85 = scmp.eq.s32.totalorder %s27, 1
      %p86 = por %p84, %p85
      %p87 = scmp.ne.s32.totalorder %s79, %s82
      %p88 = scmp.eq.s32.totalorder %s27, 0
      %p89 = por %p87, %p88
      %p90 = scmp.ne.s32.totalorder %s79, %s82
      %p91 = scmp.eq.s32.totalorder %s32, 1
      %p92 = por %p90, %p91
      %p93 = scmp.ne.s32.totalorder %s82, %s83
      %p94 = scmp.eq.s32.totalorder %s32, 0
      %p95 = por %p93, %p94
      %p96 = scmp.ne.s32.totalorder %s82, %s83
      %p97 = scmp.eq.s32.totalorder %s33, 1
      %p98 = por %p96, %p97
      %p100 = scmp.ne.s32.totalorder %s83, %s99
      %p101 = scmp.eq.s32.totalorder %s33, 0
      %p102 = por %p100, %p101
      %s103 = ssub.s32 %s27, %s34
      %p104 = scmp.eq.s32.totalorder %s103, 0
      %s106 = sadd.s32 %s105, 1
      %s107 = scalar_select %p104, %s105, %s106
      %p110 = pneg %p104
      %p111 = scmp.eq.s32.totalorder %s27, 1
      %p112 = por %p110, %p111
      %p113 = scmp.ne.s32.totalorder %s105, %s108
      %p114 = scmp.eq.s32.totalorder %s27, 0
      %p115 = por %p113, %p114
      %p116 = scmp.ne.s32.totalorder %s105, %s108
      %p117 = scmp.eq.s32.totalorder %s32, 1
      %p118 = por %p116, %p117
      %p119 = scmp.ne.s32.totalorder %s108, %s109
      %p120 = scmp.eq.s32.totalorder %s32, 0
      %p121 = por %p119, %p120
      %p122 = scmp.ne.s32.totalorder %s108, %s109
      %p123 = scmp.eq.s32.totalorder %s33, 1
      %p124 = por %p122, %p123
      %p126 = scmp.ne.s32.totalorder %s109, %s125
      %p127 = scmp.eq.s32.totalorder %s33, 0
      %p128 = por %p126, %p127
      %s129 = ssub.s32 %s27, %s34
      %p130 = scmp.eq.s32.totalorder %s129, 0
      %s132 = sadd.s32 %s131, 1
      %s133 = scalar_select %p130, %s131, %s132
      %p136 = pneg %p130
      %p137 = scmp.eq.s32.totalorder %s27, 1
      %p138 = por %p136, %p137
      %p139 = scmp.ne.s32.totalorder %s131, %s134
      %p140 = scmp.eq.s32.totalorder %s27, 0
      %p141 = por %p139, %p140
      %p142 = scmp.ne.s32.totalorder %s131, %s134
      %p143 = scmp.eq.s32.totalorder %s32, 1
      %p144 = por %p142, %p143
      %p145 = scmp.ne.s32.totalorder %s134, %s135
      %p146 = scmp.eq.s32.totalorder %s32, 0
      %p147 = por %p145, %p146
      %p148 = scmp.ne.s32.totalorder %s134, %s135
      %p149 = scmp.eq.s32.totalorder %s33, 1
      %p150 = por %p148, %p149
      %p152 = scmp.ne.s32.totalorder %s135, %s151
      %p153 = scmp.eq.s32.totalorder %s33, 0
      %p154 = por %p152, %p153
      %s155 = ssub.s32 %s27, %s34
      %p156 = scmp.eq.s32.totalorder %s155, 0
      %s158 = sadd.s32 %s157, 1
      %s159 = scalar_select %p156, %s157, %s158
      %p162 = pneg %p156
      %p163 = scmp.eq.s32.totalorder %s27, 1
      %p164 = por %p162, %p163
      %p165 = scmp.ne.s32.totalorder %s157, %s160
      %p166 = scmp.eq.s32.totalorder %s27, 0
      %p167 = por %p165, %p166
      %p168 = scmp.ne.s32.totalorder %s157, %s160
      %p169 = scmp.eq.s32.totalorder %s32, 1
      %p170 = por %p168, %p169
      %p171 = scmp.ne.s32.totalorder %s160, %s161
      %p172 = scmp.eq.s32.totalorder %s32, 0
      %p173 = por %p171, %p172
      %p174 = scmp.ne.s32.totalorder %s160, %s161
      %p175 = scmp.eq.s32.totalorder %s33, 1
      %p176 = por %p174, %p175
      %p178 = scmp.ne.s32.totalorder %s161, %s177
      %p179 = scmp.eq.s32.totalorder %s33, 0
      %p180 = por %p178, %p179
      %s181 = ssub.s32 %s27, %s34
      %p182 = scmp.eq.s32.totalorder %s181, 0
      %s184 = sadd.s32 %s183, 1
      %s185 = scalar_select %p182, %s183, %s184
      %p188 = pneg %p182
      %p189 = scmp.eq.s32.totalorder %s27, 1
      %p190 = por %p188, %p189
      %p191 = scmp.ne.s32.totalorder %s183, %s186
      %p192 = scmp.eq.s32.totalorder %s27, 0
      %p193 = por %p191, %p192
      %p194 = scmp.ne.s32.totalorder %s183, %s186
      %p195 = scmp.eq.s32.totalorder %s32, 1
      %p196 = por %p194, %p195
      %p197 = scmp.ne.s32.totalorder %s186, %s187
      %p198 = scmp.eq.s32.totalorder %s32, 0
      %p199 = por %p197, %p198
      %p200 = scmp.ne.s32.totalorder %s186, %s187
      %p201 = scmp.eq.s32.totalorder %s33, 1
      %p202 = por %p200, %p201
      %p204 = scmp.ne.s32.totalorder %s187, %s203
      %p205 = scmp.eq.s32.totalorder %s33, 0
      %p206 = por %p204, %p205
      %s207 = ssub.s32 %s27, %s34
      %p208 = scmp.eq.s32.totalorder %s207, 0
      %s210 = sadd.s32 %s209, 1
      %s211 = scalar_select %p208, %s209, %s210
      %p214 = pneg %p208
      %p215 = scmp.eq.s32.totalorder %s27, 1
      %p216 = por %p214, %p215
      %p217 = scmp.ne.s32.totalorder %s209, %s212
      %p218 = scmp.eq.s32.totalorder %s27, 0
      %p219 = por %p217, %p218
      %p220 = scmp.ne.s32.totalorder %s209, %s212
      %p221 = scmp.eq.s32.totalorder %s32, 1
      %p222 = por %p220, %p221
      %p223 = scmp.ne.s32.totalorder %s212, %s213
      %p224 = scmp.eq.s32.totalorder %s32, 0
      %p225 = por %p223, %p224
      %p226 = scmp.ne.s32.totalorder %s212, %s213
      %p227 = scmp.eq.s32.totalorder %s33, 1
      %p228 = por %p226, %p227
      %p230 = scmp.ne.s32.totalorder %s213, %s229
      %p231 = scmp.eq.s32.totalorder %s33, 0
      %p232 = por %p230, %p231
      %s233 = ssub.s32 %s27, %s34
      %p234 = scmp.eq.s32.totalorder %s233, 0
      %s236 = sadd.s32 %s235, 1
      %s237 = scalar_select %p234, %s235, %s236
      %p240 = pneg %p234
      %p241 = scmp.eq.s32.totalorder %s27, 1
      %p242 = por %p240, %p241
      %p243 = scmp.ne.s32.totalorder %s235, %s238
      %p244 = scmp.eq.s32.totalorder %s27, 0
      %p245 = por %p243, %p244
      %p246 = scmp.ne.s32.totalorder %s235, %s238
      %p247 = scmp.eq.s32.totalorder %s32, 1
      %p248 = por %p246, %p247
      %p249 = scmp.ne.s32.totalorder %s238, %s239
      %p250 = scmp.eq.s32.totalorder %s32, 0
      %p251 = por %p249, %p250
      %p252 = scmp.ne.s32.totalorder %s238, %s239
      %p253 = scmp.eq.s32.totalorder %s33, 1
      %p254 = por %p252, %p253
      %p256 = scmp.ne.s32.totalorder %s239, %s255
      %p257 = scmp.eq.s32.totalorder %s33, 0
      %p258 = por %p256, %p257
      %s260 = sadd.s32 %s259, 1
      %p263 = scmp.eq.s32.totalorder %s27, 1
      %p264 = scmp.ne.s32.totalorder %s259, %s261
      %p265 = scmp.eq.s32.totalorder %s27, 0
      %p266 = por %p264, %p265
      %p267 = scmp.ne.s32.totalorder %s259, %s261
      %p268 = scmp.eq.s32.totalorder %s32, 1
      %p269 = por %p267, %p268
      %p270 = scmp.ne.s32.totalorder %s261, %s262
      %p271 = scmp.eq.s32.totalorder %s32, 0
      %p272 = por %p270, %p271
      %p273 = scmp.ne.s32.totalorder %s261, %s262
      %p274 = scmp.eq.s32.totalorder %s33, 1
      %p275 = por %p273, %p274
      %p277 = scmp.ne.s32.totalorder %s262, %s276
      %p278 = scmp.eq.s32.totalorder %s33, 0
      %p279 = por %p277, %p278
      %p280 = scmp.le.s32.totalorder 1, %s27
      %p281 = scmp.lt.s32.totalorder %s27, 3
      %p282 = pnand %p280, %p281
      %p283 = pneg %p282
      // Predicated region
      $region9: #{transformer_lm_forward.2} parent=5 // pred_check
        _
      $region10: #{transformer_lm_forward.2} parent=5 // pred_check_branch
        %285 = sbr.rel (%p282) target = $region12
      $region11: #{transformer_lm_forward.2} parent=5 // pred_region
        %s286 = ssub.s32 %s27, 1
        // Predicated region
        $region13: #{transformer_lm_forward.2} parent=11 // pred_check
          %p287 = pneg %p48
        $region14: #{transformer_lm_forward.2} parent=11 // pred_check_branch
          %289 = sbr.rel (%p287) target = $region16
        $region15: #{transformer_lm_forward.2} parent=11 // pred_region
          _
        $region16: #{transformer_lm_forward.2} parent=11 // pred_fallthru
          _
        // Predicated region
        $region17: #{transformer_lm_forward.2} parent=11 // pred_check
          %p290 = pneg %p69
        $region18: #{transformer_lm_forward.2} parent=11 // pred_check_branch
          %292 = sbr.rel (%p290) target = $region20
        $region19: #{transformer_lm_forward.2} parent=11 // pred_region
          _
        $region20: #{transformer_lm_forward.2} parent=11 // pred_fallthru
          _
      $region12: #{transformer_lm_forward.2} parent=5 // pred_fallthru
        _
      %p293 = scmp.lt.s32.totalorder %s27, 2
      // Predicated region
      $region21: #{transformer_lm_forward.2} parent=5 // pred_check
        %p294 = pneg %p293
      $region22: #{transformer_lm_forward.2} parent=5 // pred_check_branch
        %296 = sbr.rel (%p294) target = $region24
      $region23: #{transformer_lm_forward.2} parent=5 // pred_region
        // Predicated region
        $region25: #{transformer_lm_forward.2} parent=23 // pred_check
          %p297 = pneg %p89
        $region26: #{transformer_lm_forward.2} parent=23 // pred_check_branch
          %299 = sbr.rel (%p297) target = $region28
        $region27: #{transformer_lm_forward.2} parent=23 // pred_region
          %s300 = sand.u32 %s79, 1
          %s301 = scalar_lea.sflag [#allocation4], %s300
          %s302 = sand.u32 %s79, 1
          %s303 = smul.addr %s302, 3072
          %s304 = scalar_lea.vmem [#allocation3], %s303
          %306 = vsyncadd %s301, 0
          %s307 = smul.addr %s27, 768
          %s308 = smul.addr %s307, 4
          %s309 = scalar_lea.hbm %s2, %s308
          %s310 = sshll.u32 %s309, 4
          %s311 = int_to_ptr.hbm [resolvable:$true] %s310
          %s312 = sshll.u32 %s304, 4
          %s313 = int_to_ptr.vmem [resolvable:$true] %s312
          %318 = dma.hbm_to_vmem [thread:$0]  %s311, 49152, %s313, %s301, 768, 768, 48
        $region28: #{transformer_lm_forward.2} parent=23 // pred_fallthru
          _
        // Predicated region
        $region29: #{transformer_lm_forward.2} parent=23 // pred_check
          %p319 = pneg %p115
        $region30: #{transformer_lm_forward.2} parent=23 // pred_check_branch
          %321 = sbr.rel (%p319) target = $region32
        $region31: #{transformer_lm_forward.2} parent=23 // pred_region
          %s322 = sand.u32 %s27, 1
          %s323 = scalar_lea.sflag [#allocation6], %s322
          %s324 = sand.u32 %s105, 1
          %s325 = smul.addr %s324, 12
          %s326 = scalar_lea.vmem [#allocation5], %s325
          %328 = vsyncadd %s323, 0
          %s329 = smul.addr %s27, 12
          %s330 = scalar_lea.hbm %s3, %s329
          %s332 = sshll.u32 %s330, 4
          %s333 = int_to_ptr.hbm [resolvable:$true] %s332
          %s334 = sshll.u32 %s326, 4
          %s335 = int_to_ptr.vmem [resolvable:$true] %s334
          %337 = dma.hbm_to_vmem [thread:$0]  %s333, 192, %s335, %s323
        $region32: #{transformer_lm_forward.2} parent=23 // pred_fallthru
          _
        // Predicated region
        $region33: #{transformer_lm_forward.2} parent=23 // pred_check
          %p338 = pneg %p141
        $region34: #{transformer_lm_forward.2} parent=23 // pred_check_branch
          %340 = sbr.rel (%p338) target = $region36
        $region35: #{transformer_lm_forward.2} parent=23 // pred_region
          %s341 = sand.u32 %s27, 1
          %s342 = scalar_lea.sflag [#allocation6], %s341
          %s343 = sand.u32 %s131, 1
          %s344 = smul.addr %s343, 1024
          %s345 = scalar_lea.vmem [#allocation7], %s344
          %347 = vsyncadd %s342, 0
          %s348 = smul.addr %s27, 256
          %s349 = smul.addr %s348, 4
          %s350 = scalar_lea.hbm %s4, %s349
          %s351 = sshll.u32 %s350, 4
          %s352 = int_to_ptr.hbm [resolvable:$true] %s351
          %s353 = sshll.u32 %s345, 4
          %s354 = int_to_ptr.vmem [resolvable:$true] %s353
          %359 = dma.hbm_to_vmem [thread:$0]  %s352, 16384, %s354, %s342, 256, 256, 16
        $region36: #{transformer_lm_forward.2} parent=23 // pred_fallthru
          _
        // Predicated region
        $region37: #{transformer_lm_forward.2} parent=23 // pred_check
          %p360 = pneg %p167
        $region38: #{transformer_lm_forward.2} parent=23 // pred_check_branch
          %362 = sbr.rel (%p360) target = $region40
        $region39: #{transformer_lm_forward.2} parent=23 // pred_region
          %s363 = sand.u32 %s27, 1
          %s364 = scalar_lea.sflag [#allocation9], %s363
          %s365 = sand.u32 %s157, 1
          %s366 = smul.addr %s365, 2048
          %s367 = scalar_lea.vmem [#allocation8], %s366
          %369 = vsyncadd %s364, 0
          %s370 = smul.addr %s27, 512
          %s371 = smul.addr %s370, 4
          %s372 = scalar_lea.hbm %s5, %s371
          %s373 = sshll.u32 %s372, 4
          %s374 = int_to_ptr.hbm [resolvable:$true] %s373
          %s375 = sshll.u32 %s367, 4
          %s376 = int_to_ptr.vmem [resolvable:$true] %s375
          %381 = dma.hbm_to_vmem [thread:$0]  %s374, 32768, %s376, %s364, 512, 512, 32
        $region40: #{transformer_lm_forward.2} parent=23 // pred_fallthru
          _
        // Predicated region
        $region41: #{transformer_lm_forward.2} parent=23 // pred_check
          %p382 = pneg %p193
        $region42: #{transformer_lm_forward.2} parent=23 // pred_check_branch
          %384 = sbr.rel (%p382) target = $region44
        $region43: #{transformer_lm_forward.2} parent=23 // pred_region
          %s385 = sand.u32 %s27, 1
          %s386 = scalar_lea.sflag [#allocation9], %s385
          %s387 = sand.u32 %s183, 1
          %s388 = smul.addr %s387, 8
          %s389 = scalar_lea.vmem [#allocation10], %s388
          %391 = vsyncadd %s386, 0
          %s392 = smul.addr %s27, 8
          %s393 = scalar_lea.hbm %s6, %s392
          %s395 = sshll.u32 %s393, 4
          %s396 = int_to_ptr.hbm [resolvable:$true] %s395
          %s397 = sshll.u32 %s389, 4
          %s398 = int_to_ptr.vmem [resolvable:$true] %s397
          %400 = dma.hbm_to_vmem [thread:$0]  %s396, 128, %s398, %s386
        $region44: #{transformer_lm_forward.2} parent=23 // pred_fallthru
          _
        // Predicated region
        $region45: #{transformer_lm_forward.2} parent=23 // pred_check
          %p401 = pneg %p219
        $region46: #{transformer_lm_forward.2} parent=23 // pred_check_branch
          %403 = sbr.rel (%p401) target = $region48
        $region47: #{transformer_lm_forward.2} parent=23 // pred_region
          %s404 = sand.u32 %s209, 1
          %s405 = scalar_lea.sflag [#allocation12], %s404
          %s406 = sand.u32 %s209, 1
          %s407 = smul.addr %s406, 1024
          %s408 = scalar_lea.vmem [#allocation11], %s407
          %410 = vsyncadd %s405, 0
          %s411 = smul.addr %s27, 256
          %s412 = smul.addr %s411, 4
          %s413 = scalar_lea.hbm %s7, %s412
          %s414 = sshll.u32 %s413, 4
          %s415 = int_to_ptr.hbm [resolvable:$true] %s414
          %s416 = sshll.u32 %s408, 4
          %s417 = int_to_ptr.vmem [resolvable:$true] %s416
          %422 = dma.hbm_to_vmem [thread:$0]  %s415, 16384, %s417, %s405, 256, 256, 16
        $region48: #{transformer_lm_forward.2} parent=23 // pred_fallthru
          _
        // Predicated region
        $region49: #{transformer_lm_forward.2} parent=23 // pred_check
          %p423 = pneg %p245
        $region50: #{transformer_lm_forward.2} parent=23 // pred_check_branch
          %425 = sbr.rel (%p423) target = $region52
        $region51: #{transformer_lm_forward.2} parent=23 // pred_region
          %p426 = scmp.lt.s32.totalorder %s27, 1
          %s427 = scalar_select %p426, %s27, 1
          %s428 = smul.addr %s427, 4
          %s429 = smul.addr %s428, 8
          %s430 = scalar_lea.vmem %s8, %s429
        $region52: #{transformer_lm_forward.2} parent=23 // pred_fallthru
          _
      $region24: #{transformer_lm_forward.2} parent=5 // pred_fallthru
        _
      %p431 = scmp.le.s32.totalorder 1, %s27
      %p432 = scmp.lt.s32.totalorder %s27, 3
      %p433 = pnand %p431, %p432
      %p434 = pneg %p433
      // Predicated region
      $region53: #{transformer_lm_forward.2} parent=5 // pred_check
        _
      $region54: #{transformer_lm_forward.2} parent=5 // pred_check_branch
        %436 = sbr.rel (%p433) target = $region56
      $region55: #{transformer_lm_forward.2} parent=5 // pred_region
        %s437 = ssub.s32 %s27, 1
        %s438 = sand.u32 %s82, 1
        %s439 = scalar_lea.sflag [#allocation4], %s438
        %s440 = sand.u32 %s82, 1
        %s441 = smul.addr %s440, 3072
        %s442 = scalar_lea.vmem [#allocation3], %s441
        // Predicated region
        $region57: #{transformer_lm_forward.2} parent=55 // pred_check
          %p443 = pneg %p95
        $region58: #{transformer_lm_forward.2} parent=55 // pred_check_branch
          %445 = sbr.rel (%p443) target = $region60
        $region59: #{transformer_lm_forward.2} parent=55 // pred_region
          %447 = dma.done %s439, 49152
        $region60: #{transformer_lm_forward.2} parent=55 // pred_fallthru
          _
        %s448 = sand.u32 %s32, 1
        %s449 = scalar_lea.sflag [#allocation6], %s448
        %s450 = sand.u32 %s108, 1
        %s451 = smul.addr %s450, 12
        %s452 = scalar_lea.vmem [#allocation5], %s451
        // Predicated region
        $region61: #{transformer_lm_forward.2} parent=55 // pred_check
          %p453 = pneg %p121
        $region62: #{transformer_lm_forward.2} parent=55 // pred_check_branch
          %455 = sbr.rel (%p453) target = $region64
        $region63: #{transformer_lm_forward.2} parent=55 // pred_region
          %457 = dma.done %s449, 192
        $region64: #{transformer_lm_forward.2} parent=55 // pred_fallthru
          _
        %s458 = sand.u32 %s32, 1
        %s459 = scalar_lea.sflag [#allocation6], %s458
        %s460 = sand.u32 %s134, 1
        %s461 = smul.addr %s460, 1024
        %s462 = scalar_lea.vmem [#allocation7], %s461
        // Predicated region
        $region65: #{transformer_lm_forward.2} parent=55 // pred_check
          %p463 = pneg %p147
        $region66: #{transformer_lm_forward.2} parent=55 // pred_check_branch
          %465 = sbr.rel (%p463) target = $region68
        $region67: #{transformer_lm_forward.2} parent=55 // pred_region
          %467 = dma.done %s459, 16384
        $region68: #{transformer_lm_forward.2} parent=55 // pred_fallthru
          _
        %s468 = sand.u32 %s32, 1
        %s469 = scalar_lea.sflag [#allocation9], %s468
        %s470 = sand.u32 %s160, 1
        %s471 = smul.addr %s470, 2048
        %s472 = scalar_lea.vmem [#allocation8], %s471
        // Predicated region
        $region69: #{transformer_lm_forward.2} parent=55 // pred_check
          %p473 = pneg %p173
        $region70: #{transformer_lm_forward.2} parent=55 // pred_check_branch
          %475 = sbr.rel (%p473) target = $region72
        $region71: #{transformer_lm_forward.2} parent=55 // pred_region
          %477 = dma.done %s469, 32768
        $region72: #{transformer_lm_forward.2} parent=55 // pred_fallthru
          _
        %s478 = sand.u32 %s32, 1
        %s479 = scalar_lea.sflag [#allocation9], %s478
        %s480 = sand.u32 %s186, 1
        %s481 = smul.addr %s480, 8
        %s482 = scalar_lea.vmem [#allocation10], %s481
        // Predicated region
        $region73: #{transformer_lm_forward.2} parent=55 // pred_check
          %p483 = pneg %p199
        $region74: #{transformer_lm_forward.2} parent=55 // pred_check_branch
          %485 = sbr.rel (%p483) target = $region76
        $region75: #{transformer_lm_forward.2} parent=55 // pred_region
          %487 = dma.done %s479, 128
        $region76: #{transformer_lm_forward.2} parent=55 // pred_fallthru
          _
        %s488 = sand.u32 %s212, 1
        %s489 = scalar_lea.sflag [#allocation12], %s488
        %s490 = sand.u32 %s212, 1
        %s491 = smul.addr %s490, 1024
        %s492 = scalar_lea.vmem [#allocation11], %s491
        // Predicated region
        $region77: #{transformer_lm_forward.2} parent=55 // pred_check
          %p493 = pneg %p225
        $region78: #{transformer_lm_forward.2} parent=55 // pred_check_branch
          %495 = sbr.rel (%p493) target = $region80
        $region79: #{transformer_lm_forward.2} parent=55 // pred_region
          %497 = dma.done %s489, 16384
        $region80: #{transformer_lm_forward.2} parent=55 // pred_fallthru
          _
        %p498 = pneg %p48
        %p499 = pneg %p45
        %p500 = pneg %p69
        %p501 = pneg %p66
        %s502 = sand.u32 %s82, 1
        %s503 = scalar_lea.sflag [#allocation4], %s502
        %s504 = sand.u32 %s82, 1
        %s505 = smul.addr %s504, 3072
        %s506 = scalar_lea.vmem [#allocation3], %s505
        %p507 = pneg %p95
        %p508 = pneg %p92
        %s509 = sand.u32 %s32, 1
        %s510 = scalar_lea.sflag [#allocation6], %s509
        %s511 = sand.u32 %s108, 1
        %s512 = smul.addr %s511, 12
        %s513 = scalar_lea.vmem [#allocation5], %s512
        %p514 = pneg %p121
        %p515 = pneg %p118
        %s516 = sand.u32 %s32, 1
        %s517 = scalar_lea.sflag [#allocation6], %s516
        %s518 = sand.u32 %s134, 1
        %s519 = smul.addr %s518, 1024
        %s520 = scalar_lea.vmem [#allocation7], %s519
        %p521 = pneg %p147
        %p522 = pneg %p144
        %s523 = sand.u32 %s32, 1
        %s524 = scalar_lea.sflag [#allocation9], %s523
        %s525 = sand.u32 %s160, 1
        %s526 = smul.addr %s525, 2048
        %s527 = scalar_lea.vmem [#allocation8], %s526
        %p528 = pneg %p173
        %p529 = pneg %p170
        %s530 = sand.u32 %s32, 1
        %s531 = scalar_lea.sflag [#allocation9], %s530
        %s532 = sand.u32 %s186, 1
        %s533 = smul.addr %s532, 8
        %s534 = scalar_lea.vmem [#allocation10], %s533
        %p535 = pneg %p199
        %p536 = pneg %p196
        %s537 = sand.u32 %s212, 1
        %s538 = scalar_lea.sflag [#allocation12], %s537
        %s539 = sand.u32 %s212, 1
        %s540 = smul.addr %s539, 1024
        %s541 = scalar_lea.vmem [#allocation11], %s540
        %p542 = pneg %p225
        %p543 = pneg %p222
        %p544 = scmp.lt.s32.totalorder %s32, 1
        %s545 = scalar_select %p544, %s32, 1
        %s546 = smul.addr %s545, 4
        %s547 = smul.addr %s546, 8
        %s548 = scalar_lea.vmem %s8, %s547
        %p549 = pneg %p251
        %p550 = pneg %p248
        %p551 = pneg %p272
        %p552 = pneg %p269
        %p553 = scmp.lt.s32.totalorder %s32, 1
        %s554 = scalar_select %p553, %s32, 1
        %s555 = smul.addr %s554, 4
        %s556 = smul.addr %s555, 8
        %s557 = scalar_lea.vmem %s8, %s556
        %p559 = scmp.eq.s32.totalorder %s32, 0
        // Predicated region
        $region81: #{transformer_lm_forward.2} parent=55 // pred_check
          %p560 = pneg %p559
        $region82: #{transformer_lm_forward.2} parent=55 // pred_check_branch
          %562 = sbr.rel (%p560) target = $region84
        $region83: #{transformer_lm_forward.2} parent=55 // pred_region
          %v563 = vld [vmem:[%s0] sm:$0xff]
          %v564 = vld [vmem:[%s0 + $0x8] sm:$0xff]
          %v565 = vld [vmem:[%s0 + $0x10] sm:$0xff]
          %v566 = vld [vmem:[%s0 + $0x18] sm:$0xff]
          %v567 = vld [vmem:[%s0 + $0x20] sm:$0xff]
          %v568 = vld [vmem:[%s0 + $0x28] sm:$0xff]
          %v569 = vld [vmem:[%s0 + $0x30] sm:$0xff]
          %v570 = vld [vmem:[%s0 + $0x38] sm:$0xff]
          %v571 = vunpack.c.l.bf16 %v563
          %v572 = vunpack.c.h.bf16 %v563
          %v573 = vunpack.c.l.bf16 %v564
          %v574 = vunpack.c.h.bf16 %v564
          %v575 = vunpack.c.l.bf16 %v565
          %v576 = vunpack.c.h.bf16 %v565
          %v577 = vunpack.c.l.bf16 %v566
          %v578 = vunpack.c.h.bf16 %v566
          %v579 = vunpack.c.l.bf16 %v567
          %v580 = vunpack.c.h.bf16 %v567
          %v581 = vunpack.c.l.bf16 %v568
          %v582 = vunpack.c.h.bf16 %v568
          %v583 = vunpack.c.l.bf16 %v569
          %v584 = vunpack.c.h.bf16 %v569
          %v585 = vunpack.c.l.bf16 %v570
          %v586 = vunpack.c.h.bf16 %v570
          %587 = vst [vmem:[#allocation2] sm:$0xff] %v571
          %588 = vst [vmem:[#allocation2 + $0x8] sm:$0xff] %v572
          %589 = vst [vmem:[#allocation2 + $0x10] sm:$0xff] %v573
          %590 = vst [vmem:[#allocation2 + $0x18] sm:$0xff] %v574
          %591 = vst [vmem:[#allocation2 + $0x20] sm:$0xff] %v575
          %592 = vst [vmem:[#allocation2 + $0x28] sm:$0xff] %v576
          %593 = vst [vmem:[#allocation2 + $0x30] sm:$0xff] %v577
          %594 = vst [vmem:[#allocation2 + $0x38] sm:$0xff] %v578
          %595 = vst [vmem:[#allocation2 + $0x40] sm:$0xff] %v579
          %596 = vst [vmem:[#allocation2 + $0x48] sm:$0xff] %v580
          %597 = vst [vmem:[#allocation2 + $0x50] sm:$0xff] %v581
          %598 = vst [vmem:[#allocation2 + $0x58] sm:$0xff] %v582
          %599 = vst [vmem:[#allocation2 + $0x60] sm:$0xff] %v583
          %600 = vst [vmem:[#allocation2 + $0x68] sm:$0xff] %v584
          %601 = vst [vmem:[#allocation2 + $0x70] sm:$0xff] %v585
          %602 = vst [vmem:[#allocation2 + $0x78] sm:$0xff] %v586
        $region84: #{transformer_lm_forward.2} parent=55 // pred_fallthru
          _
        %v603 = vld [vmem:[#allocation2] sm:$0xff]
        %v604 = vld [vmem:[#allocation2 + $0x8] sm:$0xff]
        %v605 = vld [vmem:[#allocation2 + $0x10] sm:$0xff]
        %v606 = vld [vmem:[#allocation2 + $0x18] sm:$0xff]
        %v607 = vld [vmem:[#allocation2 + $0x20] sm:$0xff]
        %v608 = vld [vmem:[#allocation2 + $0x28] sm:$0xff]
        %v609 = vld [vmem:[#allocation2 + $0x30] sm:$0xff]
        %v610 = vld [vmem:[#allocation2 + $0x38] sm:$0xff]
        %v611 = vld [vmem:[#allocation2 + $0x40] sm:$0xff]
        %v612 = vld [vmem:[#allocation2 + $0x48] sm:$0xff]
        %v613 = vld [vmem:[#allocation2 + $0x50] sm:$0xff]
        %v614 = vld [vmem:[#allocation2 + $0x58] sm:$0xff]
        %v615 = vld [vmem:[#allocation2 + $0x60] sm:$0xff]
        %v616 = vld [vmem:[#allocation2 + $0x68] sm:$0xff]
        %v617 = vld [vmem:[#allocation2 + $0x70] sm:$0xff]
        %v618 = vld [vmem:[#allocation2 + $0x78] sm:$0xff]
        %v619 = vpack.c.bf16 %v607, %v603
        %v620 = vpack.c.bf16 %v608, %v604
        %v621 = vpack.c.bf16 %v609, %v605
        %v622 = vpack.c.bf16 %v610, %v606
        %v623 = vpack.c.bf16 %v615, %v611
        %v624 = vpack.c.bf16 %v616, %v612
        %v625 = vpack.c.bf16 %v617, %v613
        %v626 = vpack.c.bf16 %v618, %v614
        %v627 = vld [vmem:[%s442] sm:$0xff]
        %v628 = vld [vmem:[%s442 + $0x8] sm:$0xff]
        %v629 = vld [vmem:[%s442 + $0x10] sm:$0xff]
        %v630 = vld [vmem:[%s442 + $0x18] sm:$0xff]
        %v631 = vld [vmem:[%s442 + $0x20] sm:$0xff]
        %v632 = vld [vmem:[%s442 + $0x28] sm:$0xff]
        %v633 = vld [vmem:[%s442 + $0x30] sm:$0xff]
        %v634 = vld [vmem:[%s442 + $0x38] sm:$0xff]
        %v635 = vld [vmem:[%s442 + $0x40] sm:$0xff]
        %v636 = vld [vmem:[%s442 + $0x48] sm:$0xff]
        %v637 = vld [vmem:[%s442 + $0x50] sm:$0xff]
        %v638 = vld [vmem:[%s442 + $0x58] sm:$0xff]
        %v639 = vld [vmem:[%s442 + $0x60] sm:$0xff]
        %v640 = vld [vmem:[%s442 + $0x68] sm:$0xff]
        %v641 = vld [vmem:[%s442 + $0x70] sm:$0xff]
        %v642 = vld [vmem:[%s442 + $0x78] sm:$0xff]
        %v643 = vld [vmem:[%s442 + $0x80] sm:$0xff]
        %v644 = vld [vmem:[%s442 + $0x88] sm:$0xff]
        %v645 = vld [vmem:[%s442 + $0x90] sm:$0xff]
        %v646 = vld [vmem:[%s442 + $0x98] sm:$0xff]
        %v647 = vld [vmem:[%s442 + $0xa0] sm:$0xff]
        %v648 = vld [vmem:[%s442 + $0xa8] sm:$0xff]
        %v649 = vld [vmem:[%s442 + $0xb0] sm:$0xff]
        %v650 = vld [vmem:[%s442 + $0xb8] sm:$0xff]
        %v651 = vld [vmem:[%s442 + $0xc0] sm:$0xff]
        %v652 = vld [vmem:[%s442 + $0xc8] sm:$0xff]
        %v653 = vld [vmem:[%s442 + $0xd0] sm:$0xff]
        %v654 = vld [vmem:[%s442 + $0xd8] sm:$0xff]
        %v655 = vld [vmem:[%s442 + $0xe0] sm:$0xff]
        %v656 = vld [vmem:[%s442 + $0xe8] sm:$0xff]
        %v657 = vld [vmem:[%s442 + $0xf0] sm:$0xff]
        %v658 = vld [vmem:[%s442 + $0xf8] sm:$0xff]
        %v659 = vld [vmem:[%s442 + $0x100] sm:$0xff]
        %v660 = vld [vmem:[%s442 + $0x108] sm:$0xff]
        %v661 = vld [vmem:[%s442 + $0x110] sm:$0xff]
        %v662 = vld [vmem:[%s442 + $0x118] sm:$0xff]
        %v663 = vld [vmem:[%s442 + $0x120] sm:$0xff]
        %v664 = vld [vmem:[%s442 + $0x128] sm:$0xff]
        %v665 = vld [vmem:[%s442 + $0x130] sm:$0xff]
        %v666 = vld [vmem:[%s442 + $0x138] sm:$0xff]
        %v667 = vld [vmem:[%s442 + $0x140] sm:$0xff]
        %v668 = vld [vmem:[%s442 + $0x148] sm:$0xff]
        %v669 = vld [vmem:[%s442 + $0x150] sm:$0xff]
        %v670 = vld [vmem:[%s442 + $0x158] sm:$0xff]
        %v671 = vld [vmem:[%s442 + $0x160] sm:$0xff]
        %v672 = vld [vmem:[%s442 + $0x168] sm:$0xff]
        %v673 = vld [vmem:[%s442 + $0x170] sm:$0xff]
        %v674 = vld [vmem:[%s442 + $0x178] sm:$0xff]
        %v675 = vld [vmem:[%s442 + $0x180] sm:$0xff]
        %v676 = vld [vmem:[%s442 + $0x188] sm:$0xff]
        %v677 = vld [vmem:[%s442 + $0x190] sm:$0xff]
        %v678 = vld [vmem:[%s442 + $0x198] sm:$0xff]
        %v679 = vld [vmem:[%s442 + $0x1a0] sm:$0xff]
        %v680 = vld [vmem:[%s442 + $0x1a8] sm:$0xff]
        %v681 = vld [vmem:[%s442 + $0x1b0] sm:$0xff]
        %v682 = vld [vmem:[%s442 + $0x1b8] sm:$0xff]
        %v683 = vld [vmem:[%s442 + $0x1c0] sm:$0xff]
        %v684 = vld [vmem:[%s442 + $0x1c8] sm:$0xff]
        %v685 = vld [vmem:[%s442 + $0x1d0] sm:$0xff]
        %v686 = vld [vmem:[%s442 + $0x1d8] sm:$0xff]
        %v687 = vld [vmem:[%s442 + $0x1e0] sm:$0xff]
        %v688 = vld [vmem:[%s442 + $0x1e8] sm:$0xff]
        %v689 = vld [vmem:[%s442 + $0x1f0] sm:$0xff]
        %v690 = vld [vmem:[%s442 + $0x1f8] sm:$0xff]
        %v691 = vld [vmem:[%s442 + $0x200] sm:$0xff]
        %v692 = vld [vmem:[%s442 + $0x208] sm:$0xff]
        %v693 = vld [vmem:[%s442 + $0x210] sm:$0xff]
        %v694 = vld [vmem:[%s442 + $0x218] sm:$0xff]
        %v695 = vld [vmem:[%s442 + $0x220] sm:$0xff]
        %v696 = vld [vmem:[%s442 + $0x228] sm:$0xff]
        %v697 = vld [vmem:[%s442 + $0x230] sm:$0xff]
        %v698 = vld [vmem:[%s442 + $0x238] sm:$0xff]
        %v699 = vld [vmem:[%s442 + $0x240] sm:$0xff]
        %v700 = vld [vmem:[%s442 + $0x248] sm:$0xff]
        %v701 = vld [vmem:[%s442 + $0x250] sm:$0xff]
        %v702 = vld [vmem:[%s442 + $0x258] sm:$0xff]
        %v703 = vld [vmem:[%s442 + $0x260] sm:$0xff]
        %v704 = vld [vmem:[%s442 + $0x268] sm:$0xff]
        %v705 = vld [vmem:[%s442 + $0x270] sm:$0xff]
        %v706 = vld [vmem:[%s442 + $0x278] sm:$0xff]
        %v707 = vld [vmem:[%s442 + $0x280] sm:$0xff]
        %v708 = vld [vmem:[%s442 + $0x288] sm:$0xff]
        %v709 = vld [vmem:[%s442 + $0x290] sm:$0xff]
        %v710 = vld [vmem:[%s442 + $0x298] sm:$0xff]
        %v711 = vld [vmem:[%s442 + $0x2a0] sm:$0xff]
        %v712 = vld [vmem:[%s442 + $0x2a8] sm:$0xff]
        %v713 = vld [vmem:[%s442 + $0x2b0] sm:$0xff]
        %v714 = vld [vmem:[%s442 + $0x2b8] sm:$0xff]
        %v715 = vld [vmem:[%s442 + $0x2c0] sm:$0xff]
        %v716 = vld [vmem:[%s442 + $0x2c8] sm:$0xff]
        %v717 = vld [vmem:[%s442 + $0x2d0] sm:$0xff]
        %v718 = vld [vmem:[%s442 + $0x2d8] sm:$0xff]
        %v719 = vld [vmem:[%s442 + $0x2e0] sm:$0xff]
        %v720 = vld [vmem:[%s442 + $0x2e8] sm:$0xff]
        %v721 = vld [vmem:[%s442 + $0x2f0] sm:$0xff]
        %v722 = vld [vmem:[%s442 + $0x2f8] sm:$0xff]
        %v723 = vld [vmem:[%s442 + $0x300] sm:$0xff]
        %v724 = vld [vmem:[%s442 + $0x308] sm:$0xff]
        %v725 = vld [vmem:[%s442 + $0x310] sm:$0xff]
        %v726 = vld [vmem:[%s442 + $0x318] sm:$0xff]
        %v727 = vld [vmem:[%s442 + $0x320] sm:$0xff]
        %v728 = vld [vmem:[%s442 + $0x328] sm:$0xff]
        %v729 = vld [vmem:[%s442 + $0x330] sm:$0xff]
        %v730 = vld [vmem:[%s442 + $0x338] sm:$0xff]
        %v731 = vld [vmem:[%s442 + $0x340] sm:$0xff]
        %v732 = vld [vmem:[%s442 + $0x348] sm:$0xff]
        %v733 = vld [vmem:[%s442 + $0x350] sm:$0xff]
        %v734 = vld [vmem:[%s442 + $0x358] sm:$0xff]
        %v735 = vld [vmem:[%s442 + $0x360] sm:$0xff]
        %v736 = vld [vmem:[%s442 + $0x368] sm:$0xff]
        %v737 = vld [vmem:[%s442 + $0x370] sm:$0xff]
        %v738 = vld [vmem:[%s442 + $0x378] sm:$0xff]
        %v739 = vld [vmem:[%s442 + $0x380] sm:$0xff]
        %v740 = vld [vmem:[%s442 + $0x388] sm:$0xff]
        %v741 = vld [vmem:[%s442 + $0x390] sm:$0xff]
        %v742 = vld [vmem:[%s442 + $0x398] sm:$0xff]
        %v743 = vld [vmem:[%s442 + $0x3a0] sm:$0xff]
        %v744 = vld [vmem:[%s442 + $0x3a8] sm:$0xff]
        %v745 = vld [vmem:[%s442 + $0x3b0] sm:$0xff]
        %v746 = vld [vmem:[%s442 + $0x3b8] sm:$0xff]
        %v747 = vld [vmem:[%s442 + $0x3c0] sm:$0xff]
        %v748 = vld [vmem:[%s442 + $0x3c8] sm:$0xff]
        %v749 = vld [vmem:[%s442 + $0x3d0] sm:$0xff]
        %v750 = vld [vmem:[%s442 + $0x3d8] sm:$0xff]
        %v751 = vld [vmem:[%s442 + $0x3e0] sm:$0xff]
        %v752 = vld [vmem:[%s442 + $0x3e8] sm:$0xff]
        %v753 = vld [vmem:[%s442 + $0x3f0] sm:$0xff]
        %v754 = vld [vmem:[%s442 + $0x3f8] sm:$0xff]
        %v755 = vld [vmem:[%s442 + $0x400] sm:$0xff]
        %v756 = vld [vmem:[%s442 + $0x408] sm:$0xff]
        %v757 = vld [vmem:[%s442 + $0x410] sm:$0xff]
        %v758 = vld [vmem:[%s442 + $0x418] sm:$0xff]
        %v759 = vld [vmem:[%s442 + $0x420] sm:$0xff]
        %v760 = vld [vmem:[%s442 + $0x428] sm:$0xff]
        %v761 = vld [vmem:[%s442 + $0x430] sm:$0xff]
        %v762 = vld [vmem:[%s442 + $0x438] sm:$0xff]
        %v763 = vld [vmem:[%s442 + $0x440] sm:$0xff]
        %v764 = vld [vmem:[%s442 + $0x448] sm:$0xff]
        %v765 = vld [vmem:[%s442 + $0x450] sm:$0xff]
        %v766 = vld [vmem:[%s442 + $0x458] sm:$0xff]
        %v767 = vld [vmem:[%s442 + $0x460] sm:$0xff]
        %v768 = vld [vmem:[%s442 + $0x468] sm:$0xff]
        %v769 = vld [vmem:[%s442 + $0x470] sm:$0xff]
        %v770 = vld [vmem:[%s442 + $0x478] sm:$0xff]
        %v771 = vld [vmem:[%s442 + $0x480] sm:$0xff]
        %v772 = vld [vmem:[%s442 + $0x488] sm:$0xff]
        %v773 = vld [vmem:[%s442 + $0x490] sm:$0xff]
        %v774 = vld [vmem:[%s442 + $0x498] sm:$0xff]
        %v775 = vld [vmem:[%s442 + $0x4a0] sm:$0xff]
        %v776 = vld [vmem:[%s442 + $0x4a8] sm:$0xff]
        %v777 = vld [vmem:[%s442 + $0x4b0] sm:$0xff]
        %v778 = vld [vmem:[%s442 + $0x4b8] sm:$0xff]
        %v779 = vld [vmem:[%s442 + $0x4c0] sm:$0xff]
        %v780 = vld [vmem:[%s442 + $0x4c8] sm:$0xff]
        %v781 = vld [vmem:[%s442 + $0x4d0] sm:$0xff]
        %v782 = vld [vmem:[%s442 + $0x4d8] sm:$0xff]
        %v783 = vld [vmem:[%s442 + $0x4e0] sm:$0xff]
        %v784 = vld [vmem:[%s442 + $0x4e8] sm:$0xff]
        %v785 = vld [vmem:[%s442 + $0x4f0] sm:$0xff]
        %v786 = vld [vmem:[%s442 + $0x4f8] sm:$0xff]
        %v787 = vld [vmem:[%s442 + $0x500] sm:$0xff]
        %v788 = vld [vmem:[%s442 + $0x508] sm:$0xff]
        %v789 = vld [vmem:[%s442 + $0x510] sm:$0xff]
        %v790 = vld [vmem:[%s442 + $0x518] sm:$0xff]
        %v791 = vld [vmem:[%s442 + $0x520] sm:$0xff]
        %v792 = vld [vmem:[%s442 + $0x528] sm:$0xff]
        %v793 = vld [vmem:[%s442 + $0x530] sm:$0xff]
        %v794 = vld [vmem:[%s442 + $0x538] sm:$0xff]
        %v795 = vld [vmem:[%s442 + $0x540] sm:$0xff]
        %v796 = vld [vmem:[%s442 + $0x548] sm:$0xff]
        %v797 = vld [vmem:[%s442 + $0x550] sm:$0xff]
        %v798 = vld [vmem:[%s442 + $0x558] sm:$0xff]
        %v799 = vld [vmem:[%s442 + $0x560] sm:$0xff]
        %v800 = vld [vmem:[%s442 + $0x568] sm:$0xff]
        %v801 = vld [vmem:[%s442 + $0x570] sm:$0xff]
        %v802 = vld [vmem:[%s442 + $0x578] sm:$0xff]
        %v803 = vld [vmem:[%s442 + $0x580] sm:$0xff]
        %v804 = vld [vmem:[%s442 + $0x588] sm:$0xff]
        %v805 = vld [vmem:[%s442 + $0x590] sm:$0xff]
        %v806 = vld [vmem:[%s442 + $0x598] sm:$0xff]
        %v807 = vld [vmem:[%s442 + $0x5a0] sm:$0xff]
        %v808 = vld [vmem:[%s442 + $0x5a8] sm:$0xff]
        %v809 = vld [vmem:[%s442 + $0x5b0] sm:$0xff]
        %v810 = vld [vmem:[%s442 + $0x5b8] sm:$0xff]
        %v811 = vld [vmem:[%s442 + $0x5c0] sm:$0xff]
        %v812 = vld [vmem:[%s442 + $0x5c8] sm:$0xff]
        %v813 = vld [vmem:[%s442 + $0x5d0] sm:$0xff]
        %v814 = vld [vmem:[%s442 + $0x5d8] sm:$0xff]
        %v815 = vld [vmem:[%s442 + $0x5e0] sm:$0xff]
        %v816 = vld [vmem:[%s442 + $0x5e8] sm:$0xff]
        %v817 = vld [vmem:[%s442 + $0x5f0] sm:$0xff]
        %v818 = vld [vmem:[%s442 + $0x5f8] sm:$0xff]
        %v819 = vld [vmem:[%s442 + $0x600] sm:$0xff]
        %v820 = vld [vmem:[%s442 + $0x608] sm:$0xff]
        %v821 = vld [vmem:[%s442 + $0x610] sm:$0xff]
        %v822 = vld [vmem:[%s442 + $0x618] sm:$0xff]
        %v823 = vld [vmem:[%s442 + $0x620] sm:$0xff]
        %v824 = vld [vmem:[%s442 + $0x628] sm:$0xff]
        %v825 = vld [vmem:[%s442 + $0x630] sm:$0xff]
        %v826 = vld [vmem:[%s442 + $0x638] sm:$0xff]
        %v827 = vld [vmem:[%s442 + $0x640] sm:$0xff]
        %v828 = vld [vmem:[%s442 + $0x648] sm:$0xff]
        %v829 = vld [vmem:[%s442 + $0x650] sm:$0xff]
        %v830 = vld [vmem:[%s442 + $0x658] sm:$0xff]
        %v831 = vld [vmem:[%s442 + $0x660] sm:$0xff]
        %v832 = vld [vmem:[%s442 + $0x668] sm:$0xff]
        %v833 = vld [vmem:[%s442 + $0x670] sm:$0xff]
        %v834 = vld [vmem:[%s442 + $0x678] sm:$0xff]
        %v835 = vld [vmem:[%s442 + $0x680] sm:$0xff]
        %v836 = vld [vmem:[%s442 + $0x688] sm:$0xff]
        %v837 = vld [vmem:[%s442 + $0x690] sm:$0xff]
        %v838 = vld [vmem:[%s442 + $0x698] sm:$0xff]
        %v839 = vld [vmem:[%s442 + $0x6a0] sm:$0xff]
        %v840 = vld [vmem:[%s442 + $0x6a8] sm:$0xff]
        %v841 = vld [vmem:[%s442 + $0x6b0] sm:$0xff]
        %v842 = vld [vmem:[%s442 + $0x6b8] sm:$0xff]
        %v843 = vld [vmem:[%s442 + $0x6c0] sm:$0xff]
        %v844 = vld [vmem:[%s442 + $0x6c8] sm:$0xff]
        %v845 = vld [vmem:[%s442 + $0x6d0] sm:$0xff]
        %v846 = vld [vmem:[%s442 + $0x6d8] sm:$0xff]
        %v847 = vld [vmem:[%s442 + $0x6e0] sm:$0xff]
        %v848 = vld [vmem:[%s442 + $0x6e8] sm:$0xff]
        %v849 = vld [vmem:[%s442 + $0x6f0] sm:$0xff]
        %v850 = vld [vmem:[%s442 + $0x6f8] sm:$0xff]
        %v851 = vld [vmem:[%s442 + $0x700] sm:$0xff]
        %v852 = vld [vmem:[%s442 + $0x708] sm:$0xff]
        %v853 = vld [vmem:[%s442 + $0x710] sm:$0xff]
        %v854 = vld [vmem:[%s442 + $0x718] sm:$0xff]
        %v855 = vld [vmem:[%s442 + $0x720] sm:$0xff]
        %v856 = vld [vmem:[%s442 + $0x728] sm:$0xff]
        %v857 = vld [vmem:[%s442 + $0x730] sm:$0xff]
        %v858 = vld [vmem:[%s442 + $0x738] sm:$0xff]
        %v859 = vld [vmem:[%s442 + $0x740] sm:$0xff]
        %v860 = vld [vmem:[%s442 + $0x748] sm:$0xff]
        %v861 = vld [vmem:[%s442 + $0x750] sm:$0xff]
        %v862 = vld [vmem:[%s442 + $0x758] sm:$0xff]
        %v863 = vld [vmem:[%s442 + $0x760] sm:$0xff]
        %v864 = vld [vmem:[%s442 + $0x768] sm:$0xff]
        %v865 = vld [vmem:[%s442 + $0x770] sm:$0xff]
        %v866 = vld [vmem:[%s442 + $0x778] sm:$0xff]
        %v867 = vld [vmem:[%s442 + $0x780] sm:$0xff]
        %v868 = vld [vmem:[%s442 + $0x788] sm:$0xff]
        %v869 = vld [vmem:[%s442 + $0x790] sm:$0xff]
        %v870 = vld [vmem:[%s442 + $0x798] sm:$0xff]
        %v871 = vld [vmem:[%s442 + $0x7a0] sm:$0xff]
        %v872 = vld [vmem:[%s442 + $0x7a8] sm:$0xff]
        %v873 = vld [vmem:[%s442 + $0x7b0] sm:$0xff]
        %v874 = vld [vmem:[%s442 + $0x7b8] sm:$0xff]
        %v875 = vld [vmem:[%s442 + $0x7c0] sm:$0xff]
        %v876 = vld [vmem:[%s442 + $0x7c8] sm:$0xff]
        %v877 = vld [vmem:[%s442 + $0x7d0] sm:$0xff]
        %v878 = vld [vmem:[%s442 + $0x7d8] sm:$0xff]
        %v879 = vld [vmem:[%s442 + $0x7e0] sm:$0xff]
        %v880 = vld [vmem:[%s442 + $0x7e8] sm:$0xff]
        %v881 = vld [vmem:[%s442 + $0x7f0] sm:$0xff]
        %v882 = vld [vmem:[%s442 + $0x7f8] sm:$0xff]
        %v883 = vld [vmem:[%s442 + $0x800] sm:$0xff]
        %v884 = vld [vmem:[%s442 + $0x808] sm:$0xff]
        %v885 = vld [vmem:[%s442 + $0x810] sm:$0xff]
        %v886 = vld [vmem:[%s442 + $0x818] sm:$0xff]
        %v887 = vld [vmem:[%s442 + $0x820] sm:$0xff]
        %v888 = vld [vmem:[%s442 + $0x828] sm:$0xff]
        %v889 = vld [vmem:[%s442 + $0x830] sm:$0xff]
        %v890 = vld [vmem:[%s442 + $0x838] sm:$0xff]
        %v891 = vld [vmem:[%s442 + $0x840] sm:$0xff]
        %v892 = vld [vmem:[%s442 + $0x848] sm:$0xff]
        %v893 = vld [vmem:[%s442 + $0x850] sm:$0xff]
        %v894 = vld [vmem:[%s442 + $0x858] sm:$0xff]
        %v895 = vld [vmem:[%s442 + $0x860] sm:$0xff]
        %v896 = vld [vmem:[%s442 + $0x868] sm:$0xff]
        %v897 = vld [vmem:[%s442 + $0x870] sm:$0xff]
        %v898 = vld [vmem:[%s442 + $0x878] sm:$0xff]
        %v899 = vld [vmem:[%s442 + $0x880] sm:$0xff]
        %v900 = vld [vmem:[%s442 + $0x888] sm:$0xff]
        %v901 = vld [vmem:[%s442 + $0x890] sm:$0xff]
        %v902 = vld [vmem:[%s442 + $0x898] sm:$0xff]
        %v903 = vld [vmem:[%s442 + $0x8a0] sm:$0xff]
        %v904 = vld [vmem:[%s442 + $0x8a8] sm:$0xff]
        %v905 = vld [vmem:[%s442 + $0x8b0] sm:$0xff]
        %v906 = vld [vmem:[%s442 + $0x8b8] sm:$0xff]
        %v907 = vld [vmem:[%s442 + $0x8c0] sm:$0xff]
        %v908 = vld [vmem:[%s442 + $0x8c8] sm:$0xff]
        %v909 = vld [vmem:[%s442 + $0x8d0] sm:$0xff]
        %v910 = vld [vmem:[%s442 + $0x8d8] sm:$0xff]
        %v911 = vld [vmem:[%s442 + $0x8e0] sm:$0xff]
        %v912 = vld [vmem:[%s442 + $0x8e8] sm:$0xff]
        %v913 = vld [vmem:[%s442 + $0x8f0] sm:$0xff]
        %v914 = vld [vmem:[%s442 + $0x8f8] sm:$0xff]
        %v915 = vld [vmem:[%s442 + $0x900] sm:$0xff]
        %v916 = vld [vmem:[%s442 + $0x908] sm:$0xff]
        %v917 = vld [vmem:[%s442 + $0x910] sm:$0xff]
        %v918 = vld [vmem:[%s442 + $0x918] sm:$0xff]
        %v919 = vld [vmem:[%s442 + $0x920] sm:$0xff]
        %v920 = vld [vmem:[%s442 + $0x928] sm:$0xff]
        %v921 = vld [vmem:[%s442 + $0x930] sm:$0xff]
        %v922 = vld [vmem:[%s442 + $0x938] sm:$0xff]
        %v923 = vld [vmem:[%s442 + $0x940] sm:$0xff]
        %v924 = vld [vmem:[%s442 + $0x948] sm:$0xff]
        %v925 = vld [vmem:[%s442 + $0x950] sm:$0xff]
        %v926 = vld [vmem:[%s442 + $0x958] sm:$0xff]
        %v927 = vld [vmem:[%s442 + $0x960] sm:$0xff]
        %v928 = vld [vmem:[%s442 + $0x968] sm:$0xff]
        %v929 = vld [vmem:[%s442 + $0x970] sm:$0xff]
        %v930 = vld [vmem:[%s442 + $0x978] sm:$0xff]
        %v931 = vld [vmem:[%s442 + $0x980] sm:$0xff]
        %v932 = vld [vmem:[%s442 + $0x988] sm:$0xff]
        %v933 = vld [vmem:[%s442 + $0x990] sm:$0xff]
        %v934 = vld [vmem:[%s442 + $0x998] sm:$0xff]
        %v935 = vld [vmem:[%s442 + $0x9a0] sm:$0xff]
        %v936 = vld [vmem:[%s442 + $0x9a8] sm:$0xff]
        %v937 = vld [vmem:[%s442 + $0x9b0] sm:$0xff]
        %v938 = vld [vmem:[%s442 + $0x9b8] sm:$0xff]
        %v939 = vld [vmem:[%s442 + $0x9c0] sm:$0xff]
        %v940 = vld [vmem:[%s442 + $0x9c8] sm:$0xff]
        %v941 = vld [vmem:[%s442 + $0x9d0] sm:$0xff]
        %v942 = vld [vmem:[%s442 + $0x9d8] sm:$0xff]
        %v943 = vld [vmem:[%s442 + $0x9e0] sm:$0xff]
        %v944 = vld [vmem:[%s442 + $0x9e8] sm:$0xff]
        %v945 = vld [vmem:[%s442 + $0x9f0] sm:$0xff]
        %v946 = vld [vmem:[%s442 + $0x9f8] sm:$0xff]
        %v947 = vld [vmem:[%s442 + $0xa00] sm:$0xff]
        %v948 = vld [vmem:[%s442 + $0xa08] sm:$0xff]
        %v949 = vld [vmem:[%s442 + $0xa10] sm:$0xff]
        %v950 = vld [vmem:[%s442 + $0xa18] sm:$0xff]
        %v951 = vld [vmem:[%s442 + $0xa20] sm:$0xff]
        %v952 = vld [vmem:[%s442 + $0xa28] sm:$0xff]
        %v953 = vld [vmem:[%s442 + $0xa30] sm:$0xff]
        %v954 = vld [vmem:[%s442 + $0xa38] sm:$0xff]
        %v955 = vld [vmem:[%s442 + $0xa40] sm:$0xff]
        %v956 = vld [vmem:[%s442 + $0xa48] sm:$0xff]
        %v957 = vld [vmem:[%s442 + $0xa50] sm:$0xff]
        %v958 = vld [vmem:[%s442 + $0xa58] sm:$0xff]
        %v959 = vld [vmem:[%s442 + $0xa60] sm:$0xff]
        %v960 = vld [vmem:[%s442 + $0xa68] sm:$0xff]
        %v961 = vld [vmem:[%s442 + $0xa70] sm:$0xff]
        %v962 = vld [vmem:[%s442 + $0xa78] sm:$0xff]
        %v963 = vld [vmem:[%s442 + $0xa80] sm:$0xff]
        %v964 = vld [vmem:[%s442 + $0xa88] sm:$0xff]
        %v965 = vld [vmem:[%s442 + $0xa90] sm:$0xff]
        %v966 = vld [vmem:[%s442 + $0xa98] sm:$0xff]
        %v967 = vld [vmem:[%s442 + $0xaa0] sm:$0xff]
        %v968 = vld [vmem:[%s442 + $0xaa8] sm:$0xff]
        %v969 = vld [vmem:[%s442 + $0xab0] sm:$0xff]
        %v970 = vld [vmem:[%s442 + $0xab8] sm:$0xff]
        %v971 = vld [vmem:[%s442 + $0xac0] sm:$0xff]
        %v972 = vld [vmem:[%s442 + $0xac8] sm:$0xff]
        %v973 = vld [vmem:[%s442 + $0xad0] sm:$0xff]
        %v974 = vld [vmem:[%s442 + $0xad8] sm:$0xff]
        %v975 = vld [vmem:[%s442 + $0xae0] sm:$0xff]
        %v976 = vld [vmem:[%s442 + $0xae8] sm:$0xff]
        %v977 = vld [vmem:[%s442 + $0xaf0] sm:$0xff]
        %v978 = vld [vmem:[%s442 + $0xaf8] sm:$0xff]
        %v979 = vld [vmem:[%s442 + $0xb00] sm:$0xff]
        %v980 = vld [vmem:[%s442 + $0xb08] sm:$0xff]
        %v981 = vld [vmem:[%s442 + $0xb10] sm:$0xff]
        %v982 = vld [vmem:[%s442 + $0xb18] sm:$0xff]
        %v983 = vld [vmem:[%s442 + $0xb20] sm:$0xff]
        %v984 = vld [vmem:[%s442 + $0xb28] sm:$0xff]
        %v985 = vld [vmem:[%s442 + $0xb30] sm:$0xff]
        %v986 = vld [vmem:[%s442 + $0xb38] sm:$0xff]
        %v987 = vld [vmem:[%s442 + $0xb40] sm:$0xff]
        %v988 = vld [vmem:[%s442 + $0xb48] sm:$0xff]
        %v989 = vld [vmem:[%s442 + $0xb50] sm:$0xff]
        %v990 = vld [vmem:[%s442 + $0xb58] sm:$0xff]
        %v991 = vld [vmem:[%s442 + $0xb60] sm:$0xff]
        %v992 = vld [vmem:[%s442 + $0xb68] sm:$0xff]
        %v993 = vld [vmem:[%s442 + $0xb70] sm:$0xff]
        %v994 = vld [vmem:[%s442 + $0xb78] sm:$0xff]
        %v995 = vld [vmem:[%s442 + $0xb80] sm:$0xff]
        %v996 = vld [vmem:[%s442 + $0xb88] sm:$0xff]
        %v997 = vld [vmem:[%s442 + $0xb90] sm:$0xff]
        %v998 = vld [vmem:[%s442 + $0xb98] sm:$0xff]
        %v999 = vld [vmem:[%s442 + $0xba0] sm:$0xff]
        %v1000 = vld [vmem:[%s442 + $0xba8] sm:$0xff]
        %v1001 = vld [vmem:[%s442 + $0xbb0] sm:$0xff]
        %v1002 = vld [vmem:[%s442 + $0xbb8] sm:$0xff]
        %v1003 = vld [vmem:[%s442 + $0xbc0] sm:$0xff]
        %v1004 = vld [vmem:[%s442 + $0xbc8] sm:$0xff]
        %v1005 = vld [vmem:[%s442 + $0xbd0] sm:$0xff]
        %v1006 = vld [vmem:[%s442 + $0xbd8] sm:$0xff]
        %v1007 = vld [vmem:[%s442 + $0xbe0] sm:$0xff]
        %v1008 = vld [vmem:[%s442 + $0xbe8] sm:$0xff]
        %v1009 = vld [vmem:[%s442 + $0xbf0] sm:$0xff]
        %v1010 = vld [vmem:[%s442 + $0xbf8] sm:$0xff]
        %v1011 = vld [vmem:[%s452] sm:$0xff]
        %v1012 = vld [vmem:[%s452 + $0x8] sm:$0xf]
        %v1015 = vperm.slane %v1011, 0
        %v1016 = vperm.slane %v1011, 1
        %v1017 = vperm.slane %v1011, 2
        %v1018 = vperm.slane %v1011, 3
        %v1019 = vperm.slane %v1011, 4
        %v1020 = vperm.slane %v1011, 5
        %v1021 = vperm.slane %v1011, 6
        %v1022 = vperm.slane %v1011, 7
        %v1023 = vperm.slane %v1012, 0
        %v1024 = vperm.slane %v1012, 1
        %v1025 = vperm.slane %v1012, 2
        %v1026 = vperm.slane %v1012, 3
        %v1423 = vunpack.c.l.b16 %v627
        %v1424 = vunpack.c.h.b16 %v627
        %v1425 = vunpack.c.l.b16 %v628
        %v1426 = vunpack.c.h.b16 %v628
        %v1427 = vunpack.c.l.b16 %v629
        %v1428 = vunpack.c.h.b16 %v629
        %v1429 = vunpack.c.l.b16 %v630
        %v1430 = vunpack.c.h.b16 %v630
        %v1431 = vunpack.c.l.b16 %v631
        %v1432 = vunpack.c.h.b16 %v631
        %v1433 = vunpack.c.l.b16 %v632
        %v1434 = vunpack.c.h.b16 %v632
        %v1435 = vunpack.c.l.b16 %v633
        %v1436 = vunpack.c.h.b16 %v633
        %v1437 = vunpack.c.l.b16 %v634
        %v1438 = vunpack.c.h.b16 %v634
        %v1439 = vunpack.c.l.b16 %v635
        %v1440 = vunpack.c.h.b16 %v635
        %v1441 = vunpack.c.l.b16 %v636
        %v1442 = vunpack.c.h.b16 %v636
        %v1443 = vunpack.c.l.b16 %v637
        %v1444 = vunpack.c.h.b16 %v637
        %v1445 = vunpack.c.l.b16 %v638
        %v1446 = vunpack.c.h.b16 %v638
        %v1447 = vunpack.c.l.b16 %v639
        %v1448 = vunpack.c.h.b16 %v639
        %v1449 = vunpack.c.l.b16 %v640
        %v1450 = vunpack.c.h.b16 %v640
        %v1451 = vunpack.c.l.b16 %v641
        %v1452 = vunpack.c.h.b16 %v641
        %v1453 = vunpack.c.l.b16 %v642
        %v1454 = vunpack.c.h.b16 %v642
        %v1455 = vunpack.c.l.b16 %v643
        %v1456 = vunpack.c.h.b16 %v643
        %v1457 = vunpack.c.l.b16 %v644
        %v1458 = vunpack.c.h.b16 %v644
        %v1459 = vunpack.c.l.b16 %v645
        %v1460 = vunpack.c.h.b16 %v645
        %v1461 = vunpack.c.l.b16 %v646
        %v1462 = vunpack.c.h.b16 %v646
        %v1463 = vunpack.c.l.b16 %v647
        %v1464 = vunpack.c.h.b16 %v647
        %v1465 = vunpack.c.l.b16 %v648
        %v1466 = vunpack.c.h.b16 %v648
        %v1467 = vunpack.c.l.b16 %v649
        %v1468 = vunpack.c.h.b16 %v649
        %v1469 = vunpack.c.l.b16 %v650
        %v1470 = vunpack.c.h.b16 %v650
        %v1471 = vunpack.c.l.b16 %v651
        %v1472 = vunpack.c.h.b16 %v651
        %v1473 = vunpack.c.l.b16 %v652
        %v1474 = vunpack.c.h.b16 %v652
        %v1475 = vunpack.c.l.b16 %v653
        %v1476 = vunpack.c.h.b16 %v653
        %v1477 = vunpack.c.l.b16 %v654
        %v1478 = vunpack.c.h.b16 %v654
        %v1479 = vunpack.c.l.b16 %v655
        %v1480 = vunpack.c.h.b16 %v655
        %v1481 = vunpack.c.l.b16 %v656
        %v1482 = vunpack.c.h.b16 %v656
        %v1483 = vunpack.c.l.b16 %v657
        %v1484 = vunpack.c.h.b16 %v657
        %v1485 = vunpack.c.l.b16 %v658
        %v1486 = vunpack.c.h.b16 %v658
        %v1487 = vunpack.c.l.b16 %v659
        %v1488 = vunpack.c.h.b16 %v659
        %v1489 = vunpack.c.l.b16 %v660
        %v1490 = vunpack.c.h.b16 %v660
        %v1491 = vunpack.c.l.b16 %v661
        %v1492 = vunpack.c.h.b16 %v661
        %v1493 = vunpack.c.l.b16 %v662
        %v1494 = vunpack.c.h.b16 %v662
        %v1495 = vunpack.c.l.b16 %v663
        %v1496 = vunpack.c.h.b16 %v663
        %v1497 = vunpack.c.l.b16 %v664
        %v1498 = vunpack.c.h.b16 %v664
        %v1499 = vunpack.c.l.b16 %v665
        %v1500 = vunpack.c.h.b16 %v665
        %v1501 = vunpack.c.l.b16 %v666
        %v1502 = vunpack.c.h.b16 %v666
        %v1503 = vunpack.c.l.b16 %v667
        %v1504 = vunpack.c.h.b16 %v667
        %v1505 = vunpack.c.l.b16 %v668
        %v1506 = vunpack.c.h.b16 %v668
        %v1507 = vunpack.c.l.b16 %v669
        %v1508 = vunpack.c.h.b16 %v669
        %v1509 = vunpack.c.l.b16 %v670
        %v1510 = vunpack.c.h.b16 %v670
        %v1511 = vunpack.c.l.b16 %v671
        %v1512 = vunpack.c.h.b16 %v671
        %v1513 = vunpack.c.l.b16 %v672
        %v1514 = vunpack.c.h.b16 %v672
        %v1515 = vunpack.c.l.b16 %v673
        %v1516 = vunpack.c.h.b16 %v673
        %v1517 = vunpack.c.l.b16 %v674
        %v1518 = vunpack.c.h.b16 %v674
        %v1519 = vunpack.c.l.b16 %v675
        %v1520 = vunpack.c.h.b16 %v675
        %v1521 = vunpack.c.l.b16 %v676
        %v1522 = vunpack.c.h.b16 %v676
        %v1523 = vunpack.c.l.b16 %v677
        %v1524 = vunpack.c.h.b16 %v677
        %v1525 = vunpack.c.l.b16 %v678
        %v1526 = vunpack.c.h.b16 %v678
        %v1527 = vunpack.c.l.b16 %v679
        %v1528 = vunpack.c.h.b16 %v679
        %v1529 = vunpack.c.l.b16 %v680
        %v1530 = vunpack.c.h.b16 %v680
        %v1531 = vunpack.c.l.b16 %v681
        %v1532 = vunpack.c.h.b16 %v681
        %v1533 = vunpack.c.l.b16 %v682
        %v1534 = vunpack.c.h.b16 %v682
        %v1535 = vunpack.c.l.b16 %v683
        %v1536 = vunpack.c.h.b16 %v683
        %v1537 = vunpack.c.l.b16 %v684
        %v1538 = vunpack.c.h.b16 %v684
        %v1539 = vunpack.c.l.b16 %v685
        %v1540 = vunpack.c.h.b16 %v685
        %v1541 = vunpack.c.l.b16 %v686
        %v1542 = vunpack.c.h.b16 %v686
        %v1543 = vunpack.c.l.b16 %v687
        %v1544 = vunpack.c.h.b16 %v687
        %v1545 = vunpack.c.l.b16 %v688
        %v1546 = vunpack.c.h.b16 %v688
        %v1547 = vunpack.c.l.b16 %v689
        %v1548 = vunpack.c.h.b16 %v689
        %v1549 = vunpack.c.l.b16 %v690
        %v1550 = vunpack.c.h.b16 %v690
        %v1551 = vunpack.c.l.b16 %v691
        %v1552 = vunpack.c.h.b16 %v691
        %v1553 = vunpack.c.l.b16 %v692
        %v1554 = vunpack.c.h.b16 %v692
        %v1555 = vunpack.c.l.b16 %v693
        %v1556 = vunpack.c.h.b16 %v693
        %v1557 = vunpack.c.l.b16 %v694
        %v1558 = vunpack.c.h.b16 %v694
        %v1559 = vunpack.c.l.b16 %v695
        %v1560 = vunpack.c.h.b16 %v695
        %v1561 = vunpack.c.l.b16 %v696
        %v1562 = vunpack.c.h.b16 %v696
        %v1563 = vunpack.c.l.b16 %v697
        %v1564 = vunpack.c.h.b16 %v697
        %v1565 = vunpack.c.l.b16 %v698
        %v1566 = vunpack.c.h.b16 %v698
        %v1567 = vunpack.c.l.b16 %v699
        %v1568 = vunpack.c.h.b16 %v699
        %v1569 = vunpack.c.l.b16 %v700
        %v1570 = vunpack.c.h.b16 %v700
        %v1571 = vunpack.c.l.b16 %v701
        %v1572 = vunpack.c.h.b16 %v701
        %v1573 = vunpack.c.l.b16 %v702
        %v1574 = vunpack.c.h.b16 %v702
        %v1575 = vunpack.c.l.b16 %v703
        %v1576 = vunpack.c.h.b16 %v703
        %v1577 = vunpack.c.l.b16 %v704
        %v1578 = vunpack.c.h.b16 %v704
        %v1579 = vunpack.c.l.b16 %v705
        %v1580 = vunpack.c.h.b16 %v705
        %v1581 = vunpack.c.l.b16 %v706
        %v1582 = vunpack.c.h.b16 %v706
        %v1583 = vunpack.c.l.b16 %v707
        %v1584 = vunpack.c.h.b16 %v707
        %v1585 = vunpack.c.l.b16 %v708
        %v1586 = vunpack.c.h.b16 %v708
        %v1587 = vunpack.c.l.b16 %v709
        %v1588 = vunpack.c.h.b16 %v709
        %v1589 = vunpack.c.l.b16 %v710
        %v1590 = vunpack.c.h.b16 %v710
        %v1591 = vunpack.c.l.b16 %v711
        %v1592 = vunpack.c.h.b16 %v711
        %v1593 = vunpack.c.l.b16 %v712
        %v1594 = vunpack.c.h.b16 %v712
        %v1595 = vunpack.c.l.b16 %v713
        %v1596 = vunpack.c.h.b16 %v713
        %v1597 = vunpack.c.l.b16 %v714
        %v1598 = vunpack.c.h.b16 %v714
        %v1599 = vunpack.c.l.b16 %v715
        %v1600 = vunpack.c.h.b16 %v715
        %v1601 = vunpack.c.l.b16 %v716
        %v1602 = vunpack.c.h.b16 %v716
        %v1603 = vunpack.c.l.b16 %v717
        %v1604 = vunpack.c.h.b16 %v717
        %v1605 = vunpack.c.l.b16 %v718
        %v1606 = vunpack.c.h.b16 %v718
        %v1607 = vunpack.c.l.b16 %v719
        %v1608 = vunpack.c.h.b16 %v719
        %v1609 = vunpack.c.l.b16 %v720
        %v1610 = vunpack.c.h.b16 %v720
        %v1611 = vunpack.c.l.b16 %v721
        %v1612 = vunpack.c.h.b16 %v721
        %v1613 = vunpack.c.l.b16 %v722
        %v1614 = vunpack.c.h.b16 %v722
        %v1615 = vunpack.c.l.b16 %v723
        %v1616 = vunpack.c.h.b16 %v723
        %v1617 = vunpack.c.l.b16 %v724
        %v1618 = vunpack.c.h.b16 %v724
        %v1619 = vunpack.c.l.b16 %v725
        %v1620 = vunpack.c.h.b16 %v725
        %v1621 = vunpack.c.l.b16 %v726
        %v1622 = vunpack.c.h.b16 %v726
        %v1623 = vunpack.c.l.b16 %v727
        %v1624 = vunpack.c.h.b16 %v727
        %v1625 = vunpack.c.l.b16 %v728
        %v1626 = vunpack.c.h.b16 %v728
        %v1627 = vunpack.c.l.b16 %v729
        %v1628 = vunpack.c.h.b16 %v729
        %v1629 = vunpack.c.l.b16 %v730
        %v1630 = vunpack.c.h.b16 %v730
        %v1631 = vunpack.c.l.b16 %v731
        %v1632 = vunpack.c.h.b16 %v731
        %v1633 = vunpack.c.l.b16 %v732
        %v1634 = vunpack.c.h.b16 %v732
        %v1635 = vunpack.c.l.b16 %v733
        %v1636 = vunpack.c.h.b16 %v733
        %v1637 = vunpack.c.l.b16 %v734
        %v1638 = vunpack.c.h.b16 %v734
        %v1639 = vunpack.c.l.b16 %v735
        %v1640 = vunpack.c.h.b16 %v735
        %v1641 = vunpack.c.l.b16 %v736
        %v1642 = vunpack.c.h.b16 %v736
        %v1643 = vunpack.c.l.b16 %v737
        %v1644 = vunpack.c.h.b16 %v737
        %v1645 = vunpack.c.l.b16 %v738
        %v1646 = vunpack.c.h.b16 %v738
        %v1647 = vunpack.c.l.b16 %v739
        %v1648 = vunpack.c.h.b16 %v739
        %v1649 = vunpack.c.l.b16 %v740
        %v1650 = vunpack.c.h.b16 %v740
        %v1651 = vunpack.c.l.b16 %v741
        %v1652 = vunpack.c.h.b16 %v741
        %v1653 = vunpack.c.l.b16 %v742
        %v1654 = vunpack.c.h.b16 %v742
        %v1655 = vunpack.c.l.b16 %v743
        %v1656 = vunpack.c.h.b16 %v743
        %v1657 = vunpack.c.l.b16 %v744
        %v1658 = vunpack.c.h.b16 %v744
        %v1659 = vunpack.c.l.b16 %v745
        %v1660 = vunpack.c.h.b16 %v745
        %v1661 = vunpack.c.l.b16 %v746
        %v1662 = vunpack.c.h.b16 %v746
        %v1663 = vunpack.c.l.b16 %v747
        %v1664 = vunpack.c.h.b16 %v747
        %v1665 = vunpack.c.l.b16 %v748
        %v1666 = vunpack.c.h.b16 %v748
        %v1667 = vunpack.c.l.b16 %v749
        %v1668 = vunpack.c.h.b16 %v749
        %v1669 = vunpack.c.l.b16 %v750
        %v1670 = vunpack.c.h.b16 %v750
        %v1671 = vunpack.c.l.b16 %v751
        %v1672 = vunpack.c.h.b16 %v751
        %v1673 = vunpack.c.l.b16 %v752
        %v1674 = vunpack.c.h.b16 %v752
        %v1675 = vunpack.c.l.b16 %v753
        %v1676 = vunpack.c.h.b16 %v753
        %v1677 = vunpack.c.l.b16 %v754
        %v1678 = vunpack.c.h.b16 %v754
        %v1679 = vunpack.c.l.b16 %v755
        %v1680 = vunpack.c.h.b16 %v755
        %v1681 = vunpack.c.l.b16 %v756
        %v1682 = vunpack.c.h.b16 %v756
        %v1683 = vunpack.c.l.b16 %v757
        %v1684 = vunpack.c.h.b16 %v757
        %v1685 = vunpack.c.l.b16 %v758
        %v1686 = vunpack.c.h.b16 %v758
        %v1687 = vunpack.c.l.b16 %v759
        %v1688 = vunpack.c.h.b16 %v759
        %v1689 = vunpack.c.l.b16 %v760
        %v1690 = vunpack.c.h.b16 %v760
        %v1691 = vunpack.c.l.b16 %v761
        %v1692 = vunpack.c.h.b16 %v761
        %v1693 = vunpack.c.l.b16 %v762
        %v1694 = vunpack.c.h.b16 %v762
        %v1695 = vunpack.c.l.b16 %v763
        %v1696 = vunpack.c.h.b16 %v763
        %v1697 = vunpack.c.l.b16 %v764
        %v1698 = vunpack.c.h.b16 %v764
        %v1699 = vunpack.c.l.b16 %v765
        %v1700 = vunpack.c.h.b16 %v765
        %v1701 = vunpack.c.l.b16 %v766
        %v1702 = vunpack.c.h.b16 %v766
        %v1703 = vunpack.c.l.b16 %v767
        %v1704 = vunpack.c.h.b16 %v767
        %v1705 = vunpack.c.l.b16 %v768
        %v1706 = vunpack.c.h.b16 %v768
        %v1707 = vunpack.c.l.b16 %v769
        %v1708 = vunpack.c.h.b16 %v769
        %v1709 = vunpack.c.l.b16 %v770
        %v1710 = vunpack.c.h.b16 %v770
        %v1711 = vunpack.c.l.b16 %v771
        %v1712 = vunpack.c.h.b16 %v771
        %v1713 = vunpack.c.l.b16 %v772
        %v1714 = vunpack.c.h.b16 %v772
        %v1715 = vunpack.c.l.b16 %v773
        %v1716 = vunpack.c.h.b16 %v773
        %v1717 = vunpack.c.l.b16 %v774
        %v1718 = vunpack.c.h.b16 %v774
        %v1719 = vunpack.c.l.b16 %v775
        %v1720 = vunpack.c.h.b16 %v775
        %v1721 = vunpack.c.l.b16 %v776
        %v1722 = vunpack.c.h.b16 %v776
        %v1723 = vunpack.c.l.b16 %v777
        %v1724 = vunpack.c.h.b16 %v777
        %v1725 = vunpack.c.l.b16 %v778
        %v1726 = vunpack.c.h.b16 %v778
        %v1727 = vunpack.c.l.b16 %v779
        %v1728 = vunpack.c.h.b16 %v779
        %v1729 = vunpack.c.l.b16 %v780
        %v1730 = vunpack.c.h.b16 %v780
        %v1731 = vunpack.c.l.b16 %v781
        %v1732 = vunpack.c.h.b16 %v781
        %v1733 = vunpack.c.l.b16 %v782
        %v1734 = vunpack.c.h.b16 %v782
        %v1735 = vunpack.c.l.b16 %v783
        %v1736 = vunpack.c.h.b16 %v783
        %v1737 = vunpack.c.l.b16 %v784
        %v1738 = vunpack.c.h.b16 %v784
        %v1739 = vunpack.c.l.b16 %v785
        %v1740 = vunpack.c.h.b16 %v785
        %v1741 = vunpack.c.l.b16 %v786
        %v1742 = vunpack.c.h.b16 %v786
        %v1743 = vunpack.c.l.b16 %v787
        %v1744 = vunpack.c.h.b16 %v787
        %v1745 = vunpack.c.l.b16 %v788
        %v1746 = vunpack.c.h.b16 %v788
        %v1747 = vunpack.c.l.b16 %v789
        %v1748 = vunpack.c.h.b16 %v789
        %v1749 = vunpack.c.l.b16 %v790
        %v1750 = vunpack.c.h.b16 %v790
        %v1751 = vunpack.c.l.b16 %v791
        %v1752 = vunpack.c.h.b16 %v791
        %v1753 = vunpack.c.l.b16 %v792
        %v1754 = vunpack.c.h.b16 %v792
        %v1755 = vunpack.c.l.b16 %v793
        %v1756 = vunpack.c.h.b16 %v793
        %v1757 = vunpack.c.l.b16 %v794
        %v1758 = vunpack.c.h.b16 %v794
        %v1759 = vunpack.c.l.b16 %v795
        %v1760 = vunpack.c.h.b16 %v795
        %v1761 = vunpack.c.l.b16 %v796
        %v1762 = vunpack.c.h.b16 %v796
        %v1763 = vunpack.c.l.b16 %v797
        %v1764 = vunpack.c.h.b16 %v797
        %v1765 = vunpack.c.l.b16 %v798
        %v1766 = vunpack.c.h.b16 %v798
        %v1767 = vunpack.c.l.b16 %v799
        %v1768 = vunpack.c.h.b16 %v799
        %v1769 = vunpack.c.l.b16 %v800
        %v1770 = vunpack.c.h.b16 %v800
        %v1771 = vunpack.c.l.b16 %v801
        %v1772 = vunpack.c.h.b16 %v801
        %v1773 = vunpack.c.l.b16 %v802
        %v1774 = vunpack.c.h.b16 %v802
        %v1775 = vunpack.c.l.b16 %v803
        %v1776 = vunpack.c.h.b16 %v803
        %v1777 = vunpack.c.l.b16 %v804
        %v1778 = vunpack.c.h.b16 %v804
        %v1779 = vunpack.c.l.b16 %v805
        %v1780 = vunpack.c.h.b16 %v805
        %v1781 = vunpack.c.l.b16 %v806
        %v1782 = vunpack.c.h.b16 %v806
        %v1783 = vunpack.c.l.b16 %v807
        %v1784 = vunpack.c.h.b16 %v807
        %v1785 = vunpack.c.l.b16 %v808
        %v1786 = vunpack.c.h.b16 %v808
        %v1787 = vunpack.c.l.b16 %v809
        %v1788 = vunpack.c.h.b16 %v809
        %v1789 = vunpack.c.l.b16 %v810
        %v1790 = vunpack.c.h.b16 %v810
        %v1791 = vunpack.c.l.b16 %v811
        %v1792 = vunpack.c.h.b16 %v811
        %v1793 = vunpack.c.l.b16 %v812
        %v1794 = vunpack.c.h.b16 %v812
        %v1795 = vunpack.c.l.b16 %v813
        %v1796 = vunpack.c.h.b16 %v813
        %v1797 = vunpack.c.l.b16 %v814
        %v1798 = vunpack.c.h.b16 %v814
        %v1799 = vunpack.c.l.b16 %v815
        %v1800 = vunpack.c.h.b16 %v815
        %v1801 = vunpack.c.l.b16 %v816
        %v1802 = vunpack.c.h.b16 %v816
        %v1803 = vunpack.c.l.b16 %v817
        %v1804 = vunpack.c.h.b16 %v817
        %v1805 = vunpack.c.l.b16 %v818
        %v1806 = vunpack.c.h.b16 %v818
        %v1807 = vunpack.c.l.b16 %v819
        %v1808 = vunpack.c.h.b16 %v819
        %v1809 = vunpack.c.l.b16 %v820
        %v1810 = vunpack.c.h.b16 %v820
        %v1811 = vunpack.c.l.b16 %v821
        %v1812 = vunpack.c.h.b16 %v821
        %v1813 = vunpack.c.l.b16 %v822
        %v1814 = vunpack.c.h.b16 %v822
        %v1815 = vunpack.c.l.b16 %v823
        %v1816 = vunpack.c.h.b16 %v823
        %v1817 = vunpack.c.l.b16 %v824
        %v1818 = vunpack.c.h.b16 %v824
        %v1819 = vunpack.c.l.b16 %v825
        %v1820 = vunpack.c.h.b16 %v825
        %v1821 = vunpack.c.l.b16 %v826
        %v1822 = vunpack.c.h.b16 %v826
        %v1823 = vunpack.c.l.b16 %v827
        %v1824 = vunpack.c.h.b16 %v827
        %v1825 = vunpack.c.l.b16 %v828
        %v1826 = vunpack.c.h.b16 %v828
        %v1827 = vunpack.c.l.b16 %v829
        %v1828 = vunpack.c.h.b16 %v829
        %v1829 = vunpack.c.l.b16 %v830
        %v1830 = vunpack.c.h.b16 %v830
        %v1831 = vunpack.c.l.b16 %v831
        %v1832 = vunpack.c.h.b16 %v831
        %v1833 = vunpack.c.l.b16 %v832
        %v1834 = vunpack.c.h.b16 %v832
        %v1835 = vunpack.c.l.b16 %v833
        %v1836 = vunpack.c.h.b16 %v833
        %v1837 = vunpack.c.l.b16 %v834
        %v1838 = vunpack.c.h.b16 %v834
        %v1839 = vunpack.c.l.b16 %v835
        %v1840 = vunpack.c.h.b16 %v835
        %v1841 = vunpack.c.l.b16 %v836
        %v1842 = vunpack.c.h.b16 %v836
        %v1843 = vunpack.c.l.b16 %v837
        %v1844 = vunpack.c.h.b16 %v837
        %v1845 = vunpack.c.l.b16 %v838
        %v1846 = vunpack.c.h.b16 %v838
        %v1847 = vunpack.c.l.b16 %v839
        %v1848 = vunpack.c.h.b16 %v839
        %v1849 = vunpack.c.l.b16 %v840
        %v1850 = vunpack.c.h.b16 %v840
        %v1851 = vunpack.c.l.b16 %v841
        %v1852 = vunpack.c.h.b16 %v841
        %v1853 = vunpack.c.l.b16 %v842
        %v1854 = vunpack.c.h.b16 %v842
        %v1855 = vunpack.c.l.b16 %v843
        %v1856 = vunpack.c.h.b16 %v843
        %v1857 = vunpack.c.l.b16 %v844
        %v1858 = vunpack.c.h.b16 %v844
        %v1859 = vunpack.c.l.b16 %v845
        %v1860 = vunpack.c.h.b16 %v845
        %v1861 = vunpack.c.l.b16 %v846
        %v1862 = vunpack.c.h.b16 %v846
        %v1863 = vunpack.c.l.b16 %v847
        %v1864 = vunpack.c.h.b16 %v847
        %v1865 = vunpack.c.l.b16 %v848
        %v1866 = vunpack.c.h.b16 %v848
        %v1867 = vunpack.c.l.b16 %v849
        %v1868 = vunpack.c.h.b16 %v849
        %v1869 = vunpack.c.l.b16 %v850
        %v1870 = vunpack.c.h.b16 %v850
        %v1871 = vunpack.c.l.b16 %v851
        %v1872 = vunpack.c.h.b16 %v851
        %v1873 = vunpack.c.l.b16 %v852
        %v1874 = vunpack.c.h.b16 %v852
        %v1875 = vunpack.c.l.b16 %v853
        %v1876 = vunpack.c.h.b16 %v853
        %v1877 = vunpack.c.l.b16 %v854
        %v1878 = vunpack.c.h.b16 %v854
        %v1879 = vunpack.c.l.b16 %v855
        %v1880 = vunpack.c.h.b16 %v855
        %v1881 = vunpack.c.l.b16 %v856
        %v1882 = vunpack.c.h.b16 %v856
        %v1883 = vunpack.c.l.b16 %v857
        %v1884 = vunpack.c.h.b16 %v857
        %v1885 = vunpack.c.l.b16 %v858
        %v1886 = vunpack.c.h.b16 %v858
        %v1887 = vunpack.c.l.b16 %v859
        %v1888 = vunpack.c.h.b16 %v859
        %v1889 = vunpack.c.l.b16 %v860
        %v1890 = vunpack.c.h.b16 %v860
        %v1891 = vunpack.c.l.b16 %v861
        %v1892 = vunpack.c.h.b16 %v861
        %v1893 = vunpack.c.l.b16 %v862
        %v1894 = vunpack.c.h.b16 %v862
        %v1895 = vunpack.c.l.b16 %v863
        %v1896 = vunpack.c.h.b16 %v863
        %v1897 = vunpack.c.l.b16 %v864
        %v1898 = vunpack.c.h.b16 %v864
        %v1899 = vunpack.c.l.b16 %v865
        %v1900 = vunpack.c.h.b16 %v865
        %v1901 = vunpack.c.l.b16 %v866
        %v1902 = vunpack.c.h.b16 %v866
        %v1903 = vunpack.c.l.b16 %v867
        %v1904 = vunpack.c.h.b16 %v867
        %v1905 = vunpack.c.l.b16 %v868
        %v1906 = vunpack.c.h.b16 %v868
        %v1907 = vunpack.c.l.b16 %v869
        %v1908 = vunpack.c.h.b16 %v869
        %v1909 = vunpack.c.l.b16 %v870
        %v1910 = vunpack.c.h.b16 %v870
        %v1911 = vunpack.c.l.b16 %v871
        %v1912 = vunpack.c.h.b16 %v871
        %v1913 = vunpack.c.l.b16 %v872
        %v1914 = vunpack.c.h.b16 %v872
        %v1915 = vunpack.c.l.b16 %v873
        %v1916 = vunpack.c.h.b16 %v873
        %v1917 = vunpack.c.l.b16 %v874
        %v1918 = vunpack.c.h.b16 %v874
        %v1919 = vunpack.c.l.b16 %v875
        %v1920 = vunpack.c.h.b16 %v875
        %v1921 = vunpack.c.l.b16 %v876
        %v1922 = vunpack.c.h.b16 %v876
        %v1923 = vunpack.c.l.b16 %v877
        %v1924 = vunpack.c.h.b16 %v877
        %v1925 = vunpack.c.l.b16 %v878
        %v1926 = vunpack.c.h.b16 %v878
        %v1927 = vunpack.c.l.b16 %v879
        %v1928 = vunpack.c.h.b16 %v879
        %v1929 = vunpack.c.l.b16 %v880
        %v1930 = vunpack.c.h.b16 %v880
        %v1931 = vunpack.c.l.b16 %v881
        %v1932 = vunpack.c.h.b16 %v881
        %v1933 = vunpack.c.l.b16 %v882
        %v1934 = vunpack.c.h.b16 %v882
        %v1935 = vunpack.c.l.b16 %v883
        %v1936 = vunpack.c.h.b16 %v883
        %v1937 = vunpack.c.l.b16 %v884
        %v1938 = vunpack.c.h.b16 %v884
        %v1939 = vunpack.c.l.b16 %v885
        %v1940 = vunpack.c.h.b16 %v885
        %v1941 = vunpack.c.l.b16 %v886
        %v1942 = vunpack.c.h.b16 %v886
        %v1943 = vunpack.c.l.b16 %v887
        %v1944 = vunpack.c.h.b16 %v887
        %v1945 = vunpack.c.l.b16 %v888
        %v1946 = vunpack.c.h.b16 %v888
        %v1947 = vunpack.c.l.b16 %v889
        %v1948 = vunpack.c.h.b16 %v889
        %v1949 = vunpack.c.l.b16 %v890
        %v1950 = vunpack.c.h.b16 %v890
        %v1951 = vunpack.c.l.b16 %v891
        %v1952 = vunpack.c.h.b16 %v891
        %v1953 = vunpack.c.l.b16 %v892
        %v1954 = vunpack.c.h.b16 %v892
        %v1955 = vunpack.c.l.b16 %v893
        %v1956 = vunpack.c.h.b16 %v893
        %v1957 = vunpack.c.l.b16 %v894
        %v1958 = vunpack.c.h.b16 %v894
        %v1959 = vunpack.c.l.b16 %v895
        %v1960 = vunpack.c.h.b16 %v895
        %v1961 = vunpack.c.l.b16 %v896
        %v1962 = vunpack.c.h.b16 %v896
        %v1963 = vunpack.c.l.b16 %v897
        %v1964 = vunpack.c.h.b16 %v897
        %v1965 = vunpack.c.l.b16 %v898
        %v1966 = vunpack.c.h.b16 %v898
        %v1967 = vunpack.c.l.b16 %v899
        %v1968 = vunpack.c.h.b16 %v899
        %v1969 = vunpack.c.l.b16 %v900
        %v1970 = vunpack.c.h.b16 %v900
        %v1971 = vunpack.c.l.b16 %v901
        %v1972 = vunpack.c.h.b16 %v901
        %v1973 = vunpack.c.l.b16 %v902
        %v1974 = vunpack.c.h.b16 %v902
        %v1975 = vunpack.c.l.b16 %v903
        %v1976 = vunpack.c.h.b16 %v903
        %v1977 = vunpack.c.l.b16 %v904
        %v1978 = vunpack.c.h.b16 %v904
        %v1979 = vunpack.c.l.b16 %v905
        %v1980 = vunpack.c.h.b16 %v905
        %v1981 = vunpack.c.l.b16 %v906
        %v1982 = vunpack.c.h.b16 %v906
        %v1983 = vunpack.c.l.b16 %v907
        %v1984 = vunpack.c.h.b16 %v907
        %v1985 = vunpack.c.l.b16 %v908
        %v1986 = vunpack.c.h.b16 %v908
        %v1987 = vunpack.c.l.b16 %v909
        %v1988 = vunpack.c.h.b16 %v909
        %v1989 = vunpack.c.l.b16 %v910
        %v1990 = vunpack.c.h.b16 %v910
        %v1991 = vunpack.c.l.b16 %v911
        %v1992 = vunpack.c.h.b16 %v911
        %v1993 = vunpack.c.l.b16 %v912
        %v1994 = vunpack.c.h.b16 %v912
        %v1995 = vunpack.c.l.b16 %v913
        %v1996 = vunpack.c.h.b16 %v913
        %v1997 = vunpack.c.l.b16 %v914
        %v1998 = vunpack.c.h.b16 %v914
        %v1999 = vunpack.c.l.b16 %v915
        %v2000 = vunpack.c.h.b16 %v915
        %v2001 = vunpack.c.l.b16 %v916
        %v2002 = vunpack.c.h.b16 %v916
        %v2003 = vunpack.c.l.b16 %v917
        %v2004 = vunpack.c.h.b16 %v917
        %v2005 = vunpack.c.l.b16 %v918
        %v2006 = vunpack.c.h.b16 %v918
        %v2007 = vunpack.c.l.b16 %v919
        %v2008 = vunpack.c.h.b16 %v919
        %v2009 = vunpack.c.l.b16 %v920
        %v2010 = vunpack.c.h.b16 %v920
        %v2011 = vunpack.c.l.b16 %v921
        %v2012 = vunpack.c.h.b16 %v921
        %v2013 = vunpack.c.l.b16 %v922
        %v2014 = vunpack.c.h.b16 %v922
        %v2015 = vunpack.c.l.b16 %v923
        %v2016 = vunpack.c.h.b16 %v923
        %v2017 = vunpack.c.l.b16 %v924
        %v2018 = vunpack.c.h.b16 %v924
        %v2019 = vunpack.c.l.b16 %v925
        %v2020 = vunpack.c.h.b16 %v925
        %v2021 = vunpack.c.l.b16 %v926
        %v2022 = vunpack.c.h.b16 %v926
        %v2023 = vunpack.c.l.b16 %v927
        %v2024 = vunpack.c.h.b16 %v927
        %v2025 = vunpack.c.l.b16 %v928
        %v2026 = vunpack.c.h.b16 %v928
        %v2027 = vunpack.c.l.b16 %v929
        %v2028 = vunpack.c.h.b16 %v929
        %v2029 = vunpack.c.l.b16 %v930
        %v2030 = vunpack.c.h.b16 %v930
        %v2031 = vunpack.c.l.b16 %v931
        %v2032 = vunpack.c.h.b16 %v931
        %v2033 = vunpack.c.l.b16 %v932
        %v2034 = vunpack.c.h.b16 %v932
        %v2035 = vunpack.c.l.b16 %v933
        %v2036 = vunpack.c.h.b16 %v933
        %v2037 = vunpack.c.l.b16 %v934
        %v2038 = vunpack.c.h.b16 %v934
        %v2039 = vunpack.c.l.b16 %v935
        %v2040 = vunpack.c.h.b16 %v935
        %v2041 = vunpack.c.l.b16 %v936
        %v2042 = vunpack.c.h.b16 %v936
        %v2043 = vunpack.c.l.b16 %v937
        %v2044 = vunpack.c.h.b16 %v937
        %v2045 = vunpack.c.l.b16 %v938
        %v2046 = vunpack.c.h.b16 %v938
        %v2047 = vunpack.c.l.b16 %v939
        %v2048 = vunpack.c.h.b16 %v939
        %v2049 = vunpack.c.l.b16 %v940
        %v2050 = vunpack.c.h.b16 %v940
        %v2051 = vunpack.c.l.b16 %v941
        %v2052 = vunpack.c.h.b16 %v941
        %v2053 = vunpack.c.l.b16 %v942
        %v2054 = vunpack.c.h.b16 %v942
        %v2055 = vunpack.c.l.b16 %v943
        %v2056 = vunpack.c.h.b16 %v943
        %v2057 = vunpack.c.l.b16 %v944
        %v2058 = vunpack.c.h.b16 %v944
        %v2059 = vunpack.c.l.b16 %v945
        %v2060 = vunpack.c.h.b16 %v945
        %v2061 = vunpack.c.l.b16 %v946
        %v2062 = vunpack.c.h.b16 %v946
        %v2063 = vunpack.c.l.b16 %v947
        %v2064 = vunpack.c.h.b16 %v947
        %v2065 = vunpack.c.l.b16 %v948
        %v2066 = vunpack.c.h.b16 %v948
        %v2067 = vunpack.c.l.b16 %v949
        %v2068 = vunpack.c.h.b16 %v949
        %v2069 = vunpack.c.l.b16 %v950
        %v2070 = vunpack.c.h.b16 %v950
        %v2071 = vunpack.c.l.b16 %v951
        %v2072 = vunpack.c.h.b16 %v951
        %v2073 = vunpack.c.l.b16 %v952
        %v2074 = vunpack.c.h.b16 %v952
        %v2075 = vunpack.c.l.b16 %v953
        %v2076 = vunpack.c.h.b16 %v953
        %v2077 = vunpack.c.l.b16 %v954
        %v2078 = vunpack.c.h.b16 %v954
        %v2079 = vunpack.c.l.b16 %v955
        %v2080 = vunpack.c.h.b16 %v955
        %v2081 = vunpack.c.l.b16 %v956
        %v2082 = vunpack.c.h.b16 %v956
        %v2083 = vunpack.c.l.b16 %v957
        %v2084 = vunpack.c.h.b16 %v957
        %v2085 = vunpack.c.l.b16 %v958
        %v2086 = vunpack.c.h.b16 %v958
        %v2087 = vunpack.c.l.b16 %v959
        %v2088 = vunpack.c.h.b16 %v959
        %v2089 = vunpack.c.l.b16 %v960
        %v2090 = vunpack.c.h.b16 %v960
        %v2091 = vunpack.c.l.b16 %v961
        %v2092 = vunpack.c.h.b16 %v961
        %v2093 = vunpack.c.l.b16 %v962
        %v2094 = vunpack.c.h.b16 %v962
        %v2095 = vunpack.c.l.b16 %v963
        %v2096 = vunpack.c.h.b16 %v963
        %v2097 = vunpack.c.l.b16 %v964
        %v2098 = vunpack.c.h.b16 %v964
        %v2099 = vunpack.c.l.b16 %v965
        %v2100 = vunpack.c.h.b16 %v965
        %v2101 = vunpack.c.l.b16 %v966
        %v2102 = vunpack.c.h.b16 %v966
        %v2103 = vunpack.c.l.b16 %v967
        %v2104 = vunpack.c.h.b16 %v967
        %v2105 = vunpack.c.l.b16 %v968
        %v2106 = vunpack.c.h.b16 %v968
        %v2107 = vunpack.c.l.b16 %v969
        %v2108 = vunpack.c.h.b16 %v969
        %v2109 = vunpack.c.l.b16 %v970
        %v2110 = vunpack.c.h.b16 %v970
        %v2111 = vunpack.c.l.b16 %v971
        %v2112 = vunpack.c.h.b16 %v971
        %v2113 = vunpack.c.l.b16 %v972
        %v2114 = vunpack.c.h.b16 %v972
        %v2115 = vunpack.c.l.b16 %v973
        %v2116 = vunpack.c.h.b16 %v973
        %v2117 = vunpack.c.l.b16 %v974
        %v2118 = vunpack.c.h.b16 %v974
        %v2119 = vunpack.c.l.b16 %v975
        %v2120 = vunpack.c.h.b16 %v975
        %v2121 = vunpack.c.l.b16 %v976
        %v2122 = vunpack.c.h.b16 %v976
        %v2123 = vunpack.c.l.b16 %v977
        %v2124 = vunpack.c.h.b16 %v977
        %v2125 = vunpack.c.l.b16 %v978
        %v2126 = vunpack.c.h.b16 %v978
        %v2127 = vunpack.c.l.b16 %v979
        %v2128 = vunpack.c.h.b16 %v979
        %v2129 = vunpack.c.l.b16 %v980
        %v2130 = vunpack.c.h.b16 %v980
        %v2131 = vunpack.c.l.b16 %v981
        %v2132 = vunpack.c.h.b16 %v981
        %v2133 = vunpack.c.l.b16 %v982
        %v2134 = vunpack.c.h.b16 %v982
        %v2135 = vunpack.c.l.b16 %v983
        %v2136 = vunpack.c.h.b16 %v983
        %v2137 = vunpack.c.l.b16 %v984
        %v2138 = vunpack.c.h.b16 %v984
        %v2139 = vunpack.c.l.b16 %v985
        %v2140 = vunpack.c.h.b16 %v985
        %v2141 = vunpack.c.l.b16 %v986
        %v2142 = vunpack.c.h.b16 %v986
        %v2143 = vunpack.c.l.b16 %v987
        %v2144 = vunpack.c.h.b16 %v987
        %v2145 = vunpack.c.l.b16 %v988
        %v2146 = vunpack.c.h.b16 %v988
        %v2147 = vunpack.c.l.b16 %v989
        %v2148 = vunpack.c.h.b16 %v989
        %v2149 = vunpack.c.l.b16 %v990
        %v2150 = vunpack.c.h.b16 %v990
        %v2151 = vunpack.c.l.b16 %v991
        %v2152 = vunpack.c.h.b16 %v991
        %v2153 = vunpack.c.l.b16 %v992
        %v2154 = vunpack.c.h.b16 %v992
        %v2155 = vunpack.c.l.b16 %v993
        %v2156 = vunpack.c.h.b16 %v993
        %v2157 = vunpack.c.l.b16 %v994
        %v2158 = vunpack.c.h.b16 %v994
        %v2159 = vunpack.c.l.b16 %v995
        %v2160 = vunpack.c.h.b16 %v995
        %v2161 = vunpack.c.l.b16 %v996
        %v2162 = vunpack.c.h.b16 %v996
        %v2163 = vunpack.c.l.b16 %v997
        %v2164 = vunpack.c.h.b16 %v997
        %v2165 = vunpack.c.l.b16 %v998
        %v2166 = vunpack.c.h.b16 %v998
        %v2167 = vunpack.c.l.b16 %v999
        %v2168 = vunpack.c.h.b16 %v999
        %v2169 = vunpack.c.l.b16 %v1000
        %v2170 = vunpack.c.h.b16 %v1000
        %v2171 = vunpack.c.l.b16 %v1001
        %v2172 = vunpack.c.h.b16 %v1001
        %v2173 = vunpack.c.l.b16 %v1002
        %v2174 = vunpack.c.h.b16 %v1002
        %v2175 = vunpack.c.l.b16 %v1003
        %v2176 = vunpack.c.h.b16 %v1003
        %v2177 = vunpack.c.l.b16 %v1004
        %v2178 = vunpack.c.h.b16 %v1004
        %v2179 = vunpack.c.l.b16 %v1005
        %v2180 = vunpack.c.h.b16 %v1005
        %v2181 = vunpack.c.l.b16 %v1006
        %v2182 = vunpack.c.h.b16 %v1006
        %v2183 = vunpack.c.l.b16 %v1007
        %v2184 = vunpack.c.h.b16 %v1007
        %v2185 = vunpack.c.l.b16 %v1008
        %v2186 = vunpack.c.h.b16 %v1008
        %v2187 = vunpack.c.l.b16 %v1009
        %v2188 = vunpack.c.h.b16 %v1009
        %v2189 = vunpack.c.l.b16 %v1010
        %v2190 = vunpack.c.h.b16 %v1010
        %v2191 = vpack.c.b16 %v1435, %v1423
        %v2192 = vpack.c.b16 %v1436, %v1424
        %v2193 = vpack.c.b16 %v1437, %v1425
        %v2194 = vpack.c.b16 %v1438, %v1426
        %v2195 = vpack.c.b16 %v1439, %v1427
        %v2196 = vpack.c.b16 %v1440, %v1428
        %v2197 = vpack.c.b16 %v1441, %v1429
        %v2198 = vpack.c.b16 %v1442, %v1430
        %v2199 = vpack.c.b16 %v1443, %v1431
        %v2200 = vpack.c.b16 %v1444, %v1432
        %v2201 = vpack.c.b16 %v1445, %v1433
        %v2202 = vpack.c.b16 %v1446, %v1434
        %v2203 = vpack.c.b16 %v1459, %v1447
        %v2204 = vpack.c.b16 %v1460, %v1448
        %v2205 = vpack.c.b16 %v1461, %v1449
        %v2206 = vpack.c.b16 %v1462, %v1450
        %v2207 = vpack.c.b16 %v1463, %v1451
        %v2208 = vpack.c.b16 %v1464, %v1452
        %v2209 = vpack.c.b16 %v1465, %v1453
        %v2210 = vpack.c.b16 %v1466, %v1454
        %v2211 = vpack.c.b16 %v1467, %v1455
        %v2212 = vpack.c.b16 %v1468, %v1456
        %v2213 = vpack.c.b16 %v1469, %v1457
        %v2214 = vpack.c.b16 %v1470, %v1458
        %v2215 = vpack.c.b16 %v1483, %v1471
        %v2216 = vpack.c.b16 %v1484, %v1472
        %v2217 = vpack.c.b16 %v1485, %v1473
        %v2218 = vpack.c.b16 %v1486, %v1474
        %v2219 = vpack.c.b16 %v1487, %v1475
        %v2220 = vpack.c.b16 %v1488, %v1476
        %v2221 = vpack.c.b16 %v1489, %v1477
        %v2222 = vpack.c.b16 %v1490, %v1478
        %v2223 = vpack.c.b16 %v1491, %v1479
        %v2224 = vpack.c.b16 %v1492, %v1480
        %v2225 = vpack.c.b16 %v1493, %v1481
        %v2226 = vpack.c.b16 %v1494, %v1482
        %v2227 = vpack.c.b16 %v1507, %v1495
        %v2228 = vpack.c.b16 %v1508, %v1496
        %v2229 = vpack.c.b16 %v1509, %v1497
        %v2230 = vpack.c.b16 %v1510, %v1498
        %v2231 = vpack.c.b16 %v1511, %v1499
        %v2232 = vpack.c.b16 %v1512, %v1500
        %v2233 = vpack.c.b16 %v1513, %v1501
        %v2234 = vpack.c.b16 %v1514, %v1502
        %v2235 = vpack.c.b16 %v1515, %v1503
        %v2236 = vpack.c.b16 %v1516, %v1504
        %v2237 = vpack.c.b16 %v1517, %v1505
        %v2238 = vpack.c.b16 %v1518, %v1506
        %v2239 = vpack.c.b16 %v1531, %v1519
        %v2240 = vpack.c.b16 %v1532, %v1520
        %v2241 = vpack.c.b16 %v1533, %v1521
        %v2242 = vpack.c.b16 %v1534, %v1522
        %v2243 = vpack.c.b16 %v1535, %v1523
        %v2244 = vpack.c.b16 %v1536, %v1524
        %v2245 = vpack.c.b16 %v1537, %v1525
        %v2246 = vpack.c.b16 %v1538, %v1526
        %v2247 = vpack.c.b16 %v1539, %v1527
        %v2248 = vpack.c.b16 %v1540, %v1528
        %v2249 = vpack.c.b16 %v1541, %v1529
        %v2250 = vpack.c.b16 %v1542, %v1530
        %v2251 = vpack.c.b16 %v1555, %v1543
        %v2252 = vpack.c.b16 %v1556, %v1544
        %v2253 = vpack.c.b16 %v1557, %v1545
        %v2254 = vpack.c.b16 %v1558, %v1546
        %v2255 = vpack.c.b16 %v1559, %v1547
        %v2256 = vpack.c.b16 %v1560, %v1548
        %v2257 = vpack.c.b16 %v1561, %v1549
        %v2258 = vpack.c.b16 %v1562, %v1550
        %v2259 = vpack.c.b16 %v1563, %v1551
        %v2260 = vpack.c.b16 %v1564, %v1552
        %v2261 = vpack.c.b16 %v1565, %v1553
        %v2262 = vpack.c.b16 %v1566, %v1554
        %v2263 = vpack.c.b16 %v1579, %v1567
        %v2264 = vpack.c.b16 %v1580, %v1568
        %v2265 = vpack.c.b16 %v1581, %v1569
        %v2266 = vpack.c.b16 %v1582, %v1570
        %v2267 = vpack.c.b16 %v1583, %v1571
        %v2268 = vpack.c.b16 %v1584, %v1572
        %v2269 = vpack.c.b16 %v1585, %v1573
        %v2270 = vpack.c.b16 %v1586, %v1574
        %v2271 = vpack.c.b16 %v1587, %v1575
        %v2272 = vpack.c.b16 %v1588, %v1576
        %v2273 = vpack.c.b16 %v1589, %v1577
        %v2274 = vpack.c.b16 %v1590, %v1578
        %v2275 = vpack.c.b16 %v1603, %v1591
        %v2276 = vpack.c.b16 %v1604, %v1592
        %v2277 = vpack.c.b16 %v1605, %v1593
        %v2278 = vpack.c.b16 %v1606, %v1594
        %v2279 = vpack.c.b16 %v1607, %v1595
        %v2280 = vpack.c.b16 %v1608, %v1596
        %v2281 = vpack.c.b16 %v1609, %v1597
        %v2282 = vpack.c.b16 %v1610, %v1598
        %v2283 = vpack.c.b16 %v1611, %v1599
        %v2284 = vpack.c.b16 %v1612, %v1600
        %v2285 = vpack.c.b16 %v1613, %v1601
        %v2286 = vpack.c.b16 %v1614, %v1602
        %v2287 = vpack.c.b16 %v1627, %v1615
        %v2288 = vpack.c.b16 %v1628, %v1616
        %v2289 = vpack.c.b16 %v1629, %v1617
        %v2290 = vpack.c.b16 %v1630, %v1618
        %v2291 = vpack.c.b16 %v1631, %v1619
        %v2292 = vpack.c.b16 %v1632, %v1620
        %v2293 = vpack.c.b16 %v1633, %v1621
        %v2294 = vpack.c.b16 %v1634, %v1622
        %v2295 = vpack.c.b16 %v1635, %v1623
        %v2296 = vpack.c.b16 %v1636, %v1624
        %v2297 = vpack.c.b16 %v1637, %v1625
        %v2298 = vpack.c.b16 %v1638, %v1626
        %v2299 = vpack.c.b16 %v1651, %v1639
        %v2300 = vpack.c.b16 %v1652, %v1640
        %v2301 = vpack.c.b16 %v1653, %v1641
        %v2302 = vpack.c.b16 %v1654, %v1642
        %v2303 = vpack.c.b16 %v1655, %v1643
        %v2304 = vpack.c.b16 %v1656, %v1644
        %v2305 = vpack.c.b16 %v1657, %v1645
        %v2306 = vpack.c.b16 %v1658, %v1646
        %v2307 = vpack.c.b16 %v1659, %v1647
        %v2308 = vpack.c.b16 %v1660, %v1648
        %v2309 = vpack.c.b16 %v1661, %v1649
        %v2310 = vpack.c.b16 %v1662, %v1650
        %v2311 = vpack.c.b16 %v1675, %v1663
        %v2312 = vpack.c.b16 %v1676, %v1664
        %v2313 = vpack.c.b16 %v1677, %v1665
        %v2314 = vpack.c.b16 %v1678, %v1666
        %v2315 = vpack.c.b16 %v1679, %v1667
        %v2316 = vpack.c.b16 %v1680, %v1668
        %v2317 = vpack.c.b16 %v1681, %v1669
        %v2318 = vpack.c.b16 %v1682, %v1670
        %v2319 = vpack.c.b16 %v1683, %v1671
        %v2320 = vpack.c.b16 %v1684, %v1672
        %v2321 = vpack.c.b16 %v1685, %v1673
        %v2322 = vpack.c.b16 %v1686, %v1674
        %v2323 = vpack.c.b16 %v1699, %v1687
        %v2324 = vpack.c.b16 %v1700, %v1688
        %v2325 = vpack.c.b16 %v1701, %v1689
        %v2326 = vpack.c.b16 %v1702, %v1690
        %v2327 = vpack.c.b16 %v1703, %v1691
        %v2328 = vpack.c.b16 %v1704, %v1692
        %v2329 = vpack.c.b16 %v1705, %v1693
        %v2330 = vpack.c.b16 %v1706, %v1694
        %v2331 = vpack.c.b16 %v1707, %v1695
        %v2332 = vpack.c.b16 %v1708, %v1696
        %v2333 = vpack.c.b16 %v1709, %v1697
        %v2334 = vpack.c.b16 %v1710, %v1698
        %v2335 = vpack.c.b16 %v1723, %v1711
        %v2336 = vpack.c.b16 %v1724, %v1712
        %v2337 = vpack.c.b16 %v1725, %v1713
        %v2338 = vpack.c.b16 %v1726, %v1714
        %v2339 = vpack.c.b16 %v1727, %v1715
        %v2340 = vpack.c.b16 %v1728, %v1716
        %v2341 = vpack.c.b16 %v1729, %v1717
        %v2342 = vpack.c.b16 %v1730, %v1718
        %v2343 = vpack.c.b16 %v1731, %v1719
        %v2344 = vpack.c.b16 %v1732, %v1720
        %v2345 = vpack.c.b16 %v1733, %v1721
        %v2346 = vpack.c.b16 %v1734, %v1722
        %v2347 = vpack.c.b16 %v1747, %v1735
        %v2348 = vpack.c.b16 %v1748, %v1736
        %v2349 = vpack.c.b16 %v1749, %v1737
        %v2350 = vpack.c.b16 %v1750, %v1738
        %v2351 = vpack.c.b16 %v1751, %v1739
        %v2352 = vpack.c.b16 %v1752, %v1740
        %v2353 = vpack.c.b16 %v1753, %v1741
        %v2354 = vpack.c.b16 %v1754, %v1742
        %v2355 = vpack.c.b16 %v1755, %v1743
        %v2356 = vpack.c.b16 %v1756, %v1744
        %v2357 = vpack.c.b16 %v1757, %v1745
        %v2358 = vpack.c.b16 %v1758, %v1746
        %v2359 = vpack.c.b16 %v1771, %v1759
        %v2360 = vpack.c.b16 %v1772, %v1760
        %v2361 = vpack.c.b16 %v1773, %v1761
        %v2362 = vpack.c.b16 %v1774, %v1762
        %v2363 = vpack.c.b16 %v1775, %v1763
        %v2364 = vpack.c.b16 %v1776, %v1764
        %v2365 = vpack.c.b16 %v1777, %v1765
        %v2366 = vpack.c.b16 %v1778, %v1766
        %v2367 = vpack.c.b16 %v1779, %v1767
        %v2368 = vpack.c.b16 %v1780, %v1768
        %v2369 = vpack.c.b16 %v1781, %v1769
        %v2370 = vpack.c.b16 %v1782, %v1770
        %v2371 = vpack.c.b16 %v1795, %v1783
        %v2372 = vpack.c.b16 %v1796, %v1784
        %v2373 = vpack.c.b16 %v1797, %v1785
        %v2374 = vpack.c.b16 %v1798, %v1786
        %v2375 = vpack.c.b16 %v1799, %v1787
        %v2376 = vpack.c.b16 %v1800, %v1788
        %v2377 = vpack.c.b16 %v1801, %v1789
        %v2378 = vpack.c.b16 %v1802, %v1790
        %v2379 = vpack.c.b16 %v1803, %v1791
        %v2380 = vpack.c.b16 %v1804, %v1792
        %v2381 = vpack.c.b16 %v1805, %v1793
        %v2382 = vpack.c.b16 %v1806, %v1794
        %v2383 = vpack.c.b16 %v1819, %v1807
        %v2384 = vpack.c.b16 %v1820, %v1808
        %v2385 = vpack.c.b16 %v1821, %v1809
        %v2386 = vpack.c.b16 %v1822, %v1810
        %v2387 = vpack.c.b16 %v1823, %v1811
        %v2388 = vpack.c.b16 %v1824, %v1812
        %v2389 = vpack.c.b16 %v1825, %v1813
        %v2390 = vpack.c.b16 %v1826, %v1814
        %v2391 = vpack.c.b16 %v1827, %v1815
        %v2392 = vpack.c.b16 %v1828, %v1816
        %v2393 = vpack.c.b16 %v1829, %v1817
        %v2394 = vpack.c.b16 %v1830, %v1818
        %v2395 = vpack.c.b16 %v1843, %v1831
        %v2396 = vpack.c.b16 %v1844, %v1832
        %v2397 = vpack.c.b16 %v1845, %v1833
        %v2398 = vpack.c.b16 %v1846, %v1834
        %v2399 = vpack.c.b16 %v1847, %v1835
        %v2400 = vpack.c.b16 %v1848, %v1836
        %v2401 = vpack.c.b16 %v1849, %v1837
        %v2402 = vpack.c.b16 %v1850, %v1838
        %v2403 = vpack.c.b16 %v1851, %v1839
        %v2404 = vpack.c.b16 %v1852, %v1840
        %v2405 = vpack.c.b16 %v1853, %v1841
        %v2406 = vpack.c.b16 %v1854, %v1842
        %v2407 = vpack.c.b16 %v1867, %v1855
        %v2408 = vpack.c.b16 %v1868, %v1856
        %v2409 = vpack.c.b16 %v1869, %v1857
        %v2410 = vpack.c.b16 %v1870, %v1858
        %v2411 = vpack.c.b16 %v1871, %v1859
        %v2412 = vpack.c.b16 %v1872, %v1860
        %v2413 = vpack.c.b16 %v1873, %v1861
        %v2414 = vpack.c.b16 %v1874, %v1862
        %v2415 = vpack.c.b16 %v1875, %v1863
        %v2416 = vpack.c.b16 %v1876, %v1864
        %v2417 = vpack.c.b16 %v1877, %v1865
        %v2418 = vpack.c.b16 %v1878, %v1866
        %v2419 = vpack.c.b16 %v1891, %v1879
        %v2420 = vpack.c.b16 %v1892, %v1880
        %v2421 = vpack.c.b16 %v1893, %v1881
        %v2422 = vpack.c.b16 %v1894, %v1882
        %v2423 = vpack.c.b16 %v1895, %v1883
        %v2424 = vpack.c.b16 %v1896, %v1884
        %v2425 = vpack.c.b16 %v1897, %v1885
        %v2426 = vpack.c.b16 %v1898, %v1886
        %v2427 = vpack.c.b16 %v1899, %v1887
        %v2428 = vpack.c.b16 %v1900, %v1888
        %v2429 = vpack.c.b16 %v1901, %v1889
        %v2430 = vpack.c.b16 %v1902, %v1890
        %v2431 = vpack.c.b16 %v1915, %v1903
        %v2432 = vpack.c.b16 %v1916, %v1904
        %v2433 = vpack.c.b16 %v1917, %v1905
        %v2434 = vpack.c.b16 %v1918, %v1906
        %v2435 = vpack.c.b16 %v1919, %v1907
        %v2436 = vpack.c.b16 %v1920, %v1908
        %v2437 = vpack.c.b16 %v1921, %v1909
        %v2438 = vpack.c.b16 %v1922, %v1910
        %v2439 = vpack.c.b16 %v1923, %v1911
        %v2440 = vpack.c.b16 %v1924, %v1912
        %v2441 = vpack.c.b16 %v1925, %v1913
        %v2442 = vpack.c.b16 %v1926, %v1914
        %v2443 = vpack.c.b16 %v1939, %v1927
        %v2444 = vpack.c.b16 %v1940, %v1928
        %v2445 = vpack.c.b16 %v1941, %v1929
        %v2446 = vpack.c.b16 %v1942, %v1930
        %v2447 = vpack.c.b16 %v1943, %v1931
        %v2448 = vpack.c.b16 %v1944, %v1932
        %v2449 = vpack.c.b16 %v1945, %v1933
        %v2450 = vpack.c.b16 %v1946, %v1934
        %v2451 = vpack.c.b16 %v1947, %v1935
        %v2452 = vpack.c.b16 %v1948, %v1936
        %v2453 = vpack.c.b16 %v1949, %v1937
        %v2454 = vpack.c.b16 %v1950, %v1938
        %v2455 = vpack.c.b16 %v1963, %v1951
        %v2456 = vpack.c.b16 %v1964, %v1952
        %v2457 = vpack.c.b16 %v1965, %v1953
        %v2458 = vpack.c.b16 %v1966, %v1954
        %v2459 = vpack.c.b16 %v1967, %v1955
        %v2460 = vpack.c.b16 %v1968, %v1956
        %v2461 = vpack.c.b16 %v1969, %v1957
        %v2462 = vpack.c.b16 %v1970, %v1958
        %v2463 = vpack.c.b16 %v1971, %v1959
        %v2464 = vpack.c.b16 %v1972, %v1960
        %v2465 = vpack.c.b16 %v1973, %v1961
        %v2466 = vpack.c.b16 %v1974, %v1962
        %v2467 = vpack.c.b16 %v1987, %v1975
        %v2468 = vpack.c.b16 %v1988, %v1976
        %v2469 = vpack.c.b16 %v1989, %v1977
        %v2470 = vpack.c.b16 %v1990, %v1978
        %v2471 = vpack.c.b16 %v1991, %v1979
        %v2472 = vpack.c.b16 %v1992, %v1980
        %v2473 = vpack.c.b16 %v1993, %v1981
        %v2474 = vpack.c.b16 %v1994, %v1982
        %v2475 = vpack.c.b16 %v1995, %v1983
        %v2476 = vpack.c.b16 %v1996, %v1984
        %v2477 = vpack.c.b16 %v1997, %v1985
        %v2478 = vpack.c.b16 %v1998, %v1986
        %v2479 = vpack.c.b16 %v2011, %v1999
        %v2480 = vpack.c.b16 %v2012, %v2000
        %v2481 = vpack.c.b16 %v2013, %v2001
        %v2482 = vpack.c.b16 %v2014, %v2002
        %v2483 = vpack.c.b16 %v2015, %v2003
        %v2484 = vpack.c.b16 %v2016, %v2004
        %v2485 = vpack.c.b16 %v2017, %v2005
        %v2486 = vpack.c.b16 %v2018, %v2006
        %v2487 = vpack.c.b16 %v2019, %v2007
        %v2488 = vpack.c.b16 %v2020, %v2008
        %v2489 = vpack.c.b16 %v2021, %v2009
        %v2490 = vpack.c.b16 %v2022, %v2010
        %v2491 = vpack.c.b16 %v2035, %v2023
        %v2492 = vpack.c.b16 %v2036, %v2024
        %v2493 = vpack.c.b16 %v2037, %v2025
        %v2494 = vpack.c.b16 %v2038, %v2026
        %v2495 = vpack.c.b16 %v2039, %v2027
        %v2496 = vpack.c.b16 %v2040, %v2028
        %v2497 = vpack.c.b16 %v2041, %v2029
        %v2498 = vpack.c.b16 %v2042, %v2030
        %v2499 = vpack.c.b16 %v2043, %v2031
        %v2500 = vpack.c.b16 %v2044, %v2032
        %v2501 = vpack.c.b16 %v2045, %v2033
        %v2502 = vpack.c.b16 %v2046, %v2034
        %v2503 = vpack.c.b16 %v2059, %v2047
        %v2504 = vpack.c.b16 %v2060, %v2048
        %v2505 = vpack.c.b16 %v2061, %v2049
        %v2506 = vpack.c.b16 %v2062, %v2050
        %v2507 = vpack.c.b16 %v2063, %v2051
        %v2508 = vpack.c.b16 %v2064, %v2052
        %v2509 = vpack.c.b16 %v2065, %v2053
        %v2510 = vpack.c.b16 %v2066, %v2054
        %v2511 = vpack.c.b16 %v2067, %v2055
        %v2512 = vpack.c.b16 %v2068, %v2056
        %v2513 = vpack.c.b16 %v2069, %v2057
        %v2514 = vpack.c.b16 %v2070, %v2058
        %v2515 = vpack.c.b16 %v2083, %v2071
        %v2516 = vpack.c.b16 %v2084, %v2072
        %v2517 = vpack.c.b16 %v2085, %v2073
        %v2518 = vpack.c.b16 %v2086, %v2074
        %v2519 = vpack.c.b16 %v2087, %v2075
        %v2520 = vpack.c.b16 %v2088, %v2076
        %v2521 = vpack.c.b16 %v2089, %v2077
        %v2522 = vpack.c.b16 %v2090, %v2078
        %v2523 = vpack.c.b16 %v2091, %v2079
        %v2524 = vpack.c.b16 %v2092, %v2080
        %v2525 = vpack.c.b16 %v2093, %v2081
        %v2526 = vpack.c.b16 %v2094, %v2082
        %v2527 = vpack.c.b16 %v2107, %v2095
        %v2528 = vpack.c.b16 %v2108, %v2096
        %v2529 = vpack.c.b16 %v2109, %v2097
        %v2530 = vpack.c.b16 %v2110, %v2098
        %v2531 = vpack.c.b16 %v2111, %v2099
        %v2532 = vpack.c.b16 %v2112, %v2100
        %v2533 = vpack.c.b16 %v2113, %v2101
        %v2534 = vpack.c.b16 %v2114, %v2102
        %v2535 = vpack.c.b16 %v2115, %v2103
        %v2536 = vpack.c.b16 %v2116, %v2104
        %v2537 = vpack.c.b16 %v2117, %v2105
        %v2538 = vpack.c.b16 %v2118, %v2106
        %v2539 = vpack.c.b16 %v2131, %v2119
        %v2540 = vpack.c.b16 %v2132, %v2120
        %v2541 = vpack.c.b16 %v2133, %v2121
        %v2542 = vpack.c.b16 %v2134, %v2122
        %v2543 = vpack.c.b16 %v2135, %v2123
        %v2544 = vpack.c.b16 %v2136, %v2124
        %v2545 = vpack.c.b16 %v2137, %v2125
        %v2546 = vpack.c.b16 %v2138, %v2126
        %v2547 = vpack.c.b16 %v2139, %v2127
        %v2548 = vpack.c.b16 %v2140, %v2128
        %v2549 = vpack.c.b16 %v2141, %v2129
        %v2550 = vpack.c.b16 %v2142, %v2130
        %v2551 = vpack.c.b16 %v2155, %v2143
        %v2552 = vpack.c.b16 %v2156, %v2144
        %v2553 = vpack.c.b16 %v2157, %v2145
        %v2554 = vpack.c.b16 %v2158, %v2146
        %v2555 = vpack.c.b16 %v2159, %v2147
        %v2556 = vpack.c.b16 %v2160, %v2148
        %v2557 = vpack.c.b16 %v2161, %v2149
        %v2558 = vpack.c.b16 %v2162, %v2150
        %v2559 = vpack.c.b16 %v2163, %v2151
        %v2560 = vpack.c.b16 %v2164, %v2152
        %v2561 = vpack.c.b16 %v2165, %v2153
        %v2562 = vpack.c.b16 %v2166, %v2154
        %v2563 = vpack.c.b16 %v2179, %v2167
        %v2564 = vpack.c.b16 %v2180, %v2168
        %v2565 = vpack.c.b16 %v2181, %v2169
        %v2566 = vpack.c.b16 %v2182, %v2170
        %v2567 = vpack.c.b16 %v2183, %v2171
        %v2568 = vpack.c.b16 %v2184, %v2172
        %v2569 = vpack.c.b16 %v2185, %v2173
        %v2570 = vpack.c.b16 %v2186, %v2174
        %v2571 = vpack.c.b16 %v2187, %v2175
        %v2572 = vpack.c.b16 %v2188, %v2176
        %v2573 = vpack.c.b16 %v2189, %v2177
        %v2574 = vpack.c.b16 %v2190, %v2178
        %2959 = vmatpush.bf16.msra.mxu0 %v2275
        %2960 = vmatpush.bf16.msra.mxu0 %v2263
        %2961 = vmatpush.bf16.msra.mxu0 %v2251
        %2962 = vmatpush.bf16.msra.mxu0 %v2239
        %2963 = vmatpush.bf16.msra.mxu0 %v2227
        %2964 = vmatpush.bf16.msra.mxu0 %v2215
        %2965 = vmatpush.bf16.msra.mxu0 %v2203
        %2966 = vmatpush.bf16.msra.mxu0 %v2191
        %2967 = vmatmul.bf16.gmra.mxu0 %v619
        %v2968 = vpop.f32.mrf.mxu0
        %v2969 = vadd.f32 %v1015, %v2968
        %v2970 = vpop.f32.mrf.mxu0
        %v2971 = vadd.f32 %v1015, %v2970
        %2972 = vmatmul.bf16.gmra.mxu0 %v623
        %v2973 = vpop.f32.mrf.mxu0
        %v2974 = vadd.f32 %v1015, %v2973
        %v2975 = vpop.f32.mrf.mxu0
        %v2976 = vadd.f32 %v1015, %v2975
        %2977 = vdwg.mxu0
        %2978 = vmatpush.bf16.msra.mxu0 %v2371
        %2979 = vmatpush.bf16.msra.mxu0 %v2359
        %2980 = vmatpush.bf16.msra.mxu0 %v2347
        %2981 = vmatpush.bf16.msra.mxu0 %v2335
        %2982 = vmatpush.bf16.msra.mxu0 %v2323
        %2983 = vmatpush.bf16.msra.mxu0 %v2311
        %2984 = vmatpush.bf16.msra.mxu0 %v2299
        %2985 = vmatpush.bf16.msra.mxu0 %v2287
        %2986 = vmatmul.bf16.gmra.mxu0 %v620
        %v2987 = vpop.f32.mrf.mxu0
        %v2988 = vadd.f32 %v2969, %v2987
        %v2989 = vpop.f32.mrf.mxu0
        %v2990 = vadd.f32 %v2971, %v2989
        %2991 = vmatmul.bf16.gmra.mxu0 %v624
        %v2992 = vpop.f32.mrf.mxu0
        %v2993 = vadd.f32 %v2974, %v2992
        %v2994 = vpop.f32.mrf.mxu0
        %v2995 = vadd.f32 %v2976, %v2994
        %2996 = vdwg.mxu0
        %2997 = vmatpush.bf16.msra.mxu0 %v2467
        %2998 = vmatpush.bf16.msra.mxu0 %v2455
        %2999 = vmatpush.bf16.msra.mxu0 %v2443
        %3000 = vmatpush.bf16.msra.mxu0 %v2431
        %3001 = vmatpush.bf16.msra.mxu0 %v2419
        %3002 = vmatpush.bf16.msra.mxu0 %v2407
        %3003 = vmatpush.bf16.msra.mxu0 %v2395
        %3004 = vmatpush.bf16.msra.mxu0 %v2383
        %3005 = vmatmul.bf16.gmra.mxu0 %v621
        %v3006 = vpop.f32.mrf.mxu0
        %v3007 = vadd.f32 %v2988, %v3006
        %v3008 = vpop.f32.mrf.mxu0
        %v3009 = vadd.f32 %v2990, %v3008
        %3010 = vmatmul.bf16.gmra.mxu0 %v625
        %v3011 = vpop.f32.mrf.mxu0
        %v3012 = vadd.f32 %v2993, %v3011
        %v3013 = vpop.f32.mrf.mxu0
        %v3014 = vadd.f32 %v2995, %v3013
        %3015 = vdwg.mxu0
        %3016 = vmatpush.bf16.msra.mxu0 %v2563
        %3017 = vmatpush.bf16.msra.mxu0 %v2551
        %3018 = vmatpush.bf16.msra.mxu0 %v2539
        %3019 = vmatpush.bf16.msra.mxu0 %v2527
        %3020 = vmatpush.bf16.msra.mxu0 %v2515
        %3021 = vmatpush.bf16.msra.mxu0 %v2503
        %3022 = vmatpush.bf16.msra.mxu0 %v2491
        %3023 = vmatpush.bf16.msra.mxu0 %v2479
        %3024 = vmatmul.bf16.gmra.mxu0 %v622
        %v3025 = vpop.f32.mrf.mxu0
        %v3026 = vadd.f32 %v3007, %v3025
        %v3027 = vpop.f32.mrf.mxu0
        %v3028 = vadd.f32 %v3009, %v3027
        %3029 = vmatmul.bf16.gmra.mxu0 %v626
        %v3030 = vpop.f32.mrf.mxu0
        %v3031 = vadd.f32 %v3012, %v3030
        %v3032 = vpop.f32.mrf.mxu0
        %v3033 = vadd.f32 %v3014, %v3032
        %3034 = vdwg.mxu0
        %3035 = vmatpush.bf16.msra.mxu0 %v2276
        %3036 = vmatpush.bf16.msra.mxu0 %v2264
        %3037 = vmatpush.bf16.msra.mxu0 %v2252
        %3038 = vmatpush.bf16.msra.mxu0 %v2240
        %3039 = vmatpush.bf16.msra.mxu0 %v2228
        %3040 = vmatpush.bf16.msra.mxu0 %v2216
        %3041 = vmatpush.bf16.msra.mxu0 %v2204
        %3042 = vmatpush.bf16.msra.mxu0 %v2192
        %3043 = vmatmul.bf16.gmra.mxu0 %v619
        %v3044 = vpop.f32.mrf.mxu0
        %v3045 = vadd.f32 %v1016, %v3044
        %v3046 = vpop.f32.mrf.mxu0
        %v3047 = vadd.f32 %v1016, %v3046
        %3048 = vmatmul.bf16.gmra.mxu0 %v623
        %v3049 = vpop.f32.mrf.mxu0
        %v3050 = vadd.f32 %v1016, %v3049
        %v3051 = vpop.f32.mrf.mxu0
        %v3052 = vadd.f32 %v1016, %v3051
        %3053 = vdwg.mxu0
        %3054 = vmatpush.bf16.msra.mxu0 %v2372
        %3055 = vmatpush.bf16.msra.mxu0 %v2360
        %3056 = vmatpush.bf16.msra.mxu0 %v2348
        %3057 = vmatpush.bf16.msra.mxu0 %v2336
        %3058 = vmatpush.bf16.msra.mxu0 %v2324
        %3059 = vmatpush.bf16.msra.mxu0 %v2312
        %3060 = vmatpush.bf16.msra.mxu0 %v2300
        %3061 = vmatpush.bf16.msra.mxu0 %v2288
        %3062 = vmatmul.bf16.gmra.mxu0 %v620
        %v3063 = vpop.f32.mrf.mxu0
        %v3064 = vadd.f32 %v3045, %v3063
        %v3065 = vpop.f32.mrf.mxu0
        %v3066 = vadd.f32 %v3047, %v3065
        %3067 = vmatmul.bf16.gmra.mxu0 %v624
        %v3068 = vpop.f32.mrf.mxu0
        %v3069 = vadd.f32 %v3050, %v3068
        %v3070 = vpop.f32.mrf.mxu0
        %v3071 = vadd.f32 %v3052, %v3070
        %3072 = vdwg.mxu0
        %3073 = vmatpush.bf16.msra.mxu0 %v2468
        %3074 = vmatpush.bf16.msra.mxu0 %v2456
        %3075 = vmatpush.bf16.msra.mxu0 %v2444
        %3076 = vmatpush.bf16.msra.mxu0 %v2432
        %3077 = vmatpush.bf16.msra.mxu0 %v2420
        %3078 = vmatpush.bf16.msra.mxu0 %v2408
        %3079 = vmatpush.bf16.msra.mxu0 %v2396
        %3080 = vmatpush.bf16.msra.mxu0 %v2384
        %3081 = vmatmul.bf16.gmra.mxu0 %v621
        %v3082 = vpop.f32.mrf.mxu0
        %v3083 = vadd.f32 %v3064, %v3082
        %v3084 = vpop.f32.mrf.mxu0
        %v3085 = vadd.f32 %v3066, %v3084
        %3086 = vmatmul.bf16.gmra.mxu0 %v625
        %v3087 = vpop.f32.mrf.mxu0
        %v3088 = vadd.f32 %v3069, %v3087
        %v3089 = vpop.f32.mrf.mxu0
        %v3090 = vadd.f32 %v3071, %v3089
        %3091 = vdwg.mxu0
        %3092 = vmatpush.bf16.msra.mxu0 %v2564
        %3093 = vmatpush.bf16.msra.mxu0 %v2552
        %3094 = vmatpush.bf16.msra.mxu0 %v2540
        %3095 = vmatpush.bf16.msra.mxu0 %v2528
        %3096 = vmatpush.bf16.msra.mxu0 %v2516
        %3097 = vmatpush.bf16.msra.mxu0 %v2504
        %3098 = vmatpush.bf16.msra.mxu0 %v2492
        %3099 = vmatpush.bf16.msra.mxu0 %v2480
        %3100 = vmatmul.bf16.gmra.mxu0 %v622
        %v3101 = vpop.f32.mrf.mxu0
        %v3102 = vadd.f32 %v3083, %v3101
        %v3103 = vpop.f32.mrf.mxu0
        %v3104 = vadd.f32 %v3085, %v3103
        %3105 = vmatmul.bf16.gmra.mxu0 %v626
        %v3106 = vpop.f32.mrf.mxu0
        %v3107 = vadd.f32 %v3088, %v3106
        %v3108 = vpop.f32.mrf.mxu0
        %v3109 = vadd.f32 %v3090, %v3108
        %3110 = vdwg.mxu0
        %3111 = vmatpush.bf16.msra.mxu0 %v2277
        %3112 = vmatpush.bf16.msra.mxu0 %v2265
        %3113 = vmatpush.bf16.msra.mxu0 %v2253
        %3114 = vmatpush.bf16.msra.mxu0 %v2241
        %3115 = vmatpush.bf16.msra.mxu0 %v2229
        %3116 = vmatpush.bf16.msra.mxu0 %v2217
        %3117 = vmatpush.bf16.msra.mxu0 %v2205
        %3118 = vmatpush.bf16.msra.mxu0 %v2193
        %3119 = vmatmul.bf16.gmra.mxu0 %v619
        %v3120 = vpop.f32.mrf.mxu0
        %v3121 = vadd.f32 %v1017, %v3120
        %v3122 = vpop.f32.mrf.mxu0
        %v3123 = vadd.f32 %v1017, %v3122
        %3124 = vmatmul.bf16.gmra.mxu0 %v623
        %v3125 = vpop.f32.mrf.mxu0
        %v3126 = vadd.f32 %v1017, %v3125
        %v3127 = vpop.f32.mrf.mxu0
        %v3128 = vadd.f32 %v1017, %v3127
        %3129 = vdwg.mxu0
        %3130 = vmatpush.bf16.msra.mxu0 %v2373
        %3131 = vmatpush.bf16.msra.mxu0 %v2361
        %3132 = vmatpush.bf16.msra.mxu0 %v2349
        %3133 = vmatpush.bf16.msra.mxu0 %v2337
        %3134 = vmatpush.bf16.msra.mxu0 %v2325
        %3135 = vmatpush.bf16.msra.mxu0 %v2313
        %3136 = vmatpush.bf16.msra.mxu0 %v2301
        %3137 = vmatpush.bf16.msra.mxu0 %v2289
        %3138 = vmatmul.bf16.gmra.mxu0 %v620
        %v3139 = vpop.f32.mrf.mxu0
        %v3140 = vadd.f32 %v3121, %v3139
        %v3141 = vpop.f32.mrf.mxu0
        %v3142 = vadd.f32 %v3123, %v3141
        %3143 = vmatmul.bf16.gmra.mxu0 %v624
        %v3144 = vpop.f32.mrf.mxu0
        %v3145 = vadd.f32 %v3126, %v3144
        %v3146 = vpop.f32.mrf.mxu0
        %v3147 = vadd.f32 %v3128, %v3146
        %3148 = vdwg.mxu0
        %3149 = vmatpush.bf16.msra.mxu0 %v2469
        %3150 = vmatpush.bf16.msra.mxu0 %v2457
        %3151 = vmatpush.bf16.msra.mxu0 %v2445
        %3152 = vmatpush.bf16.msra.mxu0 %v2433
        %3153 = vmatpush.bf16.msra.mxu0 %v2421
        %3154 = vmatpush.bf16.msra.mxu0 %v2409
        %3155 = vmatpush.bf16.msra.mxu0 %v2397
        %3156 = vmatpush.bf16.msra.mxu0 %v2385
        %3157 = vmatmul.bf16.gmra.mxu0 %v621
        %v3158 = vpop.f32.mrf.mxu0
        %v3159 = vadd.f32 %v3140, %v3158
        %v3160 = vpop.f32.mrf.mxu0
        %v3161 = vadd.f32 %v3142, %v3160
        %3162 = vmatmul.bf16.gmra.mxu0 %v625
        %v3163 = vpop.f32.mrf.mxu0
        %v3164 = vadd.f32 %v3145, %v3163
        %v3165 = vpop.f32.mrf.mxu0
        %v3166 = vadd.f32 %v3147, %v3165
        %3167 = vdwg.mxu0
        %3168 = vmatpush.bf16.msra.mxu0 %v2565
        %3169 = vmatpush.bf16.msra.mxu0 %v2553
        %3170 = vmatpush.bf16.msra.mxu0 %v2541
        %3171 = vmatpush.bf16.msra.mxu0 %v2529
        %3172 = vmatpush.bf16.msra.mxu0 %v2517
        %3173 = vmatpush.bf16.msra.mxu0 %v2505
        %3174 = vmatpush.bf16.msra.mxu0 %v2493
        %3175 = vmatpush.bf16.msra.mxu0 %v2481
        %3176 = vmatmul.bf16.gmra.mxu0 %v622
        %v3177 = vpop.f32.mrf.mxu0
        %v3178 = vadd.f32 %v3159, %v3177
        %v3179 = vpop.f32.mrf.mxu0
        %v3180 = vadd.f32 %v3161, %v3179
        %3181 = vmatmul.bf16.gmra.mxu0 %v626
        %v3182 = vpop.f32.mrf.mxu0
        %v3183 = vadd.f32 %v3164, %v3182
        %v3184 = vpop.f32.mrf.mxu0
        %v3185 = vadd.f32 %v3166, %v3184
        %3186 = vdwg.mxu0
        %3187 = vmatpush.bf16.msra.mxu0 %v2278
        %3188 = vmatpush.bf16.msra.mxu0 %v2266
        %3189 = vmatpush.bf16.msra.mxu0 %v2254
        %3190 = vmatpush.bf16.msra.mxu0 %v2242
        %3191 = vmatpush.bf16.msra.mxu0 %v2230
        %3192 = vmatpush.bf16.msra.mxu0 %v2218
        %3193 = vmatpush.bf16.msra.mxu0 %v2206
        %3194 = vmatpush.bf16.msra.mxu0 %v2194
        %3195 = vmatmul.bf16.gmra.mxu0 %v619
        %v3196 = vpop.f32.mrf.mxu0
        %v3197 = vadd.f32 %v1018, %v3196
        %v3198 = vpop.f32.mrf.mxu0
        %v3199 = vadd.f32 %v1018, %v3198
        %3200 = vmatmul.bf16.gmra.mxu0 %v623
        %v3201 = vpop.f32.mrf.mxu0
        %v3202 = vadd.f32 %v1018, %v3201
        %v3203 = vpop.f32.mrf.mxu0
        %v3204 = vadd.f32 %v1018, %v3203
        %3205 = vdwg.mxu0
        %3206 = vmatpush.bf16.msra.mxu0 %v2374
        %3207 = vmatpush.bf16.msra.mxu0 %v2362
        %3208 = vmatpush.bf16.msra.mxu0 %v2350
        %3209 = vmatpush.bf16.msra.mxu0 %v2338
        %3210 = vmatpush.bf16.msra.mxu0 %v2326
        %3211 = vmatpush.bf16.msra.mxu0 %v2314
        %3212 = vmatpush.bf16.msra.mxu0 %v2302
        %3213 = vmatpush.bf16.msra.mxu0 %v2290
        %3214 = vmatmul.bf16.gmra.mxu0 %v620
        %v3215 = vpop.f32.mrf.mxu0
        %v3216 = vadd.f32 %v3197, %v3215
        %v3217 = vpop.f32.mrf.mxu0
        %v3218 = vadd.f32 %v3199, %v3217
        %3219 = vmatmul.bf16.gmra.mxu0 %v624
        %v3220 = vpop.f32.mrf.mxu0
        %v3221 = vadd.f32 %v3202, %v3220
        %v3222 = vpop.f32.mrf.mxu0
        %v3223 = vadd.f32 %v3204, %v3222
        %3224 = vdwg.mxu0
        %3225 = vmatpush.bf16.msra.mxu0 %v2470
        %3226 = vmatpush.bf16.msra.mxu0 %v2458
        %3227 = vmatpush.bf16.msra.mxu0 %v2446
        %3228 = vmatpush.bf16.msra.mxu0 %v2434
        %3229 = vmatpush.bf16.msra.mxu0 %v2422
        %3230 = vmatpush.bf16.msra.mxu0 %v2410
        %3231 = vmatpush.bf16.msra.mxu0 %v2398
        %3232 = vmatpush.bf16.msra.mxu0 %v2386
        %3233 = vmatmul.bf16.gmra.mxu0 %v621
        %v3234 = vpop.f32.mrf.mxu0
        %v3235 = vadd.f32 %v3216, %v3234
        %v3236 = vpop.f32.mrf.mxu0
        %v3237 = vadd.f32 %v3218, %v3236
        %3238 = vmatmul.bf16.gmra.mxu0 %v625
        %v3239 = vpop.f32.mrf.mxu0
        %v3240 = vadd.f32 %v3221, %v3239
        %v3241 = vpop.f32.mrf.mxu0
        %v3242 = vadd.f32 %v3223, %v3241
        %3243 = vdwg.mxu0
        %3244 = vmatpush.bf16.msra.mxu0 %v2566
        %3245 = vmatpush.bf16.msra.mxu0 %v2554
        %3246 = vmatpush.bf16.msra.mxu0 %v2542
        %3247 = vmatpush.bf16.msra.mxu0 %v2530
        %3248 = vmatpush.bf16.msra.mxu0 %v2518
        %3249 = vmatpush.bf16.msra.mxu0 %v2506
        %3250 = vmatpush.bf16.msra.mxu0 %v2494
        %3251 = vmatpush.bf16.msra.mxu0 %v2482
        %3252 = vmatmul.bf16.gmra.mxu0 %v622
        %v3253 = vpop.f32.mrf.mxu0
        %v3254 = vadd.f32 %v3235, %v3253
        %v3255 = vpop.f32.mrf.mxu0
        %v3256 = vadd.f32 %v3237, %v3255
        %3257 = vmatmul.bf16.gmra.mxu0 %v626
        %v3258 = vpop.f32.mrf.mxu0
        %v3259 = vadd.f32 %v3240, %v3258
        %v3260 = vpop.f32.mrf.mxu0
        %v3261 = vadd.f32 %v3242, %v3260
        %3262 = vdwg.mxu0
        %3263 = vmatpush.bf16.msra.mxu0 %v2279
        %3264 = vmatpush.bf16.msra.mxu0 %v2267
        %3265 = vmatpush.bf16.msra.mxu0 %v2255
        %3266 = vmatpush.bf16.msra.mxu0 %v2243
        %3267 = vmatpush.bf16.msra.mxu0 %v2231
        %3268 = vmatpush.bf16.msra.mxu0 %v2219
        %3269 = vmatpush.bf16.msra.mxu0 %v2207
        %3270 = vmatpush.bf16.msra.mxu0 %v2195
        %3271 = vmatmul.bf16.gmra.mxu0 %v619
        %v3272 = vpop.f32.mrf.mxu0
        %v3273 = vadd.f32 %v1019, %v3272
        %v3274 = vpop.f32.mrf.mxu0
        %v3275 = vadd.f32 %v1019, %v3274
        %3276 = vmatmul.bf16.gmra.mxu0 %v623
        %v3277 = vpop.f32.mrf.mxu0
        %v3278 = vadd.f32 %v1019, %v3277
        %v3279 = vpop.f32.mrf.mxu0
        %v3280 = vadd.f32 %v1019, %v3279
        %3281 = vdwg.mxu0
        %3282 = vmatpush.bf16.msra.mxu0 %v2375
        %3283 = vmatpush.bf16.msra.mxu0 %v2363
        %3284 = vmatpush.bf16.msra.mxu0 %v2351
        %3285 = vmatpush.bf16.msra.mxu0 %v2339
        %3286 = vmatpush.bf16.msra.mxu0 %v2327
        %3287 = vmatpush.bf16.msra.mxu0 %v2315
        %3288 = vmatpush.bf16.msra.mxu0 %v2303
        %3289 = vmatpush.bf16.msra.mxu0 %v2291
        %3290 = vmatmul.bf16.gmra.mxu0 %v620
        %v3291 = vpop.f32.mrf.mxu0
        %v3292 = vadd.f32 %v3273, %v3291
        %v3293 = vpop.f32.mrf.mxu0
        %v3294 = vadd.f32 %v3275, %v3293
        %3295 = vmatmul.bf16.gmra.mxu0 %v624
        %v3296 = vpop.f32.mrf.mxu0
        %v3297 = vadd.f32 %v3278, %v3296
        %v3298 = vpop.f32.mrf.mxu0
        %v3299 = vadd.f32 %v3280, %v3298
        %3300 = vdwg.mxu0
        %3301 = vmatpush.bf16.msra.mxu0 %v2471
        %3302 = vmatpush.bf16.msra.mxu0 %v2459
        %3303 = vmatpush.bf16.msra.mxu0 %v2447
        %3304 = vmatpush.bf16.msra.mxu0 %v2435
        %3305 = vmatpush.bf16.msra.mxu0 %v2423
        %3306 = vmatpush.bf16.msra.mxu0 %v2411
        %3307 = vmatpush.bf16.msra.mxu0 %v2399
        %3308 = vmatpush.bf16.msra.mxu0 %v2387
        %3309 = vmatmul.bf16.gmra.mxu0 %v621
        %v3310 = vpop.f32.mrf.mxu0
        %v3311 = vadd.f32 %v3292, %v3310
        %v3312 = vpop.f32.mrf.mxu0
        %v3313 = vadd.f32 %v3294, %v3312
        %3314 = vmatmul.bf16.gmra.mxu0 %v625
        %v3315 = vpop.f32.mrf.mxu0
        %v3316 = vadd.f32 %v3297, %v3315
        %v3317 = vpop.f32.mrf.mxu0
        %v3318 = vadd.f32 %v3299, %v3317
        %3319 = vdwg.mxu0
        %3320 = vmatpush.bf16.msra.mxu0 %v2567
        %3321 = vmatpush.bf16.msra.mxu0 %v2555
        %3322 = vmatpush.bf16.msra.mxu0 %v2543
        %3323 = vmatpush.bf16.msra.mxu0 %v2531
        %3324 = vmatpush.bf16.msra.mxu0 %v2519
        %3325 = vmatpush.bf16.msra.mxu0 %v2507
        %3326 = vmatpush.bf16.msra.mxu0 %v2495
        %3327 = vmatpush.bf16.msra.mxu0 %v2483
        %3328 = vmatmul.bf16.gmra.mxu0 %v622
        %v3329 = vpop.f32.mrf.mxu0
        %v3330 = vadd.f32 %v3311, %v3329
        %v3331 = vpop.f32.mrf.mxu0
        %v3332 = vadd.f32 %v3313, %v3331
        %3333 = vmatmul.bf16.gmra.mxu0 %v626
        %v3334 = vpop.f32.mrf.mxu0
        %v3335 = vadd.f32 %v3316, %v3334
        %v3336 = vpop.f32.mrf.mxu0
        %v3337 = vadd.f32 %v3318, %v3336
        %3338 = vdwg.mxu0
        %3339 = vmatpush.bf16.msra.mxu0 %v2280
        %3340 = vmatpush.bf16.msra.mxu0 %v2268
        %3341 = vmatpush.bf16.msra.mxu0 %v2256
        %3342 = vmatpush.bf16.msra.mxu0 %v2244
        %3343 = vmatpush.bf16.msra.mxu0 %v2232
        %3344 = vmatpush.bf16.msra.mxu0 %v2220
        %3345 = vmatpush.bf16.msra.mxu0 %v2208
        %3346 = vmatpush.bf16.msra.mxu0 %v2196
        %3347 = vmatmul.bf16.gmra.mxu0 %v619
        %v3348 = vpop.f32.mrf.mxu0
        %v3349 = vadd.f32 %v1020, %v3348
        %v3350 = vpop.f32.mrf.mxu0
        %v3351 = vadd.f32 %v1020, %v3350
        %3352 = vmatmul.bf16.gmra.mxu0 %v623
        %v3353 = vpop.f32.mrf.mxu0
        %v3354 = vadd.f32 %v1020, %v3353
        %v3355 = vpop.f32.mrf.mxu0
        %v3356 = vadd.f32 %v1020, %v3355
        %3357 = vdwg.mxu0
        %3358 = vmatpush.bf16.msra.mxu0 %v2376
        %3359 = vmatpush.bf16.msra.mxu0 %v2364
        %3360 = vmatpush.bf16.msra.mxu0 %v2352
        %3361 = vmatpush.bf16.msra.mxu0 %v2340
        %3362 = vmatpush.bf16.msra.mxu0 %v2328
        %3363 = vmatpush.bf16.msra.mxu0 %v2316
        %3364 = vmatpush.bf16.msra.mxu0 %v2304
        %3365 = vmatpush.bf16.msra.mxu0 %v2292
        %3366 = vmatmul.bf16.gmra.mxu0 %v620
        %v3367 = vpop.f32.mrf.mxu0
        %v3368 = vadd.f32 %v3349, %v3367
        %v3369 = vpop.f32.mrf.mxu0
        %v3370 = vadd.f32 %v3351, %v3369
        %3371 = vmatmul.bf16.gmra.mxu0 %v624
        %v3372 = vpop.f32.mrf.mxu0
        %v3373 = vadd.f32 %v3354, %v3372
        %v3374 = vpop.f32.mrf.mxu0
        %v3375 = vadd.f32 %v3356, %v3374
        %3376 = vdwg.mxu0
        %3377 = vmatpush.bf16.msra.mxu0 %v2472
        %3378 = vmatpush.bf16.msra.mxu0 %v2460
        %3379 = vmatpush.bf16.msra.mxu0 %v2448
        %3380 = vmatpush.bf16.msra.mxu0 %v2436
        %3381 = vmatpush.bf16.msra.mxu0 %v2424
        %3382 = vmatpush.bf16.msra.mxu0 %v2412
        %3383 = vmatpush.bf16.msra.mxu0 %v2400
        %3384 = vmatpush.bf16.msra.mxu0 %v2388
        %3385 = vmatmul.bf16.gmra.mxu0 %v621
        %v3386 = vpop.f32.mrf.mxu0
        %v3387 = vadd.f32 %v3368, %v3386
        %v3388 = vpop.f32.mrf.mxu0
        %v3389 = vadd.f32 %v3370, %v3388
        %3390 = vmatmul.bf16.gmra.mxu0 %v625
        %v3391 = vpop.f32.mrf.mxu0
        %v3392 = vadd.f32 %v3373, %v3391
        %v3393 = vpop.f32.mrf.mxu0
        %v3394 = vadd.f32 %v3375, %v3393
        %3395 = vdwg.mxu0
        %3396 = vmatpush.bf16.msra.mxu0 %v2568
        %3397 = vmatpush.bf16.msra.mxu0 %v2556
        %3398 = vmatpush.bf16.msra.mxu0 %v2544
        %3399 = vmatpush.bf16.msra.mxu0 %v2532
        %3400 = vmatpush.bf16.msra.mxu0 %v2520
        %3401 = vmatpush.bf16.msra.mxu0 %v2508
        %3402 = vmatpush.bf16.msra.mxu0 %v2496
        %3403 = vmatpush.bf16.msra.mxu0 %v2484
        %3404 = vmatmul.bf16.gmra.mxu0 %v622
        %v3405 = vpop.f32.mrf.mxu0
        %v3406 = vadd.f32 %v3387, %v3405
        %v3407 = vpop.f32.mrf.mxu0
        %v3408 = vadd.f32 %v3389, %v3407
        %3409 = vmatmul.bf16.gmra.mxu0 %v626
        %v3410 = vpop.f32.mrf.mxu0
        %v3411 = vadd.f32 %v3392, %v3410
        %v3412 = vpop.f32.mrf.mxu0
        %v3413 = vadd.f32 %v3394, %v3412
        %3414 = vdwg.mxu0
        %3415 = vmatpush.bf16.msra.mxu0 %v2281
        %3416 = vmatpush.bf16.msra.mxu0 %v2269
        %3417 = vmatpush.bf16.msra.mxu0 %v2257
        %3418 = vmatpush.bf16.msra.mxu0 %v2245
        %3419 = vmatpush.bf16.msra.mxu0 %v2233
        %3420 = vmatpush.bf16.msra.mxu0 %v2221
        %3421 = vmatpush.bf16.msra.mxu0 %v2209
        %3422 = vmatpush.bf16.msra.mxu0 %v2197
        %3423 = vmatmul.bf16.gmra.mxu0 %v619
        %v3424 = vpop.f32.mrf.mxu0
        %v3425 = vadd.f32 %v1021, %v3424
        %v3426 = vpop.f32.mrf.mxu0
        %v3427 = vadd.f32 %v1021, %v3426
        %3428 = vmatmul.bf16.gmra.mxu0 %v623
        %v3429 = vpop.f32.mrf.mxu0
        %v3430 = vadd.f32 %v1021, %v3429
        %v3431 = vpop.f32.mrf.mxu0
        %v3432 = vadd.f32 %v1021, %v3431
        %3433 = vdwg.mxu0
        %3434 = vmatpush.bf16.msra.mxu0 %v2377
        %3435 = vmatpush.bf16.msra.mxu0 %v2365
        %3436 = vmatpush.bf16.msra.mxu0 %v2353
        %3437 = vmatpush.bf16.msra.mxu0 %v2341
        %3438 = vmatpush.bf16.msra.mxu0 %v2329
        %3439 = vmatpush.bf16.msra.mxu0 %v2317
        %3440 = vmatpush.bf16.msra.mxu0 %v2305
        %3441 = vmatpush.bf16.msra.mxu0 %v2293
        %3442 = vmatmul.bf16.gmra.mxu0 %v620
        %v3443 = vpop.f32.mrf.mxu0
        %v3444 = vadd.f32 %v3425, %v3443
        %v3445 = vpop.f32.mrf.mxu0
        %v3446 = vadd.f32 %v3427, %v3445
        %3447 = vmatmul.bf16.gmra.mxu0 %v624
        %v3448 = vpop.f32.mrf.mxu0
        %v3449 = vadd.f32 %v3430, %v3448
        %v3450 = vpop.f32.mrf.mxu0
        %v3451 = vadd.f32 %v3432, %v3450
        %3452 = vdwg.mxu0
        %3453 = vmatpush.bf16.msra.mxu0 %v2473
        %3454 = vmatpush.bf16.msra.mxu0 %v2461
        %3455 = vmatpush.bf16.msra.mxu0 %v2449
        %3456 = vmatpush.bf16.msra.mxu0 %v2437
        %3457 = vmatpush.bf16.msra.mxu0 %v2425
        %3458 = vmatpush.bf16.msra.mxu0 %v2413
        %3459 = vmatpush.bf16.msra.mxu0 %v2401
        %3460 = vmatpush.bf16.msra.mxu0 %v2389
        %3461 = vmatmul.bf16.gmra.mxu0 %v621
        %v3462 = vpop.f32.mrf.mxu0
        %v3463 = vadd.f32 %v3444, %v3462
        %v3464 = vpop.f32.mrf.mxu0
        %v3465 = vadd.f32 %v3446, %v3464
        %3466 = vmatmul.bf16.gmra.mxu0 %v625
        %v3467 = vpop.f32.mrf.mxu0
        %v3468 = vadd.f32 %v3449, %v3467
        %v3469 = vpop.f32.mrf.mxu0
        %v3470 = vadd.f32 %v3451, %v3469
        %3471 = vdwg.mxu0
        %3472 = vmatpush.bf16.msra.mxu0 %v2569
        %3473 = vmatpush.bf16.msra.mxu0 %v2557
        %3474 = vmatpush.bf16.msra.mxu0 %v2545
        %3475 = vmatpush.bf16.msra.mxu0 %v2533
        %3476 = vmatpush.bf16.msra.mxu0 %v2521
        %3477 = vmatpush.bf16.msra.mxu0 %v2509
        %3478 = vmatpush.bf16.msra.mxu0 %v2497
        %3479 = vmatpush.bf16.msra.mxu0 %v2485
        %3480 = vmatmul.bf16.gmra.mxu0 %v622
        %v3481 = vpop.f32.mrf.mxu0
        %v3482 = vadd.f32 %v3463, %v3481
        %v3483 = vpop.f32.mrf.mxu0
        %v3484 = vadd.f32 %v3465, %v3483
        %3485 = vmatmul.bf16.gmra.mxu0 %v626
        %v3486 = vpop.f32.mrf.mxu0
        %v3487 = vadd.f32 %v3468, %v3486
        %v3488 = vpop.f32.mrf.mxu0
        %v3489 = vadd.f32 %v3470, %v3488
        %3490 = vdwg.mxu0
        %3491 = vmatpush.bf16.msra.mxu0 %v2282
        %3492 = vmatpush.bf16.msra.mxu0 %v2270
        %3493 = vmatpush.bf16.msra.mxu0 %v2258
        %3494 = vmatpush.bf16.msra.mxu0 %v2246
        %3495 = vmatpush.bf16.msra.mxu0 %v2234
        %3496 = vmatpush.bf16.msra.mxu0 %v2222
        %3497 = vmatpush.bf16.msra.mxu0 %v2210
        %3498 = vmatpush.bf16.msra.mxu0 %v2198
        %3499 = vmatmul.bf16.gmra.mxu0 %v619
        %v3500 = vpop.f32.mrf.mxu0
        %v3501 = vadd.f32 %v1022, %v3500
        %v3502 = vpop.f32.mrf.mxu0
        %v3503 = vadd.f32 %v1022, %v3502
        %3504 = vmatmul.bf16.gmra.mxu0 %v623
        %v3505 = vpop.f32.mrf.mxu0
        %v3506 = vadd.f32 %v1022, %v3505
        %v3507 = vpop.f32.mrf.mxu0
        %v3508 = vadd.f32 %v1022, %v3507
        %3509 = vdwg.mxu0
        %3510 = vmatpush.bf16.msra.mxu0 %v2378
        %3511 = vmatpush.bf16.msra.mxu0 %v2366
        %3512 = vmatpush.bf16.msra.mxu0 %v2354
        %3513 = vmatpush.bf16.msra.mxu0 %v2342
        %3514 = vmatpush.bf16.msra.mxu0 %v2330
        %3515 = vmatpush.bf16.msra.mxu0 %v2318
        %3516 = vmatpush.bf16.msra.mxu0 %v2306
        %3517 = vmatpush.bf16.msra.mxu0 %v2294
        %3518 = vmatmul.bf16.gmra.mxu0 %v620
        %v3519 = vpop.f32.mrf.mxu0
        %v3520 = vadd.f32 %v3501, %v3519
        %v3521 = vpop.f32.mrf.mxu0
        %v3522 = vadd.f32 %v3503, %v3521
        %3523 = vmatmul.bf16.gmra.mxu0 %v624
        %v3524 = vpop.f32.mrf.mxu0
        %v3525 = vadd.f32 %v3506, %v3524
        %v3526 = vpop.f32.mrf.mxu0
        %v3527 = vadd.f32 %v3508, %v3526
        %3528 = vdwg.mxu0
        %3529 = vmatpush.bf16.msra.mxu0 %v2474
        %3530 = vmatpush.bf16.msra.mxu0 %v2462
        %3531 = vmatpush.bf16.msra.mxu0 %v2450
        %3532 = vmatpush.bf16.msra.mxu0 %v2438
        %3533 = vmatpush.bf16.msra.mxu0 %v2426
        %3534 = vmatpush.bf16.msra.mxu0 %v2414
        %3535 = vmatpush.bf16.msra.mxu0 %v2402
        %3536 = vmatpush.bf16.msra.mxu0 %v2390
        %3537 = vmatmul.bf16.gmra.mxu0 %v621
        %v3538 = vpop.f32.mrf.mxu0
        %v3539 = vadd.f32 %v3520, %v3538
        %v3540 = vpop.f32.mrf.mxu0
        %v3541 = vadd.f32 %v3522, %v3540
        %3542 = vmatmul.bf16.gmra.mxu0 %v625
        %v3543 = vpop.f32.mrf.mxu0
        %v3544 = vadd.f32 %v3525, %v3543
        %v3545 = vpop.f32.mrf.mxu0
        %v3546 = vadd.f32 %v3527, %v3545
        %3547 = vdwg.mxu0
        %3548 = vmatpush.bf16.msra.mxu0 %v2570
        %3549 = vmatpush.bf16.msra.mxu0 %v2558
        %3550 = vmatpush.bf16.msra.mxu0 %v2546
        %3551 = vmatpush.bf16.msra.mxu0 %v2534
        %3552 = vmatpush.bf16.msra.mxu0 %v2522
        %3553 = vmatpush.bf16.msra.mxu0 %v2510
        %3554 = vmatpush.bf16.msra.mxu0 %v2498
        %3555 = vmatpush.bf16.msra.mxu0 %v2486
        %3556 = vmatmul.bf16.gmra.mxu0 %v622
        %v3557 = vpop.f32.mrf.mxu0
        %v3558 = vadd.f32 %v3539, %v3557
        %v3559 = vpop.f32.mrf.mxu0
        %v3560 = vadd.f32 %v3541, %v3559
        %3561 = vmatmul.bf16.gmra.mxu0 %v626
        %v3562 = vpop.f32.mrf.mxu0
        %v3563 = vadd.f32 %v3544, %v3562
        %v3564 = vpop.f32.mrf.mxu0
        %v3565 = vadd.f32 %v3546, %v3564
        %3566 = vdwg.mxu0
        %3567 = vmatpush.bf16.msra.mxu0 %v2283
        %3568 = vmatpush.bf16.msra.mxu0 %v2271
        %3569 = vmatpush.bf16.msra.mxu0 %v2259
        %3570 = vmatpush.bf16.msra.mxu0 %v2247
        %3571 = vmatpush.bf16.msra.mxu0 %v2235
        %3572 = vmatpush.bf16.msra.mxu0 %v2223
        %3573 = vmatpush.bf16.msra.mxu0 %v2211
        %3574 = vmatpush.bf16.msra.mxu0 %v2199
        %3575 = vmatmul.bf16.gmra.mxu0 %v619
        %v3576 = vpop.f32.mrf.mxu0
        %v3577 = vadd.f32 %v1023, %v3576
        %v3578 = vpop.f32.mrf.mxu0
        %v3579 = vadd.f32 %v1023, %v3578
        %3580 = vmatmul.bf16.gmra.mxu0 %v623
        %v3581 = vpop.f32.mrf.mxu0
        %v3582 = vadd.f32 %v1023, %v3581
        %v3583 = vpop.f32.mrf.mxu0
        %v3584 = vadd.f32 %v1023, %v3583
        %3585 = vdwg.mxu0
        %3586 = vmatpush.bf16.msra.mxu0 %v2379
        %3587 = vmatpush.bf16.msra.mxu0 %v2367
        %3588 = vmatpush.bf16.msra.mxu0 %v2355
        %3589 = vmatpush.bf16.msra.mxu0 %v2343
        %3590 = vmatpush.bf16.msra.mxu0 %v2331
        %3591 = vmatpush.bf16.msra.mxu0 %v2319
        %3592 = vmatpush.bf16.msra.mxu0 %v2307
        %3593 = vmatpush.bf16.msra.mxu0 %v2295
        %3594 = vmatmul.bf16.gmra.mxu0 %v620
        %v3595 = vpop.f32.mrf.mxu0
        %v3596 = vadd.f32 %v3577, %v3595
        %v3597 = vpop.f32.mrf.mxu0
        %v3598 = vadd.f32 %v3579, %v3597
        %3599 = vmatmul.bf16.gmra.mxu0 %v624
        %v3600 = vpop.f32.mrf.mxu0
        %v3601 = vadd.f32 %v3582, %v3600
        %v3602 = vpop.f32.mrf.mxu0
        %v3603 = vadd.f32 %v3584, %v3602
        %3604 = vdwg.mxu0
        %3605 = vmatpush.bf16.msra.mxu0 %v2475
        %3606 = vmatpush.bf16.msra.mxu0 %v2463
        %3607 = vmatpush.bf16.msra.mxu0 %v2451
        %3608 = vmatpush.bf16.msra.mxu0 %v2439
        %3609 = vmatpush.bf16.msra.mxu0 %v2427
        %3610 = vmatpush.bf16.msra.mxu0 %v2415
        %3611 = vmatpush.bf16.msra.mxu0 %v2403
        %3612 = vmatpush.bf16.msra.mxu0 %v2391
        %3613 = vmatmul.bf16.gmra.mxu0 %v621
        %v3614 = vpop.f32.mrf.mxu0
        %v3615 = vadd.f32 %v3596, %v3614
        %v3616 = vpop.f32.mrf.mxu0
        %v3617 = vadd.f32 %v3598, %v3616
        %3618 = vmatmul.bf16.gmra.mxu0 %v625
        %v3619 = vpop.f32.mrf.mxu0
        %v3620 = vadd.f32 %v3601, %v3619
        %v3621 = vpop.f32.mrf.mxu0
        %v3622 = vadd.f32 %v3603, %v3621
        %3623 = vdwg.mxu0
        %3624 = vmatpush.bf16.msra.mxu0 %v2571
        %3625 = vmatpush.bf16.msra.mxu0 %v2559
        %3626 = vmatpush.bf16.msra.mxu0 %v2547
        %3627 = vmatpush.bf16.msra.mxu0 %v2535
        %3628 = vmatpush.bf16.msra.mxu0 %v2523
        %3629 = vmatpush.bf16.msra.mxu0 %v2511
        %3630 = vmatpush.bf16.msra.mxu0 %v2499
        %3631 = vmatpush.bf16.msra.mxu0 %v2487
        %3632 = vmatmul.bf16.gmra.mxu0 %v622
        %v3633 = vpop.f32.mrf.mxu0
        %v3634 = vadd.f32 %v3615, %v3633
        %v3635 = vpop.f32.mrf.mxu0
        %v3636 = vadd.f32 %v3617, %v3635
        %3637 = vmatmul.bf16.gmra.mxu0 %v626
        %v3638 = vpop.f32.mrf.mxu0
        %v3639 = vadd.f32 %v3620, %v3638
        %v3640 = vpop.f32.mrf.mxu0
        %v3641 = vadd.f32 %v3622, %v3640
        %3642 = vdwg.mxu0
        %3643 = vmatpush.bf16.msra.mxu0 %v2284
        %3644 = vmatpush.bf16.msra.mxu0 %v2272
        %3645 = vmatpush.bf16.msra.mxu0 %v2260
        %3646 = vmatpush.bf16.msra.mxu0 %v2248
        %3647 = vmatpush.bf16.msra.mxu0 %v2236
        %3648 = vmatpush.bf16.msra.mxu0 %v2224
        %3649 = vmatpush.bf16.msra.mxu0 %v2212
        %3650 = vmatpush.bf16.msra.mxu0 %v2200
        %3651 = vmatmul.bf16.gmra.mxu0 %v619
        %v3652 = vpop.f32.mrf.mxu0
        %v3653 = vadd.f32 %v1024, %v3652
        %v3654 = vpop.f32.mrf.mxu0
        %v3655 = vadd.f32 %v1024, %v3654
        %3656 = vmatmul.bf16.gmra.mxu0 %v623
        %v3657 = vpop.f32.mrf.mxu0
        %v3658 = vadd.f32 %v1024, %v3657
        %v3659 = vpop.f32.mrf.mxu0
        %v3660 = vadd.f32 %v1024, %v3659
        %3661 = vdwg.mxu0
        %3662 = vmatpush.bf16.msra.mxu0 %v2380
        %3663 = vmatpush.bf16.msra.mxu0 %v2368
        %3664 = vmatpush.bf16.msra.mxu0 %v2356
        %3665 = vmatpush.bf16.msra.mxu0 %v2344
        %3666 = vmatpush.bf16.msra.mxu0 %v2332
        %3667 = vmatpush.bf16.msra.mxu0 %v2320
        %3668 = vmatpush.bf16.msra.mxu0 %v2308
        %3669 = vmatpush.bf16.msra.mxu0 %v2296
        %3670 = vmatmul.bf16.gmra.mxu0 %v620
        %v3671 = vpop.f32.mrf.mxu0
        %v3672 = vadd.f32 %v3653, %v3671
        %v3673 = vpop.f32.mrf.mxu0
        %v3674 = vadd.f32 %v3655, %v3673
        %3675 = vmatmul.bf16.gmra.mxu0 %v624
        %v3676 = vpop.f32.mrf.mxu0
        %v3677 = vadd.f32 %v3658, %v3676
        %v3678 = vpop.f32.mrf.mxu0
        %v3679 = vadd.f32 %v3660, %v3678
        %3680 = vdwg.mxu0
        %3681 = vmatpush.bf16.msra.mxu0 %v2476
        %3682 = vmatpush.bf16.msra.mxu0 %v2464
        %3683 = vmatpush.bf16.msra.mxu0 %v2452
        %3684 = vmatpush.bf16.msra.mxu0 %v2440
        %3685 = vmatpush.bf16.msra.mxu0 %v2428
        %3686 = vmatpush.bf16.msra.mxu0 %v2416
        %3687 = vmatpush.bf16.msra.mxu0 %v2404
        %3688 = vmatpush.bf16.msra.mxu0 %v2392
        %3689 = vmatmul.bf16.gmra.mxu0 %v621
        %v3690 = vpop.f32.mrf.mxu0
        %v3691 = vadd.f32 %v3672, %v3690
        %v3692 = vpop.f32.mrf.mxu0
        %v3693 = vadd.f32 %v3674, %v3692
        %3694 = vmatmul.bf16.gmra.mxu0 %v625
        %v3695 = vpop.f32.mrf.mxu0
        %v3696 = vadd.f32 %v3677, %v3695
        %v3697 = vpop.f32.mrf.mxu0
        %v3698 = vadd.f32 %v3679, %v3697
        %3699 = vdwg.mxu0
        %3700 = vmatpush.bf16.msra.mxu0 %v2572
        %3701 = vmatpush.bf16.msra.mxu0 %v2560
        %3702 = vmatpush.bf16.msra.mxu0 %v2548
        %3703 = vmatpush.bf16.msra.mxu0 %v2536
        %3704 = vmatpush.bf16.msra.mxu0 %v2524
        %3705 = vmatpush.bf16.msra.mxu0 %v2512
        %3706 = vmatpush.bf16.msra.mxu0 %v2500
        %3707 = vmatpush.bf16.msra.mxu0 %v2488
        %3708 = vmatmul.bf16.gmra.mxu0 %v622
        %v3709 = vpop.f32.mrf.mxu0
        %v3710 = vadd.f32 %v3691, %v3709
        %v3711 = vpop.f32.mrf.mxu0
        %v3712 = vadd.f32 %v3693, %v3711
        %3713 = vmatmul.bf16.gmra.mxu0 %v626
        %v3714 = vpop.f32.mrf.mxu0
        %v3715 = vadd.f32 %v3696, %v3714
        %v3716 = vpop.f32.mrf.mxu0
        %v3717 = vadd.f32 %v3698, %v3716
        %3718 = vdwg.mxu0
        %3719 = vmatpush.bf16.msra.mxu0 %v2285
        %3720 = vmatpush.bf16.msra.mxu0 %v2273
        %3721 = vmatpush.bf16.msra.mxu0 %v2261
        %3722 = vmatpush.bf16.msra.mxu0 %v2249
        %3723 = vmatpush.bf16.msra.mxu0 %v2237
        %3724 = vmatpush.bf16.msra.mxu0 %v2225
        %3725 = vmatpush.bf16.msra.mxu0 %v2213
        %3726 = vmatpush.bf16.msra.mxu0 %v2201
        %3727 = vmatmul.bf16.gmra.mxu0 %v619
        %v3728 = vpop.f32.mrf.mxu0
        %v3729 = vadd.f32 %v1025, %v3728
        %v3730 = vpop.f32.mrf.mxu0
        %v3731 = vadd.f32 %v1025, %v3730
        %3732 = vmatmul.bf16.gmra.mxu0 %v623
        %v3733 = vpop.f32.mrf.mxu0
        %v3734 = vadd.f32 %v1025, %v3733
        %v3735 = vpop.f32.mrf.mxu0
        %v3736 = vadd.f32 %v1025, %v3735
        %3737 = vdwg.mxu0
        %3738 = vmatpush.bf16.msra.mxu0 %v2381
        %3739 = vmatpush.bf16.msra.mxu0 %v2369
        %3740 = vmatpush.bf16.msra.mxu0 %v2357
        %3741 = vmatpush.bf16.msra.mxu0 %v2345
        %3742 = vmatpush.bf16.msra.mxu0 %v2333
        %3743 = vmatpush.bf16.msra.mxu0 %v2321
        %3744 = vmatpush.bf16.msra.mxu0 %v2309
        %3745 = vmatpush.bf16.msra.mxu0 %v2297
        %3746 = vmatmul.bf16.gmra.mxu0 %v620
        %v3747 = vpop.f32.mrf.mxu0
        %v3748 = vadd.f32 %v3729, %v3747
        %v3749 = vpop.f32.mrf.mxu0
        %v3750 = vadd.f32 %v3731, %v3749
        %3751 = vmatmul.bf16.gmra.mxu0 %v624
        %v3752 = vpop.f32.mrf.mxu0
        %v3753 = vadd.f32 %v3734, %v3752
        %v3754 = vpop.f32.mrf.mxu0
        %v3755 = vadd.f32 %v3736, %v3754
        %3756 = vdwg.mxu0
        %3757 = vmatpush.bf16.msra.mxu0 %v2477
        %3758 = vmatpush.bf16.msra.mxu0 %v2465
        %3759 = vmatpush.bf16.msra.mxu0 %v2453
        %3760 = vmatpush.bf16.msra.mxu0 %v2441
        %3761 = vmatpush.bf16.msra.mxu0 %v2429
        %3762 = vmatpush.bf16.msra.mxu0 %v2417
        %3763 = vmatpush.bf16.msra.mxu0 %v2405
        %3764 = vmatpush.bf16.msra.mxu0 %v2393
        %3765 = vmatmul.bf16.gmra.mxu0 %v621
        %v3766 = vpop.f32.mrf.mxu0
        %v3767 = vadd.f32 %v3748, %v3766
        %v3768 = vpop.f32.mrf.mxu0
        %v3769 = vadd.f32 %v3750, %v3768
        %3770 = vmatmul.bf16.gmra.mxu0 %v625
        %v3771 = vpop.f32.mrf.mxu0
        %v3772 = vadd.f32 %v3753, %v3771
        %v3773 = vpop.f32.mrf.mxu0
        %v3774 = vadd.f32 %v3755, %v3773
        %3775 = vdwg.mxu0
        %3776 = vmatpush.bf16.msra.mxu0 %v2573
        %3777 = vmatpush.bf16.msra.mxu0 %v2561
        %3778 = vmatpush.bf16.msra.mxu0 %v2549
        %3779 = vmatpush.bf16.msra.mxu0 %v2537
        %3780 = vmatpush.bf16.msra.mxu0 %v2525
        %3781 = vmatpush.bf16.msra.mxu0 %v2513
        %3782 = vmatpush.bf16.msra.mxu0 %v2501
        %3783 = vmatpush.bf16.msra.mxu0 %v2489
        %3784 = vmatmul.bf16.gmra.mxu0 %v622
        %v3785 = vpop.f32.mrf.mxu0
        %v3786 = vadd.f32 %v3767, %v3785
        %v3787 = vpop.f32.mrf.mxu0
        %v3788 = vadd.f32 %v3769, %v3787
        %3789 = vmatmul.bf16.gmra.mxu0 %v626
        %v3790 = vpop.f32.mrf.mxu0
        %v3791 = vadd.f32 %v3772, %v3790
        %v3792 = vpop.f32.mrf.mxu0
        %v3793 = vadd.f32 %v3774, %v3792
        %3794 = vdwg.mxu0
        %3795 = vmatpush.bf16.msra.mxu0 %v2286
        %3796 = vmatpush.bf16.msra.mxu0 %v2274
        %3797 = vmatpush.bf16.msra.mxu0 %v2262
        %3798 = vmatpush.bf16.msra.mxu0 %v2250
        %3799 = vmatpush.bf16.msra.mxu0 %v2238
        %3800 = vmatpush.bf16.msra.mxu0 %v2226
        %3801 = vmatpush.bf16.msra.mxu0 %v2214
        %3802 = vmatpush.bf16.msra.mxu0 %v2202
        %3803 = vmatmul.bf16.gmra.mxu0 %v619
        %v3804 = vpop.f32.mrf.mxu0
        %v3805 = vadd.f32 %v1026, %v3804
        %v3806 = vpop.f32.mrf.mxu0
        %v3807 = vadd.f32 %v1026, %v3806
        %3808 = vmatmul.bf16.gmra.mxu0 %v623
        %v3809 = vpop.f32.mrf.mxu0
        %v3810 = vadd.f32 %v1026, %v3809
        %v3811 = vpop.f32.mrf.mxu0
        %v3812 = vadd.f32 %v1026, %v3811
        %3813 = vdwg.mxu0
        %3814 = vmatpush.bf16.msra.mxu0 %v2382
        %3815 = vmatpush.bf16.msra.mxu0 %v2370
        %3816 = vmatpush.bf16.msra.mxu0 %v2358
        %3817 = vmatpush.bf16.msra.mxu0 %v2346
        %3818 = vmatpush.bf16.msra.mxu0 %v2334
        %3819 = vmatpush.bf16.msra.mxu0 %v2322
        %3820 = vmatpush.bf16.msra.mxu0 %v2310
        %3821 = vmatpush.bf16.msra.mxu0 %v2298
        %3822 = vmatmul.bf16.gmra.mxu0 %v620
        %v3823 = vpop.f32.mrf.mxu0
        %v3824 = vadd.f32 %v3805, %v3823
        %v3825 = vpop.f32.mrf.mxu0
        %v3826 = vadd.f32 %v3807, %v3825
        %3827 = vmatmul.bf16.gmra.mxu0 %v624
        %v3828 = vpop.f32.mrf.mxu0
        %v3829 = vadd.f32 %v3810, %v3828
        %v3830 = vpop.f32.mrf.mxu0
        %v3831 = vadd.f32 %v3812, %v3830
        %3832 = vdwg.mxu0
        %3833 = vmatpush.bf16.msra.mxu0 %v2478
        %3834 = vmatpush.bf16.msra.mxu0 %v2466
        %3835 = vmatpush.bf16.msra.mxu0 %v2454
        %3836 = vmatpush.bf16.msra.mxu0 %v2442
        %3837 = vmatpush.bf16.msra.mxu0 %v2430
        %3838 = vmatpush.bf16.msra.mxu0 %v2418
        %3839 = vmatpush.bf16.msra.mxu0 %v2406
        %3840 = vmatpush.bf16.msra.mxu0 %v2394
        %3841 = vmatmul.bf16.gmra.mxu0 %v621
        %v3842 = vpop.f32.mrf.mxu0
        %v3843 = vadd.f32 %v3824, %v3842
        %v3844 = vpop.f32.mrf.mxu0
        %v3845 = vadd.f32 %v3826, %v3844
        %3846 = vmatmul.bf16.gmra.mxu0 %v625
        %v3847 = vpop.f32.mrf.mxu0
        %v3848 = vadd.f32 %v3829, %v3847
        %v3849 = vpop.f32.mrf.mxu0
        %v3850 = vadd.f32 %v3831, %v3849
        %3851 = vdwg.mxu0
        %3852 = vmatpush.bf16.msra.mxu0 %v2574
        %3853 = vmatpush.bf16.msra.mxu0 %v2562
        %3854 = vmatpush.bf16.msra.mxu0 %v2550
        %3855 = vmatpush.bf16.msra.mxu0 %v2538
        %3856 = vmatpush.bf16.msra.mxu0 %v2526
        %3857 = vmatpush.bf16.msra.mxu0 %v2514
        %3858 = vmatpush.bf16.msra.mxu0 %v2502
        %3859 = vmatpush.bf16.msra.mxu0 %v2490
        %3860 = vmatmul.bf16.gmra.mxu0 %v622
        %v3861 = vpop.f32.mrf.mxu0
        %v3862 = vadd.f32 %v3843, %v3861
        %v3863 = vpop.f32.mrf.mxu0
        %v3864 = vadd.f32 %v3845, %v3863
        %3865 = vmatmul.bf16.gmra.mxu0 %v626
        %v3866 = vpop.f32.mrf.mxu0
        %v3867 = vadd.f32 %v3848, %v3866
        %v3868 = vpop.f32.mrf.mxu0
        %v3869 = vadd.f32 %v3850, %v3868
        %3870 = vdwg.mxu0
        %v3871 = vpack.c.bf16 %v3102, %v3026
        %v3872 = vpack.c.bf16 %v3254, %v3178
        %v3873 = vpack.c.bf16 %v3104, %v3028
        %v3874 = vpack.c.bf16 %v3256, %v3180
        %v3875 = vpack.c.bf16 %v3107, %v3031
        %v3876 = vpack.c.bf16 %v3259, %v3183
        %v3877 = vpack.c.bf16 %v3109, %v3033
        %v3878 = vpack.c.bf16 %v3261, %v3185
        %v3879 = vpack.c.bf16 %v3406, %v3330
        %v3880 = vpack.c.bf16 %v3558, %v3482
        %v3881 = vpack.c.bf16 %v3408, %v3332
        %v3882 = vpack.c.bf16 %v3560, %v3484
        %v3883 = vpack.c.bf16 %v3411, %v3335
        %v3884 = vpack.c.bf16 %v3563, %v3487
        %v3885 = vpack.c.bf16 %v3413, %v3337
        %v3886 = vpack.c.bf16 %v3565, %v3489
        %v3887 = vpack.c.bf16 %v3710, %v3634
        %v3888 = vpack.c.bf16 %v3862, %v3786
        %v3889 = vpack.c.bf16 %v3712, %v3636
        %v3890 = vpack.c.bf16 %v3864, %v3788
        %v3891 = vpack.c.bf16 %v3715, %v3639
        %v3892 = vpack.c.bf16 %v3867, %v3791
        %v3893 = vpack.c.bf16 %v3717, %v3641
        %v3894 = vpack.c.bf16 %v3869, %v3793
        %v3897 = vrot.slane %v3871, 4
        %v3898 = vrot.slane %v3873, 4
        %v3901 = vrot.slane %v3872, 4
        %v3902 = vrot.slane %v3874, 4
        %v3905 = vrot.slane %v3875, 4
        %v3906 = vrot.slane %v3877, 4
        %v3909 = vrot.slane %v3876, 4
        %v3910 = vrot.slane %v3878, 4
        %v3913 = vrot.slane %v3879, 4
        %v3914 = vrot.slane %v3881, 4
        %v3917 = vrot.slane %v3880, 4
        %v3918 = vrot.slane %v3882, 4
        %v3921 = vrot.slane %v3883, 4
        %v3922 = vrot.slane %v3885, 4
        %v3925 = vrot.slane %v3884, 4
        %v3926 = vrot.slane %v3886, 4
        %v3929 = vrot.slane %v3887, 4
        %v3930 = vrot.slane %v3889, 4
        %v3933 = vrot.slane %v3888, 4
        %v3934 = vrot.slane %v3890, 4
        %v3937 = vrot.slane %v3891, 4
        %v3938 = vrot.slane %v3893, 4
        %v3941 = vrot.slane %v3892, 4
        %v3942 = vrot.slane %v3894, 4
        %v3943 = vld [vmem:[%s1] sm:$0xff]
        %v3944 = vld [vmem:[%s1 + $0x8] sm:$0xff]
        %v3945 = vunpack.c.l.b16 %v3871
        %v3946 = vunpack.c.l.b16 %v3873
        %v3947 = vpack.c.b16 %v3946, %v3945
        %v3949 = vunpack.c.l.b16 %v3879
        %v3950 = vunpack.c.l.b16 %v3881
        %v3951 = vpack.c.b16 %v3950, %v3949
        %3953 = vmatpush.bf16.xpose.msra.mxu0 0
        %3954 = vmatpush.bf16.xpose.msra.mxu0 0
        %3955 = vmatpush.bf16.xpose.msra.mxu0 0
        %3956 = vmatpush.bf16.xpose.msra.mxu0 0
        %3957 = vmatpush.bf16.xpose.msra.mxu0 0
        %3958 = vmatpush.bf16.xpose.msra.mxu0 0
        %3959 = vmatpush.bf16.xpose.msra.mxu0 0
        %3960 = vmatpush.bf16.xpose.msra.mxu0 %v3951
        %3961 = vmatmul.bf16.gmra.mxu0 %v3947
        %v3962 = vpop.f32.mrf.mxu0
        %v3963 = vadd.f32 %v3943, %v3962
        %v3964 = vpop.f32.mrf.mxu0
        %v3965 = vadd.f32 %v3944, %v3964
        %3966 = vdwg.mxu0
        %v3967 = vunpack.c.l.b16 %v3897
        %v3968 = vunpack.c.l.b16 %v3898
        %v3969 = vpack.c.b16 %v3968, %v3967
        %v3971 = vunpack.c.l.b16 %v3913
        %v3972 = vunpack.c.l.b16 %v3914
        %v3973 = vpack.c.b16 %v3972, %v3971
        %3975 = vmatpush.bf16.xpose.msra.mxu0 0
        %3976 = vmatpush.bf16.xpose.msra.mxu0 0
        %3977 = vmatpush.bf16.xpose.msra.mxu0 0
        %3978 = vmatpush.bf16.xpose.msra.mxu0 0
        %3979 = vmatpush.bf16.xpose.msra.mxu0 0
        %3980 = vmatpush.bf16.xpose.msra.mxu0 0
        %3981 = vmatpush.bf16.xpose.msra.mxu0 0
        %3982 = vmatpush.bf16.xpose.msra.mxu0 %v3973
        %3983 = vmatmul.bf16.gmra.mxu0 %v3969
        %v3984 = vpop.f32.mrf.mxu0
        %v3985 = vadd.f32 %v3943, %v3984
        %v3986 = vpop.f32.mrf.mxu0
        %v3987 = vadd.f32 %v3944, %v3986
        %3988 = vdwg.mxu0
        %v3989 = vunpack.c.l.b16 %v3872
        %v3990 = vunpack.c.l.b16 %v3874
        %v3991 = vpack.c.b16 %v3990, %v3989
        %v3993 = vunpack.c.l.b16 %v3880
        %v3994 = vunpack.c.l.b16 %v3882
        %v3995 = vpack.c.b16 %v3994, %v3993
        %3997 = vmatpush.bf16.xpose.msra.mxu0 0
        %3998 = vmatpush.bf16.xpose.msra.mxu0 0
        %3999 = vmatpush.bf16.xpose.msra.mxu0 0
        %4000 = vmatpush.bf16.xpose.msra.mxu0 0
        %4001 = vmatpush.bf16.xpose.msra.mxu0 0
        %4002 = vmatpush.bf16.xpose.msra.mxu0 0
        %4003 = vmatpush.bf16.xpose.msra.mxu0 0
        %4004 = vmatpush.bf16.xpose.msra.mxu0 %v3995
        %4005 = vmatmul.bf16.gmra.mxu0 %v3991
        %v4006 = vpop.f32.mrf.mxu0
        %v4007 = vadd.f32 %v3943, %v4006
        %v4008 = vpop.f32.mrf.mxu0
        %v4009 = vadd.f32 %v3944, %v4008
        %4010 = vdwg.mxu0
        %v4011 = vunpack.c.l.b16 %v3901
        %v4012 = vunpack.c.l.b16 %v3902
        %v4013 = vpack.c.b16 %v4012, %v4011
        %v4015 = vunpack.c.l.b16 %v3917
        %v4016 = vunpack.c.l.b16 %v3918
        %v4017 = vpack.c.b16 %v4016, %v4015
        %4019 = vmatpush.bf16.xpose.msra.mxu0 0
        %4020 = vmatpush.bf16.xpose.msra.mxu0 0
        %4021 = vmatpush.bf16.xpose.msra.mxu0 0
        %4022 = vmatpush.bf16.xpose.msra.mxu0 0
        %4023 = vmatpush.bf16.xpose.msra.mxu0 0
        %4024 = vmatpush.bf16.xpose.msra.mxu0 0
        %4025 = vmatpush.bf16.xpose.msra.mxu0 0
        %4026 = vmatpush.bf16.xpose.msra.mxu0 %v4017
        %4027 = vmatmul.bf16.gmra.mxu0 %v4013
        %v4028 = vpop.f32.mrf.mxu0
        %v4029 = vadd.f32 %v3943, %v4028
        %v4030 = vpop.f32.mrf.mxu0
        %v4031 = vadd.f32 %v3944, %v4030
        %4032 = vdwg.mxu0
        %v4033 = vunpack.c.l.b16 %v3875
        %v4034 = vunpack.c.l.b16 %v3877
        %v4035 = vpack.c.b16 %v4034, %v4033
        %v4037 = vunpack.c.l.b16 %v3883
        %v4038 = vunpack.c.l.b16 %v3885
        %v4039 = vpack.c.b16 %v4038, %v4037
        %4041 = vmatpush.bf16.xpose.msra.mxu0 0
        %4042 = vmatpush.bf16.xpose.msra.mxu0 0
        %4043 = vmatpush.bf16.xpose.msra.mxu0 0
        %4044 = vmatpush.bf16.xpose.msra.mxu0 0
        %4045 = vmatpush.bf16.xpose.msra.mxu0 0
        %4046 = vmatpush.bf16.xpose.msra.mxu0 0
        %4047 = vmatpush.bf16.xpose.msra.mxu0 0
        %4048 = vmatpush.bf16.xpose.msra.mxu0 %v4039
        %4049 = vmatmul.bf16.gmra.mxu0 %v4035
        %v4050 = vpop.f32.mrf.mxu0
        %v4051 = vadd.f32 %v3943, %v4050
        %v4052 = vpop.f32.mrf.mxu0
        %v4053 = vadd.f32 %v3944, %v4052
        %4054 = vdwg.mxu0
        %v4055 = vunpack.c.l.b16 %v3905
        %v4056 = vunpack.c.l.b16 %v3906
        %v4057 = vpack.c.b16 %v4056, %v4055
        %v4059 = vunpack.c.l.b16 %v3921
        %v4060 = vunpack.c.l.b16 %v3922
        %v4061 = vpack.c.b16 %v4060, %v4059
        %4063 = vmatpush.bf16.xpose.msra.mxu0 0
        %4064 = vmatpush.bf16.xpose.msra.mxu0 0
        %4065 = vmatpush.bf16.xpose.msra.mxu0 0
        %4066 = vmatpush.bf16.xpose.msra.mxu0 0
        %4067 = vmatpush.bf16.xpose.msra.mxu0 0
        %4068 = vmatpush.bf16.xpose.msra.mxu0 0
        %4069 = vmatpush.bf16.xpose.msra.mxu0 0
        %4070 = vmatpush.bf16.xpose.msra.mxu0 %v4061
        %4071 = vmatmul.bf16.gmra.mxu0 %v4057
        %v4072 = vpop.f32.mrf.mxu0
        %v4073 = vadd.f32 %v3943, %v4072
        %v4074 = vpop.f32.mrf.mxu0
        %v4075 = vadd.f32 %v3944, %v4074
        %4076 = vdwg.mxu0
        %v4077 = vunpack.c.l.b16 %v3876
        %v4078 = vunpack.c.l.b16 %v3878
        %v4079 = vpack.c.b16 %v4078, %v4077
        %v4081 = vunpack.c.l.b16 %v3884
        %v4082 = vunpack.c.l.b16 %v3886
        %v4083 = vpack.c.b16 %v4082, %v4081
        %4085 = vmatpush.bf16.xpose.msra.mxu0 0
        %4086 = vmatpush.bf16.xpose.msra.mxu0 0
        %4087 = vmatpush.bf16.xpose.msra.mxu0 0
        %4088 = vmatpush.bf16.xpose.msra.mxu0 0
        %4089 = vmatpush.bf16.xpose.msra.mxu0 0
        %4090 = vmatpush.bf16.xpose.msra.mxu0 0
        %4091 = vmatpush.bf16.xpose.msra.mxu0 0
        %4092 = vmatpush.bf16.xpose.msra.mxu0 %v4083
        %4093 = vmatmul.bf16.gmra.mxu0 %v4079
        %v4094 = vpop.f32.mrf.mxu0
        %v4095 = vadd.f32 %v3943, %v4094
        %v4096 = vpop.f32.mrf.mxu0
        %v4097 = vadd.f32 %v3944, %v4096
        %4098 = vdwg.mxu0
        %v4099 = vunpack.c.l.b16 %v3909
        %v4100 = vunpack.c.l.b16 %v3910
        %v4101 = vpack.c.b16 %v4100, %v4099
        %v4103 = vunpack.c.l.b16 %v3925
        %v4104 = vunpack.c.l.b16 %v3926
        %v4105 = vpack.c.b16 %v4104, %v4103
        %4107 = vmatpush.bf16.xpose.msra.mxu0 0
        %4108 = vmatpush.bf16.xpose.msra.mxu0 0
        %4109 = vmatpush.bf16.xpose.msra.mxu0 0
        %4110 = vmatpush.bf16.xpose.msra.mxu0 0
        %4111 = vmatpush.bf16.xpose.msra.mxu0 0
        %4112 = vmatpush.bf16.xpose.msra.mxu0 0
        %4113 = vmatpush.bf16.xpose.msra.mxu0 0
        %4114 = vmatpush.bf16.xpose.msra.mxu0 %v4105
        %4115 = vmatmul.bf16.gmra.mxu0 %v4101
        %v4116 = vpop.f32.mrf.mxu0
        %v4117 = vadd.f32 %v3943, %v4116
        %v4118 = vpop.f32.mrf.mxu0
        %v4119 = vadd.f32 %v3944, %v4118
        %4120 = vdwg.mxu0
        %vm4121 = vcmask 130048
        %v4122 = vsel %vm4121, %v3963, -inf
        %4123 = vmax.xlane.f32.xlu0 %v4122
        %v4124 = vpop.xlane.xlu0 %4123
        %v4125 = vsel %vm4121, %v3965, -inf
        %4126 = vmax.xlane.f32.xlu0 %v4125
        %v4127 = vpop.xlane.xlu0 %4126
        %v4128 = vsel %vm4121, %v3985, -inf
        %4129 = vmax.xlane.f32.xlu0 %v4128
        %v4130 = vpop.xlane.xlu0 %4129
        %v4131 = vsel %vm4121, %v3987, -inf
        %4132 = vmax.xlane.f32.xlu0 %v4131
        %v4133 = vpop.xlane.xlu0 %4132
        %v4134 = vsel %vm4121, %v4007, -inf
        %4135 = vmax.xlane.f32.xlu0 %v4134
        %v4136 = vpop.xlane.xlu0 %4135
        %v4137 = vsel %vm4121, %v4009, -inf
        %4138 = vmax.xlane.f32.xlu0 %v4137
        %v4139 = vpop.xlane.xlu0 %4138
        %v4140 = vsel %vm4121, %v4029, -inf
        %4141 = vmax.xlane.f32.xlu0 %v4140
        %v4142 = vpop.xlane.xlu0 %4141
        %v4143 = vsel %vm4121, %v4031, -inf
        %4144 = vmax.xlane.f32.xlu0 %v4143
        %v4145 = vpop.xlane.xlu0 %4144
        %v4146 = vsel %vm4121, %v4051, -inf
        %4147 = vmax.xlane.f32.xlu0 %v4146
        %v4148 = vpop.xlane.xlu0 %4147
        %v4149 = vsel %vm4121, %v4053, -inf
        %4150 = vmax.xlane.f32.xlu0 %v4149
        %v4151 = vpop.xlane.xlu0 %4150
        %v4152 = vsel %vm4121, %v4073, -inf
        %4153 = vmax.xlane.f32.xlu0 %v4152
        %v4154 = vpop.xlane.xlu0 %4153
        %v4155 = vsel %vm4121, %v4075, -inf
        %4156 = vmax.xlane.f32.xlu0 %v4155
        %v4157 = vpop.xlane.xlu0 %4156
        %v4158 = vsel %vm4121, %v4095, -inf
        %4159 = vmax.xlane.f32.xlu0 %v4158
        %v4160 = vpop.xlane.xlu0 %4159
        %v4161 = vsel %vm4121, %v4097, -inf
        %4162 = vmax.xlane.f32.xlu0 %v4161
        %v4163 = vpop.xlane.xlu0 %4162
        %v4164 = vsel %vm4121, %v4117, -inf
        %4165 = vmax.xlane.f32.xlu0 %v4164
        %v4166 = vpop.xlane.xlu0 %4165
        %v4167 = vsel %vm4121, %v4119, -inf
        %4168 = vmax.xlane.f32.xlu0 %v4167
        %v4169 = vpop.xlane.xlu0 %4168
        %v4170 = vsub.f32 %v3963, %v4124
        %v4171 = vsub.f32 %v3965, %v4127
        %v4172 = vsub.f32 %v3985, %v4130
        %v4173 = vsub.f32 %v3987, %v4133
        %v4174 = vsub.f32 %v4007, %v4136
        %v4175 = vsub.f32 %v4009, %v4139
        %v4176 = vsub.f32 %v4029, %v4142
        %v4177 = vsub.f32 %v4031, %v4145
        %v4178 = vsub.f32 %v4051, %v4148
        %v4179 = vsub.f32 %v4053, %v4151
        %v4180 = vsub.f32 %v4073, %v4154
        %v4181 = vsub.f32 %v4075, %v4157
        %v4182 = vsub.f32 %v4095, %v4160
        %v4183 = vsub.f32 %v4097, %v4163
        %v4184 = vsub.f32 %v4117, %v4166
        %v4185 = vsub.f32 %v4119, %v4169
        %v4186 = vmul.f32 %v4170, 1.442695
        %v4187 = vpow.pop %v4186
        %v4188 = vmul.f32 %v4171, 1.442695
        %v4189 = vpow.pop %v4188
        %v4190 = vmul.f32 %v4172, 1.442695
        %v4191 = vpow.pop %v4190
        %v4192 = vmul.f32 %v4173, 1.442695
        %v4193 = vpow.pop %v4192
        %v4194 = vmul.f32 %v4174, 1.442695
        %v4195 = vpow.pop %v4194
        %v4196 = vmul.f32 %v4175, 1.442695
        %v4197 = vpow.pop %v4196
        %v4198 = vmul.f32 %v4176, 1.442695
        %v4199 = vpow.pop %v4198
        %v4200 = vmul.f32 %v4177, 1.442695
        %v4201 = vpow.pop %v4200
        %v4202 = vmul.f32 %v4178, 1.442695
        %v4203 = vpow.pop %v4202
        %v4204 = vmul.f32 %v4179, 1.442695
        %v4205 = vpow.pop %v4204
        %v4206 = vmul.f32 %v4180, 1.442695
        %v4207 = vpow.pop %v4206
        %v4208 = vmul.f32 %v4181, 1.442695
        %v4209 = vpow.pop %v4208
        %v4210 = vmul.f32 %v4182, 1.442695
        %v4211 = vpow.pop %v4210
        %v4212 = vmul.f32 %v4183, 1.442695
        %v4213 = vpow.pop %v4212
        %v4214 = vmul.f32 %v4184, 1.442695
        %v4215 = vpow.pop %v4214
        %v4216 = vmul.f32 %v4185, 1.442695
        %v4217 = vpow.pop %v4216
        %v4218 = vsel %vm4121, %v4187, 0.0
        %4219 = vadd.xlane.f32.xlu0 %v4218
        %v4220 = vpop.xlane.xlu0 %4219
        %v4221 = vsel %vm4121, %v4189, 0.0
        %4222 = vadd.xlane.f32.xlu0 %v4221
        %v4223 = vpop.xlane.xlu0 %4222
        %v4224 = vsel %vm4121, %v4191, 0.0
        %4225 = vadd.xlane.f32.xlu0 %v4224
        %v4226 = vpop.xlane.xlu0 %4225
        %v4227 = vsel %vm4121, %v4193, 0.0
        %4228 = vadd.xlane.f32.xlu0 %v4227
        %v4229 = vpop.xlane.xlu0 %4228
        %v4230 = vsel %vm4121, %v4195, 0.0
        %4231 = vadd.xlane.f32.xlu0 %v4230
        %v4232 = vpop.xlane.xlu0 %4231
        %v4233 = vsel %vm4121, %v4197, 0.0
        %4234 = vadd.xlane.f32.xlu0 %v4233
        %v4235 = vpop.xlane.xlu0 %4234
        %v4236 = vsel %vm4121, %v4199, 0.0
        %4237 = vadd.xlane.f32.xlu0 %v4236
        %v4238 = vpop.xlane.xlu0 %4237
        %v4239 = vsel %vm4121, %v4201, 0.0
        %4240 = vadd.xlane.f32.xlu0 %v4239
        %v4241 = vpop.xlane.xlu0 %4240
        %v4242 = vsel %vm4121, %v4203, 0.0
        %4243 = vadd.xlane.f32.xlu0 %v4242
        %v4244 = vpop.xlane.xlu0 %4243
        %v4245 = vsel %vm4121, %v4205, 0.0
        %4246 = vadd.xlane.f32.xlu0 %v4245
        %v4247 = vpop.xlane.xlu0 %4246
        %v4248 = vsel %vm4121, %v4207, 0.0
        %4249 = vadd.xlane.f32.xlu0 %v4248
        %v4250 = vpop.xlane.xlu0 %4249
        %v4251 = vsel %vm4121, %v4209, 0.0
        %4252 = vadd.xlane.f32.xlu0 %v4251
        %v4253 = vpop.xlane.xlu0 %4252
        %v4254 = vsel %vm4121, %v4211, 0.0
        %4255 = vadd.xlane.f32.xlu0 %v4254
        %v4256 = vpop.xlane.xlu0 %4255
        %v4257 = vsel %vm4121, %v4213, 0.0
        %4258 = vadd.xlane.f32.xlu0 %v4257
        %v4259 = vpop.xlane.xlu0 %4258
        %v4260 = vsel %vm4121, %v4215, 0.0
        %4261 = vadd.xlane.f32.xlu0 %v4260
        %v4262 = vpop.xlane.xlu0 %4261
        %v4263 = vsel %vm4121, %v4217, 0.0
        %4264 = vadd.xlane.f32.xlu0 %v4263
        %v4265 = vpop.xlane.xlu0 %4264
        %v4266 = vrcp.pop %v4220
        %v4267 = vrcp.pop %v4223
        %v4268 = vrcp.pop %v4226
        %v4269 = vrcp.pop %v4229
        %v4270 = vrcp.pop %v4232
        %v4271 = vrcp.pop %v4235
        %v4272 = vrcp.pop %v4238
        %v4273 = vrcp.pop %v4241
        %v4274 = vrcp.pop %v4244
        %v4275 = vrcp.pop %v4247
        %v4276 = vrcp.pop %v4250
        %v4277 = vrcp.pop %v4253
        %v4278 = vrcp.pop %v4256
        %v4279 = vrcp.pop %v4259
        %v4280 = vrcp.pop %v4262
        %v4281 = vrcp.pop %v4265
        %v4282 = vmul.f32 %v4187, %v4266
        %v4283 = vmul.f32 %v4189, %v4267
        %v4284 = vmul.f32 %v4191, %v4268
        %v4285 = vmul.f32 %v4193, %v4269
        %v4286 = vmul.f32 %v4195, %v4270
        %v4287 = vmul.f32 %v4197, %v4271
        %v4288 = vmul.f32 %v4199, %v4272
        %v4289 = vmul.f32 %v4201, %v4273
        %v4290 = vmul.f32 %v4203, %v4274
        %v4291 = vmul.f32 %v4205, %v4275
        %v4292 = vmul.f32 %v4207, %v4276
        %v4293 = vmul.f32 %v4209, %v4277
        %v4294 = vmul.f32 %v4211, %v4278
        %v4295 = vmul.f32 %v4213, %v4279
        %v4296 = vmul.f32 %v4215, %v4280
        %v4297 = vmul.f32 %v4217, %v4281
        %v4298 = vpack.c.bf16 %v4282, %v4282
        %v4299 = vpack.c.bf16 %v4283, %v4283
        %v4300 = vpack.c.bf16 %v4284, %v4284
        %v4301 = vpack.c.bf16 %v4285, %v4285
        %v4302 = vpack.c.bf16 %v4286, %v4286
        %v4303 = vpack.c.bf16 %v4287, %v4287
        %v4304 = vpack.c.bf16 %v4288, %v4288
        %v4305 = vpack.c.bf16 %v4289, %v4289
        %v4306 = vpack.c.bf16 %v4290, %v4290
        %v4307 = vpack.c.bf16 %v4291, %v4291
        %v4308 = vpack.c.bf16 %v4292, %v4292
        %v4309 = vpack.c.bf16 %v4293, %v4293
        %v4310 = vpack.c.bf16 %v4294, %v4294
        %v4311 = vpack.c.bf16 %v4295, %v4295
        %v4312 = vpack.c.bf16 %v4296, %v4296
        %v4313 = vpack.c.bf16 %v4297, %v4297
        %v4316 = vunpack.c.l.b16 %v4298
        %v4317 = vunpack.c.l.b16 %v4299
        %v4318 = vpack.c.b16 %v4317, %v4316
        %v4319 = vunpack.c.l.b16 %v3887
        %v4320 = vunpack.c.l.b16 %v3889
        %v4321 = vpack.c.b16 %v4320, %v4319
        %v4324 = vsel %vm4121, %v4318, 0
        %4326 = vmatpush.bf16.msra.mxu0 0
        %4327 = vmatpush.bf16.msra.mxu0 0
        %4328 = vmatpush.bf16.msra.mxu0 0
        %4329 = vmatpush.bf16.msra.mxu0 0
        %4330 = vmatpush.bf16.msra.mxu0 0
        %4331 = vmatpush.bf16.msra.mxu0 0
        %4332 = vmatpush.bf16.msra.mxu0 0
        %4333 = vmatpush.bf16.msra.mxu0 %v4321
        %4334 = vmatmul.bf16.gmra.mxu0 %v4324
        %v4335 = vpop.f32.mrf.mxu0
        %v4336 = vadd.f32 0.0, %v4335
        %v4337 = vpop.f32.mrf.mxu0
        %v4338 = vadd.f32 0.0, %v4337
        %4339 = vdwg.mxu0
        %v4342 = vunpack.c.l.b16 %v4300
        %v4343 = vunpack.c.l.b16 %v4301
        %v4344 = vpack.c.b16 %v4343, %v4342
        %v4345 = vunpack.c.l.b16 %v3929
        %v4346 = vunpack.c.l.b16 %v3930
        %v4347 = vpack.c.b16 %v4346, %v4345
        %v4350 = vsel %vm4121, %v4344, 0
        %4352 = vmatpush.bf16.msra.mxu0 0
        %4353 = vmatpush.bf16.msra.mxu0 0
        %4354 = vmatpush.bf16.msra.mxu0 0
        %4355 = vmatpush.bf16.msra.mxu0 0
        %4356 = vmatpush.bf16.msra.mxu0 0
        %4357 = vmatpush.bf16.msra.mxu0 0
        %4358 = vmatpush.bf16.msra.mxu0 0
        %4359 = vmatpush.bf16.msra.mxu0 %v4347
        %4360 = vmatmul.bf16.gmra.mxu0 %v4350
        %v4361 = vpop.f32.mrf.mxu0
        %v4362 = vadd.f32 0.0, %v4361
        %v4363 = vpop.f32.mrf.mxu0
        %v4364 = vadd.f32 0.0, %v4363
        %4365 = vdwg.mxu0
        %v4368 = vunpack.c.l.b16 %v4302
        %v4369 = vunpack.c.l.b16 %v4303
        %v4370 = vpack.c.b16 %v4369, %v4368
        %v4371 = vunpack.c.l.b16 %v3888
        %v4372 = vunpack.c.l.b16 %v3890
        %v4373 = vpack.c.b16 %v4372, %v4371
        %v4376 = vsel %vm4121, %v4370, 0
        %4378 = vmatpush.bf16.msra.mxu0 0
        %4379 = vmatpush.bf16.msra.mxu0 0
        %4380 = vmatpush.bf16.msra.mxu0 0
        %4381 = vmatpush.bf16.msra.mxu0 0
        %4382 = vmatpush.bf16.msra.mxu0 0
        %4383 = vmatpush.bf16.msra.mxu0 0
        %4384 = vmatpush.bf16.msra.mxu0 0
        %4385 = vmatpush.bf16.msra.mxu0 %v4373
        %4386 = vmatmul.bf16.gmra.mxu0 %v4376
        %v4387 = vpop.f32.mrf.mxu0
        %v4388 = vadd.f32 0.0, %v4387
        %v4389 = vpop.f32.mrf.mxu0
        %v4390 = vadd.f32 0.0, %v4389
        %4391 = vdwg.mxu0
        %v4394 = vunpack.c.l.b16 %v4304
        %v4395 = vunpack.c.l.b16 %v4305
        %v4396 = vpack.c.b16 %v4395, %v4394
        %v4397 = vunpack.c.l.b16 %v3933
        %v4398 = vunpack.c.l.b16 %v3934
        %v4399 = vpack.c.b16 %v4398, %v4397
        %v4402 = vsel %vm4121, %v4396, 0
        %4404 = vmatpush.bf16.msra.mxu0 0
        %4405 = vmatpush.bf16.msra.mxu0 0
        %4406 = vmatpush.bf16.msra.mxu0 0
        %4407 = vmatpush.bf16.msra.mxu0 0
        %4408 = vmatpush.bf16.msra.mxu0 0
        %4409 = vmatpush.bf16.msra.mxu0 0
        %4410 = vmatpush.bf16.msra.mxu0 0
        %4411 = vmatpush.bf16.msra.mxu0 %v4399
        %4412 = vmatmul.bf16.gmra.mxu0 %v4402
        %v4413 = vpop.f32.mrf.mxu0
        %v4414 = vadd.f32 0.0, %v4413
        %v4415 = vpop.f32.mrf.mxu0
        %v4416 = vadd.f32 0.0, %v4415
        %4417 = vdwg.mxu0
        %v4420 = vunpack.c.l.b16 %v4306
        %v4421 = vunpack.c.l.b16 %v4307
        %v4422 = vpack.c.b16 %v4421, %v4420
        %v4423 = vunpack.c.l.b16 %v3891
        %v4424 = vunpack.c.l.b16 %v3893
        %v4425 = vpack.c.b16 %v4424, %v4423
        %v4428 = vsel %vm4121, %v4422, 0
        %4430 = vmatpush.bf16.msra.mxu0 0
        %4431 = vmatpush.bf16.msra.mxu0 0
        %4432 = vmatpush.bf16.msra.mxu0 0
        %4433 = vmatpush.bf16.msra.mxu0 0
        %4434 = vmatpush.bf16.msra.mxu0 0
        %4435 = vmatpush.bf16.msra.mxu0 0
        %4436 = vmatpush.bf16.msra.mxu0 0
        %4437 = vmatpush.bf16.msra.mxu0 %v4425
        %4438 = vmatmul.bf16.gmra.mxu0 %v4428
        %v4439 = vpop.f32.mrf.mxu0
        %v4440 = vadd.f32 0.0, %v4439
        %v4441 = vpop.f32.mrf.mxu0
        %v4442 = vadd.f32 0.0, %v4441
        %4443 = vdwg.mxu0
        %v4446 = vunpack.c.l.b16 %v4308
        %v4447 = vunpack.c.l.b16 %v4309
        %v4448 = vpack.c.b16 %v4447, %v4446
        %v4449 = vunpack.c.l.b16 %v3937
        %v4450 = vunpack.c.l.b16 %v3938
        %v4451 = vpack.c.b16 %v4450, %v4449
        %v4454 = vsel %vm4121, %v4448, 0
        %4456 = vmatpush.bf16.msra.mxu0 0
        %4457 = vmatpush.bf16.msra.mxu0 0
        %4458 = vmatpush.bf16.msra.mxu0 0
        %4459 = vmatpush.bf16.msra.mxu0 0
        %4460 = vmatpush.bf16.msra.mxu0 0
        %4461 = vmatpush.bf16.msra.mxu0 0
        %4462 = vmatpush.bf16.msra.mxu0 0
        %4463 = vmatpush.bf16.msra.mxu0 %v4451
        %4464 = vmatmul.bf16.gmra.mxu0 %v4454
        %v4465 = vpop.f32.mrf.mxu0
        %v4466 = vadd.f32 0.0, %v4465
        %v4467 = vpop.f32.mrf.mxu0
        %v4468 = vadd.f32 0.0, %v4467
        %4469 = vdwg.mxu0
        %v4472 = vunpack.c.l.b16 %v4310
        %v4473 = vunpack.c.l.b16 %v4311
        %v4474 = vpack.c.b16 %v4473, %v4472
        %v4475 = vunpack.c.l.b16 %v3892
        %v4476 = vunpack.c.l.b16 %v3894
        %v4477 = vpack.c.b16 %v4476, %v4475
        %v4480 = vsel %vm4121, %v4474, 0
        %4482 = vmatpush.bf16.msra.mxu0 0
        %4483 = vmatpush.bf16.msra.mxu0 0
        %4484 = vmatpush.bf16.msra.mxu0 0
        %4485 = vmatpush.bf16.msra.mxu0 0
        %4486 = vmatpush.bf16.msra.mxu0 0
        %4487 = vmatpush.bf16.msra.mxu0 0
        %4488 = vmatpush.bf16.msra.mxu0 0
        %4489 = vmatpush.bf16.msra.mxu0 %v4477
        %4490 = vmatmul.bf16.gmra.mxu0 %v4480
        %v4491 = vpop.f32.mrf.mxu0
        %v4492 = vadd.f32 0.0, %v4491
        %v4493 = vpop.f32.mrf.mxu0
        %v4494 = vadd.f32 0.0, %v4493
        %4495 = vdwg.mxu0
        %v4498 = vunpack.c.l.b16 %v4312
        %v4499 = vunpack.c.l.b16 %v4313
        %v4500 = vpack.c.b16 %v4499, %v4498
        %v4501 = vunpack.c.l.b16 %v3941
        %v4502 = vunpack.c.l.b16 %v3942
        %v4503 = vpack.c.b16 %v4502, %v4501
        %v4506 = vsel %vm4121, %v4500, 0
        %4508 = vmatpush.bf16.msra.mxu0 0
        %4509 = vmatpush.bf16.msra.mxu0 0
        %4510 = vmatpush.bf16.msra.mxu0 0
        %4511 = vmatpush.bf16.msra.mxu0 0
        %4512 = vmatpush.bf16.msra.mxu0 0
        %4513 = vmatpush.bf16.msra.mxu0 0
        %4514 = vmatpush.bf16.msra.mxu0 0
        %4515 = vmatpush.bf16.msra.mxu0 %v4503
        %4516 = vmatmul.bf16.gmra.mxu0 %v4506
        %v4517 = vpop.f32.mrf.mxu0
        %v4518 = vadd.f32 0.0, %v4517
        %v4519 = vpop.f32.mrf.mxu0
        %v4520 = vadd.f32 0.0, %v4519
        %4521 = vdwg.mxu0
        %v4522 = vld [vmem:[%s557] sm:$0x3f]
        %v4523 = vld [vmem:[%s557 + $0x8] sm:$0x3f]
        %v4524 = vld [vmem:[%s557 + $0x10] sm:$0x3f]
        %v4525 = vld [vmem:[%s557 + $0x18] sm:$0x3f]
        %v4526 = vpack.c.bf16 %v4338, %v4336
        %v4527 = vpack.c.bf16 %v4364, %v4362
        %v4528 = vpack.c.bf16 %v4390, %v4388
        %v4529 = vpack.c.bf16 %v4416, %v4414
        %v4530 = vpack.c.bf16 %v4442, %v4440
        %v4531 = vpack.c.bf16 %v4468, %v4466
        %v4532 = vpack.c.bf16 %v4494, %v4492
        %v4533 = vpack.c.bf16 %v4520, %v4518
        %v4534 = vld [vmem:[%s462] sm:$0xff]
        %v4535 = vld [vmem:[%s462 + $0x8] sm:$0xff]
        %v4536 = vld [vmem:[%s462 + $0x10] sm:$0xff]
        %v4537 = vld [vmem:[%s462 + $0x18] sm:$0xff]
        %v4538 = vld [vmem:[%s462 + $0x20] sm:$0xff]
        %v4539 = vld [vmem:[%s462 + $0x28] sm:$0xff]
        %v4540 = vld [vmem:[%s462 + $0x30] sm:$0xff]
        %v4541 = vld [vmem:[%s462 + $0x38] sm:$0xff]
        %v4542 = vld [vmem:[%s462 + $0x40] sm:$0xff]
        %v4543 = vld [vmem:[%s462 + $0x48] sm:$0xff]
        %v4544 = vld [vmem:[%s462 + $0x50] sm:$0xff]
        %v4545 = vld [vmem:[%s462 + $0x58] sm:$0xff]
        %v4546 = vld [vmem:[%s462 + $0x60] sm:$0xff]
        %v4547 = vld [vmem:[%s462 + $0x68] sm:$0xff]
        %v4548 = vld [vmem:[%s462 + $0x70] sm:$0xff]
        %v4549 = vld [vmem:[%s462 + $0x78] sm:$0xff]
        %v4550 = vld [vmem:[%s462 + $0x80] sm:$0xff]
        %v4551 = vld [vmem:[%s462 + $0x88] sm:$0xff]
        %v4552 = vld [vmem:[%s462 + $0x90] sm:$0xff]
        %v4553 = vld [vmem:[%s462 + $0x98] sm:$0xff]
        %v4554 = vld [vmem:[%s462 + $0xa0] sm:$0xff]
        %v4555 = vld [vmem:[%s462 + $0xa8] sm:$0xff]
        %v4556 = vld [vmem:[%s462 + $0xb0] sm:$0xff]
        %v4557 = vld [vmem:[%s462 + $0xb8] sm:$0xff]
        %v4558 = vld [vmem:[%s462 + $0xc0] sm:$0xff]
        %v4559 = vld [vmem:[%s462 + $0xc8] sm:$0xff]
        %v4560 = vld [vmem:[%s462 + $0xd0] sm:$0xff]
        %v4561 = vld [vmem:[%s462 + $0xd8] sm:$0xff]
        %v4562 = vld [vmem:[%s462 + $0xe0] sm:$0xff]
        %v4563 = vld [vmem:[%s462 + $0xe8] sm:$0xff]
        %v4564 = vld [vmem:[%s462 + $0xf0] sm:$0xff]
        %v4565 = vld [vmem:[%s462 + $0xf8] sm:$0xff]
        %v4566 = vld [vmem:[%s462 + $0x100] sm:$0xff]
        %v4567 = vld [vmem:[%s462 + $0x108] sm:$0xff]
        %v4568 = vld [vmem:[%s462 + $0x110] sm:$0xff]
        %v4569 = vld [vmem:[%s462 + $0x118] sm:$0xff]
        %v4570 = vld [vmem:[%s462 + $0x120] sm:$0xff]
        %v4571 = vld [vmem:[%s462 + $0x128] sm:$0xff]
        %v4572 = vld [vmem:[%s462 + $0x130] sm:$0xff]
        %v4573 = vld [vmem:[%s462 + $0x138] sm:$0xff]
        %v4574 = vld [vmem:[%s462 + $0x140] sm:$0xff]
        %v4575 = vld [vmem:[%s462 + $0x148] sm:$0xff]
        %v4576 = vld [vmem:[%s462 + $0x150] sm:$0xff]
        %v4577 = vld [vmem:[%s462 + $0x158] sm:$0xff]
        %v4578 = vld [vmem:[%s462 + $0x160] sm:$0xff]
        %v4579 = vld [vmem:[%s462 + $0x168] sm:$0xff]
        %v4580 = vld [vmem:[%s462 + $0x170] sm:$0xff]
        %v4581 = vld [vmem:[%s462 + $0x178] sm:$0xff]
        %v4582 = vld [vmem:[%s462 + $0x180] sm:$0xff]
        %v4583 = vld [vmem:[%s462 + $0x188] sm:$0xff]
        %v4584 = vld [vmem:[%s462 + $0x190] sm:$0xff]
        %v4585 = vld [vmem:[%s462 + $0x198] sm:$0xff]
        %v4586 = vld [vmem:[%s462 + $0x1a0] sm:$0xff]
        %v4587 = vld [vmem:[%s462 + $0x1a8] sm:$0xff]
        %v4588 = vld [vmem:[%s462 + $0x1b0] sm:$0xff]
        %v4589 = vld [vmem:[%s462 + $0x1b8] sm:$0xff]
        %v4590 = vld [vmem:[%s462 + $0x1c0] sm:$0xff]
        %v4591 = vld [vmem:[%s462 + $0x1c8] sm:$0xff]
        %v4592 = vld [vmem:[%s462 + $0x1d0] sm:$0xff]
        %v4593 = vld [vmem:[%s462 + $0x1d8] sm:$0xff]
        %v4594 = vld [vmem:[%s462 + $0x1e0] sm:$0xff]
        %v4595 = vld [vmem:[%s462 + $0x1e8] sm:$0xff]
        %v4596 = vld [vmem:[%s462 + $0x1f0] sm:$0xff]
        %v4597 = vld [vmem:[%s462 + $0x1f8] sm:$0xff]
        %v4598 = vld [vmem:[%s462 + $0x200] sm:$0xff]
        %v4599 = vld [vmem:[%s462 + $0x208] sm:$0xff]
        %v4600 = vld [vmem:[%s462 + $0x210] sm:$0xff]
        %v4601 = vld [vmem:[%s462 + $0x218] sm:$0xff]
        %v4602 = vld [vmem:[%s462 + $0x220] sm:$0xff]
        %v4603 = vld [vmem:[%s462 + $0x228] sm:$0xff]
        %v4604 = vld [vmem:[%s462 + $0x230] sm:$0xff]
        %v4605 = vld [vmem:[%s462 + $0x238] sm:$0xff]
        %v4606 = vld [vmem:[%s462 + $0x240] sm:$0xff]
        %v4607 = vld [vmem:[%s462 + $0x248] sm:$0xff]
        %v4608 = vld [vmem:[%s462 + $0x250] sm:$0xff]
        %v4609 = vld [vmem:[%s462 + $0x258] sm:$0xff]
        %v4610 = vld [vmem:[%s462 + $0x260] sm:$0xff]
        %v4611 = vld [vmem:[%s462 + $0x268] sm:$0xff]
        %v4612 = vld [vmem:[%s462 + $0x270] sm:$0xff]
        %v4613 = vld [vmem:[%s462 + $0x278] sm:$0xff]
        %v4614 = vld [vmem:[%s462 + $0x280] sm:$0xff]
        %v4615 = vld [vmem:[%s462 + $0x288] sm:$0xff]
        %v4616 = vld [vmem:[%s462 + $0x290] sm:$0xff]
        %v4617 = vld [vmem:[%s462 + $0x298] sm:$0xff]
        %v4618 = vld [vmem:[%s462 + $0x2a0] sm:$0xff]
        %v4619 = vld [vmem:[%s462 + $0x2a8] sm:$0xff]
        %v4620 = vld [vmem:[%s462 + $0x2b0] sm:$0xff]
        %v4621 = vld [vmem:[%s462 + $0x2b8] sm:$0xff]
        %v4622 = vld [vmem:[%s462 + $0x2c0] sm:$0xff]
        %v4623 = vld [vmem:[%s462 + $0x2c8] sm:$0xff]
        %v4624 = vld [vmem:[%s462 + $0x2d0] sm:$0xff]
        %v4625 = vld [vmem:[%s462 + $0x2d8] sm:$0xff]
        %v4626 = vld [vmem:[%s462 + $0x2e0] sm:$0xff]
        %v4627 = vld [vmem:[%s462 + $0x2e8] sm:$0xff]
        %v4628 = vld [vmem:[%s462 + $0x2f0] sm:$0xff]
        %v4629 = vld [vmem:[%s462 + $0x2f8] sm:$0xff]
        %v4630 = vld [vmem:[%s462 + $0x300] sm:$0xff]
        %v4631 = vld [vmem:[%s462 + $0x308] sm:$0xff]
        %v4632 = vld [vmem:[%s462 + $0x310] sm:$0xff]
        %v4633 = vld [vmem:[%s462 + $0x318] sm:$0xff]
        %v4634 = vld [vmem:[%s462 + $0x320] sm:$0xff]
        %v4635 = vld [vmem:[%s462 + $0x328] sm:$0xff]
        %v4636 = vld [vmem:[%s462 + $0x330] sm:$0xff]
        %v4637 = vld [vmem:[%s462 + $0x338] sm:$0xff]
        %v4638 = vld [vmem:[%s462 + $0x340] sm:$0xff]
        %v4639 = vld [vmem:[%s462 + $0x348] sm:$0xff]
        %v4640 = vld [vmem:[%s462 + $0x350] sm:$0xff]
        %v4641 = vld [vmem:[%s462 + $0x358] sm:$0xff]
        %v4642 = vld [vmem:[%s462 + $0x360] sm:$0xff]
        %v4643 = vld [vmem:[%s462 + $0x368] sm:$0xff]
        %v4644 = vld [vmem:[%s462 + $0x370] sm:$0xff]
        %v4645 = vld [vmem:[%s462 + $0x378] sm:$0xff]
        %v4646 = vld [vmem:[%s462 + $0x380] sm:$0xff]
        %v4647 = vld [vmem:[%s462 + $0x388] sm:$0xff]
        %v4648 = vld [vmem:[%s462 + $0x390] sm:$0xff]
        %v4649 = vld [vmem:[%s462 + $0x398] sm:$0xff]
        %v4650 = vld [vmem:[%s462 + $0x3a0] sm:$0xff]
        %v4651 = vld [vmem:[%s462 + $0x3a8] sm:$0xff]
        %v4652 = vld [vmem:[%s462 + $0x3b0] sm:$0xff]
        %v4653 = vld [vmem:[%s462 + $0x3b8] sm:$0xff]
        %v4654 = vld [vmem:[%s462 + $0x3c0] sm:$0xff]
        %v4655 = vld [vmem:[%s462 + $0x3c8] sm:$0xff]
        %v4656 = vld [vmem:[%s462 + $0x3d0] sm:$0xff]
        %v4657 = vld [vmem:[%s462 + $0x3d8] sm:$0xff]
        %v4658 = vld [vmem:[%s462 + $0x3e0] sm:$0xff]
        %v4659 = vld [vmem:[%s462 + $0x3e8] sm:$0xff]
        %v4660 = vld [vmem:[%s462 + $0x3f0] sm:$0xff]
        %v4661 = vld [vmem:[%s462 + $0x3f8] sm:$0xff]
        %v4662 = vperm.slane %v4522, 0
        %v4663 = vperm.slane %v4523, 0
        %v4664 = vperm.slane %v4524, 0
        %v4665 = vperm.slane %v4525, 0
        %v4794 = vunpack.c.l.b16 %v4534
        %v4795 = vunpack.c.h.b16 %v4534
        %v4796 = vunpack.c.l.b16 %v4535
        %v4797 = vunpack.c.h.b16 %v4535
        %v4798 = vunpack.c.l.b16 %v4536
        %v4799 = vunpack.c.h.b16 %v4536
        %v4800 = vunpack.c.l.b16 %v4537
        %v4801 = vunpack.c.h.b16 %v4537
        %v4802 = vunpack.c.l.b16 %v4538
        %v4803 = vunpack.c.h.b16 %v4538
        %v4804 = vunpack.c.l.b16 %v4539
        %v4805 = vunpack.c.h.b16 %v4539
        %v4806 = vunpack.c.l.b16 %v4540
        %v4807 = vunpack.c.h.b16 %v4540
        %v4808 = vunpack.c.l.b16 %v4541
        %v4809 = vunpack.c.h.b16 %v4541
        %v4810 = vunpack.c.l.b16 %v4542
        %v4811 = vunpack.c.h.b16 %v4542
        %v4812 = vunpack.c.l.b16 %v4543
        %v4813 = vunpack.c.h.b16 %v4543
        %v4814 = vunpack.c.l.b16 %v4544
        %v4815 = vunpack.c.h.b16 %v4544
        %v4816 = vunpack.c.l.b16 %v4545
        %v4817 = vunpack.c.h.b16 %v4545
        %v4818 = vunpack.c.l.b16 %v4546
        %v4819 = vunpack.c.h.b16 %v4546
        %v4820 = vunpack.c.l.b16 %v4547
        %v4821 = vunpack.c.h.b16 %v4547
        %v4822 = vunpack.c.l.b16 %v4548
        %v4823 = vunpack.c.h.b16 %v4548
        %v4824 = vunpack.c.l.b16 %v4549
        %v4825 = vunpack.c.h.b16 %v4549
        %v4826 = vunpack.c.l.b16 %v4550
        %v4827 = vunpack.c.h.b16 %v4550
        %v4828 = vunpack.c.l.b16 %v4551
        %v4829 = vunpack.c.h.b16 %v4551
        %v4830 = vunpack.c.l.b16 %v4552
        %v4831 = vunpack.c.h.b16 %v4552
        %v4832 = vunpack.c.l.b16 %v4553
        %v4833 = vunpack.c.h.b16 %v4553
        %v4834 = vunpack.c.l.b16 %v4554
        %v4835 = vunpack.c.h.b16 %v4554
        %v4836 = vunpack.c.l.b16 %v4555
        %v4837 = vunpack.c.h.b16 %v4555
        %v4838 = vunpack.c.l.b16 %v4556
        %v4839 = vunpack.c.h.b16 %v4556
        %v4840 = vunpack.c.l.b16 %v4557
        %v4841 = vunpack.c.h.b16 %v4557
        %v4842 = vunpack.c.l.b16 %v4558
        %v4843 = vunpack.c.h.b16 %v4558
        %v4844 = vunpack.c.l.b16 %v4559
        %v4845 = vunpack.c.h.b16 %v4559
        %v4846 = vunpack.c.l.b16 %v4560
        %v4847 = vunpack.c.h.b16 %v4560
        %v4848 = vunpack.c.l.b16 %v4561
        %v4849 = vunpack.c.h.b16 %v4561
        %v4850 = vunpack.c.l.b16 %v4562
        %v4851 = vunpack.c.h.b16 %v4562
        %v4852 = vunpack.c.l.b16 %v4563
        %v4853 = vunpack.c.h.b16 %v4563
        %v4854 = vunpack.c.l.b16 %v4564
        %v4855 = vunpack.c.h.b16 %v4564
        %v4856 = vunpack.c.l.b16 %v4565
        %v4857 = vunpack.c.h.b16 %v4565
        %v4858 = vunpack.c.l.b16 %v4566
        %v4859 = vunpack.c.h.b16 %v4566
        %v4860 = vunpack.c.l.b16 %v4567
        %v4861 = vunpack.c.h.b16 %v4567
        %v4862 = vunpack.c.l.b16 %v4568
        %v4863 = vunpack.c.h.b16 %v4568
        %v4864 = vunpack.c.l.b16 %v4569
        %v4865 = vunpack.c.h.b16 %v4569
        %v4866 = vunpack.c.l.b16 %v4570
        %v4867 = vunpack.c.h.b16 %v4570
        %v4868 = vunpack.c.l.b16 %v4571
        %v4869 = vunpack.c.h.b16 %v4571
        %v4870 = vunpack.c.l.b16 %v4572
        %v4871 = vunpack.c.h.b16 %v4572
        %v4872 = vunpack.c.l.b16 %v4573
        %v4873 = vunpack.c.h.b16 %v4573
        %v4874 = vunpack.c.l.b16 %v4574
        %v4875 = vunpack.c.h.b16 %v4574
        %v4876 = vunpack.c.l.b16 %v4575
        %v4877 = vunpack.c.h.b16 %v4575
        %v4878 = vunpack.c.l.b16 %v4576
        %v4879 = vunpack.c.h.b16 %v4576
        %v4880 = vunpack.c.l.b16 %v4577
        %v4881 = vunpack.c.h.b16 %v4577
        %v4882 = vunpack.c.l.b16 %v4578
        %v4883 = vunpack.c.h.b16 %v4578
        %v4884 = vunpack.c.l.b16 %v4579
        %v4885 = vunpack.c.h.b16 %v4579
        %v4886 = vunpack.c.l.b16 %v4580
        %v4887 = vunpack.c.h.b16 %v4580
        %v4888 = vunpack.c.l.b16 %v4581
        %v4889 = vunpack.c.h.b16 %v4581
        %v4890 = vunpack.c.l.b16 %v4582
        %v4891 = vunpack.c.h.b16 %v4582
        %v4892 = vunpack.c.l.b16 %v4583
        %v4893 = vunpack.c.h.b16 %v4583
        %v4894 = vunpack.c.l.b16 %v4584
        %v4895 = vunpack.c.h.b16 %v4584
        %v4896 = vunpack.c.l.b16 %v4585
        %v4897 = vunpack.c.h.b16 %v4585
        %v4898 = vunpack.c.l.b16 %v4586
        %v4899 = vunpack.c.h.b16 %v4586
        %v4900 = vunpack.c.l.b16 %v4587
        %v4901 = vunpack.c.h.b16 %v4587
        %v4902 = vunpack.c.l.b16 %v4588
        %v4903 = vunpack.c.h.b16 %v4588
        %v4904 = vunpack.c.l.b16 %v4589
        %v4905 = vunpack.c.h.b16 %v4589
        %v4906 = vunpack.c.l.b16 %v4590
        %v4907 = vunpack.c.h.b16 %v4590
        %v4908 = vunpack.c.l.b16 %v4591
        %v4909 = vunpack.c.h.b16 %v4591
        %v4910 = vunpack.c.l.b16 %v4592
        %v4911 = vunpack.c.h.b16 %v4592
        %v4912 = vunpack.c.l.b16 %v4593
        %v4913 = vunpack.c.h.b16 %v4593
        %v4914 = vunpack.c.l.b16 %v4594
        %v4915 = vunpack.c.h.b16 %v4594
        %v4916 = vunpack.c.l.b16 %v4595
        %v4917 = vunpack.c.h.b16 %v4595
        %v4918 = vunpack.c.l.b16 %v4596
        %v4919 = vunpack.c.h.b16 %v4596
        %v4920 = vunpack.c.l.b16 %v4597
        %v4921 = vunpack.c.h.b16 %v4597
        %v4922 = vunpack.c.l.b16 %v4598
        %v4923 = vunpack.c.h.b16 %v4598
        %v4924 = vunpack.c.l.b16 %v4599
        %v4925 = vunpack.c.h.b16 %v4599
        %v4926 = vunpack.c.l.b16 %v4600
        %v4927 = vunpack.c.h.b16 %v4600
        %v4928 = vunpack.c.l.b16 %v4601
        %v4929 = vunpack.c.h.b16 %v4601
        %v4930 = vunpack.c.l.b16 %v4602
        %v4931 = vunpack.c.h.b16 %v4602
        %v4932 = vunpack.c.l.b16 %v4603
        %v4933 = vunpack.c.h.b16 %v4603
        %v4934 = vunpack.c.l.b16 %v4604
        %v4935 = vunpack.c.h.b16 %v4604
        %v4936 = vunpack.c.l.b16 %v4605
        %v4937 = vunpack.c.h.b16 %v4605
        %v4938 = vunpack.c.l.b16 %v4606
        %v4939 = vunpack.c.h.b16 %v4606
        %v4940 = vunpack.c.l.b16 %v4607
        %v4941 = vunpack.c.h.b16 %v4607
        %v4942 = vunpack.c.l.b16 %v4608
        %v4943 = vunpack.c.h.b16 %v4608
        %v4944 = vunpack.c.l.b16 %v4609
        %v4945 = vunpack.c.h.b16 %v4609
        %v4946 = vunpack.c.l.b16 %v4610
        %v4947 = vunpack.c.h.b16 %v4610
        %v4948 = vunpack.c.l.b16 %v4611
        %v4949 = vunpack.c.h.b16 %v4611
        %v4950 = vunpack.c.l.b16 %v4612
        %v4951 = vunpack.c.h.b16 %v4612
        %v4952 = vunpack.c.l.b16 %v4613
        %v4953 = vunpack.c.h.b16 %v4613
        %v4954 = vunpack.c.l.b16 %v4614
        %v4955 = vunpack.c.h.b16 %v4614
        %v4956 = vunpack.c.l.b16 %v4615
        %v4957 = vunpack.c.h.b16 %v4615
        %v4958 = vunpack.c.l.b16 %v4616
        %v4959 = vunpack.c.h.b16 %v4616
        %v4960 = vunpack.c.l.b16 %v4617
        %v4961 = vunpack.c.h.b16 %v4617
        %v4962 = vunpack.c.l.b16 %v4618
        %v4963 = vunpack.c.h.b16 %v4618
        %v4964 = vunpack.c.l.b16 %v4619
        %v4965 = vunpack.c.h.b16 %v4619
        %v4966 = vunpack.c.l.b16 %v4620
        %v4967 = vunpack.c.h.b16 %v4620
        %v4968 = vunpack.c.l.b16 %v4621
        %v4969 = vunpack.c.h.b16 %v4621
        %v4970 = vunpack.c.l.b16 %v4622
        %v4971 = vunpack.c.h.b16 %v4622
        %v4972 = vunpack.c.l.b16 %v4623
        %v4973 = vunpack.c.h.b16 %v4623
        %v4974 = vunpack.c.l.b16 %v4624
        %v4975 = vunpack.c.h.b16 %v4624
        %v4976 = vunpack.c.l.b16 %v4625
        %v4977 = vunpack.c.h.b16 %v4625
        %v4978 = vunpack.c.l.b16 %v4626
        %v4979 = vunpack.c.h.b16 %v4626
        %v4980 = vunpack.c.l.b16 %v4627
        %v4981 = vunpack.c.h.b16 %v4627
        %v4982 = vunpack.c.l.b16 %v4628
        %v4983 = vunpack.c.h.b16 %v4628
        %v4984 = vunpack.c.l.b16 %v4629
        %v4985 = vunpack.c.h.b16 %v4629
        %v4986 = vunpack.c.l.b16 %v4630
        %v4987 = vunpack.c.h.b16 %v4630
        %v4988 = vunpack.c.l.b16 %v4631
        %v4989 = vunpack.c.h.b16 %v4631
        %v4990 = vunpack.c.l.b16 %v4632
        %v4991 = vunpack.c.h.b16 %v4632
        %v4992 = vunpack.c.l.b16 %v4633
        %v4993 = vunpack.c.h.b16 %v4633
        %v4994 = vunpack.c.l.b16 %v4634
        %v4995 = vunpack.c.h.b16 %v4634
        %v4996 = vunpack.c.l.b16 %v4635
        %v4997 = vunpack.c.h.b16 %v4635
        %v4998 = vunpack.c.l.b16 %v4636
        %v4999 = vunpack.c.h.b16 %v4636
        %v5000 = vunpack.c.l.b16 %v4637
        %v5001 = vunpack.c.h.b16 %v4637
        %v5002 = vunpack.c.l.b16 %v4638
        %v5003 = vunpack.c.h.b16 %v4638
        %v5004 = vunpack.c.l.b16 %v4639
        %v5005 = vunpack.c.h.b16 %v4639
        %v5006 = vunpack.c.l.b16 %v4640
        %v5007 = vunpack.c.h.b16 %v4640
        %v5008 = vunpack.c.l.b16 %v4641
        %v5009 = vunpack.c.h.b16 %v4641
        %v5010 = vunpack.c.l.b16 %v4642
        %v5011 = vunpack.c.h.b16 %v4642
        %v5012 = vunpack.c.l.b16 %v4643
        %v5013 = vunpack.c.h.b16 %v4643
        %v5014 = vunpack.c.l.b16 %v4644
        %v5015 = vunpack.c.h.b16 %v4644
        %v5016 = vunpack.c.l.b16 %v4645
        %v5017 = vunpack.c.h.b16 %v4645
        %v5018 = vunpack.c.l.b16 %v4646
        %v5019 = vunpack.c.h.b16 %v4646
        %v5020 = vunpack.c.l.b16 %v4647
        %v5021 = vunpack.c.h.b16 %v4647
        %v5022 = vunpack.c.l.b16 %v4648
        %v5023 = vunpack.c.h.b16 %v4648
        %v5024 = vunpack.c.l.b16 %v4649
        %v5025 = vunpack.c.h.b16 %v4649
        %v5026 = vunpack.c.l.b16 %v4650
        %v5027 = vunpack.c.h.b16 %v4650
        %v5028 = vunpack.c.l.b16 %v4651
        %v5029 = vunpack.c.h.b16 %v4651
        %v5030 = vunpack.c.l.b16 %v4652
        %v5031 = vunpack.c.h.b16 %v4652
        %v5032 = vunpack.c.l.b16 %v4653
        %v5033 = vunpack.c.h.b16 %v4653
        %v5034 = vunpack.c.l.b16 %v4654
        %v5035 = vunpack.c.h.b16 %v4654
        %v5036 = vunpack.c.l.b16 %v4655
        %v5037 = vunpack.c.h.b16 %v4655
        %v5038 = vunpack.c.l.b16 %v4656
        %v5039 = vunpack.c.h.b16 %v4656
        %v5040 = vunpack.c.l.b16 %v4657
        %v5041 = vunpack.c.h.b16 %v4657
        %v5042 = vunpack.c.l.b16 %v4658
        %v5043 = vunpack.c.h.b16 %v4658
        %v5044 = vunpack.c.l.b16 %v4659
        %v5045 = vunpack.c.h.b16 %v4659
        %v5046 = vunpack.c.l.b16 %v4660
        %v5047 = vunpack.c.h.b16 %v4660
        %v5048 = vunpack.c.l.b16 %v4661
        %v5049 = vunpack.c.h.b16 %v4661
        %v5050 = vpack.c.b16 %v4798, %v4794
        %v5051 = vpack.c.b16 %v4799, %v4795
        %v5052 = vpack.c.b16 %v4800, %v4796
        %v5053 = vpack.c.b16 %v4801, %v4797
        %v5054 = vpack.c.b16 %v4806, %v4802
        %v5055 = vpack.c.b16 %v4807, %v4803
        %v5056 = vpack.c.b16 %v4808, %v4804
        %v5057 = vpack.c.b16 %v4809, %v4805
        %v5058 = vpack.c.b16 %v4814, %v4810
        %v5059 = vpack.c.b16 %v4815, %v4811
        %v5060 = vpack.c.b16 %v4816, %v4812
        %v5061 = vpack.c.b16 %v4817, %v4813
        %v5062 = vpack.c.b16 %v4822, %v4818
        %v5063 = vpack.c.b16 %v4823, %v4819
        %v5064 = vpack.c.b16 %v4824, %v4820
        %v5065 = vpack.c.b16 %v4825, %v4821
        %v5066 = vpack.c.b16 %v4830, %v4826
        %v5067 = vpack.c.b16 %v4831, %v4827
        %v5068 = vpack.c.b16 %v4832, %v4828
        %v5069 = vpack.c.b16 %v4833, %v4829
        %v5070 = vpack.c.b16 %v4838, %v4834
        %v5071 = vpack.c.b16 %v4839, %v4835
        %v5072 = vpack.c.b16 %v4840, %v4836
        %v5073 = vpack.c.b16 %v4841, %v4837
        %v5074 = vpack.c.b16 %v4846, %v4842
        %v5075 = vpack.c.b16 %v4847, %v4843
        %v5076 = vpack.c.b16 %v4848, %v4844
        %v5077 = vpack.c.b16 %v4849, %v4845
        %v5078 = vpack.c.b16 %v4854, %v4850
        %v5079 = vpack.c.b16 %v4855, %v4851
        %v5080 = vpack.c.b16 %v4856, %v4852
        %v5081 = vpack.c.b16 %v4857, %v4853
        %v5082 = vpack.c.b16 %v4862, %v4858
        %v5083 = vpack.c.b16 %v4863, %v4859
        %v5084 = vpack.c.b16 %v4864, %v4860
        %v5085 = vpack.c.b16 %v4865, %v4861
        %v5086 = vpack.c.b16 %v4870, %v4866
        %v5087 = vpack.c.b16 %v4871, %v4867
        %v5088 = vpack.c.b16 %v4872, %v4868
        %v5089 = vpack.c.b16 %v4873, %v4869
        %v5090 = vpack.c.b16 %v4878, %v4874
        %v5091 = vpack.c.b16 %v4879, %v4875
        %v5092 = vpack.c.b16 %v4880, %v4876
        %v5093 = vpack.c.b16 %v4881, %v4877
        %v5094 = vpack.c.b16 %v4886, %v4882
        %v5095 = vpack.c.b16 %v4887, %v4883
        %v5096 = vpack.c.b16 %v4888, %v4884
        %v5097 = vpack.c.b16 %v4889, %v4885
        %v5098 = vpack.c.b16 %v4894, %v4890
        %v5099 = vpack.c.b16 %v4895, %v4891
        %v5100 = vpack.c.b16 %v4896, %v4892
        %v5101 = vpack.c.b16 %v4897, %v4893
        %v5102 = vpack.c.b16 %v4902, %v4898
        %v5103 = vpack.c.b16 %v4903, %v4899
        %v5104 = vpack.c.b16 %v4904, %v4900
        %v5105 = vpack.c.b16 %v4905, %v4901
        %v5106 = vpack.c.b16 %v4910, %v4906
        %v5107 = vpack.c.b16 %v4911, %v4907
        %v5108 = vpack.c.b16 %v4912, %v4908
        %v5109 = vpack.c.b16 %v4913, %v4909
        %v5110 = vpack.c.b16 %v4918, %v4914
        %v5111 = vpack.c.b16 %v4919, %v4915
        %v5112 = vpack.c.b16 %v4920, %v4916
        %v5113 = vpack.c.b16 %v4921, %v4917
        %v5114 = vpack.c.b16 %v4926, %v4922
        %v5115 = vpack.c.b16 %v4927, %v4923
        %v5116 = vpack.c.b16 %v4928, %v4924
        %v5117 = vpack.c.b16 %v4929, %v4925
        %v5118 = vpack.c.b16 %v4934, %v4930
        %v5119 = vpack.c.b16 %v4935, %v4931
        %v5120 = vpack.c.b16 %v4936, %v4932
        %v5121 = vpack.c.b16 %v4937, %v4933
        %v5122 = vpack.c.b16 %v4942, %v4938
        %v5123 = vpack.c.b16 %v4943, %v4939
        %v5124 = vpack.c.b16 %v4944, %v4940
        %v5125 = vpack.c.b16 %v4945, %v4941
        %v5126 = vpack.c.b16 %v4950, %v4946
        %v5127 = vpack.c.b16 %v4951, %v4947
        %v5128 = vpack.c.b16 %v4952, %v4948
        %v5129 = vpack.c.b16 %v4953, %v4949
        %v5130 = vpack.c.b16 %v4958, %v4954
        %v5131 = vpack.c.b16 %v4959, %v4955
        %v5132 = vpack.c.b16 %v4960, %v4956
        %v5133 = vpack.c.b16 %v4961, %v4957
        %v5134 = vpack.c.b16 %v4966, %v4962
        %v5135 = vpack.c.b16 %v4967, %v4963
        %v5136 = vpack.c.b16 %v4968, %v4964
        %v5137 = vpack.c.b16 %v4969, %v4965
        %v5138 = vpack.c.b16 %v4974, %v4970
        %v5139 = vpack.c.b16 %v4975, %v4971
        %v5140 = vpack.c.b16 %v4976, %v4972
        %v5141 = vpack.c.b16 %v4977, %v4973
        %v5142 = vpack.c.b16 %v4982, %v4978
        %v5143 = vpack.c.b16 %v4983, %v4979
        %v5144 = vpack.c.b16 %v4984, %v4980
        %v5145 = vpack.c.b16 %v4985, %v4981
        %v5146 = vpack.c.b16 %v4990, %v4986
        %v5147 = vpack.c.b16 %v4991, %v4987
        %v5148 = vpack.c.b16 %v4992, %v4988
        %v5149 = vpack.c.b16 %v4993, %v4989
        %v5150 = vpack.c.b16 %v4998, %v4994
        %v5151 = vpack.c.b16 %v4999, %v4995
        %v5152 = vpack.c.b16 %v5000, %v4996
        %v5153 = vpack.c.b16 %v5001, %v4997
        %v5154 = vpack.c.b16 %v5006, %v5002
        %v5155 = vpack.c.b16 %v5007, %v5003
        %v5156 = vpack.c.b16 %v5008, %v5004
        %v5157 = vpack.c.b16 %v5009, %v5005
        %v5158 = vpack.c.b16 %v5014, %v5010
        %v5159 = vpack.c.b16 %v5015, %v5011
        %v5160 = vpack.c.b16 %v5016, %v5012
        %v5161 = vpack.c.b16 %v5017, %v5013
        %v5162 = vpack.c.b16 %v5022, %v5018
        %v5163 = vpack.c.b16 %v5023, %v5019
        %v5164 = vpack.c.b16 %v5024, %v5020
        %v5165 = vpack.c.b16 %v5025, %v5021
        %v5166 = vpack.c.b16 %v5030, %v5026
        %v5167 = vpack.c.b16 %v5031, %v5027
        %v5168 = vpack.c.b16 %v5032, %v5028
        %v5169 = vpack.c.b16 %v5033, %v5029
        %v5170 = vpack.c.b16 %v5038, %v5034
        %v5171 = vpack.c.b16 %v5039, %v5035
        %v5172 = vpack.c.b16 %v5040, %v5036
        %v5173 = vpack.c.b16 %v5041, %v5037
        %v5174 = vpack.c.b16 %v5046, %v5042
        %v5175 = vpack.c.b16 %v5047, %v5043
        %v5176 = vpack.c.b16 %v5048, %v5044
        %v5177 = vpack.c.b16 %v5049, %v5045
        %5306 = vmatpush.bf16.msra.mxu0 %v5078
        %5307 = vmatpush.bf16.msra.mxu0 %v5074
        %5308 = vmatpush.bf16.msra.mxu0 %v5070
        %5309 = vmatpush.bf16.msra.mxu0 %v5066
        %5310 = vmatpush.bf16.msra.mxu0 %v5062
        %5311 = vmatpush.bf16.msra.mxu0 %v5058
        %5312 = vmatpush.bf16.msra.mxu0 %v5054
        %5313 = vmatpush.bf16.msra.mxu0 %v5050
        %5314 = vmatmul.bf16.gmra.mxu0 %v4526
        %v5315 = vpop.f32.mrf.mxu0
        %v5316 = vadd.f32 %v4662, %v5315
        %v5317 = vpop.f32.mrf.mxu0
        %v5318 = vadd.f32 %v4662, %v5317
        %5319 = vmatmul.bf16.gmra.mxu0 %v4530
        %v5320 = vpop.f32.mrf.mxu0
        %v5321 = vadd.f32 %v4662, %v5320
        %v5322 = vpop.f32.mrf.mxu0
        %v5323 = vadd.f32 %v4662, %v5322
        %5324 = vdwg.mxu0
        %5325 = vmatpush.bf16.msra.mxu0 %v5110
        %5326 = vmatpush.bf16.msra.mxu0 %v5106
        %5327 = vmatpush.bf16.msra.mxu0 %v5102
        %5328 = vmatpush.bf16.msra.mxu0 %v5098
        %5329 = vmatpush.bf16.msra.mxu0 %v5094
        %5330 = vmatpush.bf16.msra.mxu0 %v5090
        %5331 = vmatpush.bf16.msra.mxu0 %v5086
        %5332 = vmatpush.bf16.msra.mxu0 %v5082
        %5333 = vmatmul.bf16.gmra.mxu0 %v4527
        %v5334 = vpop.f32.mrf.mxu0
        %v5335 = vadd.f32 %v5316, %v5334
        %v5336 = vpop.f32.mrf.mxu0
        %v5337 = vadd.f32 %v5318, %v5336
        %5338 = vmatmul.bf16.gmra.mxu0 %v4531
        %v5339 = vpop.f32.mrf.mxu0
        %v5340 = vadd.f32 %v5321, %v5339
        %v5341 = vpop.f32.mrf.mxu0
        %v5342 = vadd.f32 %v5323, %v5341
        %5343 = vdwg.mxu0
        %5344 = vmatpush.bf16.msra.mxu0 %v5142
        %5345 = vmatpush.bf16.msra.mxu0 %v5138
        %5346 = vmatpush.bf16.msra.mxu0 %v5134
        %5347 = vmatpush.bf16.msra.mxu0 %v5130
        %5348 = vmatpush.bf16.msra.mxu0 %v5126
        %5349 = vmatpush.bf16.msra.mxu0 %v5122
        %5350 = vmatpush.bf16.msra.mxu0 %v5118
        %5351 = vmatpush.bf16.msra.mxu0 %v5114
        %5352 = vmatmul.bf16.gmra.mxu0 %v4528
        %v5353 = vpop.f32.mrf.mxu0
        %v5354 = vadd.f32 %v5335, %v5353
        %v5355 = vpop.f32.mrf.mxu0
        %v5356 = vadd.f32 %v5337, %v5355
        %5357 = vmatmul.bf16.gmra.mxu0 %v4532
        %v5358 = vpop.f32.mrf.mxu0
        %v5359 = vadd.f32 %v5340, %v5358
        %v5360 = vpop.f32.mrf.mxu0
        %v5361 = vadd.f32 %v5342, %v5360
        %5362 = vdwg.mxu0
        %5363 = vmatpush.bf16.msra.mxu0 %v5174
        %5364 = vmatpush.bf16.msra.mxu0 %v5170
        %5365 = vmatpush.bf16.msra.mxu0 %v5166
        %5366 = vmatpush.bf16.msra.mxu0 %v5162
        %5367 = vmatpush.bf16.msra.mxu0 %v5158
        %5368 = vmatpush.bf16.msra.mxu0 %v5154
        %5369 = vmatpush.bf16.msra.mxu0 %v5150
        %5370 = vmatpush.bf16.msra.mxu0 %v5146
        %5371 = vmatmul.bf16.gmra.mxu0 %v4529
        %v5372 = vpop.f32.mrf.mxu0
        %v5373 = vadd.f32 %v5354, %v5372
        %v5374 = vpop.f32.mrf.mxu0
        %v5375 = vadd.f32 %v5356, %v5374
        %5376 = vmatmul.bf16.gmra.mxu0 %v4533
        %v5377 = vpop.f32.mrf.mxu0
        %v5378 = vadd.f32 %v5359, %v5377
        %v5379 = vpop.f32.mrf.mxu0
        %v5380 = vadd.f32 %v5361, %v5379
        %5381 = vdwg.mxu0
        %5382 = vmatpush.bf16.msra.mxu0 %v5079
        %5383 = vmatpush.bf16.msra.mxu0 %v5075
        %5384 = vmatpush.bf16.msra.mxu0 %v5071
        %5385 = vmatpush.bf16.msra.mxu0 %v5067
        %5386 = vmatpush.bf16.msra.mxu0 %v5063
        %5387 = vmatpush.bf16.msra.mxu0 %v5059
        %5388 = vmatpush.bf16.msra.mxu0 %v5055
        %5389 = vmatpush.bf16.msra.mxu0 %v5051
        %5390 = vmatmul.bf16.gmra.mxu0 %v4526
        %v5391 = vpop.f32.mrf.mxu0
        %v5392 = vadd.f32 %v4663, %v5391
        %v5393 = vpop.f32.mrf.mxu0
        %v5394 = vadd.f32 %v4663, %v5393
        %5395 = vmatmul.bf16.gmra.mxu0 %v4530
        %v5396 = vpop.f32.mrf.mxu0
        %v5397 = vadd.f32 %v4663, %v5396
        %v5398 = vpop.f32.mrf.mxu0
        %v5399 = vadd.f32 %v4663, %v5398
        %5400 = vdwg.mxu0
        %5401 = vmatpush.bf16.msra.mxu0 %v5111
        %5402 = vmatpush.bf16.msra.mxu0 %v5107
        %5403 = vmatpush.bf16.msra.mxu0 %v5103
        %5404 = vmatpush.bf16.msra.mxu0 %v5099
        %5405 = vmatpush.bf16.msra.mxu0 %v5095
        %5406 = vmatpush.bf16.msra.mxu0 %v5091
        %5407 = vmatpush.bf16.msra.mxu0 %v5087
        %5408 = vmatpush.bf16.msra.mxu0 %v5083
        %5409 = vmatmul.bf16.gmra.mxu0 %v4527
        %v5410 = vpop.f32.mrf.mxu0
        %v5411 = vadd.f32 %v5392, %v5410
        %v5412 = vpop.f32.mrf.mxu0
        %v5413 = vadd.f32 %v5394, %v5412
        %5414 = vmatmul.bf16.gmra.mxu0 %v4531
        %v5415 = vpop.f32.mrf.mxu0
        %v5416 = vadd.f32 %v5397, %v5415
        %v5417 = vpop.f32.mrf.mxu0
        %v5418 = vadd.f32 %v5399, %v5417
        %5419 = vdwg.mxu0
        %5420 = vmatpush.bf16.msra.mxu0 %v5143
        %5421 = vmatpush.bf16.msra.mxu0 %v5139
        %5422 = vmatpush.bf16.msra.mxu0 %v5135
        %5423 = vmatpush.bf16.msra.mxu0 %v5131
        %5424 = vmatpush.bf16.msra.mxu0 %v5127
        %5425 = vmatpush.bf16.msra.mxu0 %v5123
        %5426 = vmatpush.bf16.msra.mxu0 %v5119
        %5427 = vmatpush.bf16.msra.mxu0 %v5115
        %5428 = vmatmul.bf16.gmra.mxu0 %v4528
        %v5429 = vpop.f32.mrf.mxu0
        %v5430 = vadd.f32 %v5411, %v5429
        %v5431 = vpop.f32.mrf.mxu0
        %v5432 = vadd.f32 %v5413, %v5431
        %5433 = vmatmul.bf16.gmra.mxu0 %v4532
        %v5434 = vpop.f32.mrf.mxu0
        %v5435 = vadd.f32 %v5416, %v5434
        %v5436 = vpop.f32.mrf.mxu0
        %v5437 = vadd.f32 %v5418, %v5436
        %5438 = vdwg.mxu0
        %5439 = vmatpush.bf16.msra.mxu0 %v5175
        %5440 = vmatpush.bf16.msra.mxu0 %v5171
        %5441 = vmatpush.bf16.msra.mxu0 %v5167
        %5442 = vmatpush.bf16.msra.mxu0 %v5163
        %5443 = vmatpush.bf16.msra.mxu0 %v5159
        %5444 = vmatpush.bf16.msra.mxu0 %v5155
        %5445 = vmatpush.bf16.msra.mxu0 %v5151
        %5446 = vmatpush.bf16.msra.mxu0 %v5147
        %5447 = vmatmul.bf16.gmra.mxu0 %v4529
        %v5448 = vpop.f32.mrf.mxu0
        %v5449 = vadd.f32 %v5430, %v5448
        %v5450 = vpop.f32.mrf.mxu0
        %v5451 = vadd.f32 %v5432, %v5450
        %5452 = vmatmul.bf16.gmra.mxu0 %v4533
        %v5453 = vpop.f32.mrf.mxu0
        %v5454 = vadd.f32 %v5435, %v5453
        %v5455 = vpop.f32.mrf.mxu0
        %v5456 = vadd.f32 %v5437, %v5455
        %5457 = vdwg.mxu0
        %5458 = vmatpush.bf16.msra.mxu0 %v5080
        %5459 = vmatpush.bf16.msra.mxu0 %v5076
        %5460 = vmatpush.bf16.msra.mxu0 %v5072
        %5461 = vmatpush.bf16.msra.mxu0 %v5068
        %5462 = vmatpush.bf16.msra.mxu0 %v5064
        %5463 = vmatpush.bf16.msra.mxu0 %v5060
        %5464 = vmatpush.bf16.msra.mxu0 %v5056
        %5465 = vmatpush.bf16.msra.mxu0 %v5052
        %5466 = vmatmul.bf16.gmra.mxu0 %v4526
        %v5467 = vpop.f32.mrf.mxu0
        %v5468 = vadd.f32 %v4664, %v5467
        %v5469 = vpop.f32.mrf.mxu0
        %v5470 = vadd.f32 %v4664, %v5469
        %5471 = vmatmul.bf16.gmra.mxu0 %v4530
        %v5472 = vpop.f32.mrf.mxu0
        %v5473 = vadd.f32 %v4664, %v5472
        %v5474 = vpop.f32.mrf.mxu0
        %v5475 = vadd.f32 %v4664, %v5474
        %5476 = vdwg.mxu0
        %5477 = vmatpush.bf16.msra.mxu0 %v5112
        %5478 = vmatpush.bf16.msra.mxu0 %v5108
        %5479 = vmatpush.bf16.msra.mxu0 %v5104
        %5480 = vmatpush.bf16.msra.mxu0 %v5100
        %5481 = vmatpush.bf16.msra.mxu0 %v5096
        %5482 = vmatpush.bf16.msra.mxu0 %v5092
        %5483 = vmatpush.bf16.msra.mxu0 %v5088
        %5484 = vmatpush.bf16.msra.mxu0 %v5084
        %5485 = vmatmul.bf16.gmra.mxu0 %v4527
        %v5486 = vpop.f32.mrf.mxu0
        %v5487 = vadd.f32 %v5468, %v5486
        %v5488 = vpop.f32.mrf.mxu0
        %v5489 = vadd.f32 %v5470, %v5488
        %5490 = vmatmul.bf16.gmra.mxu0 %v4531
        %v5491 = vpop.f32.mrf.mxu0
        %v5492 = vadd.f32 %v5473, %v5491
        %v5493 = vpop.f32.mrf.mxu0
        %v5494 = vadd.f32 %v5475, %v5493
        %5495 = vdwg.mxu0
        %5496 = vmatpush.bf16.msra.mxu0 %v5144
        %5497 = vmatpush.bf16.msra.mxu0 %v5140
        %5498 = vmatpush.bf16.msra.mxu0 %v5136
        %5499 = vmatpush.bf16.msra.mxu0 %v5132
        %5500 = vmatpush.bf16.msra.mxu0 %v5128
        %5501 = vmatpush.bf16.msra.mxu0 %v5124
        %5502 = vmatpush.bf16.msra.mxu0 %v5120
        %5503 = vmatpush.bf16.msra.mxu0 %v5116
        %5504 = vmatmul.bf16.gmra.mxu0 %v4528
        %v5505 = vpop.f32.mrf.mxu0
        %v5506 = vadd.f32 %v5487, %v5505
        %v5507 = vpop.f32.mrf.mxu0
        %v5508 = vadd.f32 %v5489, %v5507
        %5509 = vmatmul.bf16.gmra.mxu0 %v4532
        %v5510 = vpop.f32.mrf.mxu0
        %v5511 = vadd.f32 %v5492, %v5510
        %v5512 = vpop.f32.mrf.mxu0
        %v5513 = vadd.f32 %v5494, %v5512
        %5514 = vdwg.mxu0
        %5515 = vmatpush.bf16.msra.mxu0 %v5176
        %5516 = vmatpush.bf16.msra.mxu0 %v5172
        %5517 = vmatpush.bf16.msra.mxu0 %v5168
        %5518 = vmatpush.bf16.msra.mxu0 %v5164
        %5519 = vmatpush.bf16.msra.mxu0 %v5160
        %5520 = vmatpush.bf16.msra.mxu0 %v5156
        %5521 = vmatpush.bf16.msra.mxu0 %v5152
        %5522 = vmatpush.bf16.msra.mxu0 %v5148
        %5523 = vmatmul.bf16.gmra.mxu0 %v4529
        %v5524 = vpop.f32.mrf.mxu0
        %v5525 = vadd.f32 %v5506, %v5524
        %v5526 = vpop.f32.mrf.mxu0
        %v5527 = vadd.f32 %v5508, %v5526
        %5528 = vmatmul.bf16.gmra.mxu0 %v4533
        %v5529 = vpop.f32.mrf.mxu0
        %v5530 = vadd.f32 %v5511, %v5529
        %v5531 = vpop.f32.mrf.mxu0
        %v5532 = vadd.f32 %v5513, %v5531
        %5533 = vdwg.mxu0
        %5534 = vmatpush.bf16.msra.mxu0 %v5081
        %5535 = vmatpush.bf16.msra.mxu0 %v5077
        %5536 = vmatpush.bf16.msra.mxu0 %v5073
        %5537 = vmatpush.bf16.msra.mxu0 %v5069
        %5538 = vmatpush.bf16.msra.mxu0 %v5065
        %5539 = vmatpush.bf16.msra.mxu0 %v5061
        %5540 = vmatpush.bf16.msra.mxu0 %v5057
        %5541 = vmatpush.bf16.msra.mxu0 %v5053
        %5542 = vmatmul.bf16.gmra.mxu0 %v4526
        %v5543 = vpop.f32.mrf.mxu0
        %v5544 = vadd.f32 %v4665, %v5543
        %v5545 = vpop.f32.mrf.mxu0
        %v5546 = vadd.f32 %v4665, %v5545
        %5547 = vmatmul.bf16.gmra.mxu0 %v4530
        %v5548 = vpop.f32.mrf.mxu0
        %v5549 = vadd.f32 %v4665, %v5548
        %v5550 = vpop.f32.mrf.mxu0
        %v5551 = vadd.f32 %v4665, %v5550
        %5552 = vdwg.mxu0
        %5553 = vmatpush.bf16.msra.mxu0 %v5113
        %5554 = vmatpush.bf16.msra.mxu0 %v5109
        %5555 = vmatpush.bf16.msra.mxu0 %v5105
        %5556 = vmatpush.bf16.msra.mxu0 %v5101
        %5557 = vmatpush.bf16.msra.mxu0 %v5097
        %5558 = vmatpush.bf16.msra.mxu0 %v5093
        %5559 = vmatpush.bf16.msra.mxu0 %v5089
        %5560 = vmatpush.bf16.msra.mxu0 %v5085
        %5561 = vmatmul.bf16.gmra.mxu0 %v4527
        %v5562 = vpop.f32.mrf.mxu0
        %v5563 = vadd.f32 %v5544, %v5562
        %v5564 = vpop.f32.mrf.mxu0
        %v5565 = vadd.f32 %v5546, %v5564
        %5566 = vmatmul.bf16.gmra.mxu0 %v4531
        %v5567 = vpop.f32.mrf.mxu0
        %v5568 = vadd.f32 %v5549, %v5567
        %v5569 = vpop.f32.mrf.mxu0
        %v5570 = vadd.f32 %v5551, %v5569
        %5571 = vdwg.mxu0
        %5572 = vmatpush.bf16.msra.mxu0 %v5145
        %5573 = vmatpush.bf16.msra.mxu0 %v5141
        %5574 = vmatpush.bf16.msra.mxu0 %v5137
        %5575 = vmatpush.bf16.msra.mxu0 %v5133
        %5576 = vmatpush.bf16.msra.mxu0 %v5129
        %5577 = vmatpush.bf16.msra.mxu0 %v5125
        %5578 = vmatpush.bf16.msra.mxu0 %v5121
        %5579 = vmatpush.bf16.msra.mxu0 %v5117
        %5580 = vmatmul.bf16.gmra.mxu0 %v4528
        %v5581 = vpop.f32.mrf.mxu0
        %v5582 = vadd.f32 %v5563, %v5581
        %v5583 = vpop.f32.mrf.mxu0
        %v5584 = vadd.f32 %v5565, %v5583
        %5585 = vmatmul.bf16.gmra.mxu0 %v4532
        %v5586 = vpop.f32.mrf.mxu0
        %v5587 = vadd.f32 %v5568, %v5586
        %v5588 = vpop.f32.mrf.mxu0
        %v5589 = vadd.f32 %v5570, %v5588
        %5590 = vdwg.mxu0
        %5591 = vmatpush.bf16.msra.mxu0 %v5177
        %5592 = vmatpush.bf16.msra.mxu0 %v5173
        %5593 = vmatpush.bf16.msra.mxu0 %v5169
        %5594 = vmatpush.bf16.msra.mxu0 %v5165
        %5595 = vmatpush.bf16.msra.mxu0 %v5161
        %5596 = vmatpush.bf16.msra.mxu0 %v5157
        %5597 = vmatpush.bf16.msra.mxu0 %v5153
        %5598 = vmatpush.bf16.msra.mxu0 %v5149
        %5599 = vmatmul.bf16.gmra.mxu0 %v4529
        %v5600 = vpop.f32.mrf.mxu0
        %v5601 = vadd.f32 %v5582, %v5600
        %v5602 = vpop.f32.mrf.mxu0
        %v5603 = vadd.f32 %v5584, %v5602
        %5604 = vmatmul.bf16.gmra.mxu0 %v4533
        %v5605 = vpop.f32.mrf.mxu0
        %v5606 = vadd.f32 %v5587, %v5605
        %v5607 = vpop.f32.mrf.mxu0
        %v5608 = vadd.f32 %v5589, %v5607
        %5609 = vdwg.mxu0
        %v5610 = vadd.f32 %v603, %v5373
        %v5611 = vadd.f32 %v604, %v5449
        %v5612 = vadd.f32 %v605, %v5525
        %v5613 = vadd.f32 %v606, %v5601
        %v5614 = vadd.f32 %v607, %v5375
        %v5615 = vadd.f32 %v608, %v5451
        %v5616 = vadd.f32 %v609, %v5527
        %v5617 = vadd.f32 %v610, %v5603
        %v5618 = vadd.f32 %v611, %v5378
        %v5619 = vadd.f32 %v612, %v5454
        %v5620 = vadd.f32 %v613, %v5530
        %v5621 = vadd.f32 %v614, %v5606
        %v5622 = vadd.f32 %v615, %v5380
        %v5623 = vadd.f32 %v616, %v5456
        %v5624 = vadd.f32 %v617, %v5532
        %v5625 = vadd.f32 %v618, %v5608
        %v5626 = vadd.f32 %v5610, %v5611
        %v5627 = vadd.f32 %v5626, %v5612
        %v5628 = vadd.f32 %v5627, %v5613
        %5629 = vadd.xlane.f32.xlu0 %v5628
        %v5630 = vpop.xlane.xlu0 %5629
        %v5631 = vadd.f32 %v5614, %v5615
        %v5632 = vadd.f32 %v5631, %v5616
        %v5633 = vadd.f32 %v5632, %v5617
        %5634 = vadd.xlane.f32.xlu0 %v5633
        %v5635 = vpop.xlane.xlu0 %5634
        %v5636 = vadd.f32 %v5618, %v5619
        %v5637 = vadd.f32 %v5636, %v5620
        %v5638 = vadd.f32 %v5637, %v5621
        %5639 = vadd.xlane.f32.xlu0 %v5638
        %v5640 = vpop.xlane.xlu0 %5639
        %v5641 = vadd.f32 %v5622, %v5623
        %v5642 = vadd.f32 %v5641, %v5624
        %v5643 = vadd.f32 %v5642, %v5625
        %5644 = vadd.xlane.f32.xlu0 %v5643
        %v5645 = vpop.xlane.xlu0 %5644
        %v5646 = vrcp.pop 512.0
        %v5647 = vmul.f32 512.0, %v5646
        %v5648 = vsub.f32 1.0, %v5647
        %v5649 = vmul.f32 %v5646, %v5648
        %v5650 = vadd.f32 %v5646, %v5649
        %vm5651 = vweird.f32 %v5646
        %v5652 = vsel %vm5651, %v5646, %v5650
        %v5653 = vmul.f32 %v5630, %v5652
        %v5654 = vmul.f32 %v5635, %v5652
        %v5655 = vmul.f32 %v5640, %v5652
        %v5656 = vmul.f32 %v5645, %v5652
        %v5657 = vsub.f32 %v5610, %v5653
        %v5658 = vsub.f32 %v5611, %v5653
        %v5659 = vsub.f32 %v5612, %v5653
        %v5660 = vsub.f32 %v5613, %v5653
        %v5661 = vsub.f32 %v5614, %v5654
        %v5662 = vsub.f32 %v5615, %v5654
        %v5663 = vsub.f32 %v5616, %v5654
        %v5664 = vsub.f32 %v5617, %v5654
        %v5665 = vsub.f32 %v5618, %v5655
        %v5666 = vsub.f32 %v5619, %v5655
        %v5667 = vsub.f32 %v5620, %v5655
        %v5668 = vsub.f32 %v5621, %v5655
        %v5669 = vsub.f32 %v5622, %v5656
        %v5670 = vsub.f32 %v5623, %v5656
        %v5671 = vsub.f32 %v5624, %v5656
        %v5672 = vsub.f32 %v5625, %v5656
        %v5673 = vmul.f32 %v5657, %v5657
        %v5674 = vmul.f32 %v5658, %v5658
        %v5675 = vmul.f32 %v5659, %v5659
        %v5676 = vmul.f32 %v5660, %v5660
        %v5677 = vmul.f32 %v5661, %v5661
        %v5678 = vmul.f32 %v5662, %v5662
        %v5679 = vmul.f32 %v5663, %v5663
        %v5680 = vmul.f32 %v5664, %v5664
        %v5681 = vmul.f32 %v5665, %v5665
        %v5682 = vmul.f32 %v5666, %v5666
        %v5683 = vmul.f32 %v5667, %v5667
        %v5684 = vmul.f32 %v5668, %v5668
        %v5685 = vmul.f32 %v5669, %v5669
        %v5686 = vmul.f32 %v5670, %v5670
        %v5687 = vmul.f32 %v5671, %v5671
        %v5688 = vmul.f32 %v5672, %v5672
        %v5689 = vadd.f32 %v5673, %v5674
        %v5690 = vadd.f32 %v5689, %v5675
        %v5691 = vadd.f32 %v5690, %v5676
        %5692 = vadd.xlane.f32.xlu0 %v5691
        %v5693 = vpop.xlane.xlu0 %5692
        %v5694 = vadd.f32 %v5677, %v5678
        %v5695 = vadd.f32 %v5694, %v5679
        %v5696 = vadd.f32 %v5695, %v5680
        %5697 = vadd.xlane.f32.xlu0 %v5696
        %v5698 = vpop.xlane.xlu0 %5697
        %v5699 = vadd.f32 %v5681, %v5682
        %v5700 = vadd.f32 %v5699, %v5683
        %v5701 = vadd.f32 %v5700, %v5684
        %5702 = vadd.xlane.f32.xlu0 %v5701
        %v5703 = vpop.xlane.xlu0 %5702
        %v5704 = vadd.f32 %v5685, %v5686
        %v5705 = vadd.f32 %v5704, %v5687
        %v5706 = vadd.f32 %v5705, %v5688
        %5707 = vadd.xlane.f32.xlu0 %v5706
        %v5708 = vpop.xlane.xlu0 %5707
        %v5709 = vmul.f32 %v5693, %v5652
        %v5710 = vmul.f32 %v5698, %v5652
        %v5711 = vmul.f32 %v5703, %v5652
        %v5712 = vmul.f32 %v5708, %v5652
        %v5713 = vadd.f32 %v5709, 1e-05
        %v5714 = vadd.f32 %v5710, 1e-05
        %v5715 = vadd.f32 %v5711, 1e-05
        %v5716 = vadd.f32 %v5712, 1e-05
        %v5717 = vrsqrt.pop %v5713
        %v5718 = vmul.f32 %v5717, %v5713
        %v5719 = vmul.f32 %v5718, %v5717
        %v5720 = vmul.f32 0.5, %v5719
        %v5721 = vsub.f32 1.5, %v5720
        %v5722 = vmul.f32 %v5717, %v5721
        %vm5723 = vweird.f32 %v5713
        %vm5724 = vweird.f32 %v5717
        %vm5725 = vmor %vm5723, %vm5724
        %v5726 = vsel %vm5725, %v5717, %v5722
        %v5727 = vrsqrt.pop %v5714
        %v5728 = vmul.f32 %v5727, %v5714
        %v5729 = vmul.f32 %v5728, %v5727
        %v5730 = vmul.f32 0.5, %v5729
        %v5731 = vsub.f32 1.5, %v5730
        %v5732 = vmul.f32 %v5727, %v5731
        %vm5733 = vweird.f32 %v5714
        %vm5734 = vweird.f32 %v5727
        %vm5735 = vmor %vm5733, %vm5734
        %v5736 = vsel %vm5735, %v5727, %v5732
        %v5737 = vrsqrt.pop %v5715
        %v5738 = vmul.f32 %v5737, %v5715
        %v5739 = vmul.f32 %v5738, %v5737
        %v5740 = vmul.f32 0.5, %v5739
        %v5741 = vsub.f32 1.5, %v5740
        %v5742 = vmul.f32 %v5737, %v5741
        %vm5743 = vweird.f32 %v5715
        %vm5744 = vweird.f32 %v5737
        %vm5745 = vmor %vm5743, %vm5744
        %v5746 = vsel %vm5745, %v5737, %v5742
        %v5747 = vrsqrt.pop %v5716
        %v5748 = vmul.f32 %v5747, %v5716
        %v5749 = vmul.f32 %v5748, %v5747
        %v5750 = vmul.f32 0.5, %v5749
        %v5751 = vsub.f32 1.5, %v5750
        %v5752 = vmul.f32 %v5747, %v5751
        %vm5753 = vweird.f32 %v5716
        %vm5754 = vweird.f32 %v5747
        %vm5755 = vmor %vm5753, %vm5754
        %v5756 = vsel %vm5755, %v5747, %v5752
        %v5757 = vmul.f32 %v5657, %v5726
        %v5758 = vmul.f32 %v5658, %v5726
        %v5759 = vmul.f32 %v5659, %v5726
        %v5760 = vmul.f32 %v5660, %v5726
        %v5761 = vmul.f32 %v5661, %v5736
        %v5762 = vmul.f32 %v5662, %v5736
        %v5763 = vmul.f32 %v5663, %v5736
        %v5764 = vmul.f32 %v5664, %v5736
        %v5765 = vmul.f32 %v5665, %v5746
        %v5766 = vmul.f32 %v5666, %v5746
        %v5767 = vmul.f32 %v5667, %v5746
        %v5768 = vmul.f32 %v5668, %v5746
        %v5769 = vmul.f32 %v5669, %v5756
        %v5770 = vmul.f32 %v5670, %v5756
        %v5771 = vmul.f32 %v5671, %v5756
        %v5772 = vmul.f32 %v5672, %v5756
        %v5773 = vperm.slane %v4522, 1
        %v5774 = vperm.slane %v4523, 1
        %v5775 = vperm.slane %v4524, 1
        %v5776 = vperm.slane %v4525, 1
        %v5777 = vmul.f32 %v5757, %v5773
        %v5778 = vmul.f32 %v5758, %v5774
        %v5779 = vmul.f32 %v5759, %v5775
        %v5780 = vmul.f32 %v5760, %v5776
        %v5781 = vmul.f32 %v5761, %v5773
        %v5782 = vmul.f32 %v5762, %v5774
        %v5783 = vmul.f32 %v5763, %v5775
        %v5784 = vmul.f32 %v5764, %v5776
        %v5785 = vmul.f32 %v5765, %v5773
        %v5786 = vmul.f32 %v5766, %v5774
        %v5787 = vmul.f32 %v5767, %v5775
        %v5788 = vmul.f32 %v5768, %v5776
        %v5789 = vmul.f32 %v5769, %v5773
        %v5790 = vmul.f32 %v5770, %v5774
        %v5791 = vmul.f32 %v5771, %v5775
        %v5792 = vmul.f32 %v5772, %v5776
        %v5793 = vperm.slane %v4522, 2
        %v5794 = vperm.slane %v4523, 2
        %v5795 = vperm.slane %v4524, 2
        %v5796 = vperm.slane %v4525, 2
        %v5797 = vadd.f32 %v5777, %v5793
        %v5798 = vadd.f32 %v5778, %v5794
        %v5799 = vadd.f32 %v5779, %v5795
        %v5800 = vadd.f32 %v5780, %v5796
        %v5801 = vadd.f32 %v5781, %v5793
        %v5802 = vadd.f32 %v5782, %v5794
        %v5803 = vadd.f32 %v5783, %v5795
        %v5804 = vadd.f32 %v5784, %v5796
        %v5805 = vadd.f32 %v5785, %v5793
        %v5806 = vadd.f32 %v5786, %v5794
        %v5807 = vadd.f32 %v5787, %v5795
        %v5808 = vadd.f32 %v5788, %v5796
        %v5809 = vadd.f32 %v5789, %v5793
        %v5810 = vadd.f32 %v5790, %v5794
        %v5811 = vadd.f32 %v5791, %v5795
        %v5812 = vadd.f32 %v5792, %v5796
        %v5813 = vpack.c.bf16 %v5801, %v5797
        %v5814 = vpack.c.bf16 %v5802, %v5798
        %v5815 = vpack.c.bf16 %v5803, %v5799
        %v5816 = vpack.c.bf16 %v5804, %v5800
        %v5817 = vpack.c.bf16 %v5809, %v5805
        %v5818 = vpack.c.bf16 %v5810, %v5806
        %v5819 = vpack.c.bf16 %v5811, %v5807
        %v5820 = vpack.c.bf16 %v5812, %v5808
        %v5821 = vld [vmem:[%s472] sm:$0xff]
        %v5822 = vld [vmem:[%s472 + $0x8] sm:$0xff]
        %v5823 = vld [vmem:[%s472 + $0x10] sm:$0xff]
        %v5824 = vld [vmem:[%s472 + $0x18] sm:$0xff]
        %v5825 = vld [vmem:[%s472 + $0x20] sm:$0xff]
        %v5826 = vld [vmem:[%s472 + $0x28] sm:$0xff]
        %v5827 = vld [vmem:[%s472 + $0x30] sm:$0xff]
        %v5828 = vld [vmem:[%s472 + $0x38] sm:$0xff]
        %v5829 = vld [vmem:[%s472 + $0x40] sm:$0xff]
        %v5830 = vld [vmem:[%s472 + $0x48] sm:$0xff]
        %v5831 = vld [vmem:[%s472 + $0x50] sm:$0xff]
        %v5832 = vld [vmem:[%s472 + $0x58] sm:$0xff]
        %v5833 = vld [vmem:[%s472 + $0x60] sm:$0xff]
        %v5834 = vld [vmem:[%s472 + $0x68] sm:$0xff]
        %v5835 = vld [vmem:[%s472 + $0x70] sm:$0xff]
        %v5836 = vld [vmem:[%s472 + $0x78] sm:$0xff]
        %v5837 = vld [vmem:[%s472 + $0x80] sm:$0xff]
        %v5838 = vld [vmem:[%s472 + $0x88] sm:$0xff]
        %v5839 = vld [vmem:[%s472 + $0x90] sm:$0xff]
        %v5840 = vld [vmem:[%s472 + $0x98] sm:$0xff]
        %v5841 = vld [vmem:[%s472 + $0xa0] sm:$0xff]
        %v5842 = vld [vmem:[%s472 + $0xa8] sm:$0xff]
        %v5843 = vld [vmem:[%s472 + $0xb0] sm:$0xff]
        %v5844 = vld [vmem:[%s472 + $0xb8] sm:$0xff]
        %v5845 = vld [vmem:[%s472 + $0xc0] sm:$0xff]
        %v5846 = vld [vmem:[%s472 + $0xc8] sm:$0xff]
        %v5847 = vld [vmem:[%s472 + $0xd0] sm:$0xff]
        %v5848 = vld [vmem:[%s472 + $0xd8] sm:$0xff]
        %v5849 = vld [vmem:[%s472 + $0xe0] sm:$0xff]
        %v5850 = vld [vmem:[%s472 + $0xe8] sm:$0xff]
        %v5851 = vld [vmem:[%s472 + $0xf0] sm:$0xff]
        %v5852 = vld [vmem:[%s472 + $0xf8] sm:$0xff]
        %v5853 = vld [vmem:[%s472 + $0x100] sm:$0xff]
        %v5854 = vld [vmem:[%s472 + $0x108] sm:$0xff]
        %v5855 = vld [vmem:[%s472 + $0x110] sm:$0xff]
        %v5856 = vld [vmem:[%s472 + $0x118] sm:$0xff]
        %v5857 = vld [vmem:[%s472 + $0x120] sm:$0xff]
        %v5858 = vld [vmem:[%s472 + $0x128] sm:$0xff]
        %v5859 = vld [vmem:[%s472 + $0x130] sm:$0xff]
        %v5860 = vld [vmem:[%s472 + $0x138] sm:$0xff]
        %v5861 = vld [vmem:[%s472 + $0x140] sm:$0xff]
        %v5862 = vld [vmem:[%s472 + $0x148] sm:$0xff]
        %v5863 = vld [vmem:[%s472 + $0x150] sm:$0xff]
        %v5864 = vld [vmem:[%s472 + $0x158] sm:$0xff]
        %v5865 = vld [vmem:[%s472 + $0x160] sm:$0xff]
        %v5866 = vld [vmem:[%s472 + $0x168] sm:$0xff]
        %v5867 = vld [vmem:[%s472 + $0x170] sm:$0xff]
        %v5868 = vld [vmem:[%s472 + $0x178] sm:$0xff]
        %v5869 = vld [vmem:[%s472 + $0x180] sm:$0xff]
        %v5870 = vld [vmem:[%s472 + $0x188] sm:$0xff]
        %v5871 = vld [vmem:[%s472 + $0x190] sm:$0xff]
        %v5872 = vld [vmem:[%s472 + $0x198] sm:$0xff]
        %v5873 = vld [vmem:[%s472 + $0x1a0] sm:$0xff]
        %v5874 = vld [vmem:[%s472 + $0x1a8] sm:$0xff]
        %v5875 = vld [vmem:[%s472 + $0x1b0] sm:$0xff]
        %v5876 = vld [vmem:[%s472 + $0x1b8] sm:$0xff]
        %v5877 = vld [vmem:[%s472 + $0x1c0] sm:$0xff]
        %v5878 = vld [vmem:[%s472 + $0x1c8] sm:$0xff]
        %v5879 = vld [vmem:[%s472 + $0x1d0] sm:$0xff]
        %v5880 = vld [vmem:[%s472 + $0x1d8] sm:$0xff]
        %v5881 = vld [vmem:[%s472 + $0x1e0] sm:$0xff]
        %v5882 = vld [vmem:[%s472 + $0x1e8] sm:$0xff]
        %v5883 = vld [vmem:[%s472 + $0x1f0] sm:$0xff]
        %v5884 = vld [vmem:[%s472 + $0x1f8] sm:$0xff]
        %v5885 = vld [vmem:[%s472 + $0x200] sm:$0xff]
        %v5886 = vld [vmem:[%s472 + $0x208] sm:$0xff]
        %v5887 = vld [vmem:[%s472 + $0x210] sm:$0xff]
        %v5888 = vld [vmem:[%s472 + $0x218] sm:$0xff]
        %v5889 = vld [vmem:[%s472 + $0x220] sm:$0xff]
        %v5890 = vld [vmem:[%s472 + $0x228] sm:$0xff]
        %v5891 = vld [vmem:[%s472 + $0x230] sm:$0xff]
        %v5892 = vld [vmem:[%s472 + $0x238] sm:$0xff]
        %v5893 = vld [vmem:[%s472 + $0x240] sm:$0xff]
        %v5894 = vld [vmem:[%s472 + $0x248] sm:$0xff]
        %v5895 = vld [vmem:[%s472 + $0x250] sm:$0xff]
        %v5896 = vld [vmem:[%s472 + $0x258] sm:$0xff]
        %v5897 = vld [vmem:[%s472 + $0x260] sm:$0xff]
        %v5898 = vld [vmem:[%s472 + $0x268] sm:$0xff]
        %v5899 = vld [vmem:[%s472 + $0x270] sm:$0xff]
        %v5900 = vld [vmem:[%s472 + $0x278] sm:$0xff]
        %v5901 = vld [vmem:[%s472 + $0x280] sm:$0xff]
        %v5902 = vld [vmem:[%s472 + $0x288] sm:$0xff]
        %v5903 = vld [vmem:[%s472 + $0x290] sm:$0xff]
        %v5904 = vld [vmem:[%s472 + $0x298] sm:$0xff]
        %v5905 = vld [vmem:[%s472 + $0x2a0] sm:$0xff]
        %v5906 = vld [vmem:[%s472 + $0x2a8] sm:$0xff]
        %v5907 = vld [vmem:[%s472 + $0x2b0] sm:$0xff]
        %v5908 = vld [vmem:[%s472 + $0x2b8] sm:$0xff]
        %v5909 = vld [vmem:[%s472 + $0x2c0] sm:$0xff]
        %v5910 = vld [vmem:[%s472 + $0x2c8] sm:$0xff]
        %v5911 = vld [vmem:[%s472 + $0x2d0] sm:$0xff]
        %v5912 = vld [vmem:[%s472 + $0x2d8] sm:$0xff]
        %v5913 = vld [vmem:[%s472 + $0x2e0] sm:$0xff]
        %v5914 = vld [vmem:[%s472 + $0x2e8] sm:$0xff]
        %v5915 = vld [vmem:[%s472 + $0x2f0] sm:$0xff]
        %v5916 = vld [vmem:[%s472 + $0x2f8] sm:$0xff]
        %v5917 = vld [vmem:[%s472 + $0x300] sm:$0xff]
        %v5918 = vld [vmem:[%s472 + $0x308] sm:$0xff]
        %v5919 = vld [vmem:[%s472 + $0x310] sm:$0xff]
        %v5920 = vld [vmem:[%s472 + $0x318] sm:$0xff]
        %v5921 = vld [vmem:[%s472 + $0x320] sm:$0xff]
        %v5922 = vld [vmem:[%s472 + $0x328] sm:$0xff]
        %v5923 = vld [vmem:[%s472 + $0x330] sm:$0xff]
        %v5924 = vld [vmem:[%s472 + $0x338] sm:$0xff]
        %v5925 = vld [vmem:[%s472 + $0x340] sm:$0xff]
        %v5926 = vld [vmem:[%s472 + $0x348] sm:$0xff]
        %v5927 = vld [vmem:[%s472 + $0x350] sm:$0xff]
        %v5928 = vld [vmem:[%s472 + $0x358] sm:$0xff]
        %v5929 = vld [vmem:[%s472 + $0x360] sm:$0xff]
        %v5930 = vld [vmem:[%s472 + $0x368] sm:$0xff]
        %v5931 = vld [vmem:[%s472 + $0x370] sm:$0xff]
        %v5932 = vld [vmem:[%s472 + $0x378] sm:$0xff]
        %v5933 = vld [vmem:[%s472 + $0x380] sm:$0xff]
        %v5934 = vld [vmem:[%s472 + $0x388] sm:$0xff]
        %v5935 = vld [vmem:[%s472 + $0x390] sm:$0xff]
        %v5936 = vld [vmem:[%s472 + $0x398] sm:$0xff]
        %v5937 = vld [vmem:[%s472 + $0x3a0] sm:$0xff]
        %v5938 = vld [vmem:[%s472 + $0x3a8] sm:$0xff]
        %v5939 = vld [vmem:[%s472 + $0x3b0] sm:$0xff]
        %v5940 = vld [vmem:[%s472 + $0x3b8] sm:$0xff]
        %v5941 = vld [vmem:[%s472 + $0x3c0] sm:$0xff]
        %v5942 = vld [vmem:[%s472 + $0x3c8] sm:$0xff]
        %v5943 = vld [vmem:[%s472 + $0x3d0] sm:$0xff]
        %v5944 = vld [vmem:[%s472 + $0x3d8] sm:$0xff]
        %v5945 = vld [vmem:[%s472 + $0x3e0] sm:$0xff]
        %v5946 = vld [vmem:[%s472 + $0x3e8] sm:$0xff]
        %v5947 = vld [vmem:[%s472 + $0x3f0] sm:$0xff]
        %v5948 = vld [vmem:[%s472 + $0x3f8] sm:$0xff]
        %v5949 = vld [vmem:[%s472 + $0x400] sm:$0xff]
        %v5950 = vld [vmem:[%s472 + $0x408] sm:$0xff]
        %v5951 = vld [vmem:[%s472 + $0x410] sm:$0xff]
        %v5952 = vld [vmem:[%s472 + $0x418] sm:$0xff]
        %v5953 = vld [vmem:[%s472 + $0x420] sm:$0xff]
        %v5954 = vld [vmem:[%s472 + $0x428] sm:$0xff]
        %v5955 = vld [vmem:[%s472 + $0x430] sm:$0xff]
        %v5956 = vld [vmem:[%s472 + $0x438] sm:$0xff]
        %v5957 = vld [vmem:[%s472 + $0x440] sm:$0xff]
        %v5958 = vld [vmem:[%s472 + $0x448] sm:$0xff]
        %v5959 = vld [vmem:[%s472 + $0x450] sm:$0xff]
        %v5960 = vld [vmem:[%s472 + $0x458] sm:$0xff]
        %v5961 = vld [vmem:[%s472 + $0x460] sm:$0xff]
        %v5962 = vld [vmem:[%s472 + $0x468] sm:$0xff]
        %v5963 = vld [vmem:[%s472 + $0x470] sm:$0xff]
        %v5964 = vld [vmem:[%s472 + $0x478] sm:$0xff]
        %v5965 = vld [vmem:[%s472 + $0x480] sm:$0xff]
        %v5966 = vld [vmem:[%s472 + $0x488] sm:$0xff]
        %v5967 = vld [vmem:[%s472 + $0x490] sm:$0xff]
        %v5968 = vld [vmem:[%s472 + $0x498] sm:$0xff]
        %v5969 = vld [vmem:[%s472 + $0x4a0] sm:$0xff]
        %v5970 = vld [vmem:[%s472 + $0x4a8] sm:$0xff]
        %v5971 = vld [vmem:[%s472 + $0x4b0] sm:$0xff]
        %v5972 = vld [vmem:[%s472 + $0x4b8] sm:$0xff]
        %v5973 = vld [vmem:[%s472 + $0x4c0] sm:$0xff]
        %v5974 = vld [vmem:[%s472 + $0x4c8] sm:$0xff]
        %v5975 = vld [vmem:[%s472 + $0x4d0] sm:$0xff]
        %v5976 = vld [vmem:[%s472 + $0x4d8] sm:$0xff]
        %v5977 = vld [vmem:[%s472 + $0x4e0] sm:$0xff]
        %v5978 = vld [vmem:[%s472 + $0x4e8] sm:$0xff]
        %v5979 = vld [vmem:[%s472 + $0x4f0] sm:$0xff]
        %v5980 = vld [vmem:[%s472 + $0x4f8] sm:$0xff]
        %v5981 = vld [vmem:[%s472 + $0x500] sm:$0xff]
        %v5982 = vld [vmem:[%s472 + $0x508] sm:$0xff]
        %v5983 = vld [vmem:[%s472 + $0x510] sm:$0xff]
        %v5984 = vld [vmem:[%s472 + $0x518] sm:$0xff]
        %v5985 = vld [vmem:[%s472 + $0x520] sm:$0xff]
        %v5986 = vld [vmem:[%s472 + $0x528] sm:$0xff]
        %v5987 = vld [vmem:[%s472 + $0x530] sm:$0xff]
        %v5988 = vld [vmem:[%s472 + $0x538] sm:$0xff]
        %v5989 = vld [vmem:[%s472 + $0x540] sm:$0xff]
        %v5990 = vld [vmem:[%s472 + $0x548] sm:$0xff]
        %v5991 = vld [vmem:[%s472 + $0x550] sm:$0xff]
        %v5992 = vld [vmem:[%s472 + $0x558] sm:$0xff]
        %v5993 = vld [vmem:[%s472 + $0x560] sm:$0xff]
        %v5994 = vld [vmem:[%s472 + $0x568] sm:$0xff]
        %v5995 = vld [vmem:[%s472 + $0x570] sm:$0xff]
        %v5996 = vld [vmem:[%s472 + $0x578] sm:$0xff]
        %v5997 = vld [vmem:[%s472 + $0x580] sm:$0xff]
        %v5998 = vld [vmem:[%s472 + $0x588] sm:$0xff]
        %v5999 = vld [vmem:[%s472 + $0x590] sm:$0xff]
        %v6000 = vld [vmem:[%s472 + $0x598] sm:$0xff]
        %v6001 = vld [vmem:[%s472 + $0x5a0] sm:$0xff]
        %v6002 = vld [vmem:[%s472 + $0x5a8] sm:$0xff]
        %v6003 = vld [vmem:[%s472 + $0x5b0] sm:$0xff]
        %v6004 = vld [vmem:[%s472 + $0x5b8] sm:$0xff]
        %v6005 = vld [vmem:[%s472 + $0x5c0] sm:$0xff]
        %v6006 = vld [vmem:[%s472 + $0x5c8] sm:$0xff]
        %v6007 = vld [vmem:[%s472 + $0x5d0] sm:$0xff]
        %v6008 = vld [vmem:[%s472 + $0x5d8] sm:$0xff]
        %v6009 = vld [vmem:[%s472 + $0x5e0] sm:$0xff]
        %v6010 = vld [vmem:[%s472 + $0x5e8] sm:$0xff]
        %v6011 = vld [vmem:[%s472 + $0x5f0] sm:$0xff]
        %v6012 = vld [vmem:[%s472 + $0x5f8] sm:$0xff]
        %v6013 = vld [vmem:[%s472 + $0x600] sm:$0xff]
        %v6014 = vld [vmem:[%s472 + $0x608] sm:$0xff]
        %v6015 = vld [vmem:[%s472 + $0x610] sm:$0xff]
        %v6016 = vld [vmem:[%s472 + $0x618] sm:$0xff]
        %v6017 = vld [vmem:[%s472 + $0x620] sm:$0xff]
        %v6018 = vld [vmem:[%s472 + $0x628] sm:$0xff]
        %v6019 = vld [vmem:[%s472 + $0x630] sm:$0xff]
        %v6020 = vld [vmem:[%s472 + $0x638] sm:$0xff]
        %v6021 = vld [vmem:[%s472 + $0x640] sm:$0xff]
        %v6022 = vld [vmem:[%s472 + $0x648] sm:$0xff]
        %v6023 = vld [vmem:[%s472 + $0x650] sm:$0xff]
        %v6024 = vld [vmem:[%s472 + $0x658] sm:$0xff]
        %v6025 = vld [vmem:[%s472 + $0x660] sm:$0xff]
        %v6026 = vld [vmem:[%s472 + $0x668] sm:$0xff]
        %v6027 = vld [vmem:[%s472 + $0x670] sm:$0xff]
        %v6028 = vld [vmem:[%s472 + $0x678] sm:$0xff]
        %v6029 = vld [vmem:[%s472 + $0x680] sm:$0xff]
        %v6030 = vld [vmem:[%s472 + $0x688] sm:$0xff]
        %v6031 = vld [vmem:[%s472 + $0x690] sm:$0xff]
        %v6032 = vld [vmem:[%s472 + $0x698] sm:$0xff]
        %v6033 = vld [vmem:[%s472 + $0x6a0] sm:$0xff]
        %v6034 = vld [vmem:[%s472 + $0x6a8] sm:$0xff]
        %v6035 = vld [vmem:[%s472 + $0x6b0] sm:$0xff]
        %v6036 = vld [vmem:[%s472 + $0x6b8] sm:$0xff]
        %v6037 = vld [vmem:[%s472 + $0x6c0] sm:$0xff]
        %v6038 = vld [vmem:[%s472 + $0x6c8] sm:$0xff]
        %v6039 = vld [vmem:[%s472 + $0x6d0] sm:$0xff]
        %v6040 = vld [vmem:[%s472 + $0x6d8] sm:$0xff]
        %v6041 = vld [vmem:[%s472 + $0x6e0] sm:$0xff]
        %v6042 = vld [vmem:[%s472 + $0x6e8] sm:$0xff]
        %v6043 = vld [vmem:[%s472 + $0x6f0] sm:$0xff]
        %v6044 = vld [vmem:[%s472 + $0x6f8] sm:$0xff]
        %v6045 = vld [vmem:[%s472 + $0x700] sm:$0xff]
        %v6046 = vld [vmem:[%s472 + $0x708] sm:$0xff]
        %v6047 = vld [vmem:[%s472 + $0x710] sm:$0xff]
        %v6048 = vld [vmem:[%s472 + $0x718] sm:$0xff]
        %v6049 = vld [vmem:[%s472 + $0x720] sm:$0xff]
        %v6050 = vld [vmem:[%s472 + $0x728] sm:$0xff]
        %v6051 = vld [vmem:[%s472 + $0x730] sm:$0xff]
        %v6052 = vld [vmem:[%s472 + $0x738] sm:$0xff]
        %v6053 = vld [vmem:[%s472 + $0x740] sm:$0xff]
        %v6054 = vld [vmem:[%s472 + $0x748] sm:$0xff]
        %v6055 = vld [vmem:[%s472 + $0x750] sm:$0xff]
        %v6056 = vld [vmem:[%s472 + $0x758] sm:$0xff]
        %v6057 = vld [vmem:[%s472 + $0x760] sm:$0xff]
        %v6058 = vld [vmem:[%s472 + $0x768] sm:$0xff]
        %v6059 = vld [vmem:[%s472 + $0x770] sm:$0xff]
        %v6060 = vld [vmem:[%s472 + $0x778] sm:$0xff]
        %v6061 = vld [vmem:[%s472 + $0x780] sm:$0xff]
        %v6062 = vld [vmem:[%s472 + $0x788] sm:$0xff]
        %v6063 = vld [vmem:[%s472 + $0x790] sm:$0xff]
        %v6064 = vld [vmem:[%s472 + $0x798] sm:$0xff]
        %v6065 = vld [vmem:[%s472 + $0x7a0] sm:$0xff]
        %v6066 = vld [vmem:[%s472 + $0x7a8] sm:$0xff]
        %v6067 = vld [vmem:[%s472 + $0x7b0] sm:$0xff]
        %v6068 = vld [vmem:[%s472 + $0x7b8] sm:$0xff]
        %v6069 = vld [vmem:[%s472 + $0x7c0] sm:$0xff]
        %v6070 = vld [vmem:[%s472 + $0x7c8] sm:$0xff]
        %v6071 = vld [vmem:[%s472 + $0x7d0] sm:$0xff]
        %v6072 = vld [vmem:[%s472 + $0x7d8] sm:$0xff]
        %v6073 = vld [vmem:[%s472 + $0x7e0] sm:$0xff]
        %v6074 = vld [vmem:[%s472 + $0x7e8] sm:$0xff]
        %v6075 = vld [vmem:[%s472 + $0x7f0] sm:$0xff]
        %v6076 = vld [vmem:[%s472 + $0x7f8] sm:$0xff]
        %v6077 = vld [vmem:[%s482] sm:$0xff]
        %v6079 = vperm.slane %v6077, 0
        %v6080 = vperm.slane %v6077, 1
        %v6081 = vperm.slane %v6077, 2
        %v6082 = vperm.slane %v6077, 3
        %v6083 = vperm.slane %v6077, 4
        %v6084 = vperm.slane %v6077, 5
        %v6085 = vperm.slane %v6077, 6
        %v6086 = vperm.slane %v6077, 7
        %v6351 = vunpack.c.l.b16 %v5821
        %v6352 = vunpack.c.h.b16 %v5821
        %v6353 = vunpack.c.l.b16 %v5822
        %v6354 = vunpack.c.h.b16 %v5822
        %v6355 = vunpack.c.l.b16 %v5823
        %v6356 = vunpack.c.h.b16 %v5823
        %v6357 = vunpack.c.l.b16 %v5824
        %v6358 = vunpack.c.h.b16 %v5824
        %v6359 = vunpack.c.l.b16 %v5825
        %v6360 = vunpack.c.h.b16 %v5825
        %v6361 = vunpack.c.l.b16 %v5826
        %v6362 = vunpack.c.h.b16 %v5826
        %v6363 = vunpack.c.l.b16 %v5827
        %v6364 = vunpack.c.h.b16 %v5827
        %v6365 = vunpack.c.l.b16 %v5828
        %v6366 = vunpack.c.h.b16 %v5828
        %v6367 = vunpack.c.l.b16 %v5829
        %v6368 = vunpack.c.h.b16 %v5829
        %v6369 = vunpack.c.l.b16 %v5830
        %v6370 = vunpack.c.h.b16 %v5830
        %v6371 = vunpack.c.l.b16 %v5831
        %v6372 = vunpack.c.h.b16 %v5831
        %v6373 = vunpack.c.l.b16 %v5832
        %v6374 = vunpack.c.h.b16 %v5832
        %v6375 = vunpack.c.l.b16 %v5833
        %v6376 = vunpack.c.h.b16 %v5833
        %v6377 = vunpack.c.l.b16 %v5834
        %v6378 = vunpack.c.h.b16 %v5834
        %v6379 = vunpack.c.l.b16 %v5835
        %v6380 = vunpack.c.h.b16 %v5835
        %v6381 = vunpack.c.l.b16 %v5836
        %v6382 = vunpack.c.h.b16 %v5836
        %v6383 = vunpack.c.l.b16 %v5837
        %v6384 = vunpack.c.h.b16 %v5837
        %v6385 = vunpack.c.l.b16 %v5838
        %v6386 = vunpack.c.h.b16 %v5838
        %v6387 = vunpack.c.l.b16 %v5839
        %v6388 = vunpack.c.h.b16 %v5839
        %v6389 = vunpack.c.l.b16 %v5840
        %v6390 = vunpack.c.h.b16 %v5840
        %v6391 = vunpack.c.l.b16 %v5841
        %v6392 = vunpack.c.h.b16 %v5841
        %v6393 = vunpack.c.l.b16 %v5842
        %v6394 = vunpack.c.h.b16 %v5842
        %v6395 = vunpack.c.l.b16 %v5843
        %v6396 = vunpack.c.h.b16 %v5843
        %v6397 = vunpack.c.l.b16 %v5844
        %v6398 = vunpack.c.h.b16 %v5844
        %v6399 = vunpack.c.l.b16 %v5845
        %v6400 = vunpack.c.h.b16 %v5845
        %v6401 = vunpack.c.l.b16 %v5846
        %v6402 = vunpack.c.h.b16 %v5846
        %v6403 = vunpack.c.l.b16 %v5847
        %v6404 = vunpack.c.h.b16 %v5847
        %v6405 = vunpack.c.l.b16 %v5848
        %v6406 = vunpack.c.h.b16 %v5848
        %v6407 = vunpack.c.l.b16 %v5849
        %v6408 = vunpack.c.h.b16 %v5849
        %v6409 = vunpack.c.l.b16 %v5850
        %v6410 = vunpack.c.h.b16 %v5850
        %v6411 = vunpack.c.l.b16 %v5851
        %v6412 = vunpack.c.h.b16 %v5851
        %v6413 = vunpack.c.l.b16 %v5852
        %v6414 = vunpack.c.h.b16 %v5852
        %v6415 = vunpack.c.l.b16 %v5853
        %v6416 = vunpack.c.h.b16 %v5853
        %v6417 = vunpack.c.l.b16 %v5854
        %v6418 = vunpack.c.h.b16 %v5854
        %v6419 = vunpack.c.l.b16 %v5855
        %v6420 = vunpack.c.h.b16 %v5855
        %v6421 = vunpack.c.l.b16 %v5856
        %v6422 = vunpack.c.h.b16 %v5856
        %v6423 = vunpack.c.l.b16 %v5857
        %v6424 = vunpack.c.h.b16 %v5857
        %v6425 = vunpack.c.l.b16 %v5858
        %v6426 = vunpack.c.h.b16 %v5858
        %v6427 = vunpack.c.l.b16 %v5859
        %v6428 = vunpack.c.h.b16 %v5859
        %v6429 = vunpack.c.l.b16 %v5860
        %v6430 = vunpack.c.h.b16 %v5860
        %v6431 = vunpack.c.l.b16 %v5861
        %v6432 = vunpack.c.h.b16 %v5861
        %v6433 = vunpack.c.l.b16 %v5862
        %v6434 = vunpack.c.h.b16 %v5862
        %v6435 = vunpack.c.l.b16 %v5863
        %v6436 = vunpack.c.h.b16 %v5863
        %v6437 = vunpack.c.l.b16 %v5864
        %v6438 = vunpack.c.h.b16 %v5864
        %v6439 = vunpack.c.l.b16 %v5865
        %v6440 = vunpack.c.h.b16 %v5865
        %v6441 = vunpack.c.l.b16 %v5866
        %v6442 = vunpack.c.h.b16 %v5866
        %v6443 = vunpack.c.l.b16 %v5867
        %v6444 = vunpack.c.h.b16 %v5867
        %v6445 = vunpack.c.l.b16 %v5868
        %v6446 = vunpack.c.h.b16 %v5868
        %v6447 = vunpack.c.l.b16 %v5869
        %v6448 = vunpack.c.h.b16 %v5869
        %v6449 = vunpack.c.l.b16 %v5870
        %v6450 = vunpack.c.h.b16 %v5870
        %v6451 = vunpack.c.l.b16 %v5871
        %v6452 = vunpack.c.h.b16 %v5871
        %v6453 = vunpack.c.l.b16 %v5872
        %v6454 = vunpack.c.h.b16 %v5872
        %v6455 = vunpack.c.l.b16 %v5873
        %v6456 = vunpack.c.h.b16 %v5873
        %v6457 = vunpack.c.l.b16 %v5874
        %v6458 = vunpack.c.h.b16 %v5874
        %v6459 = vunpack.c.l.b16 %v5875
        %v6460 = vunpack.c.h.b16 %v5875
        %v6461 = vunpack.c.l.b16 %v5876
        %v6462 = vunpack.c.h.b16 %v5876
        %v6463 = vunpack.c.l.b16 %v5877
        %v6464 = vunpack.c.h.b16 %v5877
        %v6465 = vunpack.c.l.b16 %v5878
        %v6466 = vunpack.c.h.b16 %v5878
        %v6467 = vunpack.c.l.b16 %v5879
        %v6468 = vunpack.c.h.b16 %v5879
        %v6469 = vunpack.c.l.b16 %v5880
        %v6470 = vunpack.c.h.b16 %v5880
        %v6471 = vunpack.c.l.b16 %v5881
        %v6472 = vunpack.c.h.b16 %v5881
        %v6473 = vunpack.c.l.b16 %v5882
        %v6474 = vunpack.c.h.b16 %v5882
        %v6475 = vunpack.c.l.b16 %v5883
        %v6476 = vunpack.c.h.b16 %v5883
        %v6477 = vunpack.c.l.b16 %v5884
        %v6478 = vunpack.c.h.b16 %v5884
        %v6479 = vunpack.c.l.b16 %v5885
        %v6480 = vunpack.c.h.b16 %v5885
        %v6481 = vunpack.c.l.b16 %v5886
        %v6482 = vunpack.c.h.b16 %v5886
        %v6483 = vunpack.c.l.b16 %v5887
        %v6484 = vunpack.c.h.b16 %v5887
        %v6485 = vunpack.c.l.b16 %v5888
        %v6486 = vunpack.c.h.b16 %v5888
        %v6487 = vunpack.c.l.b16 %v5889
        %v6488 = vunpack.c.h.b16 %v5889
        %v6489 = vunpack.c.l.b16 %v5890
        %v6490 = vunpack.c.h.b16 %v5890
        %v6491 = vunpack.c.l.b16 %v5891
        %v6492 = vunpack.c.h.b16 %v5891
        %v6493 = vunpack.c.l.b16 %v5892
        %v6494 = vunpack.c.h.b16 %v5892
        %v6495 = vunpack.c.l.b16 %v5893
        %v6496 = vunpack.c.h.b16 %v5893
        %v6497 = vunpack.c.l.b16 %v5894
        %v6498 = vunpack.c.h.b16 %v5894
        %v6499 = vunpack.c.l.b16 %v5895
        %v6500 = vunpack.c.h.b16 %v5895
        %v6501 = vunpack.c.l.b16 %v5896
        %v6502 = vunpack.c.h.b16 %v5896
        %v6503 = vunpack.c.l.b16 %v5897
        %v6504 = vunpack.c.h.b16 %v5897
        %v6505 = vunpack.c.l.b16 %v5898
        %v6506 = vunpack.c.h.b16 %v5898
        %v6507 = vunpack.c.l.b16 %v5899
        %v6508 = vunpack.c.h.b16 %v5899
        %v6509 = vunpack.c.l.b16 %v5900
        %v6510 = vunpack.c.h.b16 %v5900
        %v6511 = vunpack.c.l.b16 %v5901
        %v6512 = vunpack.c.h.b16 %v5901
        %v6513 = vunpack.c.l.b16 %v5902
        %v6514 = vunpack.c.h.b16 %v5902
        %v6515 = vunpack.c.l.b16 %v5903
        %v6516 = vunpack.c.h.b16 %v5903
        %v6517 = vunpack.c.l.b16 %v5904
        %v6518 = vunpack.c.h.b16 %v5904
        %v6519 = vunpack.c.l.b16 %v5905
        %v6520 = vunpack.c.h.b16 %v5905
        %v6521 = vunpack.c.l.b16 %v5906
        %v6522 = vunpack.c.h.b16 %v5906
        %v6523 = vunpack.c.l.b16 %v5907
        %v6524 = vunpack.c.h.b16 %v5907
        %v6525 = vunpack.c.l.b16 %v5908
        %v6526 = vunpack.c.h.b16 %v5908
        %v6527 = vunpack.c.l.b16 %v5909
        %v6528 = vunpack.c.h.b16 %v5909
        %v6529 = vunpack.c.l.b16 %v5910
        %v6530 = vunpack.c.h.b16 %v5910
        %v6531 = vunpack.c.l.b16 %v5911
        %v6532 = vunpack.c.h.b16 %v5911
        %v6533 = vunpack.c.l.b16 %v5912
        %v6534 = vunpack.c.h.b16 %v5912
        %v6535 = vunpack.c.l.b16 %v5913
        %v6536 = vunpack.c.h.b16 %v5913
        %v6537 = vunpack.c.l.b16 %v5914
        %v6538 = vunpack.c.h.b16 %v5914
        %v6539 = vunpack.c.l.b16 %v5915
        %v6540 = vunpack.c.h.b16 %v5915
        %v6541 = vunpack.c.l.b16 %v5916
        %v6542 = vunpack.c.h.b16 %v5916
        %v6543 = vunpack.c.l.b16 %v5917
        %v6544 = vunpack.c.h.b16 %v5917
        %v6545 = vunpack.c.l.b16 %v5918
        %v6546 = vunpack.c.h.b16 %v5918
        %v6547 = vunpack.c.l.b16 %v5919
        %v6548 = vunpack.c.h.b16 %v5919
        %v6549 = vunpack.c.l.b16 %v5920
        %v6550 = vunpack.c.h.b16 %v5920
        %v6551 = vunpack.c.l.b16 %v5921
        %v6552 = vunpack.c.h.b16 %v5921
        %v6553 = vunpack.c.l.b16 %v5922
        %v6554 = vunpack.c.h.b16 %v5922
        %v6555 = vunpack.c.l.b16 %v5923
        %v6556 = vunpack.c.h.b16 %v5923
        %v6557 = vunpack.c.l.b16 %v5924
        %v6558 = vunpack.c.h.b16 %v5924
        %v6559 = vunpack.c.l.b16 %v5925
        %v6560 = vunpack.c.h.b16 %v5925
        %v6561 = vunpack.c.l.b16 %v5926
        %v6562 = vunpack.c.h.b16 %v5926
        %v6563 = vunpack.c.l.b16 %v5927
        %v6564 = vunpack.c.h.b16 %v5927
        %v6565 = vunpack.c.l.b16 %v5928
        %v6566 = vunpack.c.h.b16 %v5928
        %v6567 = vunpack.c.l.b16 %v5929
        %v6568 = vunpack.c.h.b16 %v5929
        %v6569 = vunpack.c.l.b16 %v5930
        %v6570 = vunpack.c.h.b16 %v5930
        %v6571 = vunpack.c.l.b16 %v5931
        %v6572 = vunpack.c.h.b16 %v5931
        %v6573 = vunpack.c.l.b16 %v5932
        %v6574 = vunpack.c.h.b16 %v5932
        %v6575 = vunpack.c.l.b16 %v5933
        %v6576 = vunpack.c.h.b16 %v5933
        %v6577 = vunpack.c.l.b16 %v5934
        %v6578 = vunpack.c.h.b16 %v5934
        %v6579 = vunpack.c.l.b16 %v5935
        %v6580 = vunpack.c.h.b16 %v5935
        %v6581 = vunpack.c.l.b16 %v5936
        %v6582 = vunpack.c.h.b16 %v5936
        %v6583 = vunpack.c.l.b16 %v5937
        %v6584 = vunpack.c.h.b16 %v5937
        %v6585 = vunpack.c.l.b16 %v5938
        %v6586 = vunpack.c.h.b16 %v5938
        %v6587 = vunpack.c.l.b16 %v5939
        %v6588 = vunpack.c.h.b16 %v5939
        %v6589 = vunpack.c.l.b16 %v5940
        %v6590 = vunpack.c.h.b16 %v5940
        %v6591 = vunpack.c.l.b16 %v5941
        %v6592 = vunpack.c.h.b16 %v5941
        %v6593 = vunpack.c.l.b16 %v5942
        %v6594 = vunpack.c.h.b16 %v5942
        %v6595 = vunpack.c.l.b16 %v5943
        %v6596 = vunpack.c.h.b16 %v5943
        %v6597 = vunpack.c.l.b16 %v5944
        %v6598 = vunpack.c.h.b16 %v5944
        %v6599 = vunpack.c.l.b16 %v5945
        %v6600 = vunpack.c.h.b16 %v5945
        %v6601 = vunpack.c.l.b16 %v5946
        %v6602 = vunpack.c.h.b16 %v5946
        %v6603 = vunpack.c.l.b16 %v5947
        %v6604 = vunpack.c.h.b16 %v5947
        %v6605 = vunpack.c.l.b16 %v5948
        %v6606 = vunpack.c.h.b16 %v5948
        %v6607 = vunpack.c.l.b16 %v5949
        %v6608 = vunpack.c.h.b16 %v5949
        %v6609 = vunpack.c.l.b16 %v5950
        %v6610 = vunpack.c.h.b16 %v5950
        %v6611 = vunpack.c.l.b16 %v5951
        %v6612 = vunpack.c.h.b16 %v5951
        %v6613 = vunpack.c.l.b16 %v5952
        %v6614 = vunpack.c.h.b16 %v5952
        %v6615 = vunpack.c.l.b16 %v5953
        %v6616 = vunpack.c.h.b16 %v5953
        %v6617 = vunpack.c.l.b16 %v5954
        %v6618 = vunpack.c.h.b16 %v5954
        %v6619 = vunpack.c.l.b16 %v5955
        %v6620 = vunpack.c.h.b16 %v5955
        %v6621 = vunpack.c.l.b16 %v5956
        %v6622 = vunpack.c.h.b16 %v5956
        %v6623 = vunpack.c.l.b16 %v5957
        %v6624 = vunpack.c.h.b16 %v5957
        %v6625 = vunpack.c.l.b16 %v5958
        %v6626 = vunpack.c.h.b16 %v5958
        %v6627 = vunpack.c.l.b16 %v5959
        %v6628 = vunpack.c.h.b16 %v5959
        %v6629 = vunpack.c.l.b16 %v5960
        %v6630 = vunpack.c.h.b16 %v5960
        %v6631 = vunpack.c.l.b16 %v5961
        %v6632 = vunpack.c.h.b16 %v5961
        %v6633 = vunpack.c.l.b16 %v5962
        %v6634 = vunpack.c.h.b16 %v5962
        %v6635 = vunpack.c.l.b16 %v5963
        %v6636 = vunpack.c.h.b16 %v5963
        %v6637 = vunpack.c.l.b16 %v5964
        %v6638 = vunpack.c.h.b16 %v5964
        %v6639 = vunpack.c.l.b16 %v5965
        %v6640 = vunpack.c.h.b16 %v5965
        %v6641 = vunpack.c.l.b16 %v5966
        %v6642 = vunpack.c.h.b16 %v5966
        %v6643 = vunpack.c.l.b16 %v5967
        %v6644 = vunpack.c.h.b16 %v5967
        %v6645 = vunpack.c.l.b16 %v5968
        %v6646 = vunpack.c.h.b16 %v5968
        %v6647 = vunpack.c.l.b16 %v5969
        %v6648 = vunpack.c.h.b16 %v5969
        %v6649 = vunpack.c.l.b16 %v5970
        %v6650 = vunpack.c.h.b16 %v5970
        %v6651 = vunpack.c.l.b16 %v5971
        %v6652 = vunpack.c.h.b16 %v5971
        %v6653 = vunpack.c.l.b16 %v5972
        %v6654 = vunpack.c.h.b16 %v5972
        %v6655 = vunpack.c.l.b16 %v5973
        %v6656 = vunpack.c.h.b16 %v5973
        %v6657 = vunpack.c.l.b16 %v5974
        %v6658 = vunpack.c.h.b16 %v5974
        %v6659 = vunpack.c.l.b16 %v5975
        %v6660 = vunpack.c.h.b16 %v5975
        %v6661 = vunpack.c.l.b16 %v5976
        %v6662 = vunpack.c.h.b16 %v5976
        %v6663 = vunpack.c.l.b16 %v5977
        %v6664 = vunpack.c.h.b16 %v5977
        %v6665 = vunpack.c.l.b16 %v5978
        %v6666 = vunpack.c.h.b16 %v5978
        %v6667 = vunpack.c.l.b16 %v5979
        %v6668 = vunpack.c.h.b16 %v5979
        %v6669 = vunpack.c.l.b16 %v5980
        %v6670 = vunpack.c.h.b16 %v5980
        %v6671 = vunpack.c.l.b16 %v5981
        %v6672 = vunpack.c.h.b16 %v5981
        %v6673 = vunpack.c.l.b16 %v5982
        %v6674 = vunpack.c.h.b16 %v5982
        %v6675 = vunpack.c.l.b16 %v5983
        %v6676 = vunpack.c.h.b16 %v5983
        %v6677 = vunpack.c.l.b16 %v5984
        %v6678 = vunpack.c.h.b16 %v5984
        %v6679 = vunpack.c.l.b16 %v5985
        %v6680 = vunpack.c.h.b16 %v5985
        %v6681 = vunpack.c.l.b16 %v5986
        %v6682 = vunpack.c.h.b16 %v5986
        %v6683 = vunpack.c.l.b16 %v5987
        %v6684 = vunpack.c.h.b16 %v5987
        %v6685 = vunpack.c.l.b16 %v5988
        %v6686 = vunpack.c.h.b16 %v5988
        %v6687 = vunpack.c.l.b16 %v5989
        %v6688 = vunpack.c.h.b16 %v5989
        %v6689 = vunpack.c.l.b16 %v5990
        %v6690 = vunpack.c.h.b16 %v5990
        %v6691 = vunpack.c.l.b16 %v5991
        %v6692 = vunpack.c.h.b16 %v5991
        %v6693 = vunpack.c.l.b16 %v5992
        %v6694 = vunpack.c.h.b16 %v5992
        %v6695 = vunpack.c.l.b16 %v5993
        %v6696 = vunpack.c.h.b16 %v5993
        %v6697 = vunpack.c.l.b16 %v5994
        %v6698 = vunpack.c.h.b16 %v5994
        %v6699 = vunpack.c.l.b16 %v5995
        %v6700 = vunpack.c.h.b16 %v5995
        %v6701 = vunpack.c.l.b16 %v5996
        %v6702 = vunpack.c.h.b16 %v5996
        %v6703 = vunpack.c.l.b16 %v5997
        %v6704 = vunpack.c.h.b16 %v5997
        %v6705 = vunpack.c.l.b16 %v5998
        %v6706 = vunpack.c.h.b16 %v5998
        %v6707 = vunpack.c.l.b16 %v5999
        %v6708 = vunpack.c.h.b16 %v5999
        %v6709 = vunpack.c.l.b16 %v6000
        %v6710 = vunpack.c.h.b16 %v6000
        %v6711 = vunpack.c.l.b16 %v6001
        %v6712 = vunpack.c.h.b16 %v6001
        %v6713 = vunpack.c.l.b16 %v6002
        %v6714 = vunpack.c.h.b16 %v6002
        %v6715 = vunpack.c.l.b16 %v6003
        %v6716 = vunpack.c.h.b16 %v6003
        %v6717 = vunpack.c.l.b16 %v6004
        %v6718 = vunpack.c.h.b16 %v6004
        %v6719 = vunpack.c.l.b16 %v6005
        %v6720 = vunpack.c.h.b16 %v6005
        %v6721 = vunpack.c.l.b16 %v6006
        %v6722 = vunpack.c.h.b16 %v6006
        %v6723 = vunpack.c.l.b16 %v6007
        %v6724 = vunpack.c.h.b16 %v6007
        %v6725 = vunpack.c.l.b16 %v6008
        %v6726 = vunpack.c.h.b16 %v6008
        %v6727 = vunpack.c.l.b16 %v6009
        %v6728 = vunpack.c.h.b16 %v6009
        %v6729 = vunpack.c.l.b16 %v6010
        %v6730 = vunpack.c.h.b16 %v6010
        %v6731 = vunpack.c.l.b16 %v6011
        %v6732 = vunpack.c.h.b16 %v6011
        %v6733 = vunpack.c.l.b16 %v6012
        %v6734 = vunpack.c.h.b16 %v6012
        %v6735 = vunpack.c.l.b16 %v6013
        %v6736 = vunpack.c.h.b16 %v6013
        %v6737 = vunpack.c.l.b16 %v6014
        %v6738 = vunpack.c.h.b16 %v6014
        %v6739 = vunpack.c.l.b16 %v6015
        %v6740 = vunpack.c.h.b16 %v6015
        %v6741 = vunpack.c.l.b16 %v6016
        %v6742 = vunpack.c.h.b16 %v6016
        %v6743 = vunpack.c.l.b16 %v6017
        %v6744 = vunpack.c.h.b16 %v6017
        %v6745 = vunpack.c.l.b16 %v6018
        %v6746 = vunpack.c.h.b16 %v6018
        %v6747 = vunpack.c.l.b16 %v6019
        %v6748 = vunpack.c.h.b16 %v6019
        %v6749 = vunpack.c.l.b16 %v6020
        %v6750 = vunpack.c.h.b16 %v6020
        %v6751 = vunpack.c.l.b16 %v6021
        %v6752 = vunpack.c.h.b16 %v6021
        %v6753 = vunpack.c.l.b16 %v6022
        %v6754 = vunpack.c.h.b16 %v6022
        %v6755 = vunpack.c.l.b16 %v6023
        %v6756 = vunpack.c.h.b16 %v6023
        %v6757 = vunpack.c.l.b16 %v6024
        %v6758 = vunpack.c.h.b16 %v6024
        %v6759 = vunpack.c.l.b16 %v6025
        %v6760 = vunpack.c.h.b16 %v6025
        %v6761 = vunpack.c.l.b16 %v6026
        %v6762 = vunpack.c.h.b16 %v6026
        %v6763 = vunpack.c.l.b16 %v6027
        %v6764 = vunpack.c.h.b16 %v6027
        %v6765 = vunpack.c.l.b16 %v6028
        %v6766 = vunpack.c.h.b16 %v6028
        %v6767 = vunpack.c.l.b16 %v6029
        %v6768 = vunpack.c.h.b16 %v6029
        %v6769 = vunpack.c.l.b16 %v6030
        %v6770 = vunpack.c.h.b16 %v6030
        %v6771 = vunpack.c.l.b16 %v6031
        %v6772 = vunpack.c.h.b16 %v6031
        %v6773 = vunpack.c.l.b16 %v6032
        %v6774 = vunpack.c.h.b16 %v6032
        %v6775 = vunpack.c.l.b16 %v6033
        %v6776 = vunpack.c.h.b16 %v6033
        %v6777 = vunpack.c.l.b16 %v6034
        %v6778 = vunpack.c.h.b16 %v6034
        %v6779 = vunpack.c.l.b16 %v6035
        %v6780 = vunpack.c.h.b16 %v6035
        %v6781 = vunpack.c.l.b16 %v6036
        %v6782 = vunpack.c.h.b16 %v6036
        %v6783 = vunpack.c.l.b16 %v6037
        %v6784 = vunpack.c.h.b16 %v6037
        %v6785 = vunpack.c.l.b16 %v6038
        %v6786 = vunpack.c.h.b16 %v6038
        %v6787 = vunpack.c.l.b16 %v6039
        %v6788 = vunpack.c.h.b16 %v6039
        %v6789 = vunpack.c.l.b16 %v6040
        %v6790 = vunpack.c.h.b16 %v6040
        %v6791 = vunpack.c.l.b16 %v6041
        %v6792 = vunpack.c.h.b16 %v6041
        %v6793 = vunpack.c.l.b16 %v6042
        %v6794 = vunpack.c.h.b16 %v6042
        %v6795 = vunpack.c.l.b16 %v6043
        %v6796 = vunpack.c.h.b16 %v6043
        %v6797 = vunpack.c.l.b16 %v6044
        %v6798 = vunpack.c.h.b16 %v6044
        %v6799 = vunpack.c.l.b16 %v6045
        %v6800 = vunpack.c.h.b16 %v6045
        %v6801 = vunpack.c.l.b16 %v6046
        %v6802 = vunpack.c.h.b16 %v6046
        %v6803 = vunpack.c.l.b16 %v6047
        %v6804 = vunpack.c.h.b16 %v6047
        %v6805 = vunpack.c.l.b16 %v6048
        %v6806 = vunpack.c.h.b16 %v6048
        %v6807 = vunpack.c.l.b16 %v6049
        %v6808 = vunpack.c.h.b16 %v6049
        %v6809 = vunpack.c.l.b16 %v6050
        %v6810 = vunpack.c.h.b16 %v6050
        %v6811 = vunpack.c.l.b16 %v6051
        %v6812 = vunpack.c.h.b16 %v6051
        %v6813 = vunpack.c.l.b16 %v6052
        %v6814 = vunpack.c.h.b16 %v6052
        %v6815 = vunpack.c.l.b16 %v6053
        %v6816 = vunpack.c.h.b16 %v6053
        %v6817 = vunpack.c.l.b16 %v6054
        %v6818 = vunpack.c.h.b16 %v6054
        %v6819 = vunpack.c.l.b16 %v6055
        %v6820 = vunpack.c.h.b16 %v6055
        %v6821 = vunpack.c.l.b16 %v6056
        %v6822 = vunpack.c.h.b16 %v6056
        %v6823 = vunpack.c.l.b16 %v6057
        %v6824 = vunpack.c.h.b16 %v6057
        %v6825 = vunpack.c.l.b16 %v6058
        %v6826 = vunpack.c.h.b16 %v6058
        %v6827 = vunpack.c.l.b16 %v6059
        %v6828 = vunpack.c.h.b16 %v6059
        %v6829 = vunpack.c.l.b16 %v6060
        %v6830 = vunpack.c.h.b16 %v6060
        %v6831 = vunpack.c.l.b16 %v6061
        %v6832 = vunpack.c.h.b16 %v6061
        %v6833 = vunpack.c.l.b16 %v6062
        %v6834 = vunpack.c.h.b16 %v6062
        %v6835 = vunpack.c.l.b16 %v6063
        %v6836 = vunpack.c.h.b16 %v6063
        %v6837 = vunpack.c.l.b16 %v6064
        %v6838 = vunpack.c.h.b16 %v6064
        %v6839 = vunpack.c.l.b16 %v6065
        %v6840 = vunpack.c.h.b16 %v6065
        %v6841 = vunpack.c.l.b16 %v6066
        %v6842 = vunpack.c.h.b16 %v6066
        %v6843 = vunpack.c.l.b16 %v6067
        %v6844 = vunpack.c.h.b16 %v6067
        %v6845 = vunpack.c.l.b16 %v6068
        %v6846 = vunpack.c.h.b16 %v6068
        %v6847 = vunpack.c.l.b16 %v6069
        %v6848 = vunpack.c.h.b16 %v6069
        %v6849 = vunpack.c.l.b16 %v6070
        %v6850 = vunpack.c.h.b16 %v6070
        %v6851 = vunpack.c.l.b16 %v6071
        %v6852 = vunpack.c.h.b16 %v6071
        %v6853 = vunpack.c.l.b16 %v6072
        %v6854 = vunpack.c.h.b16 %v6072
        %v6855 = vunpack.c.l.b16 %v6073
        %v6856 = vunpack.c.h.b16 %v6073
        %v6857 = vunpack.c.l.b16 %v6074
        %v6858 = vunpack.c.h.b16 %v6074
        %v6859 = vunpack.c.l.b16 %v6075
        %v6860 = vunpack.c.h.b16 %v6075
        %v6861 = vunpack.c.l.b16 %v6076
        %v6862 = vunpack.c.h.b16 %v6076
        %v6863 = vpack.c.b16 %v6359, %v6351
        %v6864 = vpack.c.b16 %v6360, %v6352
        %v6865 = vpack.c.b16 %v6361, %v6353
        %v6866 = vpack.c.b16 %v6362, %v6354
        %v6867 = vpack.c.b16 %v6363, %v6355
        %v6868 = vpack.c.b16 %v6364, %v6356
        %v6869 = vpack.c.b16 %v6365, %v6357
        %v6870 = vpack.c.b16 %v6366, %v6358
        %v6871 = vpack.c.b16 %v6375, %v6367
        %v6872 = vpack.c.b16 %v6376, %v6368
        %v6873 = vpack.c.b16 %v6377, %v6369
        %v6874 = vpack.c.b16 %v6378, %v6370
        %v6875 = vpack.c.b16 %v6379, %v6371
        %v6876 = vpack.c.b16 %v6380, %v6372
        %v6877 = vpack.c.b16 %v6381, %v6373
        %v6878 = vpack.c.b16 %v6382, %v6374
        %v6879 = vpack.c.b16 %v6391, %v6383
        %v6880 = vpack.c.b16 %v6392, %v6384
        %v6881 = vpack.c.b16 %v6393, %v6385
        %v6882 = vpack.c.b16 %v6394, %v6386
        %v6883 = vpack.c.b16 %v6395, %v6387
        %v6884 = vpack.c.b16 %v6396, %v6388
        %v6885 = vpack.c.b16 %v6397, %v6389
        %v6886 = vpack.c.b16 %v6398, %v6390
        %v6887 = vpack.c.b16 %v6407, %v6399
        %v6888 = vpack.c.b16 %v6408, %v6400
        %v6889 = vpack.c.b16 %v6409, %v6401
        %v6890 = vpack.c.b16 %v6410, %v6402
        %v6891 = vpack.c.b16 %v6411, %v6403
        %v6892 = vpack.c.b16 %v6412, %v6404
        %v6893 = vpack.c.b16 %v6413, %v6405
        %v6894 = vpack.c.b16 %v6414, %v6406
        %v6895 = vpack.c.b16 %v6423, %v6415
        %v6896 = vpack.c.b16 %v6424, %v6416
        %v6897 = vpack.c.b16 %v6425, %v6417
        %v6898 = vpack.c.b16 %v6426, %v6418
        %v6899 = vpack.c.b16 %v6427, %v6419
        %v6900 = vpack.c.b16 %v6428, %v6420
        %v6901 = vpack.c.b16 %v6429, %v6421
        %v6902 = vpack.c.b16 %v6430, %v6422
        %v6903 = vpack.c.b16 %v6439, %v6431
        %v6904 = vpack.c.b16 %v6440, %v6432
        %v6905 = vpack.c.b16 %v6441, %v6433
        %v6906 = vpack.c.b16 %v6442, %v6434
        %v6907 = vpack.c.b16 %v6443, %v6435
        %v6908 = vpack.c.b16 %v6444, %v6436
        %v6909 = vpack.c.b16 %v6445, %v6437
        %v6910 = vpack.c.b16 %v6446, %v6438
        %v6911 = vpack.c.b16 %v6455, %v6447
        %v6912 = vpack.c.b16 %v6456, %v6448
        %v6913 = vpack.c.b16 %v6457, %v6449
        %v6914 = vpack.c.b16 %v6458, %v6450
        %v6915 = vpack.c.b16 %v6459, %v6451
        %v6916 = vpack.c.b16 %v6460, %v6452
        %v6917 = vpack.c.b16 %v6461, %v6453
        %v6918 = vpack.c.b16 %v6462, %v6454
        %v6919 = vpack.c.b16 %v6471, %v6463
        %v6920 = vpack.c.b16 %v6472, %v6464
        %v6921 = vpack.c.b16 %v6473, %v6465
        %v6922 = vpack.c.b16 %v6474, %v6466
        %v6923 = vpack.c.b16 %v6475, %v6467
        %v6924 = vpack.c.b16 %v6476, %v6468
        %v6925 = vpack.c.b16 %v6477, %v6469
        %v6926 = vpack.c.b16 %v6478, %v6470
        %v6927 = vpack.c.b16 %v6487, %v6479
        %v6928 = vpack.c.b16 %v6488, %v6480
        %v6929 = vpack.c.b16 %v6489, %v6481
        %v6930 = vpack.c.b16 %v6490, %v6482
        %v6931 = vpack.c.b16 %v6491, %v6483
        %v6932 = vpack.c.b16 %v6492, %v6484
        %v6933 = vpack.c.b16 %v6493, %v6485
        %v6934 = vpack.c.b16 %v6494, %v6486
        %v6935 = vpack.c.b16 %v6503, %v6495
        %v6936 = vpack.c.b16 %v6504, %v6496
        %v6937 = vpack.c.b16 %v6505, %v6497
        %v6938 = vpack.c.b16 %v6506, %v6498
        %v6939 = vpack.c.b16 %v6507, %v6499
        %v6940 = vpack.c.b16 %v6508, %v6500
        %v6941 = vpack.c.b16 %v6509, %v6501
        %v6942 = vpack.c.b16 %v6510, %v6502
        %v6943 = vpack.c.b16 %v6519, %v6511
        %v6944 = vpack.c.b16 %v6520, %v6512
        %v6945 = vpack.c.b16 %v6521, %v6513
        %v6946 = vpack.c.b16 %v6522, %v6514
        %v6947 = vpack.c.b16 %v6523, %v6515
        %v6948 = vpack.c.b16 %v6524, %v6516
        %v6949 = vpack.c.b16 %v6525, %v6517
        %v6950 = vpack.c.b16 %v6526, %v6518
        %v6951 = vpack.c.b16 %v6535, %v6527
        %v6952 = vpack.c.b16 %v6536, %v6528
        %v6953 = vpack.c.b16 %v6537, %v6529
        %v6954 = vpack.c.b16 %v6538, %v6530
        %v6955 = vpack.c.b16 %v6539, %v6531
        %v6956 = vpack.c.b16 %v6540, %v6532
        %v6957 = vpack.c.b16 %v6541, %v6533
        %v6958 = vpack.c.b16 %v6542, %v6534
        %v6959 = vpack.c.b16 %v6551, %v6543
        %v6960 = vpack.c.b16 %v6552, %v6544
        %v6961 = vpack.c.b16 %v6553, %v6545
        %v6962 = vpack.c.b16 %v6554, %v6546
        %v6963 = vpack.c.b16 %v6555, %v6547
        %v6964 = vpack.c.b16 %v6556, %v6548
        %v6965 = vpack.c.b16 %v6557, %v6549
        %v6966 = vpack.c.b16 %v6558, %v6550
        %v6967 = vpack.c.b16 %v6567, %v6559
        %v6968 = vpack.c.b16 %v6568, %v6560
        %v6969 = vpack.c.b16 %v6569, %v6561
        %v6970 = vpack.c.b16 %v6570, %v6562
        %v6971 = vpack.c.b16 %v6571, %v6563
        %v6972 = vpack.c.b16 %v6572, %v6564
        %v6973 = vpack.c.b16 %v6573, %v6565
        %v6974 = vpack.c.b16 %v6574, %v6566
        %v6975 = vpack.c.b16 %v6583, %v6575
        %v6976 = vpack.c.b16 %v6584, %v6576
        %v6977 = vpack.c.b16 %v6585, %v6577
        %v6978 = vpack.c.b16 %v6586, %v6578
        %v6979 = vpack.c.b16 %v6587, %v6579
        %v6980 = vpack.c.b16 %v6588, %v6580
        %v6981 = vpack.c.b16 %v6589, %v6581
        %v6982 = vpack.c.b16 %v6590, %v6582
        %v6983 = vpack.c.b16 %v6599, %v6591
        %v6984 = vpack.c.b16 %v6600, %v6592
        %v6985 = vpack.c.b16 %v6601, %v6593
        %v6986 = vpack.c.b16 %v6602, %v6594
        %v6987 = vpack.c.b16 %v6603, %v6595
        %v6988 = vpack.c.b16 %v6604, %v6596
        %v6989 = vpack.c.b16 %v6605, %v6597
        %v6990 = vpack.c.b16 %v6606, %v6598
        %v6991 = vpack.c.b16 %v6615, %v6607
        %v6992 = vpack.c.b16 %v6616, %v6608
        %v6993 = vpack.c.b16 %v6617, %v6609
        %v6994 = vpack.c.b16 %v6618, %v6610
        %v6995 = vpack.c.b16 %v6619, %v6611
        %v6996 = vpack.c.b16 %v6620, %v6612
        %v6997 = vpack.c.b16 %v6621, %v6613
        %v6998 = vpack.c.b16 %v6622, %v6614
        %v6999 = vpack.c.b16 %v6631, %v6623
        %v7000 = vpack.c.b16 %v6632, %v6624
        %v7001 = vpack.c.b16 %v6633, %v6625
        %v7002 = vpack.c.b16 %v6634, %v6626
        %v7003 = vpack.c.b16 %v6635, %v6627
        %v7004 = vpack.c.b16 %v6636, %v6628
        %v7005 = vpack.c.b16 %v6637, %v6629
        %v7006 = vpack.c.b16 %v6638, %v6630
        %v7007 = vpack.c.b16 %v6647, %v6639
        %v7008 = vpack.c.b16 %v6648, %v6640
        %v7009 = vpack.c.b16 %v6649, %v6641
        %v7010 = vpack.c.b16 %v6650, %v6642
        %v7011 = vpack.c.b16 %v6651, %v6643
        %v7012 = vpack.c.b16 %v6652, %v6644
        %v7013 = vpack.c.b16 %v6653, %v6645
        %v7014 = vpack.c.b16 %v6654, %v6646
        %v7015 = vpack.c.b16 %v6663, %v6655
        %v7016 = vpack.c.b16 %v6664, %v6656
        %v7017 = vpack.c.b16 %v6665, %v6657
        %v7018 = vpack.c.b16 %v6666, %v6658
        %v7019 = vpack.c.b16 %v6667, %v6659
        %v7020 = vpack.c.b16 %v6668, %v6660
        %v7021 = vpack.c.b16 %v6669, %v6661
        %v7022 = vpack.c.b16 %v6670, %v6662
        %v7023 = vpack.c.b16 %v6679, %v6671
        %v7024 = vpack.c.b16 %v6680, %v6672
        %v7025 = vpack.c.b16 %v6681, %v6673
        %v7026 = vpack.c.b16 %v6682, %v6674
        %v7027 = vpack.c.b16 %v6683, %v6675
        %v7028 = vpack.c.b16 %v6684, %v6676
        %v7029 = vpack.c.b16 %v6685, %v6677
        %v7030 = vpack.c.b16 %v6686, %v6678
        %v7031 = vpack.c.b16 %v6695, %v6687
        %v7032 = vpack.c.b16 %v6696, %v6688
        %v7033 = vpack.c.b16 %v6697, %v6689
        %v7034 = vpack.c.b16 %v6698, %v6690
        %v7035 = vpack.c.b16 %v6699, %v6691
        %v7036 = vpack.c.b16 %v6700, %v6692
        %v7037 = vpack.c.b16 %v6701, %v6693
        %v7038 = vpack.c.b16 %v6702, %v6694
        %v7039 = vpack.c.b16 %v6711, %v6703
        %v7040 = vpack.c.b16 %v6712, %v6704
        %v7041 = vpack.c.b16 %v6713, %v6705
        %v7042 = vpack.c.b16 %v6714, %v6706
        %v7043 = vpack.c.b16 %v6715, %v6707
        %v7044 = vpack.c.b16 %v6716, %v6708
        %v7045 = vpack.c.b16 %v6717, %v6709
        %v7046 = vpack.c.b16 %v6718, %v6710
        %v7047 = vpack.c.b16 %v6727, %v6719
        %v7048 = vpack.c.b16 %v6728, %v6720
        %v7049 = vpack.c.b16 %v6729, %v6721
        %v7050 = vpack.c.b16 %v6730, %v6722
        %v7051 = vpack.c.b16 %v6731, %v6723
        %v7052 = vpack.c.b16 %v6732, %v6724
        %v7053 = vpack.c.b16 %v6733, %v6725
        %v7054 = vpack.c.b16 %v6734, %v6726
        %v7055 = vpack.c.b16 %v6743, %v6735
        %v7056 = vpack.c.b16 %v6744, %v6736
        %v7057 = vpack.c.b16 %v6745, %v6737
        %v7058 = vpack.c.b16 %v6746, %v6738
        %v7059 = vpack.c.b16 %v6747, %v6739
        %v7060 = vpack.c.b16 %v6748, %v6740
        %v7061 = vpack.c.b16 %v6749, %v6741
        %v7062 = vpack.c.b16 %v6750, %v6742
        %v7063 = vpack.c.b16 %v6759, %v6751
        %v7064 = vpack.c.b16 %v6760, %v6752
        %v7065 = vpack.c.b16 %v6761, %v6753
        %v7066 = vpack.c.b16 %v6762, %v6754
        %v7067 = vpack.c.b16 %v6763, %v6755
        %v7068 = vpack.c.b16 %v6764, %v6756
        %v7069 = vpack.c.b16 %v6765, %v6757
        %v7070 = vpack.c.b16 %v6766, %v6758
        %v7071 = vpack.c.b16 %v6775, %v6767
        %v7072 = vpack.c.b16 %v6776, %v6768
        %v7073 = vpack.c.b16 %v6777, %v6769
        %v7074 = vpack.c.b16 %v6778, %v6770
        %v7075 = vpack.c.b16 %v6779, %v6771
        %v7076 = vpack.c.b16 %v6780, %v6772
        %v7077 = vpack.c.b16 %v6781, %v6773
        %v7078 = vpack.c.b16 %v6782, %v6774
        %v7079 = vpack.c.b16 %v6791, %v6783
        %v7080 = vpack.c.b16 %v6792, %v6784
        %v7081 = vpack.c.b16 %v6793, %v6785
        %v7082 = vpack.c.b16 %v6794, %v6786
        %v7083 = vpack.c.b16 %v6795, %v6787
        %v7084 = vpack.c.b16 %v6796, %v6788
        %v7085 = vpack.c.b16 %v6797, %v6789
        %v7086 = vpack.c.b16 %v6798, %v6790
        %v7087 = vpack.c.b16 %v6807, %v6799
        %v7088 = vpack.c.b16 %v6808, %v6800
        %v7089 = vpack.c.b16 %v6809, %v6801
        %v7090 = vpack.c.b16 %v6810, %v6802
        %v7091 = vpack.c.b16 %v6811, %v6803
        %v7092 = vpack.c.b16 %v6812, %v6804
        %v7093 = vpack.c.b16 %v6813, %v6805
        %v7094 = vpack.c.b16 %v6814, %v6806
        %v7095 = vpack.c.b16 %v6823, %v6815
        %v7096 = vpack.c.b16 %v6824, %v6816
        %v7097 = vpack.c.b16 %v6825, %v6817
        %v7098 = vpack.c.b16 %v6826, %v6818
        %v7099 = vpack.c.b16 %v6827, %v6819
        %v7100 = vpack.c.b16 %v6828, %v6820
        %v7101 = vpack.c.b16 %v6829, %v6821
        %v7102 = vpack.c.b16 %v6830, %v6822
        %v7103 = vpack.c.b16 %v6839, %v6831
        %v7104 = vpack.c.b16 %v6840, %v6832
        %v7105 = vpack.c.b16 %v6841, %v6833
        %v7106 = vpack.c.b16 %v6842, %v6834
        %v7107 = vpack.c.b16 %v6843, %v6835
        %v7108 = vpack.c.b16 %v6844, %v6836
        %v7109 = vpack.c.b16 %v6845, %v6837
        %v7110 = vpack.c.b16 %v6846, %v6838
        %v7111 = vpack.c.b16 %v6855, %v6847
        %v7112 = vpack.c.b16 %v6856, %v6848
        %v7113 = vpack.c.b16 %v6857, %v6849
        %v7114 = vpack.c.b16 %v6858, %v6850
        %v7115 = vpack.c.b16 %v6859, %v6851
        %v7116 = vpack.c.b16 %v6860, %v6852
        %v7117 = vpack.c.b16 %v6861, %v6853
        %v7118 = vpack.c.b16 %v6862, %v6854
        %7375 = vmatpush.bf16.msra.mxu0 %v6919
        %7376 = vmatpush.bf16.msra.mxu0 %v6911
        %7377 = vmatpush.bf16.msra.mxu0 %v6903
        %7378 = vmatpush.bf16.msra.mxu0 %v6895
        %7379 = vmatpush.bf16.msra.mxu0 %v6887
        %7380 = vmatpush.bf16.msra.mxu0 %v6879
        %7381 = vmatpush.bf16.msra.mxu0 %v6871
        %7382 = vmatpush.bf16.msra.mxu0 %v6863
        %7383 = vmatmul.bf16.gmra.mxu0 %v5813
        %v7384 = vpop.f32.mrf.mxu0
        %v7385 = vadd.f32 %v6079, %v7384
        %v7386 = vpop.f32.mrf.mxu0
        %v7387 = vadd.f32 %v6079, %v7386
        %7388 = vmatmul.bf16.gmra.mxu0 %v5817
        %v7389 = vpop.f32.mrf.mxu0
        %v7390 = vadd.f32 %v6079, %v7389
        %v7391 = vpop.f32.mrf.mxu0
        %v7392 = vadd.f32 %v6079, %v7391
        %7393 = vdwg.mxu0
        %7394 = vmatpush.bf16.msra.mxu0 %v6983
        %7395 = vmatpush.bf16.msra.mxu0 %v6975
        %7396 = vmatpush.bf16.msra.mxu0 %v6967
        %7397 = vmatpush.bf16.msra.mxu0 %v6959
        %7398 = vmatpush.bf16.msra.mxu0 %v6951
        %7399 = vmatpush.bf16.msra.mxu0 %v6943
        %7400 = vmatpush.bf16.msra.mxu0 %v6935
        %7401 = vmatpush.bf16.msra.mxu0 %v6927
        %7402 = vmatmul.bf16.gmra.mxu0 %v5814
        %v7403 = vpop.f32.mrf.mxu0
        %v7404 = vadd.f32 %v7385, %v7403
        %v7405 = vpop.f32.mrf.mxu0
        %v7406 = vadd.f32 %v7387, %v7405
        %7407 = vmatmul.bf16.gmra.mxu0 %v5818
        %v7408 = vpop.f32.mrf.mxu0
        %v7409 = vadd.f32 %v7390, %v7408
        %v7410 = vpop.f32.mrf.mxu0
        %v7411 = vadd.f32 %v7392, %v7410
        %7412 = vdwg.mxu0
        %7413 = vmatpush.bf16.msra.mxu0 %v7047
        %7414 = vmatpush.bf16.msra.mxu0 %v7039
        %7415 = vmatpush.bf16.msra.mxu0 %v7031
        %7416 = vmatpush.bf16.msra.mxu0 %v7023
        %7417 = vmatpush.bf16.msra.mxu0 %v7015
        %7418 = vmatpush.bf16.msra.mxu0 %v7007
        %7419 = vmatpush.bf16.msra.mxu0 %v6999
        %7420 = vmatpush.bf16.msra.mxu0 %v6991
        %7421 = vmatmul.bf16.gmra.mxu0 %v5815
        %v7422 = vpop.f32.mrf.mxu0
        %v7423 = vadd.f32 %v7404, %v7422
        %v7424 = vpop.f32.mrf.mxu0
        %v7425 = vadd.f32 %v7406, %v7424
        %7426 = vmatmul.bf16.gmra.mxu0 %v5819
        %v7427 = vpop.f32.mrf.mxu0
        %v7428 = vadd.f32 %v7409, %v7427
        %v7429 = vpop.f32.mrf.mxu0
        %v7430 = vadd.f32 %v7411, %v7429
        %7431 = vdwg.mxu0
        %7432 = vmatpush.bf16.msra.mxu0 %v7111
        %7433 = vmatpush.bf16.msra.mxu0 %v7103
        %7434 = vmatpush.bf16.msra.mxu0 %v7095
        %7435 = vmatpush.bf16.msra.mxu0 %v7087
        %7436 = vmatpush.bf16.msra.mxu0 %v7079
        %7437 = vmatpush.bf16.msra.mxu0 %v7071
        %7438 = vmatpush.bf16.msra.mxu0 %v7063
        %7439 = vmatpush.bf16.msra.mxu0 %v7055
        %7440 = vmatmul.bf16.gmra.mxu0 %v5816
        %v7441 = vpop.f32.mrf.mxu0
        %v7442 = vadd.f32 %v7423, %v7441
        %v7443 = vpop.f32.mrf.mxu0
        %v7444 = vadd.f32 %v7425, %v7443
        %7445 = vmatmul.bf16.gmra.mxu0 %v5820
        %v7446 = vpop.f32.mrf.mxu0
        %v7447 = vadd.f32 %v7428, %v7446
        %v7448 = vpop.f32.mrf.mxu0
        %v7449 = vadd.f32 %v7430, %v7448
        %7450 = vdwg.mxu0
        %7451 = vmatpush.bf16.msra.mxu0 %v6920
        %7452 = vmatpush.bf16.msra.mxu0 %v6912
        %7453 = vmatpush.bf16.msra.mxu0 %v6904
        %7454 = vmatpush.bf16.msra.mxu0 %v6896
        %7455 = vmatpush.bf16.msra.mxu0 %v6888
        %7456 = vmatpush.bf16.msra.mxu0 %v6880
        %7457 = vmatpush.bf16.msra.mxu0 %v6872
        %7458 = vmatpush.bf16.msra.mxu0 %v6864
        %7459 = vmatmul.bf16.gmra.mxu0 %v5813
        %v7460 = vpop.f32.mrf.mxu0
        %v7461 = vadd.f32 %v6080, %v7460
        %v7462 = vpop.f32.mrf.mxu0
        %v7463 = vadd.f32 %v6080, %v7462
        %7464 = vmatmul.bf16.gmra.mxu0 %v5817
        %v7465 = vpop.f32.mrf.mxu0
        %v7466 = vadd.f32 %v6080, %v7465
        %v7467 = vpop.f32.mrf.mxu0
        %v7468 = vadd.f32 %v6080, %v7467
        %7469 = vdwg.mxu0
        %7470 = vmatpush.bf16.msra.mxu0 %v6984
        %7471 = vmatpush.bf16.msra.mxu0 %v6976
        %7472 = vmatpush.bf16.msra.mxu0 %v6968
        %7473 = vmatpush.bf16.msra.mxu0 %v6960
        %7474 = vmatpush.bf16.msra.mxu0 %v6952
        %7475 = vmatpush.bf16.msra.mxu0 %v6944
        %7476 = vmatpush.bf16.msra.mxu0 %v6936
        %7477 = vmatpush.bf16.msra.mxu0 %v6928
        %7478 = vmatmul.bf16.gmra.mxu0 %v5814
        %v7479 = vpop.f32.mrf.mxu0
        %v7480 = vadd.f32 %v7461, %v7479
        %v7481 = vpop.f32.mrf.mxu0
        %v7482 = vadd.f32 %v7463, %v7481
        %7483 = vmatmul.bf16.gmra.mxu0 %v5818
        %v7484 = vpop.f32.mrf.mxu0
        %v7485 = vadd.f32 %v7466, %v7484
        %v7486 = vpop.f32.mrf.mxu0
        %v7487 = vadd.f32 %v7468, %v7486
        %7488 = vdwg.mxu0
        %7489 = vmatpush.bf16.msra.mxu0 %v7048
        %7490 = vmatpush.bf16.msra.mxu0 %v7040
        %7491 = vmatpush.bf16.msra.mxu0 %v7032
        %7492 = vmatpush.bf16.msra.mxu0 %v7024
        %7493 = vmatpush.bf16.msra.mxu0 %v7016
        %7494 = vmatpush.bf16.msra.mxu0 %v7008
        %7495 = vmatpush.bf16.msra.mxu0 %v7000
        %7496 = vmatpush.bf16.msra.mxu0 %v6992
        %7497 = vmatmul.bf16.gmra.mxu0 %v5815
        %v7498 = vpop.f32.mrf.mxu0
        %v7499 = vadd.f32 %v7480, %v7498
        %v7500 = vpop.f32.mrf.mxu0
        %v7501 = vadd.f32 %v7482, %v7500
        %7502 = vmatmul.bf16.gmra.mxu0 %v5819
        %v7503 = vpop.f32.mrf.mxu0
        %v7504 = vadd.f32 %v7485, %v7503
        %v7505 = vpop.f32.mrf.mxu0
        %v7506 = vadd.f32 %v7487, %v7505
        %7507 = vdwg.mxu0
        %7508 = vmatpush.bf16.msra.mxu0 %v7112
        %7509 = vmatpush.bf16.msra.mxu0 %v7104
        %7510 = vmatpush.bf16.msra.mxu0 %v7096
        %7511 = vmatpush.bf16.msra.mxu0 %v7088
        %7512 = vmatpush.bf16.msra.mxu0 %v7080
        %7513 = vmatpush.bf16.msra.mxu0 %v7072
        %7514 = vmatpush.bf16.msra.mxu0 %v7064
        %7515 = vmatpush.bf16.msra.mxu0 %v7056
        %7516 = vmatmul.bf16.gmra.mxu0 %v5816
        %v7517 = vpop.f32.mrf.mxu0
        %v7518 = vadd.f32 %v7499, %v7517
        %v7519 = vpop.f32.mrf.mxu0
        %v7520 = vadd.f32 %v7501, %v7519
        %7521 = vmatmul.bf16.gmra.mxu0 %v5820
        %v7522 = vpop.f32.mrf.mxu0
        %v7523 = vadd.f32 %v7504, %v7522
        %v7524 = vpop.f32.mrf.mxu0
        %v7525 = vadd.f32 %v7506, %v7524
        %7526 = vdwg.mxu0
        %7527 = vmatpush.bf16.msra.mxu0 %v6921
        %7528 = vmatpush.bf16.msra.mxu0 %v6913
        %7529 = vmatpush.bf16.msra.mxu0 %v6905
        %7530 = vmatpush.bf16.msra.mxu0 %v6897
        %7531 = vmatpush.bf16.msra.mxu0 %v6889
        %7532 = vmatpush.bf16.msra.mxu0 %v6881
        %7533 = vmatpush.bf16.msra.mxu0 %v6873
        %7534 = vmatpush.bf16.msra.mxu0 %v6865
        %7535 = vmatmul.bf16.gmra.mxu0 %v5813
        %v7536 = vpop.f32.mrf.mxu0
        %v7537 = vadd.f32 %v6081, %v7536
        %v7538 = vpop.f32.mrf.mxu0
        %v7539 = vadd.f32 %v6081, %v7538
        %7540 = vmatmul.bf16.gmra.mxu0 %v5817
        %v7541 = vpop.f32.mrf.mxu0
        %v7542 = vadd.f32 %v6081, %v7541
        %v7543 = vpop.f32.mrf.mxu0
        %v7544 = vadd.f32 %v6081, %v7543
        %7545 = vdwg.mxu0
        %7546 = vmatpush.bf16.msra.mxu0 %v6985
        %7547 = vmatpush.bf16.msra.mxu0 %v6977
        %7548 = vmatpush.bf16.msra.mxu0 %v6969
        %7549 = vmatpush.bf16.msra.mxu0 %v6961
        %7550 = vmatpush.bf16.msra.mxu0 %v6953
        %7551 = vmatpush.bf16.msra.mxu0 %v6945
        %7552 = vmatpush.bf16.msra.mxu0 %v6937
        %7553 = vmatpush.bf16.msra.mxu0 %v6929
        %7554 = vmatmul.bf16.gmra.mxu0 %v5814
        %v7555 = vpop.f32.mrf.mxu0
        %v7556 = vadd.f32 %v7537, %v7555
        %v7557 = vpop.f32.mrf.mxu0
        %v7558 = vadd.f32 %v7539, %v7557
        %7559 = vmatmul.bf16.gmra.mxu0 %v5818
        %v7560 = vpop.f32.mrf.mxu0
        %v7561 = vadd.f32 %v7542, %v7560
        %v7562 = vpop.f32.mrf.mxu0
        %v7563 = vadd.f32 %v7544, %v7562
        %7564 = vdwg.mxu0
        %7565 = vmatpush.bf16.msra.mxu0 %v7049
        %7566 = vmatpush.bf16.msra.mxu0 %v7041
        %7567 = vmatpush.bf16.msra.mxu0 %v7033
        %7568 = vmatpush.bf16.msra.mxu0 %v7025
        %7569 = vmatpush.bf16.msra.mxu0 %v7017
        %7570 = vmatpush.bf16.msra.mxu0 %v7009
        %7571 = vmatpush.bf16.msra.mxu0 %v7001
        %7572 = vmatpush.bf16.msra.mxu0 %v6993
        %7573 = vmatmul.bf16.gmra.mxu0 %v5815
        %v7574 = vpop.f32.mrf.mxu0
        %v7575 = vadd.f32 %v7556, %v7574
        %v7576 = vpop.f32.mrf.mxu0
        %v7577 = vadd.f32 %v7558, %v7576
        %7578 = vmatmul.bf16.gmra.mxu0 %v5819
        %v7579 = vpop.f32.mrf.mxu0
        %v7580 = vadd.f32 %v7561, %v7579
        %v7581 = vpop.f32.mrf.mxu0
        %v7582 = vadd.f32 %v7563, %v7581
        %7583 = vdwg.mxu0
        %7584 = vmatpush.bf16.msra.mxu0 %v7113
        %7585 = vmatpush.bf16.msra.mxu0 %v7105
        %7586 = vmatpush.bf16.msra.mxu0 %v7097
        %7587 = vmatpush.bf16.msra.mxu0 %v7089
        %7588 = vmatpush.bf16.msra.mxu0 %v7081
        %7589 = vmatpush.bf16.msra.mxu0 %v7073
        %7590 = vmatpush.bf16.msra.mxu0 %v7065
        %7591 = vmatpush.bf16.msra.mxu0 %v7057
        %7592 = vmatmul.bf16.gmra.mxu0 %v5816
        %v7593 = vpop.f32.mrf.mxu0
        %v7594 = vadd.f32 %v7575, %v7593
        %v7595 = vpop.f32.mrf.mxu0
        %v7596 = vadd.f32 %v7577, %v7595
        %7597 = vmatmul.bf16.gmra.mxu0 %v5820
        %v7598 = vpop.f32.mrf.mxu0
        %v7599 = vadd.f32 %v7580, %v7598
        %v7600 = vpop.f32.mrf.mxu0
        %v7601 = vadd.f32 %v7582, %v7600
        %7602 = vdwg.mxu0
        %7603 = vmatpush.bf16.msra.mxu0 %v6922
        %7604 = vmatpush.bf16.msra.mxu0 %v6914
        %7605 = vmatpush.bf16.msra.mxu0 %v6906
        %7606 = vmatpush.bf16.msra.mxu0 %v6898
        %7607 = vmatpush.bf16.msra.mxu0 %v6890
        %7608 = vmatpush.bf16.msra.mxu0 %v6882
        %7609 = vmatpush.bf16.msra.mxu0 %v6874
        %7610 = vmatpush.bf16.msra.mxu0 %v6866
        %7611 = vmatmul.bf16.gmra.mxu0 %v5813
        %v7612 = vpop.f32.mrf.mxu0
        %v7613 = vadd.f32 %v6082, %v7612
        %v7614 = vpop.f32.mrf.mxu0
        %v7615 = vadd.f32 %v6082, %v7614
        %7616 = vmatmul.bf16.gmra.mxu0 %v5817
        %v7617 = vpop.f32.mrf.mxu0
        %v7618 = vadd.f32 %v6082, %v7617
        %v7619 = vpop.f32.mrf.mxu0
        %v7620 = vadd.f32 %v6082, %v7619
        %7621 = vdwg.mxu0
        %7622 = vmatpush.bf16.msra.mxu0 %v6986
        %7623 = vmatpush.bf16.msra.mxu0 %v6978
        %7624 = vmatpush.bf16.msra.mxu0 %v6970
        %7625 = vmatpush.bf16.msra.mxu0 %v6962
        %7626 = vmatpush.bf16.msra.mxu0 %v6954
        %7627 = vmatpush.bf16.msra.mxu0 %v6946
        %7628 = vmatpush.bf16.msra.mxu0 %v6938
        %7629 = vmatpush.bf16.msra.mxu0 %v6930
        %7630 = vmatmul.bf16.gmra.mxu0 %v5814
        %v7631 = vpop.f32.mrf.mxu0
        %v7632 = vadd.f32 %v7613, %v7631
        %v7633 = vpop.f32.mrf.mxu0
        %v7634 = vadd.f32 %v7615, %v7633
        %7635 = vmatmul.bf16.gmra.mxu0 %v5818
        %v7636 = vpop.f32.mrf.mxu0
        %v7637 = vadd.f32 %v7618, %v7636
        %v7638 = vpop.f32.mrf.mxu0
        %v7639 = vadd.f32 %v7620, %v7638
        %7640 = vdwg.mxu0
        %7641 = vmatpush.bf16.msra.mxu0 %v7050
        %7642 = vmatpush.bf16.msra.mxu0 %v7042
        %7643 = vmatpush.bf16.msra.mxu0 %v7034
        %7644 = vmatpush.bf16.msra.mxu0 %v7026
        %7645 = vmatpush.bf16.msra.mxu0 %v7018
        %7646 = vmatpush.bf16.msra.mxu0 %v7010
        %7647 = vmatpush.bf16.msra.mxu0 %v7002
        %7648 = vmatpush.bf16.msra.mxu0 %v6994
        %7649 = vmatmul.bf16.gmra.mxu0 %v5815
        %v7650 = vpop.f32.mrf.mxu0
        %v7651 = vadd.f32 %v7632, %v7650
        %v7652 = vpop.f32.mrf.mxu0
        %v7653 = vadd.f32 %v7634, %v7652
        %7654 = vmatmul.bf16.gmra.mxu0 %v5819
        %v7655 = vpop.f32.mrf.mxu0
        %v7656 = vadd.f32 %v7637, %v7655
        %v7657 = vpop.f32.mrf.mxu0
        %v7658 = vadd.f32 %v7639, %v7657
        %7659 = vdwg.mxu0
        %7660 = vmatpush.bf16.msra.mxu0 %v7114
        %7661 = vmatpush.bf16.msra.mxu0 %v7106
        %7662 = vmatpush.bf16.msra.mxu0 %v7098
        %7663 = vmatpush.bf16.msra.mxu0 %v7090
        %7664 = vmatpush.bf16.msra.mxu0 %v7082
        %7665 = vmatpush.bf16.msra.mxu0 %v7074
        %7666 = vmatpush.bf16.msra.mxu0 %v7066
        %7667 = vmatpush.bf16.msra.mxu0 %v7058
        %7668 = vmatmul.bf16.gmra.mxu0 %v5816
        %v7669 = vpop.f32.mrf.mxu0
        %v7670 = vadd.f32 %v7651, %v7669
        %v7671 = vpop.f32.mrf.mxu0
        %v7672 = vadd.f32 %v7653, %v7671
        %7673 = vmatmul.bf16.gmra.mxu0 %v5820
        %v7674 = vpop.f32.mrf.mxu0
        %v7675 = vadd.f32 %v7656, %v7674
        %v7676 = vpop.f32.mrf.mxu0
        %v7677 = vadd.f32 %v7658, %v7676
        %7678 = vdwg.mxu0
        %7679 = vmatpush.bf16.msra.mxu0 %v6923
        %7680 = vmatpush.bf16.msra.mxu0 %v6915
        %7681 = vmatpush.bf16.msra.mxu0 %v6907
        %7682 = vmatpush.bf16.msra.mxu0 %v6899
        %7683 = vmatpush.bf16.msra.mxu0 %v6891
        %7684 = vmatpush.bf16.msra.mxu0 %v6883
        %7685 = vmatpush.bf16.msra.mxu0 %v6875
        %7686 = vmatpush.bf16.msra.mxu0 %v6867
        %7687 = vmatmul.bf16.gmra.mxu0 %v5813
        %v7688 = vpop.f32.mrf.mxu0
        %v7689 = vadd.f32 %v6083, %v7688
        %v7690 = vpop.f32.mrf.mxu0
        %v7691 = vadd.f32 %v6083, %v7690
        %7692 = vmatmul.bf16.gmra.mxu0 %v5817
        %v7693 = vpop.f32.mrf.mxu0
        %v7694 = vadd.f32 %v6083, %v7693
        %v7695 = vpop.f32.mrf.mxu0
        %v7696 = vadd.f32 %v6083, %v7695
        %7697 = vdwg.mxu0
        %7698 = vmatpush.bf16.msra.mxu0 %v6987
        %7699 = vmatpush.bf16.msra.mxu0 %v6979
        %7700 = vmatpush.bf16.msra.mxu0 %v6971
        %7701 = vmatpush.bf16.msra.mxu0 %v6963
        %7702 = vmatpush.bf16.msra.mxu0 %v6955
        %7703 = vmatpush.bf16.msra.mxu0 %v6947
        %7704 = vmatpush.bf16.msra.mxu0 %v6939
        %7705 = vmatpush.bf16.msra.mxu0 %v6931
        %7706 = vmatmul.bf16.gmra.mxu0 %v5814
        %v7707 = vpop.f32.mrf.mxu0
        %v7708 = vadd.f32 %v7689, %v7707
        %v7709 = vpop.f32.mrf.mxu0
        %v7710 = vadd.f32 %v7691, %v7709
        %7711 = vmatmul.bf16.gmra.mxu0 %v5818
        %v7712 = vpop.f32.mrf.mxu0
        %v7713 = vadd.f32 %v7694, %v7712
        %v7714 = vpop.f32.mrf.mxu0
        %v7715 = vadd.f32 %v7696, %v7714
        %7716 = vdwg.mxu0
        %7717 = vmatpush.bf16.msra.mxu0 %v7051
        %7718 = vmatpush.bf16.msra.mxu0 %v7043
        %7719 = vmatpush.bf16.msra.mxu0 %v7035
        %7720 = vmatpush.bf16.msra.mxu0 %v7027
        %7721 = vmatpush.bf16.msra.mxu0 %v7019
        %7722 = vmatpush.bf16.msra.mxu0 %v7011
        %7723 = vmatpush.bf16.msra.mxu0 %v7003
        %7724 = vmatpush.bf16.msra.mxu0 %v6995
        %7725 = vmatmul.bf16.gmra.mxu0 %v5815
        %v7726 = vpop.f32.mrf.mxu0
        %v7727 = vadd.f32 %v7708, %v7726
        %v7728 = vpop.f32.mrf.mxu0
        %v7729 = vadd.f32 %v7710, %v7728
        %7730 = vmatmul.bf16.gmra.mxu0 %v5819
        %v7731 = vpop.f32.mrf.mxu0
        %v7732 = vadd.f32 %v7713, %v7731
        %v7733 = vpop.f32.mrf.mxu0
        %v7734 = vadd.f32 %v7715, %v7733
        %7735 = vdwg.mxu0
        %7736 = vmatpush.bf16.msra.mxu0 %v7115
        %7737 = vmatpush.bf16.msra.mxu0 %v7107
        %7738 = vmatpush.bf16.msra.mxu0 %v7099
        %7739 = vmatpush.bf16.msra.mxu0 %v7091
        %7740 = vmatpush.bf16.msra.mxu0 %v7083
        %7741 = vmatpush.bf16.msra.mxu0 %v7075
        %7742 = vmatpush.bf16.msra.mxu0 %v7067
        %7743 = vmatpush.bf16.msra.mxu0 %v7059
        %7744 = vmatmul.bf16.gmra.mxu0 %v5816
        %v7745 = vpop.f32.mrf.mxu0
        %v7746 = vadd.f32 %v7727, %v7745
        %v7747 = vpop.f32.mrf.mxu0
        %v7748 = vadd.f32 %v7729, %v7747
        %7749 = vmatmul.bf16.gmra.mxu0 %v5820
        %v7750 = vpop.f32.mrf.mxu0
        %v7751 = vadd.f32 %v7732, %v7750
        %v7752 = vpop.f32.mrf.mxu0
        %v7753 = vadd.f32 %v7734, %v7752
        %7754 = vdwg.mxu0
        %7755 = vmatpush.bf16.msra.mxu0 %v6924
        %7756 = vmatpush.bf16.msra.mxu0 %v6916
        %7757 = vmatpush.bf16.msra.mxu0 %v6908
        %7758 = vmatpush.bf16.msra.mxu0 %v6900
        %7759 = vmatpush.bf16.msra.mxu0 %v6892
        %7760 = vmatpush.bf16.msra.mxu0 %v6884
        %7761 = vmatpush.bf16.msra.mxu0 %v6876
        %7762 = vmatpush.bf16.msra.mxu0 %v6868
        %7763 = vmatmul.bf16.gmra.mxu0 %v5813
        %v7764 = vpop.f32.mrf.mxu0
        %v7765 = vadd.f32 %v6084, %v7764
        %v7766 = vpop.f32.mrf.mxu0
        %v7767 = vadd.f32 %v6084, %v7766
        %7768 = vmatmul.bf16.gmra.mxu0 %v5817
        %v7769 = vpop.f32.mrf.mxu0
        %v7770 = vadd.f32 %v6084, %v7769
        %v7771 = vpop.f32.mrf.mxu0
        %v7772 = vadd.f32 %v6084, %v7771
        %7773 = vdwg.mxu0
        %7774 = vmatpush.bf16.msra.mxu0 %v6988
        %7775 = vmatpush.bf16.msra.mxu0 %v6980
        %7776 = vmatpush.bf16.msra.mxu0 %v6972
        %7777 = vmatpush.bf16.msra.mxu0 %v6964
        %7778 = vmatpush.bf16.msra.mxu0 %v6956
        %7779 = vmatpush.bf16.msra.mxu0 %v6948
        %7780 = vmatpush.bf16.msra.mxu0 %v6940
        %7781 = vmatpush.bf16.msra.mxu0 %v6932
        %7782 = vmatmul.bf16.gmra.mxu0 %v5814
        %v7783 = vpop.f32.mrf.mxu0
        %v7784 = vadd.f32 %v7765, %v7783
        %v7785 = vpop.f32.mrf.mxu0
        %v7786 = vadd.f32 %v7767, %v7785
        %7787 = vmatmul.bf16.gmra.mxu0 %v5818
        %v7788 = vpop.f32.mrf.mxu0
        %v7789 = vadd.f32 %v7770, %v7788
        %v7790 = vpop.f32.mrf.mxu0
        %v7791 = vadd.f32 %v7772, %v7790
        %7792 = vdwg.mxu0
        %7793 = vmatpush.bf16.msra.mxu0 %v7052
        %7794 = vmatpush.bf16.msra.mxu0 %v7044
        %7795 = vmatpush.bf16.msra.mxu0 %v7036
        %7796 = vmatpush.bf16.msra.mxu0 %v7028
        %7797 = vmatpush.bf16.msra.mxu0 %v7020
        %7798 = vmatpush.bf16.msra.mxu0 %v7012
        %7799 = vmatpush.bf16.msra.mxu0 %v7004
        %7800 = vmatpush.bf16.msra.mxu0 %v6996
        %7801 = vmatmul.bf16.gmra.mxu0 %v5815
        %v7802 = vpop.f32.mrf.mxu0
        %v7803 = vadd.f32 %v7784, %v7802
        %v7804 = vpop.f32.mrf.mxu0
        %v7805 = vadd.f32 %v7786, %v7804
        %7806 = vmatmul.bf16.gmra.mxu0 %v5819
        %v7807 = vpop.f32.mrf.mxu0
        %v7808 = vadd.f32 %v7789, %v7807
        %v7809 = vpop.f32.mrf.mxu0
        %v7810 = vadd.f32 %v7791, %v7809
        %7811 = vdwg.mxu0
        %7812 = vmatpush.bf16.msra.mxu0 %v7116
        %7813 = vmatpush.bf16.msra.mxu0 %v7108
        %7814 = vmatpush.bf16.msra.mxu0 %v7100
        %7815 = vmatpush.bf16.msra.mxu0 %v7092
        %7816 = vmatpush.bf16.msra.mxu0 %v7084
        %7817 = vmatpush.bf16.msra.mxu0 %v7076
        %7818 = vmatpush.bf16.msra.mxu0 %v7068
        %7819 = vmatpush.bf16.msra.mxu0 %v7060
        %7820 = vmatmul.bf16.gmra.mxu0 %v5816
        %v7821 = vpop.f32.mrf.mxu0
        %v7822 = vadd.f32 %v7803, %v7821
        %v7823 = vpop.f32.mrf.mxu0
        %v7824 = vadd.f32 %v7805, %v7823
        %7825 = vmatmul.bf16.gmra.mxu0 %v5820
        %v7826 = vpop.f32.mrf.mxu0
        %v7827 = vadd.f32 %v7808, %v7826
        %v7828 = vpop.f32.mrf.mxu0
        %v7829 = vadd.f32 %v7810, %v7828
        %7830 = vdwg.mxu0
        %7831 = vmatpush.bf16.msra.mxu0 %v6925
        %7832 = vmatpush.bf16.msra.mxu0 %v6917
        %7833 = vmatpush.bf16.msra.mxu0 %v6909
        %7834 = vmatpush.bf16.msra.mxu0 %v6901
        %7835 = vmatpush.bf16.msra.mxu0 %v6893
        %7836 = vmatpush.bf16.msra.mxu0 %v6885
        %7837 = vmatpush.bf16.msra.mxu0 %v6877
        %7838 = vmatpush.bf16.msra.mxu0 %v6869
        %7839 = vmatmul.bf16.gmra.mxu0 %v5813
        %v7840 = vpop.f32.mrf.mxu0
        %v7841 = vadd.f32 %v6085, %v7840
        %v7842 = vpop.f32.mrf.mxu0
        %v7843 = vadd.f32 %v6085, %v7842
        %7844 = vmatmul.bf16.gmra.mxu0 %v5817
        %v7845 = vpop.f32.mrf.mxu0
        %v7846 = vadd.f32 %v6085, %v7845
        %v7847 = vpop.f32.mrf.mxu0
        %v7848 = vadd.f32 %v6085, %v7847
        %7849 = vdwg.mxu0
        %7850 = vmatpush.bf16.msra.mxu0 %v6989
        %7851 = vmatpush.bf16.msra.mxu0 %v6981
        %7852 = vmatpush.bf16.msra.mxu0 %v6973
        %7853 = vmatpush.bf16.msra.mxu0 %v6965
        %7854 = vmatpush.bf16.msra.mxu0 %v6957
        %7855 = vmatpush.bf16.msra.mxu0 %v6949
        %7856 = vmatpush.bf16.msra.mxu0 %v6941
        %7857 = vmatpush.bf16.msra.mxu0 %v6933
        %7858 = vmatmul.bf16.gmra.mxu0 %v5814
        %v7859 = vpop.f32.mrf.mxu0
        %v7860 = vadd.f32 %v7841, %v7859
        %v7861 = vpop.f32.mrf.mxu0
        %v7862 = vadd.f32 %v7843, %v7861
        %7863 = vmatmul.bf16.gmra.mxu0 %v5818
        %v7864 = vpop.f32.mrf.mxu0
        %v7865 = vadd.f32 %v7846, %v7864
        %v7866 = vpop.f32.mrf.mxu0
        %v7867 = vadd.f32 %v7848, %v7866
        %7868 = vdwg.mxu0
        %7869 = vmatpush.bf16.msra.mxu0 %v7053
        %7870 = vmatpush.bf16.msra.mxu0 %v7045
        %7871 = vmatpush.bf16.msra.mxu0 %v7037
        %7872 = vmatpush.bf16.msra.mxu0 %v7029
        %7873 = vmatpush.bf16.msra.mxu0 %v7021
        %7874 = vmatpush.bf16.msra.mxu0 %v7013
        %7875 = vmatpush.bf16.msra.mxu0 %v7005
        %7876 = vmatpush.bf16.msra.mxu0 %v6997
        %7877 = vmatmul.bf16.gmra.mxu0 %v5815
        %v7878 = vpop.f32.mrf.mxu0
        %v7879 = vadd.f32 %v7860, %v7878
        %v7880 = vpop.f32.mrf.mxu0
        %v7881 = vadd.f32 %v7862, %v7880
        %7882 = vmatmul.bf16.gmra.mxu0 %v5819
        %v7883 = vpop.f32.mrf.mxu0
        %v7884 = vadd.f32 %v7865, %v7883
        %v7885 = vpop.f32.mrf.mxu0
        %v7886 = vadd.f32 %v7867, %v7885
        %7887 = vdwg.mxu0
        %7888 = vmatpush.bf16.msra.mxu0 %v7117
        %7889 = vmatpush.bf16.msra.mxu0 %v7109
        %7890 = vmatpush.bf16.msra.mxu0 %v7101
        %7891 = vmatpush.bf16.msra.mxu0 %v7093
        %7892 = vmatpush.bf16.msra.mxu0 %v7085
        %7893 = vmatpush.bf16.msra.mxu0 %v7077
        %7894 = vmatpush.bf16.msra.mxu0 %v7069
        %7895 = vmatpush.bf16.msra.mxu0 %v7061
        %7896 = vmatmul.bf16.gmra.mxu0 %v5816
        %v7897 = vpop.f32.mrf.mxu0
        %v7898 = vadd.f32 %v7879, %v7897
        %v7899 = vpop.f32.mrf.mxu0
        %v7900 = vadd.f32 %v7881, %v7899
        %7901 = vmatmul.bf16.gmra.mxu0 %v5820
        %v7902 = vpop.f32.mrf.mxu0
        %v7903 = vadd.f32 %v7884, %v7902
        %v7904 = vpop.f32.mrf.mxu0
        %v7905 = vadd.f32 %v7886, %v7904
        %7906 = vdwg.mxu0
        %7907 = vmatpush.bf16.msra.mxu0 %v6926
        %7908 = vmatpush.bf16.msra.mxu0 %v6918
        %7909 = vmatpush.bf16.msra.mxu0 %v6910
        %7910 = vmatpush.bf16.msra.mxu0 %v6902
        %7911 = vmatpush.bf16.msra.mxu0 %v6894
        %7912 = vmatpush.bf16.msra.mxu0 %v6886
        %7913 = vmatpush.bf16.msra.mxu0 %v6878
        %7914 = vmatpush.bf16.msra.mxu0 %v6870
        %7915 = vmatmul.bf16.gmra.mxu0 %v5813
        %v7916 = vpop.f32.mrf.mxu0
        %v7917 = vadd.f32 %v6086, %v7916
        %v7918 = vpop.f32.mrf.mxu0
        %v7919 = vadd.f32 %v6086, %v7918
        %7920 = vmatmul.bf16.gmra.mxu0 %v5817
        %v7921 = vpop.f32.mrf.mxu0
        %v7922 = vadd.f32 %v6086, %v7921
        %v7923 = vpop.f32.mrf.mxu0
        %v7924 = vadd.f32 %v6086, %v7923
        %7925 = vdwg.mxu0
        %7926 = vmatpush.bf16.msra.mxu0 %v6990
        %7927 = vmatpush.bf16.msra.mxu0 %v6982
        %7928 = vmatpush.bf16.msra.mxu0 %v6974
        %7929 = vmatpush.bf16.msra.mxu0 %v6966
        %7930 = vmatpush.bf16.msra.mxu0 %v6958
        %7931 = vmatpush.bf16.msra.mxu0 %v6950
        %7932 = vmatpush.bf16.msra.mxu0 %v6942
        %7933 = vmatpush.bf16.msra.mxu0 %v6934
        %7934 = vmatmul.bf16.gmra.mxu0 %v5814
        %v7935 = vpop.f32.mrf.mxu0
        %v7936 = vadd.f32 %v7917, %v7935
        %v7937 = vpop.f32.mrf.mxu0
        %v7938 = vadd.f32 %v7919, %v7937
        %7939 = vmatmul.bf16.gmra.mxu0 %v5818
        %v7940 = vpop.f32.mrf.mxu0
        %v7941 = vadd.f32 %v7922, %v7940
        %v7942 = vpop.f32.mrf.mxu0
        %v7943 = vadd.f32 %v7924, %v7942
        %7944 = vdwg.mxu0
        %7945 = vmatpush.bf16.msra.mxu0 %v7054
        %7946 = vmatpush.bf16.msra.mxu0 %v7046
        %7947 = vmatpush.bf16.msra.mxu0 %v7038
        %7948 = vmatpush.bf16.msra.mxu0 %v7030
        %7949 = vmatpush.bf16.msra.mxu0 %v7022
        %7950 = vmatpush.bf16.msra.mxu0 %v7014
        %7951 = vmatpush.bf16.msra.mxu0 %v7006
        %7952 = vmatpush.bf16.msra.mxu0 %v6998
        %7953 = vmatmul.bf16.gmra.mxu0 %v5815
        %v7954 = vpop.f32.mrf.mxu0
        %v7955 = vadd.f32 %v7936, %v7954
        %v7956 = vpop.f32.mrf.mxu0
        %v7957 = vadd.f32 %v7938, %v7956
        %7958 = vmatmul.bf16.gmra.mxu0 %v5819
        %v7959 = vpop.f32.mrf.mxu0
        %v7960 = vadd.f32 %v7941, %v7959
        %v7961 = vpop.f32.mrf.mxu0
        %v7962 = vadd.f32 %v7943, %v7961
        %7963 = vdwg.mxu0
        %7964 = vmatpush.bf16.msra.mxu0 %v7118
        %7965 = vmatpush.bf16.msra.mxu0 %v7110
        %7966 = vmatpush.bf16.msra.mxu0 %v7102
        %7967 = vmatpush.bf16.msra.mxu0 %v7094
        %7968 = vmatpush.bf16.msra.mxu0 %v7086
        %7969 = vmatpush.bf16.msra.mxu0 %v7078
        %7970 = vmatpush.bf16.msra.mxu0 %v7070
        %7971 = vmatpush.bf16.msra.mxu0 %v7062
        %7972 = vmatmul.bf16.gmra.mxu0 %v5816
        %v7973 = vpop.f32.mrf.mxu0
        %v7974 = vadd.f32 %v7955, %v7973
        %v7975 = vpop.f32.mrf.mxu0
        %v7976 = vadd.f32 %v7957, %v7975
        %7977 = vmatmul.bf16.gmra.mxu0 %v5820
        %v7978 = vpop.f32.mrf.mxu0
        %v7979 = vadd.f32 %v7960, %v7978
        %v7980 = vpop.f32.mrf.mxu0
        %v7981 = vadd.f32 %v7962, %v7980
        %7982 = vdwg.mxu0
        %v7983 = vxor.u32 %v7746, 2147483648
        %v7984 = vxor.u32 %v7822, 2147483648
        %v7985 = vxor.u32 %v7898, 2147483648
        %v7986 = vxor.u32 %v7974, 2147483648
        %v7987 = vxor.u32 %v7748, 2147483648
        %v7988 = vxor.u32 %v7824, 2147483648
        %v7989 = vxor.u32 %v7900, 2147483648
        %v7990 = vxor.u32 %v7976, 2147483648
        %v7991 = vxor.u32 %v7751, 2147483648
        %v7992 = vxor.u32 %v7827, 2147483648
        %v7993 = vxor.u32 %v7903, 2147483648
        %v7994 = vxor.u32 %v7979, 2147483648
        %v7995 = vxor.u32 %v7753, 2147483648
        %v7996 = vxor.u32 %v7829, 2147483648
        %v7997 = vxor.u32 %v7905, 2147483648
        %v7998 = vxor.u32 %v7981, 2147483648
        %v7999 = vmul.f32 %v7983, 1.442695
        %v8000 = vpow.pop %v7999
        %v8001 = vmul.f32 %v7984, 1.442695
        %v8002 = vpow.pop %v8001
        %v8003 = vmul.f32 %v7985, 1.442695
        %v8004 = vpow.pop %v8003
        %v8005 = vmul.f32 %v7986, 1.442695
        %v8006 = vpow.pop %v8005
        %v8007 = vmul.f32 %v7987, 1.442695
        %v8008 = vpow.pop %v8007
        %v8009 = vmul.f32 %v7988, 1.442695
        %v8010 = vpow.pop %v8009
        %v8011 = vmul.f32 %v7989, 1.442695
        %v8012 = vpow.pop %v8011
        %v8013 = vmul.f32 %v7990, 1.442695
        %v8014 = vpow.pop %v8013
        %v8015 = vmul.f32 %v7991, 1.442695
        %v8016 = vpow.pop %v8015
        %v8017 = vmul.f32 %v7992, 1.442695
        %v8018 = vpow.pop %v8017
        %v8019 = vmul.f32 %v7993, 1.442695
        %v8020 = vpow.pop %v8019
        %v8021 = vmul.f32 %v7994, 1.442695
        %v8022 = vpow.pop %v8021
        %v8023 = vmul.f32 %v7995, 1.442695
        %v8024 = vpow.pop %v8023
        %v8025 = vmul.f32 %v7996, 1.442695
        %v8026 = vpow.pop %v8025
        %v8027 = vmul.f32 %v7997, 1.442695
        %v8028 = vpow.pop %v8027
        %v8029 = vmul.f32 %v7998, 1.442695
        %v8030 = vpow.pop %v8029
        %v8031 = vadd.f32 %v8000, 1.0
        %v8032 = vadd.f32 %v8002, 1.0
        %v8033 = vadd.f32 %v8004, 1.0
        %v8034 = vadd.f32 %v8006, 1.0
        %v8035 = vadd.f32 %v8008, 1.0
        %v8036 = vadd.f32 %v8010, 1.0
        %v8037 = vadd.f32 %v8012, 1.0
        %v8038 = vadd.f32 %v8014, 1.0
        %v8039 = vadd.f32 %v8016, 1.0
        %v8040 = vadd.f32 %v8018, 1.0
        %v8041 = vadd.f32 %v8020, 1.0
        %v8042 = vadd.f32 %v8022, 1.0
        %v8043 = vadd.f32 %v8024, 1.0
        %v8044 = vadd.f32 %v8026, 1.0
        %v8045 = vadd.f32 %v8028, 1.0
        %v8046 = vadd.f32 %v8030, 1.0
        %v8047 = vrcp.pop %v8031
        %v8048 = vmul.f32 %v8031, %v8047
        %v8049 = vsub.f32 1.0, %v8048
        %v8050 = vmul.f32 %v8047, %v8049
        %v8051 = vadd.f32 %v8047, %v8050
        %vm8052 = vweird.f32 %v8031
        %vm8053 = vweird.f32 %v8047
        %vm8054 = vmor %vm8052, %vm8053
        %v8055 = vsel %vm8054, %v8047, %v8051
        %v8056 = vand.u32 2147483647, %v8031
        %vm8057 = vcmp.eq.f32.partialorder %v8056, 8.507059e+37
        %v8058 = vand.u32 %v8031, 2147483648
        %v8059 = vor.u32 1.1754944e-38, %v8058
        %v8060 = vsel %vm8057, %v8059, %v8055
        %v8061 = vmul.f32 1.0, %v8060
        %v8062 = vrcp.pop %v8032
        %v8063 = vmul.f32 %v8032, %v8062
        %v8064 = vsub.f32 1.0, %v8063
        %v8065 = vmul.f32 %v8062, %v8064
        %v8066 = vadd.f32 %v8062, %v8065
        %vm8067 = vweird.f32 %v8032
        %vm8068 = vweird.f32 %v8062
        %vm8069 = vmor %vm8067, %vm8068
        %v8070 = vsel %vm8069, %v8062, %v8066
        %v8071 = vand.u32 2147483647, %v8032
        %vm8072 = vcmp.eq.f32.partialorder %v8071, 8.507059e+37
        %v8073 = vand.u32 %v8032, 2147483648
        %v8074 = vor.u32 1.1754944e-38, %v8073
        %v8075 = vsel %vm8072, %v8074, %v8070
        %v8076 = vmul.f32 1.0, %v8075
        %v8077 = vrcp.pop %v8033
        %v8078 = vmul.f32 %v8033, %v8077
        %v8079 = vsub.f32 1.0, %v8078
        %v8080 = vmul.f32 %v8077, %v8079
        %v8081 = vadd.f32 %v8077, %v8080
        %vm8082 = vweird.f32 %v8033
        %vm8083 = vweird.f32 %v8077
        %vm8084 = vmor %vm8082, %vm8083
        %v8085 = vsel %vm8084, %v8077, %v8081
        %v8086 = vand.u32 2147483647, %v8033
        %vm8087 = vcmp.eq.f32.partialorder %v8086, 8.507059e+37
        %v8088 = vand.u32 %v8033, 2147483648
        %v8089 = vor.u32 1.1754944e-38, %v8088
        %v8090 = vsel %vm8087, %v8089, %v8085
        %v8091 = vmul.f32 1.0, %v8090
        %v8092 = vrcp.pop %v8034
        %v8093 = vmul.f32 %v8034, %v8092
        %v8094 = vsub.f32 1.0, %v8093
        %v8095 = vmul.f32 %v8092, %v8094
        %v8096 = vadd.f32 %v8092, %v8095
        %vm8097 = vweird.f32 %v8034
        %vm8098 = vweird.f32 %v8092
        %vm8099 = vmor %vm8097, %vm8098
        %v8100 = vsel %vm8099, %v8092, %v8096
        %v8101 = vand.u32 2147483647, %v8034
        %vm8102 = vcmp.eq.f32.partialorder %v8101, 8.507059e+37
        %v8103 = vand.u32 %v8034, 2147483648
        %v8104 = vor.u32 1.1754944e-38, %v8103
        %v8105 = vsel %vm8102, %v8104, %v8100
        %v8106 = vmul.f32 1.0, %v8105
        %v8107 = vrcp.pop %v8035
        %v8108 = vmul.f32 %v8035, %v8107
        %v8109 = vsub.f32 1.0, %v8108
        %v8110 = vmul.f32 %v8107, %v8109
        %v8111 = vadd.f32 %v8107, %v8110
        %vm8112 = vweird.f32 %v8035
        %vm8113 = vweird.f32 %v8107
        %vm8114 = vmor %vm8112, %vm8113
        %v8115 = vsel %vm8114, %v8107, %v8111
        %v8116 = vand.u32 2147483647, %v8035
        %vm8117 = vcmp.eq.f32.partialorder %v8116, 8.507059e+37
        %v8118 = vand.u32 %v8035, 2147483648
        %v8119 = vor.u32 1.1754944e-38, %v8118
        %v8120 = vsel %vm8117, %v8119, %v8115
        %v8121 = vmul.f32 1.0, %v8120
        %v8122 = vrcp.pop %v8036
        %v8123 = vmul.f32 %v8036, %v8122
        %v8124 = vsub.f32 1.0, %v8123
        %v8125 = vmul.f32 %v8122, %v8124
        %v8126 = vadd.f32 %v8122, %v8125
        %vm8127 = vweird.f32 %v8036
        %vm8128 = vweird.f32 %v8122
        %vm8129 = vmor %vm8127, %vm8128
        %v8130 = vsel %vm8129, %v8122, %v8126
        %v8131 = vand.u32 2147483647, %v8036
        %vm8132 = vcmp.eq.f32.partialorder %v8131, 8.507059e+37
        %v8133 = vand.u32 %v8036, 2147483648
        %v8134 = vor.u32 1.1754944e-38, %v8133
        %v8135 = vsel %vm8132, %v8134, %v8130
        %v8136 = vmul.f32 1.0, %v8135
        %v8137 = vrcp.pop %v8037
        %v8138 = vmul.f32 %v8037, %v8137
        %v8139 = vsub.f32 1.0, %v8138
        %v8140 = vmul.f32 %v8137, %v8139
        %v8141 = vadd.f32 %v8137, %v8140
        %vm8142 = vweird.f32 %v8037
        %vm8143 = vweird.f32 %v8137
        %vm8144 = vmor %vm8142, %vm8143
        %v8145 = vsel %vm8144, %v8137, %v8141
        %v8146 = vand.u32 2147483647, %v8037
        %vm8147 = vcmp.eq.f32.partialorder %v8146, 8.507059e+37
        %v8148 = vand.u32 %v8037, 2147483648
        %v8149 = vor.u32 1.1754944e-38, %v8148
        %v8150 = vsel %vm8147, %v8149, %v8145
        %v8151 = vmul.f32 1.0, %v8150
        %v8152 = vrcp.pop %v8038
        %v8153 = vmul.f32 %v8038, %v8152
        %v8154 = vsub.f32 1.0, %v8153
        %v8155 = vmul.f32 %v8152, %v8154
        %v8156 = vadd.f32 %v8152, %v8155
        %vm8157 = vweird.f32 %v8038
        %vm8158 = vweird.f32 %v8152
        %vm8159 = vmor %vm8157, %vm8158
        %v8160 = vsel %vm8159, %v8152, %v8156
        %v8161 = vand.u32 2147483647, %v8038
        %vm8162 = vcmp.eq.f32.partialorder %v8161, 8.507059e+37
        %v8163 = vand.u32 %v8038, 2147483648
        %v8164 = vor.u32 1.1754944e-38, %v8163
        %v8165 = vsel %vm8162, %v8164, %v8160
        %v8166 = vmul.f32 1.0, %v8165
        %v8167 = vrcp.pop %v8039
        %v8168 = vmul.f32 %v8039, %v8167
        %v8169 = vsub.f32 1.0, %v8168
        %v8170 = vmul.f32 %v8167, %v8169
        %v8171 = vadd.f32 %v8167, %v8170
        %vm8172 = vweird.f32 %v8039
        %vm8173 = vweird.f32 %v8167
        %vm8174 = vmor %vm8172, %vm8173
        %v8175 = vsel %vm8174, %v8167, %v8171
        %v8176 = vand.u32 2147483647, %v8039
        %vm8177 = vcmp.eq.f32.partialorder %v8176, 8.507059e+37
        %v8178 = vand.u32 %v8039, 2147483648
        %v8179 = vor.u32 1.1754944e-38, %v8178
        %v8180 = vsel %vm8177, %v8179, %v8175
        %v8181 = vmul.f32 1.0, %v8180
        %v8182 = vrcp.pop %v8040
        %v8183 = vmul.f32 %v8040, %v8182
        %v8184 = vsub.f32 1.0, %v8183
        %v8185 = vmul.f32 %v8182, %v8184
        %v8186 = vadd.f32 %v8182, %v8185
        %vm8187 = vweird.f32 %v8040
        %vm8188 = vweird.f32 %v8182
        %vm8189 = vmor %vm8187, %vm8188
        %v8190 = vsel %vm8189, %v8182, %v8186
        %v8191 = vand.u32 2147483647, %v8040
        %vm8192 = vcmp.eq.f32.partialorder %v8191, 8.507059e+37
        %v8193 = vand.u32 %v8040, 2147483648
        %v8194 = vor.u32 1.1754944e-38, %v8193
        %v8195 = vsel %vm8192, %v8194, %v8190
        %v8196 = vmul.f32 1.0, %v8195
        %v8197 = vrcp.pop %v8041
        %v8198 = vmul.f32 %v8041, %v8197
        %v8199 = vsub.f32 1.0, %v8198
        %v8200 = vmul.f32 %v8197, %v8199
        %v8201 = vadd.f32 %v8197, %v8200
        %vm8202 = vweird.f32 %v8041
        %vm8203 = vweird.f32 %v8197
        %vm8204 = vmor %vm8202, %vm8203
        %v8205 = vsel %vm8204, %v8197, %v8201
        %v8206 = vand.u32 2147483647, %v8041
        %vm8207 = vcmp.eq.f32.partialorder %v8206, 8.507059e+37
        %v8208 = vand.u32 %v8041, 2147483648
        %v8209 = vor.u32 1.1754944e-38, %v8208
        %v8210 = vsel %vm8207, %v8209, %v8205
        %v8211 = vmul.f32 1.0, %v8210
        %v8212 = vrcp.pop %v8042
        %v8213 = vmul.f32 %v8042, %v8212
        %v8214 = vsub.f32 1.0, %v8213
        %v8215 = vmul.f32 %v8212, %v8214
        %v8216 = vadd.f32 %v8212, %v8215
        %vm8217 = vweird.f32 %v8042
        %vm8218 = vweird.f32 %v8212
        %vm8219 = vmor %vm8217, %vm8218
        %v8220 = vsel %vm8219, %v8212, %v8216
        %v8221 = vand.u32 2147483647, %v8042
        %vm8222 = vcmp.eq.f32.partialorder %v8221, 8.507059e+37
        %v8223 = vand.u32 %v8042, 2147483648
        %v8224 = vor.u32 1.1754944e-38, %v8223
        %v8225 = vsel %vm8222, %v8224, %v8220
        %v8226 = vmul.f32 1.0, %v8225
        %v8227 = vrcp.pop %v8043
        %v8228 = vmul.f32 %v8043, %v8227
        %v8229 = vsub.f32 1.0, %v8228
        %v8230 = vmul.f32 %v8227, %v8229
        %v8231 = vadd.f32 %v8227, %v8230
        %vm8232 = vweird.f32 %v8043
        %vm8233 = vweird.f32 %v8227
        %vm8234 = vmor %vm8232, %vm8233
        %v8235 = vsel %vm8234, %v8227, %v8231
        %v8236 = vand.u32 2147483647, %v8043
        %vm8237 = vcmp.eq.f32.partialorder %v8236, 8.507059e+37
        %v8238 = vand.u32 %v8043, 2147483648
        %v8239 = vor.u32 1.1754944e-38, %v8238
        %v8240 = vsel %vm8237, %v8239, %v8235
        %v8241 = vmul.f32 1.0, %v8240
        %v8242 = vrcp.pop %v8044
        %v8243 = vmul.f32 %v8044, %v8242
        %v8244 = vsub.f32 1.0, %v8243
        %v8245 = vmul.f32 %v8242, %v8244
        %v8246 = vadd.f32 %v8242, %v8245
        %vm8247 = vweird.f32 %v8044
        %vm8248 = vweird.f32 %v8242
        %vm8249 = vmor %vm8247, %vm8248
        %v8250 = vsel %vm8249, %v8242, %v8246
        %v8251 = vand.u32 2147483647, %v8044
        %vm8252 = vcmp.eq.f32.partialorder %v8251, 8.507059e+37
        %v8253 = vand.u32 %v8044, 2147483648
        %v8254 = vor.u32 1.1754944e-38, %v8253
        %v8255 = vsel %vm8252, %v8254, %v8250
        %v8256 = vmul.f32 1.0, %v8255
        %v8257 = vrcp.pop %v8045
        %v8258 = vmul.f32 %v8045, %v8257
        %v8259 = vsub.f32 1.0, %v8258
        %v8260 = vmul.f32 %v8257, %v8259
        %v8261 = vadd.f32 %v8257, %v8260
        %vm8262 = vweird.f32 %v8045
        %vm8263 = vweird.f32 %v8257
        %vm8264 = vmor %vm8262, %vm8263
        %v8265 = vsel %vm8264, %v8257, %v8261
        %v8266 = vand.u32 2147483647, %v8045
        %vm8267 = vcmp.eq.f32.partialorder %v8266, 8.507059e+37
        %v8268 = vand.u32 %v8045, 2147483648
        %v8269 = vor.u32 1.1754944e-38, %v8268
        %v8270 = vsel %vm8267, %v8269, %v8265
        %v8271 = vmul.f32 1.0, %v8270
        %v8272 = vrcp.pop %v8046
        %v8273 = vmul.f32 %v8046, %v8272
        %v8274 = vsub.f32 1.0, %v8273
        %v8275 = vmul.f32 %v8272, %v8274
        %v8276 = vadd.f32 %v8272, %v8275
        %vm8277 = vweird.f32 %v8046
        %vm8278 = vweird.f32 %v8272
        %vm8279 = vmor %vm8277, %vm8278
        %v8280 = vsel %vm8279, %v8272, %v8276
        %v8281 = vand.u32 2147483647, %v8046
        %vm8282 = vcmp.eq.f32.partialorder %v8281, 8.507059e+37
        %v8283 = vand.u32 %v8046, 2147483648
        %v8284 = vor.u32 1.1754944e-38, %v8283
        %v8285 = vsel %vm8282, %v8284, %v8280
        %v8286 = vmul.f32 1.0, %v8285
        %v8287 = vmul.f32 %v7442, %v8061
        %v8288 = vmul.f32 %v7518, %v8076
        %v8289 = vmul.f32 %v7594, %v8091
        %v8290 = vmul.f32 %v7670, %v8106
        %v8291 = vmul.f32 %v7444, %v8121
        %v8292 = vmul.f32 %v7520, %v8136
        %v8293 = vmul.f32 %v7596, %v8151
        %v8294 = vmul.f32 %v7672, %v8166
        %v8295 = vmul.f32 %v7447, %v8181
        %v8296 = vmul.f32 %v7523, %v8196
        %v8297 = vmul.f32 %v7599, %v8211
        %v8298 = vmul.f32 %v7675, %v8226
        %v8299 = vmul.f32 %v7449, %v8241
        %v8300 = vmul.f32 %v7525, %v8256
        %v8301 = vmul.f32 %v7601, %v8271
        %v8302 = vmul.f32 %v7677, %v8286
        %v8303 = vpack.c.bf16 %v8291, %v8287
        %v8304 = vpack.c.bf16 %v8292, %v8288
        %v8305 = vpack.c.bf16 %v8293, %v8289
        %v8306 = vpack.c.bf16 %v8294, %v8290
        %v8307 = vpack.c.bf16 %v8299, %v8295
        %v8308 = vpack.c.bf16 %v8300, %v8296
        %v8309 = vpack.c.bf16 %v8301, %v8297
        %v8310 = vpack.c.bf16 %v8302, %v8298
        %v8311 = vld [vmem:[%s492] sm:$0xff]
        %v8312 = vld [vmem:[%s492 + $0x8] sm:$0xff]
        %v8313 = vld [vmem:[%s492 + $0x10] sm:$0xff]
        %v8314 = vld [vmem:[%s492 + $0x18] sm:$0xff]
        %v8315 = vld [vmem:[%s492 + $0x20] sm:$0xff]
        %v8316 = vld [vmem:[%s492 + $0x28] sm:$0xff]
        %v8317 = vld [vmem:[%s492 + $0x30] sm:$0xff]
        %v8318 = vld [vmem:[%s492 + $0x38] sm:$0xff]
        %v8319 = vld [vmem:[%s492 + $0x40] sm:$0xff]
        %v8320 = vld [vmem:[%s492 + $0x48] sm:$0xff]
        %v8321 = vld [vmem:[%s492 + $0x50] sm:$0xff]
        %v8322 = vld [vmem:[%s492 + $0x58] sm:$0xff]
        %v8323 = vld [vmem:[%s492 + $0x60] sm:$0xff]
        %v8324 = vld [vmem:[%s492 + $0x68] sm:$0xff]
        %v8325 = vld [vmem:[%s492 + $0x70] sm:$0xff]
        %v8326 = vld [vmem:[%s492 + $0x78] sm:$0xff]
        %v8327 = vld [vmem:[%s492 + $0x80] sm:$0xff]
        %v8328 = vld [vmem:[%s492 + $0x88] sm:$0xff]
        %v8329 = vld [vmem:[%s492 + $0x90] sm:$0xff]
        %v8330 = vld [vmem:[%s492 + $0x98] sm:$0xff]
        %v8331 = vld [vmem:[%s492 + $0xa0] sm:$0xff]
        %v8332 = vld [vmem:[%s492 + $0xa8] sm:$0xff]
        %v8333 = vld [vmem:[%s492 + $0xb0] sm:$0xff]
        %v8334 = vld [vmem:[%s492 + $0xb8] sm:$0xff]
        %v8335 = vld [vmem:[%s492 + $0xc0] sm:$0xff]
        %v8336 = vld [vmem:[%s492 + $0xc8] sm:$0xff]
        %v8337 = vld [vmem:[%s492 + $0xd0] sm:$0xff]
        %v8338 = vld [vmem:[%s492 + $0xd8] sm:$0xff]
        %v8339 = vld [vmem:[%s492 + $0xe0] sm:$0xff]
        %v8340 = vld [vmem:[%s492 + $0xe8] sm:$0xff]
        %v8341 = vld [vmem:[%s492 + $0xf0] sm:$0xff]
        %v8342 = vld [vmem:[%s492 + $0xf8] sm:$0xff]
        %v8343 = vld [vmem:[%s492 + $0x100] sm:$0xff]
        %v8344 = vld [vmem:[%s492 + $0x108] sm:$0xff]
        %v8345 = vld [vmem:[%s492 + $0x110] sm:$0xff]
        %v8346 = vld [vmem:[%s492 + $0x118] sm:$0xff]
        %v8347 = vld [vmem:[%s492 + $0x120] sm:$0xff]
        %v8348 = vld [vmem:[%s492 + $0x128] sm:$0xff]
        %v8349 = vld [vmem:[%s492 + $0x130] sm:$0xff]
        %v8350 = vld [vmem:[%s492 + $0x138] sm:$0xff]
        %v8351 = vld [vmem:[%s492 + $0x140] sm:$0xff]
        %v8352 = vld [vmem:[%s492 + $0x148] sm:$0xff]
        %v8353 = vld [vmem:[%s492 + $0x150] sm:$0xff]
        %v8354 = vld [vmem:[%s492 + $0x158] sm:$0xff]
        %v8355 = vld [vmem:[%s492 + $0x160] sm:$0xff]
        %v8356 = vld [vmem:[%s492 + $0x168] sm:$0xff]
        %v8357 = vld [vmem:[%s492 + $0x170] sm:$0xff]
        %v8358 = vld [vmem:[%s492 + $0x178] sm:$0xff]
        %v8359 = vld [vmem:[%s492 + $0x180] sm:$0xff]
        %v8360 = vld [vmem:[%s492 + $0x188] sm:$0xff]
        %v8361 = vld [vmem:[%s492 + $0x190] sm:$0xff]
        %v8362 = vld [vmem:[%s492 + $0x198] sm:$0xff]
        %v8363 = vld [vmem:[%s492 + $0x1a0] sm:$0xff]
        %v8364 = vld [vmem:[%s492 + $0x1a8] sm:$0xff]
        %v8365 = vld [vmem:[%s492 + $0x1b0] sm:$0xff]
        %v8366 = vld [vmem:[%s492 + $0x1b8] sm:$0xff]
        %v8367 = vld [vmem:[%s492 + $0x1c0] sm:$0xff]
        %v8368 = vld [vmem:[%s492 + $0x1c8] sm:$0xff]
        %v8369 = vld [vmem:[%s492 + $0x1d0] sm:$0xff]
        %v8370 = vld [vmem:[%s492 + $0x1d8] sm:$0xff]
        %v8371 = vld [vmem:[%s492 + $0x1e0] sm:$0xff]
        %v8372 = vld [vmem:[%s492 + $0x1e8] sm:$0xff]
        %v8373 = vld [vmem:[%s492 + $0x1f0] sm:$0xff]
        %v8374 = vld [vmem:[%s492 + $0x1f8] sm:$0xff]
        %v8375 = vld [vmem:[%s492 + $0x200] sm:$0xff]
        %v8376 = vld [vmem:[%s492 + $0x208] sm:$0xff]
        %v8377 = vld [vmem:[%s492 + $0x210] sm:$0xff]
        %v8378 = vld [vmem:[%s492 + $0x218] sm:$0xff]
        %v8379 = vld [vmem:[%s492 + $0x220] sm:$0xff]
        %v8380 = vld [vmem:[%s492 + $0x228] sm:$0xff]
        %v8381 = vld [vmem:[%s492 + $0x230] sm:$0xff]
        %v8382 = vld [vmem:[%s492 + $0x238] sm:$0xff]
        %v8383 = vld [vmem:[%s492 + $0x240] sm:$0xff]
        %v8384 = vld [vmem:[%s492 + $0x248] sm:$0xff]
        %v8385 = vld [vmem:[%s492 + $0x250] sm:$0xff]
        %v8386 = vld [vmem:[%s492 + $0x258] sm:$0xff]
        %v8387 = vld [vmem:[%s492 + $0x260] sm:$0xff]
        %v8388 = vld [vmem:[%s492 + $0x268] sm:$0xff]
        %v8389 = vld [vmem:[%s492 + $0x270] sm:$0xff]
        %v8390 = vld [vmem:[%s492 + $0x278] sm:$0xff]
        %v8391 = vld [vmem:[%s492 + $0x280] sm:$0xff]
        %v8392 = vld [vmem:[%s492 + $0x288] sm:$0xff]
        %v8393 = vld [vmem:[%s492 + $0x290] sm:$0xff]
        %v8394 = vld [vmem:[%s492 + $0x298] sm:$0xff]
        %v8395 = vld [vmem:[%s492 + $0x2a0] sm:$0xff]
        %v8396 = vld [vmem:[%s492 + $0x2a8] sm:$0xff]
        %v8397 = vld [vmem:[%s492 + $0x2b0] sm:$0xff]
        %v8398 = vld [vmem:[%s492 + $0x2b8] sm:$0xff]
        %v8399 = vld [vmem:[%s492 + $0x2c0] sm:$0xff]
        %v8400 = vld [vmem:[%s492 + $0x2c8] sm:$0xff]
        %v8401 = vld [vmem:[%s492 + $0x2d0] sm:$0xff]
        %v8402 = vld [vmem:[%s492 + $0x2d8] sm:$0xff]
        %v8403 = vld [vmem:[%s492 + $0x2e0] sm:$0xff]
        %v8404 = vld [vmem:[%s492 + $0x2e8] sm:$0xff]
        %v8405 = vld [vmem:[%s492 + $0x2f0] sm:$0xff]
        %v8406 = vld [vmem:[%s492 + $0x2f8] sm:$0xff]
        %v8407 = vld [vmem:[%s492 + $0x300] sm:$0xff]
        %v8408 = vld [vmem:[%s492 + $0x308] sm:$0xff]
        %v8409 = vld [vmem:[%s492 + $0x310] sm:$0xff]
        %v8410 = vld [vmem:[%s492 + $0x318] sm:$0xff]
        %v8411 = vld [vmem:[%s492 + $0x320] sm:$0xff]
        %v8412 = vld [vmem:[%s492 + $0x328] sm:$0xff]
        %v8413 = vld [vmem:[%s492 + $0x330] sm:$0xff]
        %v8414 = vld [vmem:[%s492 + $0x338] sm:$0xff]
        %v8415 = vld [vmem:[%s492 + $0x340] sm:$0xff]
        %v8416 = vld [vmem:[%s492 + $0x348] sm:$0xff]
        %v8417 = vld [vmem:[%s492 + $0x350] sm:$0xff]
        %v8418 = vld [vmem:[%s492 + $0x358] sm:$0xff]
        %v8419 = vld [vmem:[%s492 + $0x360] sm:$0xff]
        %v8420 = vld [vmem:[%s492 + $0x368] sm:$0xff]
        %v8421 = vld [vmem:[%s492 + $0x370] sm:$0xff]
        %v8422 = vld [vmem:[%s492 + $0x378] sm:$0xff]
        %v8423 = vld [vmem:[%s492 + $0x380] sm:$0xff]
        %v8424 = vld [vmem:[%s492 + $0x388] sm:$0xff]
        %v8425 = vld [vmem:[%s492 + $0x390] sm:$0xff]
        %v8426 = vld [vmem:[%s492 + $0x398] sm:$0xff]
        %v8427 = vld [vmem:[%s492 + $0x3a0] sm:$0xff]
        %v8428 = vld [vmem:[%s492 + $0x3a8] sm:$0xff]
        %v8429 = vld [vmem:[%s492 + $0x3b0] sm:$0xff]
        %v8430 = vld [vmem:[%s492 + $0x3b8] sm:$0xff]
        %v8431 = vld [vmem:[%s492 + $0x3c0] sm:$0xff]
        %v8432 = vld [vmem:[%s492 + $0x3c8] sm:$0xff]
        %v8433 = vld [vmem:[%s492 + $0x3d0] sm:$0xff]
        %v8434 = vld [vmem:[%s492 + $0x3d8] sm:$0xff]
        %v8435 = vld [vmem:[%s492 + $0x3e0] sm:$0xff]
        %v8436 = vld [vmem:[%s492 + $0x3e8] sm:$0xff]
        %v8437 = vld [vmem:[%s492 + $0x3f0] sm:$0xff]
        %v8438 = vld [vmem:[%s492 + $0x3f8] sm:$0xff]
        %v8439 = vperm.slane %v4522, 3
        %v8440 = vperm.slane %v4523, 3
        %v8441 = vperm.slane %v4524, 3
        %v8442 = vperm.slane %v4525, 3
        %v8571 = vunpack.c.l.b16 %v8311
        %v8572 = vunpack.c.h.b16 %v8311
        %v8573 = vunpack.c.l.b16 %v8312
        %v8574 = vunpack.c.h.b16 %v8312
        %v8575 = vunpack.c.l.b16 %v8313
        %v8576 = vunpack.c.h.b16 %v8313
        %v8577 = vunpack.c.l.b16 %v8314
        %v8578 = vunpack.c.h.b16 %v8314
        %v8579 = vunpack.c.l.b16 %v8315
        %v8580 = vunpack.c.h.b16 %v8315
        %v8581 = vunpack.c.l.b16 %v8316
        %v8582 = vunpack.c.h.b16 %v8316
        %v8583 = vunpack.c.l.b16 %v8317
        %v8584 = vunpack.c.h.b16 %v8317
        %v8585 = vunpack.c.l.b16 %v8318
        %v8586 = vunpack.c.h.b16 %v8318
        %v8587 = vunpack.c.l.b16 %v8319
        %v8588 = vunpack.c.h.b16 %v8319
        %v8589 = vunpack.c.l.b16 %v8320
        %v8590 = vunpack.c.h.b16 %v8320
        %v8591 = vunpack.c.l.b16 %v8321
        %v8592 = vunpack.c.h.b16 %v8321
        %v8593 = vunpack.c.l.b16 %v8322
        %v8594 = vunpack.c.h.b16 %v8322
        %v8595 = vunpack.c.l.b16 %v8323
        %v8596 = vunpack.c.h.b16 %v8323
        %v8597 = vunpack.c.l.b16 %v8324
        %v8598 = vunpack.c.h.b16 %v8324
        %v8599 = vunpack.c.l.b16 %v8325
        %v8600 = vunpack.c.h.b16 %v8325
        %v8601 = vunpack.c.l.b16 %v8326
        %v8602 = vunpack.c.h.b16 %v8326
        %v8603 = vunpack.c.l.b16 %v8327
        %v8604 = vunpack.c.h.b16 %v8327
        %v8605 = vunpack.c.l.b16 %v8328
        %v8606 = vunpack.c.h.b16 %v8328
        %v8607 = vunpack.c.l.b16 %v8329
        %v8608 = vunpack.c.h.b16 %v8329
        %v8609 = vunpack.c.l.b16 %v8330
        %v8610 = vunpack.c.h.b16 %v8330
        %v8611 = vunpack.c.l.b16 %v8331
        %v8612 = vunpack.c.h.b16 %v8331
        %v8613 = vunpack.c.l.b16 %v8332
        %v8614 = vunpack.c.h.b16 %v8332
        %v8615 = vunpack.c.l.b16 %v8333
        %v8616 = vunpack.c.h.b16 %v8333
        %v8617 = vunpack.c.l.b16 %v8334
        %v8618 = vunpack.c.h.b16 %v8334
        %v8619 = vunpack.c.l.b16 %v8335
        %v8620 = vunpack.c.h.b16 %v8335
        %v8621 = vunpack.c.l.b16 %v8336
        %v8622 = vunpack.c.h.b16 %v8336
        %v8623 = vunpack.c.l.b16 %v8337
        %v8624 = vunpack.c.h.b16 %v8337
        %v8625 = vunpack.c.l.b16 %v8338
        %v8626 = vunpack.c.h.b16 %v8338
        %v8627 = vunpack.c.l.b16 %v8339
        %v8628 = vunpack.c.h.b16 %v8339
        %v8629 = vunpack.c.l.b16 %v8340
        %v8630 = vunpack.c.h.b16 %v8340
        %v8631 = vunpack.c.l.b16 %v8341
        %v8632 = vunpack.c.h.b16 %v8341
        %v8633 = vunpack.c.l.b16 %v8342
        %v8634 = vunpack.c.h.b16 %v8342
        %v8635 = vunpack.c.l.b16 %v8343
        %v8636 = vunpack.c.h.b16 %v8343
        %v8637 = vunpack.c.l.b16 %v8344
        %v8638 = vunpack.c.h.b16 %v8344
        %v8639 = vunpack.c.l.b16 %v8345
        %v8640 = vunpack.c.h.b16 %v8345
        %v8641 = vunpack.c.l.b16 %v8346
        %v8642 = vunpack.c.h.b16 %v8346
        %v8643 = vunpack.c.l.b16 %v8347
        %v8644 = vunpack.c.h.b16 %v8347
        %v8645 = vunpack.c.l.b16 %v8348
        %v8646 = vunpack.c.h.b16 %v8348
        %v8647 = vunpack.c.l.b16 %v8349
        %v8648 = vunpack.c.h.b16 %v8349
        %v8649 = vunpack.c.l.b16 %v8350
        %v8650 = vunpack.c.h.b16 %v8350
        %v8651 = vunpack.c.l.b16 %v8351
        %v8652 = vunpack.c.h.b16 %v8351
        %v8653 = vunpack.c.l.b16 %v8352
        %v8654 = vunpack.c.h.b16 %v8352
        %v8655 = vunpack.c.l.b16 %v8353
        %v8656 = vunpack.c.h.b16 %v8353
        %v8657 = vunpack.c.l.b16 %v8354
        %v8658 = vunpack.c.h.b16 %v8354
        %v8659 = vunpack.c.l.b16 %v8355
        %v8660 = vunpack.c.h.b16 %v8355
        %v8661 = vunpack.c.l.b16 %v8356
        %v8662 = vunpack.c.h.b16 %v8356
        %v8663 = vunpack.c.l.b16 %v8357
        %v8664 = vunpack.c.h.b16 %v8357
        %v8665 = vunpack.c.l.b16 %v8358
        %v8666 = vunpack.c.h.b16 %v8358
        %v8667 = vunpack.c.l.b16 %v8359
        %v8668 = vunpack.c.h.b16 %v8359
        %v8669 = vunpack.c.l.b16 %v8360
        %v8670 = vunpack.c.h.b16 %v8360
        %v8671 = vunpack.c.l.b16 %v8361
        %v8672 = vunpack.c.h.b16 %v8361
        %v8673 = vunpack.c.l.b16 %v8362
        %v8674 = vunpack.c.h.b16 %v8362
        %v8675 = vunpack.c.l.b16 %v8363
        %v8676 = vunpack.c.h.b16 %v8363
        %v8677 = vunpack.c.l.b16 %v8364
        %v8678 = vunpack.c.h.b16 %v8364
        %v8679 = vunpack.c.l.b16 %v8365
        %v8680 = vunpack.c.h.b16 %v8365
        %v8681 = vunpack.c.l.b16 %v8366
        %v8682 = vunpack.c.h.b16 %v8366
        %v8683 = vunpack.c.l.b16 %v8367
        %v8684 = vunpack.c.h.b16 %v8367
        %v8685 = vunpack.c.l.b16 %v8368
        %v8686 = vunpack.c.h.b16 %v8368
        %v8687 = vunpack.c.l.b16 %v8369
        %v8688 = vunpack.c.h.b16 %v8369
        %v8689 = vunpack.c.l.b16 %v8370
        %v8690 = vunpack.c.h.b16 %v8370
        %v8691 = vunpack.c.l.b16 %v8371
        %v8692 = vunpack.c.h.b16 %v8371
        %v8693 = vunpack.c.l.b16 %v8372
        %v8694 = vunpack.c.h.b16 %v8372
        %v8695 = vunpack.c.l.b16 %v8373
        %v8696 = vunpack.c.h.b16 %v8373
        %v8697 = vunpack.c.l.b16 %v8374
        %v8698 = vunpack.c.h.b16 %v8374
        %v8699 = vunpack.c.l.b16 %v8375
        %v8700 = vunpack.c.h.b16 %v8375
        %v8701 = vunpack.c.l.b16 %v8376
        %v8702 = vunpack.c.h.b16 %v8376
        %v8703 = vunpack.c.l.b16 %v8377
        %v8704 = vunpack.c.h.b16 %v8377
        %v8705 = vunpack.c.l.b16 %v8378
        %v8706 = vunpack.c.h.b16 %v8378
        %v8707 = vunpack.c.l.b16 %v8379
        %v8708 = vunpack.c.h.b16 %v8379
        %v8709 = vunpack.c.l.b16 %v8380
        %v8710 = vunpack.c.h.b16 %v8380
        %v8711 = vunpack.c.l.b16 %v8381
        %v8712 = vunpack.c.h.b16 %v8381
        %v8713 = vunpack.c.l.b16 %v8382
        %v8714 = vunpack.c.h.b16 %v8382
        %v8715 = vunpack.c.l.b16 %v8383
        %v8716 = vunpack.c.h.b16 %v8383
        %v8717 = vunpack.c.l.b16 %v8384
        %v8718 = vunpack.c.h.b16 %v8384
        %v8719 = vunpack.c.l.b16 %v8385
        %v8720 = vunpack.c.h.b16 %v8385
        %v8721 = vunpack.c.l.b16 %v8386
        %v8722 = vunpack.c.h.b16 %v8386
        %v8723 = vunpack.c.l.b16 %v8387
        %v8724 = vunpack.c.h.b16 %v8387
        %v8725 = vunpack.c.l.b16 %v8388
        %v8726 = vunpack.c.h.b16 %v8388
        %v8727 = vunpack.c.l.b16 %v8389
        %v8728 = vunpack.c.h.b16 %v8389
        %v8729 = vunpack.c.l.b16 %v8390
        %v8730 = vunpack.c.h.b16 %v8390
        %v8731 = vunpack.c.l.b16 %v8391
        %v8732 = vunpack.c.h.b16 %v8391
        %v8733 = vunpack.c.l.b16 %v8392
        %v8734 = vunpack.c.h.b16 %v8392
        %v8735 = vunpack.c.l.b16 %v8393
        %v8736 = vunpack.c.h.b16 %v8393
        %v8737 = vunpack.c.l.b16 %v8394
        %v8738 = vunpack.c.h.b16 %v8394
        %v8739 = vunpack.c.l.b16 %v8395
        %v8740 = vunpack.c.h.b16 %v8395
        %v8741 = vunpack.c.l.b16 %v8396
        %v8742 = vunpack.c.h.b16 %v8396
        %v8743 = vunpack.c.l.b16 %v8397
        %v8744 = vunpack.c.h.b16 %v8397
        %v8745 = vunpack.c.l.b16 %v8398
        %v8746 = vunpack.c.h.b16 %v8398
        %v8747 = vunpack.c.l.b16 %v8399
        %v8748 = vunpack.c.h.b16 %v8399
        %v8749 = vunpack.c.l.b16 %v8400
        %v8750 = vunpack.c.h.b16 %v8400
        %v8751 = vunpack.c.l.b16 %v8401
        %v8752 = vunpack.c.h.b16 %v8401
        %v8753 = vunpack.c.l.b16 %v8402
        %v8754 = vunpack.c.h.b16 %v8402
        %v8755 = vunpack.c.l.b16 %v8403
        %v8756 = vunpack.c.h.b16 %v8403
        %v8757 = vunpack.c.l.b16 %v8404
        %v8758 = vunpack.c.h.b16 %v8404
        %v8759 = vunpack.c.l.b16 %v8405
        %v8760 = vunpack.c.h.b16 %v8405
        %v8761 = vunpack.c.l.b16 %v8406
        %v8762 = vunpack.c.h.b16 %v8406
        %v8763 = vunpack.c.l.b16 %v8407
        %v8764 = vunpack.c.h.b16 %v8407
        %v8765 = vunpack.c.l.b16 %v8408
        %v8766 = vunpack.c.h.b16 %v8408
        %v8767 = vunpack.c.l.b16 %v8409
        %v8768 = vunpack.c.h.b16 %v8409
        %v8769 = vunpack.c.l.b16 %v8410
        %v8770 = vunpack.c.h.b16 %v8410
        %v8771 = vunpack.c.l.b16 %v8411
        %v8772 = vunpack.c.h.b16 %v8411
        %v8773 = vunpack.c.l.b16 %v8412
        %v8774 = vunpack.c.h.b16 %v8412
        %v8775 = vunpack.c.l.b16 %v8413
        %v8776 = vunpack.c.h.b16 %v8413
        %v8777 = vunpack.c.l.b16 %v8414
        %v8778 = vunpack.c.h.b16 %v8414
        %v8779 = vunpack.c.l.b16 %v8415
        %v8780 = vunpack.c.h.b16 %v8415
        %v8781 = vunpack.c.l.b16 %v8416
        %v8782 = vunpack.c.h.b16 %v8416
        %v8783 = vunpack.c.l.b16 %v8417
        %v8784 = vunpack.c.h.b16 %v8417
        %v8785 = vunpack.c.l.b16 %v8418
        %v8786 = vunpack.c.h.b16 %v8418
        %v8787 = vunpack.c.l.b16 %v8419
        %v8788 = vunpack.c.h.b16 %v8419
        %v8789 = vunpack.c.l.b16 %v8420
        %v8790 = vunpack.c.h.b16 %v8420
        %v8791 = vunpack.c.l.b16 %v8421
        %v8792 = vunpack.c.h.b16 %v8421
        %v8793 = vunpack.c.l.b16 %v8422
        %v8794 = vunpack.c.h.b16 %v8422
        %v8795 = vunpack.c.l.b16 %v8423
        %v8796 = vunpack.c.h.b16 %v8423
        %v8797 = vunpack.c.l.b16 %v8424
        %v8798 = vunpack.c.h.b16 %v8424
        %v8799 = vunpack.c.l.b16 %v8425
        %v8800 = vunpack.c.h.b16 %v8425
        %v8801 = vunpack.c.l.b16 %v8426
        %v8802 = vunpack.c.h.b16 %v8426
        %v8803 = vunpack.c.l.b16 %v8427
        %v8804 = vunpack.c.h.b16 %v8427
        %v8805 = vunpack.c.l.b16 %v8428
        %v8806 = vunpack.c.h.b16 %v8428
        %v8807 = vunpack.c.l.b16 %v8429
        %v8808 = vunpack.c.h.b16 %v8429
        %v8809 = vunpack.c.l.b16 %v8430
        %v8810 = vunpack.c.h.b16 %v8430
        %v8811 = vunpack.c.l.b16 %v8431
        %v8812 = vunpack.c.h.b16 %v8431
        %v8813 = vunpack.c.l.b16 %v8432
        %v8814 = vunpack.c.h.b16 %v8432
        %v8815 = vunpack.c.l.b16 %v8433
        %v8816 = vunpack.c.h.b16 %v8433
        %v8817 = vunpack.c.l.b16 %v8434
        %v8818 = vunpack.c.h.b16 %v8434
        %v8819 = vunpack.c.l.b16 %v8435
        %v8820 = vunpack.c.h.b16 %v8435
        %v8821 = vunpack.c.l.b16 %v8436
        %v8822 = vunpack.c.h.b16 %v8436
        %v8823 = vunpack.c.l.b16 %v8437
        %v8824 = vunpack.c.h.b16 %v8437
        %v8825 = vunpack.c.l.b16 %v8438
        %v8826 = vunpack.c.h.b16 %v8438
        %v8827 = vpack.c.b16 %v8575, %v8571
        %v8828 = vpack.c.b16 %v8576, %v8572
        %v8829 = vpack.c.b16 %v8577, %v8573
        %v8830 = vpack.c.b16 %v8578, %v8574
        %v8831 = vpack.c.b16 %v8583, %v8579
        %v8832 = vpack.c.b16 %v8584, %v8580
        %v8833 = vpack.c.b16 %v8585, %v8581
        %v8834 = vpack.c.b16 %v8586, %v8582
        %v8835 = vpack.c.b16 %v8591, %v8587
        %v8836 = vpack.c.b16 %v8592, %v8588
        %v8837 = vpack.c.b16 %v8593, %v8589
        %v8838 = vpack.c.b16 %v8594, %v8590
        %v8839 = vpack.c.b16 %v8599, %v8595
        %v8840 = vpack.c.b16 %v8600, %v8596
        %v8841 = vpack.c.b16 %v8601, %v8597
        %v8842 = vpack.c.b16 %v8602, %v8598
        %v8843 = vpack.c.b16 %v8607, %v8603
        %v8844 = vpack.c.b16 %v8608, %v8604
        %v8845 = vpack.c.b16 %v8609, %v8605
        %v8846 = vpack.c.b16 %v8610, %v8606
        %v8847 = vpack.c.b16 %v8615, %v8611
        %v8848 = vpack.c.b16 %v8616, %v8612
        %v8849 = vpack.c.b16 %v8617, %v8613
        %v8850 = vpack.c.b16 %v8618, %v8614
        %v8851 = vpack.c.b16 %v8623, %v8619
        %v8852 = vpack.c.b16 %v8624, %v8620
        %v8853 = vpack.c.b16 %v8625, %v8621
        %v8854 = vpack.c.b16 %v8626, %v8622
        %v8855 = vpack.c.b16 %v8631, %v8627
        %v8856 = vpack.c.b16 %v8632, %v8628
        %v8857 = vpack.c.b16 %v8633, %v8629
        %v8858 = vpack.c.b16 %v8634, %v8630
        %v8859 = vpack.c.b16 %v8639, %v8635
        %v8860 = vpack.c.b16 %v8640, %v8636
        %v8861 = vpack.c.b16 %v8641, %v8637
        %v8862 = vpack.c.b16 %v8642, %v8638
        %v8863 = vpack.c.b16 %v8647, %v8643
        %v8864 = vpack.c.b16 %v8648, %v8644
        %v8865 = vpack.c.b16 %v8649, %v8645
        %v8866 = vpack.c.b16 %v8650, %v8646
        %v8867 = vpack.c.b16 %v8655, %v8651
        %v8868 = vpack.c.b16 %v8656, %v8652
        %v8869 = vpack.c.b16 %v8657, %v8653
        %v8870 = vpack.c.b16 %v8658, %v8654
        %v8871 = vpack.c.b16 %v8663, %v8659
        %v8872 = vpack.c.b16 %v8664, %v8660
        %v8873 = vpack.c.b16 %v8665, %v8661
        %v8874 = vpack.c.b16 %v8666, %v8662
        %v8875 = vpack.c.b16 %v8671, %v8667
        %v8876 = vpack.c.b16 %v8672, %v8668
        %v8877 = vpack.c.b16 %v8673, %v8669
        %v8878 = vpack.c.b16 %v8674, %v8670
        %v8879 = vpack.c.b16 %v8679, %v8675
        %v8880 = vpack.c.b16 %v8680, %v8676
        %v8881 = vpack.c.b16 %v8681, %v8677
        %v8882 = vpack.c.b16 %v8682, %v8678
        %v8883 = vpack.c.b16 %v8687, %v8683
        %v8884 = vpack.c.b16 %v8688, %v8684
        %v8885 = vpack.c.b16 %v8689, %v8685
        %v8886 = vpack.c.b16 %v8690, %v8686
        %v8887 = vpack.c.b16 %v8695, %v8691
        %v8888 = vpack.c.b16 %v8696, %v8692
        %v8889 = vpack.c.b16 %v8697, %v8693
        %v8890 = vpack.c.b16 %v8698, %v8694
        %v8891 = vpack.c.b16 %v8703, %v8699
        %v8892 = vpack.c.b16 %v8704, %v8700
        %v8893 = vpack.c.b16 %v8705, %v8701
        %v8894 = vpack.c.b16 %v8706, %v8702
        %v8895 = vpack.c.b16 %v8711, %v8707
        %v8896 = vpack.c.b16 %v8712, %v8708
        %v8897 = vpack.c.b16 %v8713, %v8709
        %v8898 = vpack.c.b16 %v8714, %v8710
        %v8899 = vpack.c.b16 %v8719, %v8715
        %v8900 = vpack.c.b16 %v8720, %v8716
        %v8901 = vpack.c.b16 %v8721, %v8717
        %v8902 = vpack.c.b16 %v8722, %v8718
        %v8903 = vpack.c.b16 %v8727, %v8723
        %v8904 = vpack.c.b16 %v8728, %v8724
        %v8905 = vpack.c.b16 %v8729, %v8725
        %v8906 = vpack.c.b16 %v8730, %v8726
        %v8907 = vpack.c.b16 %v8735, %v8731
        %v8908 = vpack.c.b16 %v8736, %v8732
        %v8909 = vpack.c.b16 %v8737, %v8733
        %v8910 = vpack.c.b16 %v8738, %v8734
        %v8911 = vpack.c.b16 %v8743, %v8739
        %v8912 = vpack.c.b16 %v8744, %v8740
        %v8913 = vpack.c.b16 %v8745, %v8741
        %v8914 = vpack.c.b16 %v8746, %v8742
        %v8915 = vpack.c.b16 %v8751, %v8747
        %v8916 = vpack.c.b16 %v8752, %v8748
        %v8917 = vpack.c.b16 %v8753, %v8749
        %v8918 = vpack.c.b16 %v8754, %v8750
        %v8919 = vpack.c.b16 %v8759, %v8755
        %v8920 = vpack.c.b16 %v8760, %v8756
        %v8921 = vpack.c.b16 %v8761, %v8757
        %v8922 = vpack.c.b16 %v8762, %v8758
        %v8923 = vpack.c.b16 %v8767, %v8763
        %v8924 = vpack.c.b16 %v8768, %v8764
        %v8925 = vpack.c.b16 %v8769, %v8765
        %v8926 = vpack.c.b16 %v8770, %v8766
        %v8927 = vpack.c.b16 %v8775, %v8771
        %v8928 = vpack.c.b16 %v8776, %v8772
        %v8929 = vpack.c.b16 %v8777, %v8773
        %v8930 = vpack.c.b16 %v8778, %v8774
        %v8931 = vpack.c.b16 %v8783, %v8779
        %v8932 = vpack.c.b16 %v8784, %v8780
        %v8933 = vpack.c.b16 %v8785, %v8781
        %v8934 = vpack.c.b16 %v8786, %v8782
        %v8935 = vpack.c.b16 %v8791, %v8787
        %v8936 = vpack.c.b16 %v8792, %v8788
        %v8937 = vpack.c.b16 %v8793, %v8789
        %v8938 = vpack.c.b16 %v8794, %v8790
        %v8939 = vpack.c.b16 %v8799, %v8795
        %v8940 = vpack.c.b16 %v8800, %v8796
        %v8941 = vpack.c.b16 %v8801, %v8797
        %v8942 = vpack.c.b16 %v8802, %v8798
        %v8943 = vpack.c.b16 %v8807, %v8803
        %v8944 = vpack.c.b16 %v8808, %v8804
        %v8945 = vpack.c.b16 %v8809, %v8805
        %v8946 = vpack.c.b16 %v8810, %v8806
        %v8947 = vpack.c.b16 %v8815, %v8811
        %v8948 = vpack.c.b16 %v8816, %v8812
        %v8949 = vpack.c.b16 %v8817, %v8813
        %v8950 = vpack.c.b16 %v8818, %v8814
        %v8951 = vpack.c.b16 %v8823, %v8819
        %v8952 = vpack.c.b16 %v8824, %v8820
        %v8953 = vpack.c.b16 %v8825, %v8821
        %v8954 = vpack.c.b16 %v8826, %v8822
        %9083 = vmatpush.bf16.msra.mxu0 %v8855
        %9084 = vmatpush.bf16.msra.mxu0 %v8851
        %9085 = vmatpush.bf16.msra.mxu0 %v8847
        %9086 = vmatpush.bf16.msra.mxu0 %v8843
        %9087 = vmatpush.bf16.msra.mxu0 %v8839
        %9088 = vmatpush.bf16.msra.mxu0 %v8835
        %9089 = vmatpush.bf16.msra.mxu0 %v8831
        %9090 = vmatpush.bf16.msra.mxu0 %v8827
        %9091 = vmatmul.bf16.gmra.mxu0 %v8303
        %v9092 = vpop.f32.mrf.mxu0
        %v9093 = vadd.f32 %v8439, %v9092
        %v9094 = vpop.f32.mrf.mxu0
        %v9095 = vadd.f32 %v8439, %v9094
        %9096 = vmatmul.bf16.gmra.mxu0 %v8307
        %v9097 = vpop.f32.mrf.mxu0
        %v9098 = vadd.f32 %v8439, %v9097
        %v9099 = vpop.f32.mrf.mxu0
        %v9100 = vadd.f32 %v8439, %v9099
        %9101 = vdwg.mxu0
        %9102 = vmatpush.bf16.msra.mxu0 %v8887
        %9103 = vmatpush.bf16.msra.mxu0 %v8883
        %9104 = vmatpush.bf16.msra.mxu0 %v8879
        %9105 = vmatpush.bf16.msra.mxu0 %v8875
        %9106 = vmatpush.bf16.msra.mxu0 %v8871
        %9107 = vmatpush.bf16.msra.mxu0 %v8867
        %9108 = vmatpush.bf16.msra.mxu0 %v8863
        %9109 = vmatpush.bf16.msra.mxu0 %v8859
        %9110 = vmatmul.bf16.gmra.mxu0 %v8304
        %v9111 = vpop.f32.mrf.mxu0
        %v9112 = vadd.f32 %v9093, %v9111
        %v9113 = vpop.f32.mrf.mxu0
        %v9114 = vadd.f32 %v9095, %v9113
        %9115 = vmatmul.bf16.gmra.mxu0 %v8308
        %v9116 = vpop.f32.mrf.mxu0
        %v9117 = vadd.f32 %v9098, %v9116
        %v9118 = vpop.f32.mrf.mxu0
        %v9119 = vadd.f32 %v9100, %v9118
        %9120 = vdwg.mxu0
        %9121 = vmatpush.bf16.msra.mxu0 %v8919
        %9122 = vmatpush.bf16.msra.mxu0 %v8915
        %9123 = vmatpush.bf16.msra.mxu0 %v8911
        %9124 = vmatpush.bf16.msra.mxu0 %v8907
        %9125 = vmatpush.bf16.msra.mxu0 %v8903
        %9126 = vmatpush.bf16.msra.mxu0 %v8899
        %9127 = vmatpush.bf16.msra.mxu0 %v8895
        %9128 = vmatpush.bf16.msra.mxu0 %v8891
        %9129 = vmatmul.bf16.gmra.mxu0 %v8305
        %v9130 = vpop.f32.mrf.mxu0
        %v9131 = vadd.f32 %v9112, %v9130
        %v9132 = vpop.f32.mrf.mxu0
        %v9133 = vadd.f32 %v9114, %v9132
        %9134 = vmatmul.bf16.gmra.mxu0 %v8309
        %v9135 = vpop.f32.mrf.mxu0
        %v9136 = vadd.f32 %v9117, %v9135
        %v9137 = vpop.f32.mrf.mxu0
        %v9138 = vadd.f32 %v9119, %v9137
        %9139 = vdwg.mxu0
        %9140 = vmatpush.bf16.msra.mxu0 %v8951
        %9141 = vmatpush.bf16.msra.mxu0 %v8947
        %9142 = vmatpush.bf16.msra.mxu0 %v8943
        %9143 = vmatpush.bf16.msra.mxu0 %v8939
        %9144 = vmatpush.bf16.msra.mxu0 %v8935
        %9145 = vmatpush.bf16.msra.mxu0 %v8931
        %9146 = vmatpush.bf16.msra.mxu0 %v8927
        %9147 = vmatpush.bf16.msra.mxu0 %v8923
        %9148 = vmatmul.bf16.gmra.mxu0 %v8306
        %v9149 = vpop.f32.mrf.mxu0
        %v9150 = vadd.f32 %v9131, %v9149
        %v9151 = vpop.f32.mrf.mxu0
        %v9152 = vadd.f32 %v9133, %v9151
        %9153 = vmatmul.bf16.gmra.mxu0 %v8310
        %v9154 = vpop.f32.mrf.mxu0
        %v9155 = vadd.f32 %v9136, %v9154
        %v9156 = vpop.f32.mrf.mxu0
        %v9157 = vadd.f32 %v9138, %v9156
        %9158 = vdwg.mxu0
        %9159 = vmatpush.bf16.msra.mxu0 %v8856
        %9160 = vmatpush.bf16.msra.mxu0 %v8852
        %9161 = vmatpush.bf16.msra.mxu0 %v8848
        %9162 = vmatpush.bf16.msra.mxu0 %v8844
        %9163 = vmatpush.bf16.msra.mxu0 %v8840
        %9164 = vmatpush.bf16.msra.mxu0 %v8836
        %9165 = vmatpush.bf16.msra.mxu0 %v8832
        %9166 = vmatpush.bf16.msra.mxu0 %v8828
        %9167 = vmatmul.bf16.gmra.mxu0 %v8303
        %v9168 = vpop.f32.mrf.mxu0
        %v9169 = vadd.f32 %v8440, %v9168
        %v9170 = vpop.f32.mrf.mxu0
        %v9171 = vadd.f32 %v8440, %v9170
        %9172 = vmatmul.bf16.gmra.mxu0 %v8307
        %v9173 = vpop.f32.mrf.mxu0
        %v9174 = vadd.f32 %v8440, %v9173
        %v9175 = vpop.f32.mrf.mxu0
        %v9176 = vadd.f32 %v8440, %v9175
        %9177 = vdwg.mxu0
        %9178 = vmatpush.bf16.msra.mxu0 %v8888
        %9179 = vmatpush.bf16.msra.mxu0 %v8884
        %9180 = vmatpush.bf16.msra.mxu0 %v8880
        %9181 = vmatpush.bf16.msra.mxu0 %v8876
        %9182 = vmatpush.bf16.msra.mxu0 %v8872
        %9183 = vmatpush.bf16.msra.mxu0 %v8868
        %9184 = vmatpush.bf16.msra.mxu0 %v8864
        %9185 = vmatpush.bf16.msra.mxu0 %v8860
        %9186 = vmatmul.bf16.gmra.mxu0 %v8304
        %v9187 = vpop.f32.mrf.mxu0
        %v9188 = vadd.f32 %v9169, %v9187
        %v9189 = vpop.f32.mrf.mxu0
        %v9190 = vadd.f32 %v9171, %v9189
        %9191 = vmatmul.bf16.gmra.mxu0 %v8308
        %v9192 = vpop.f32.mrf.mxu0
        %v9193 = vadd.f32 %v9174, %v9192
        %v9194 = vpop.f32.mrf.mxu0
        %v9195 = vadd.f32 %v9176, %v9194
        %9196 = vdwg.mxu0
        %9197 = vmatpush.bf16.msra.mxu0 %v8920
        %9198 = vmatpush.bf16.msra.mxu0 %v8916
        %9199 = vmatpush.bf16.msra.mxu0 %v8912
        %9200 = vmatpush.bf16.msra.mxu0 %v8908
        %9201 = vmatpush.bf16.msra.mxu0 %v8904
        %9202 = vmatpush.bf16.msra.mxu0 %v8900
        %9203 = vmatpush.bf16.msra.mxu0 %v8896
        %9204 = vmatpush.bf16.msra.mxu0 %v8892
        %9205 = vmatmul.bf16.gmra.mxu0 %v8305
        %v9206 = vpop.f32.mrf.mxu0
        %v9207 = vadd.f32 %v9188, %v9206
        %v9208 = vpop.f32.mrf.mxu0
        %v9209 = vadd.f32 %v9190, %v9208
        %9210 = vmatmul.bf16.gmra.mxu0 %v8309
        %v9211 = vpop.f32.mrf.mxu0
        %v9212 = vadd.f32 %v9193, %v9211
        %v9213 = vpop.f32.mrf.mxu0
        %v9214 = vadd.f32 %v9195, %v9213
        %9215 = vdwg.mxu0
        %9216 = vmatpush.bf16.msra.mxu0 %v8952
        %9217 = vmatpush.bf16.msra.mxu0 %v8948
        %9218 = vmatpush.bf16.msra.mxu0 %v8944
        %9219 = vmatpush.bf16.msra.mxu0 %v8940
        %9220 = vmatpush.bf16.msra.mxu0 %v8936
        %9221 = vmatpush.bf16.msra.mxu0 %v8932
        %9222 = vmatpush.bf16.msra.mxu0 %v8928
        %9223 = vmatpush.bf16.msra.mxu0 %v8924
        %9224 = vmatmul.bf16.gmra.mxu0 %v8306
        %v9225 = vpop.f32.mrf.mxu0
        %v9226 = vadd.f32 %v9207, %v9225
        %v9227 = vpop.f32.mrf.mxu0
        %v9228 = vadd.f32 %v9209, %v9227
        %9229 = vmatmul.bf16.gmra.mxu0 %v8310
        %v9230 = vpop.f32.mrf.mxu0
        %v9231 = vadd.f32 %v9212, %v9230
        %v9232 = vpop.f32.mrf.mxu0
        %v9233 = vadd.f32 %v9214, %v9232
        %9234 = vdwg.mxu0
        %9235 = vmatpush.bf16.msra.mxu0 %v8857
        %9236 = vmatpush.bf16.msra.mxu0 %v8853
        %9237 = vmatpush.bf16.msra.mxu0 %v8849
        %9238 = vmatpush.bf16.msra.mxu0 %v8845
        %9239 = vmatpush.bf16.msra.mxu0 %v8841
        %9240 = vmatpush.bf16.msra.mxu0 %v8837
        %9241 = vmatpush.bf16.msra.mxu0 %v8833
        %9242 = vmatpush.bf16.msra.mxu0 %v8829
        %9243 = vmatmul.bf16.gmra.mxu0 %v8303
        %v9244 = vpop.f32.mrf.mxu0
        %v9245 = vadd.f32 %v8441, %v9244
        %v9246 = vpop.f32.mrf.mxu0
        %v9247 = vadd.f32 %v8441, %v9246
        %9248 = vmatmul.bf16.gmra.mxu0 %v8307
        %v9249 = vpop.f32.mrf.mxu0
        %v9250 = vadd.f32 %v8441, %v9249
        %v9251 = vpop.f32.mrf.mxu0
        %v9252 = vadd.f32 %v8441, %v9251
        %9253 = vdwg.mxu0
        %9254 = vmatpush.bf16.msra.mxu0 %v8889
        %9255 = vmatpush.bf16.msra.mxu0 %v8885
        %9256 = vmatpush.bf16.msra.mxu0 %v8881
        %9257 = vmatpush.bf16.msra.mxu0 %v8877
        %9258 = vmatpush.bf16.msra.mxu0 %v8873
        %9259 = vmatpush.bf16.msra.mxu0 %v8869
        %9260 = vmatpush.bf16.msra.mxu0 %v8865
        %9261 = vmatpush.bf16.msra.mxu0 %v8861
        %9262 = vmatmul.bf16.gmra.mxu0 %v8304
        %v9263 = vpop.f32.mrf.mxu0
        %v9264 = vadd.f32 %v9245, %v9263
        %v9265 = vpop.f32.mrf.mxu0
        %v9266 = vadd.f32 %v9247, %v9265
        %9267 = vmatmul.bf16.gmra.mxu0 %v8308
        %v9268 = vpop.f32.mrf.mxu0
        %v9269 = vadd.f32 %v9250, %v9268
        %v9270 = vpop.f32.mrf.mxu0
        %v9271 = vadd.f32 %v9252, %v9270
        %9272 = vdwg.mxu0
        %9273 = vmatpush.bf16.msra.mxu0 %v8921
        %9274 = vmatpush.bf16.msra.mxu0 %v8917
        %9275 = vmatpush.bf16.msra.mxu0 %v8913
        %9276 = vmatpush.bf16.msra.mxu0 %v8909
        %9277 = vmatpush.bf16.msra.mxu0 %v8905
        %9278 = vmatpush.bf16.msra.mxu0 %v8901
        %9279 = vmatpush.bf16.msra.mxu0 %v8897
        %9280 = vmatpush.bf16.msra.mxu0 %v8893
        %9281 = vmatmul.bf16.gmra.mxu0 %v8305
        %v9282 = vpop.f32.mrf.mxu0
        %v9283 = vadd.f32 %v9264, %v9282
        %v9284 = vpop.f32.mrf.mxu0
        %v9285 = vadd.f32 %v9266, %v9284
        %9286 = vmatmul.bf16.gmra.mxu0 %v8309
        %v9287 = vpop.f32.mrf.mxu0
        %v9288 = vadd.f32 %v9269, %v9287
        %v9289 = vpop.f32.mrf.mxu0
        %v9290 = vadd.f32 %v9271, %v9289
        %9291 = vdwg.mxu0
        %9292 = vmatpush.bf16.msra.mxu0 %v8953
        %9293 = vmatpush.bf16.msra.mxu0 %v8949
        %9294 = vmatpush.bf16.msra.mxu0 %v8945
        %9295 = vmatpush.bf16.msra.mxu0 %v8941
        %9296 = vmatpush.bf16.msra.mxu0 %v8937
        %9297 = vmatpush.bf16.msra.mxu0 %v8933
        %9298 = vmatpush.bf16.msra.mxu0 %v8929
        %9299 = vmatpush.bf16.msra.mxu0 %v8925
        %9300 = vmatmul.bf16.gmra.mxu0 %v8306
        %v9301 = vpop.f32.mrf.mxu0
        %v9302 = vadd.f32 %v9283, %v9301
        %v9303 = vpop.f32.mrf.mxu0
        %v9304 = vadd.f32 %v9285, %v9303
        %9305 = vmatmul.bf16.gmra.mxu0 %v8310
        %v9306 = vpop.f32.mrf.mxu0
        %v9307 = vadd.f32 %v9288, %v9306
        %v9308 = vpop.f32.mrf.mxu0
        %v9309 = vadd.f32 %v9290, %v9308
        %9310 = vdwg.mxu0
        %9311 = vmatpush.bf16.msra.mxu0 %v8858
        %9312 = vmatpush.bf16.msra.mxu0 %v8854
        %9313 = vmatpush.bf16.msra.mxu0 %v8850
        %9314 = vmatpush.bf16.msra.mxu0 %v8846
        %9315 = vmatpush.bf16.msra.mxu0 %v8842
        %9316 = vmatpush.bf16.msra.mxu0 %v8838
        %9317 = vmatpush.bf16.msra.mxu0 %v8834
        %9318 = vmatpush.bf16.msra.mxu0 %v8830
        %9319 = vmatmul.bf16.gmra.mxu0 %v8303
        %v9320 = vpop.f32.mrf.mxu0
        %v9321 = vadd.f32 %v8442, %v9320
        %v9322 = vpop.f32.mrf.mxu0
        %v9323 = vadd.f32 %v8442, %v9322
        %9324 = vmatmul.bf16.gmra.mxu0 %v8307
        %v9325 = vpop.f32.mrf.mxu0
        %v9326 = vadd.f32 %v8442, %v9325
        %v9327 = vpop.f32.mrf.mxu0
        %v9328 = vadd.f32 %v8442, %v9327
        %9329 = vdwg.mxu0
        %9330 = vmatpush.bf16.msra.mxu0 %v8890
        %9331 = vmatpush.bf16.msra.mxu0 %v8886
        %9332 = vmatpush.bf16.msra.mxu0 %v8882
        %9333 = vmatpush.bf16.msra.mxu0 %v8878
        %9334 = vmatpush.bf16.msra.mxu0 %v8874
        %9335 = vmatpush.bf16.msra.mxu0 %v8870
        %9336 = vmatpush.bf16.msra.mxu0 %v8866
        %9337 = vmatpush.bf16.msra.mxu0 %v8862
        %9338 = vmatmul.bf16.gmra.mxu0 %v8304
        %v9339 = vpop.f32.mrf.mxu0
        %v9340 = vadd.f32 %v9321, %v9339
        %v9341 = vpop.f32.mrf.mxu0
        %v9342 = vadd.f32 %v9323, %v9341
        %9343 = vmatmul.bf16.gmra.mxu0 %v8308
        %v9344 = vpop.f32.mrf.mxu0
        %v9345 = vadd.f32 %v9326, %v9344
        %v9346 = vpop.f32.mrf.mxu0
        %v9347 = vadd.f32 %v9328, %v9346
        %9348 = vdwg.mxu0
        %9349 = vmatpush.bf16.msra.mxu0 %v8922
        %9350 = vmatpush.bf16.msra.mxu0 %v8918
        %9351 = vmatpush.bf16.msra.mxu0 %v8914
        %9352 = vmatpush.bf16.msra.mxu0 %v8910
        %9353 = vmatpush.bf16.msra.mxu0 %v8906
        %9354 = vmatpush.bf16.msra.mxu0 %v8902
        %9355 = vmatpush.bf16.msra.mxu0 %v8898
        %9356 = vmatpush.bf16.msra.mxu0 %v8894
        %9357 = vmatmul.bf16.gmra.mxu0 %v8305
        %v9358 = vpop.f32.mrf.mxu0
        %v9359 = vadd.f32 %v9340, %v9358
        %v9360 = vpop.f32.mrf.mxu0
        %v9361 = vadd.f32 %v9342, %v9360
        %9362 = vmatmul.bf16.gmra.mxu0 %v8309
        %v9363 = vpop.f32.mrf.mxu0
        %v9364 = vadd.f32 %v9345, %v9363
        %v9365 = vpop.f32.mrf.mxu0
        %v9366 = vadd.f32 %v9347, %v9365
        %9367 = vdwg.mxu0
        %9368 = vmatpush.bf16.msra.mxu0 %v8954
        %9369 = vmatpush.bf16.msra.mxu0 %v8950
        %9370 = vmatpush.bf16.msra.mxu0 %v8946
        %9371 = vmatpush.bf16.msra.mxu0 %v8942
        %9372 = vmatpush.bf16.msra.mxu0 %v8938
        %9373 = vmatpush.bf16.msra.mxu0 %v8934
        %9374 = vmatpush.bf16.msra.mxu0 %v8930
        %9375 = vmatpush.bf16.msra.mxu0 %v8926
        %9376 = vmatmul.bf16.gmra.mxu0 %v8306
        %v9377 = vpop.f32.mrf.mxu0
        %v9378 = vadd.f32 %v9359, %v9377
        %v9379 = vpop.f32.mrf.mxu0
        %v9380 = vadd.f32 %v9361, %v9379
        %9381 = vmatmul.bf16.gmra.mxu0 %v8310
        %v9382 = vpop.f32.mrf.mxu0
        %v9383 = vadd.f32 %v9364, %v9382
        %v9384 = vpop.f32.mrf.mxu0
        %v9385 = vadd.f32 %v9366, %v9384
        %9386 = vdwg.mxu0
        %v9387 = vadd.f32 %v5797, %v9150
        %v9388 = vadd.f32 %v5798, %v9226
        %v9389 = vadd.f32 %v5799, %v9302
        %v9390 = vadd.f32 %v5800, %v9378
        %v9391 = vadd.f32 %v5801, %v9152
        %v9392 = vadd.f32 %v5802, %v9228
        %v9393 = vadd.f32 %v5803, %v9304
        %v9394 = vadd.f32 %v5804, %v9380
        %v9395 = vadd.f32 %v5805, %v9155
        %v9396 = vadd.f32 %v5806, %v9231
        %v9397 = vadd.f32 %v5807, %v9307
        %v9398 = vadd.f32 %v5808, %v9383
        %v9399 = vadd.f32 %v5809, %v9157
        %v9400 = vadd.f32 %v5810, %v9233
        %v9401 = vadd.f32 %v5811, %v9309
        %v9402 = vadd.f32 %v5812, %v9385
        %v9403 = vadd.f32 %v9387, %v9388
        %v9404 = vadd.f32 %v9403, %v9389
        %v9405 = vadd.f32 %v9404, %v9390
        %9406 = vadd.xlane.f32.xlu0 %v9405
        %v9407 = vpop.xlane.xlu0 %9406
        %v9408 = vadd.f32 %v9391, %v9392
        %v9409 = vadd.f32 %v9408, %v9393
        %v9410 = vadd.f32 %v9409, %v9394
        %9411 = vadd.xlane.f32.xlu0 %v9410
        %v9412 = vpop.xlane.xlu0 %9411
        %v9413 = vadd.f32 %v9395, %v9396
        %v9414 = vadd.f32 %v9413, %v9397
        %v9415 = vadd.f32 %v9414, %v9398
        %9416 = vadd.xlane.f32.xlu0 %v9415
        %v9417 = vpop.xlane.xlu0 %9416
        %v9418 = vadd.f32 %v9399, %v9400
        %v9419 = vadd.f32 %v9418, %v9401
        %v9420 = vadd.f32 %v9419, %v9402
        %9421 = vadd.xlane.f32.xlu0 %v9420
        %v9422 = vpop.xlane.xlu0 %9421
        %v9423 = vmul.f32 %v9407, %v5652
        %v9424 = vmul.f32 %v9412, %v5652
        %v9425 = vmul.f32 %v9417, %v5652
        %v9426 = vmul.f32 %v9422, %v5652
        %v9427 = vsub.f32 %v9387, %v9423
        %v9428 = vsub.f32 %v9388, %v9423
        %v9429 = vsub.f32 %v9389, %v9423
        %v9430 = vsub.f32 %v9390, %v9423
        %v9431 = vsub.f32 %v9391, %v9424
        %v9432 = vsub.f32 %v9392, %v9424
        %v9433 = vsub.f32 %v9393, %v9424
        %v9434 = vsub.f32 %v9394, %v9424
        %v9435 = vsub.f32 %v9395, %v9425
        %v9436 = vsub.f32 %v9396, %v9425
        %v9437 = vsub.f32 %v9397, %v9425
        %v9438 = vsub.f32 %v9398, %v9425
        %v9439 = vsub.f32 %v9399, %v9426
        %v9440 = vsub.f32 %v9400, %v9426
        %v9441 = vsub.f32 %v9401, %v9426
        %v9442 = vsub.f32 %v9402, %v9426
        %v9443 = vmul.f32 %v9427, %v9427
        %v9444 = vmul.f32 %v9428, %v9428
        %v9445 = vmul.f32 %v9429, %v9429
        %v9446 = vmul.f32 %v9430, %v9430
        %v9447 = vmul.f32 %v9431, %v9431
        %v9448 = vmul.f32 %v9432, %v9432
        %v9449 = vmul.f32 %v9433, %v9433
        %v9450 = vmul.f32 %v9434, %v9434
        %v9451 = vmul.f32 %v9435, %v9435
        %v9452 = vmul.f32 %v9436, %v9436
        %v9453 = vmul.f32 %v9437, %v9437
        %v9454 = vmul.f32 %v9438, %v9438
        %v9455 = vmul.f32 %v9439, %v9439
        %v9456 = vmul.f32 %v9440, %v9440
        %v9457 = vmul.f32 %v9441, %v9441
        %v9458 = vmul.f32 %v9442, %v9442
        %v9459 = vadd.f32 %v9443, %v9444
        %v9460 = vadd.f32 %v9459, %v9445
        %v9461 = vadd.f32 %v9460, %v9446
        %9462 = vadd.xlane.f32.xlu0 %v9461
        %v9463 = vpop.xlane.xlu0 %9462
        %v9464 = vadd.f32 %v9447, %v9448
        %v9465 = vadd.f32 %v9464, %v9449
        %v9466 = vadd.f32 %v9465, %v9450
        %9467 = vadd.xlane.f32.xlu0 %v9466
        %v9468 = vpop.xlane.xlu0 %9467
        %v9469 = vadd.f32 %v9451, %v9452
        %v9470 = vadd.f32 %v9469, %v9453
        %v9471 = vadd.f32 %v9470, %v9454
        %9472 = vadd.xlane.f32.xlu0 %v9471
        %v9473 = vpop.xlane.xlu0 %9472
        %v9474 = vadd.f32 %v9455, %v9456
        %v9475 = vadd.f32 %v9474, %v9457
        %v9476 = vadd.f32 %v9475, %v9458
        %9477 = vadd.xlane.f32.xlu0 %v9476
        %v9478 = vpop.xlane.xlu0 %9477
        %v9479 = vmul.f32 %v9463, %v5652
        %v9480 = vmul.f32 %v9468, %v5652
        %v9481 = vmul.f32 %v9473, %v5652
        %v9482 = vmul.f32 %v9478, %v5652
        %v9483 = vadd.f32 %v9479, 1e-05
        %v9484 = vadd.f32 %v9480, 1e-05
        %v9485 = vadd.f32 %v9481, 1e-05
        %v9486 = vadd.f32 %v9482, 1e-05
        %v9487 = vrsqrt.pop %v9483
        %v9488 = vmul.f32 %v9487, %v9483
        %v9489 = vmul.f32 %v9488, %v9487
        %v9490 = vmul.f32 0.5, %v9489
        %v9491 = vsub.f32 1.5, %v9490
        %v9492 = vmul.f32 %v9487, %v9491
        %vm9493 = vweird.f32 %v9483
        %vm9494 = vweird.f32 %v9487
        %vm9495 = vmor %vm9493, %vm9494
        %v9496 = vsel %vm9495, %v9487, %v9492
        %v9497 = vrsqrt.pop %v9484
        %v9498 = vmul.f32 %v9497, %v9484
        %v9499 = vmul.f32 %v9498, %v9497
        %v9500 = vmul.f32 0.5, %v9499
        %v9501 = vsub.f32 1.5, %v9500
        %v9502 = vmul.f32 %v9497, %v9501
        %vm9503 = vweird.f32 %v9484
        %vm9504 = vweird.f32 %v9497
        %vm9505 = vmor %vm9503, %vm9504
        %v9506 = vsel %vm9505, %v9497, %v9502
        %v9507 = vrsqrt.pop %v9485
        %v9508 = vmul.f32 %v9507, %v9485
        %v9509 = vmul.f32 %v9508, %v9507
        %v9510 = vmul.f32 0.5, %v9509
        %v9511 = vsub.f32 1.5, %v9510
        %v9512 = vmul.f32 %v9507, %v9511
        %vm9513 = vweird.f32 %v9485
        %vm9514 = vweird.f32 %v9507
        %vm9515 = vmor %vm9513, %vm9514
        %v9516 = vsel %vm9515, %v9507, %v9512
        %v9517 = vrsqrt.pop %v9486
        %v9518 = vmul.f32 %v9517, %v9486
        %v9519 = vmul.f32 %v9518, %v9517
        %v9520 = vmul.f32 0.5, %v9519
        %v9521 = vsub.f32 1.5, %v9520
        %v9522 = vmul.f32 %v9517, %v9521
        %vm9523 = vweird.f32 %v9486
        %vm9524 = vweird.f32 %v9517
        %vm9525 = vmor %vm9523, %vm9524
        %v9526 = vsel %vm9525, %v9517, %v9522
        %v9527 = vmul.f32 %v9427, %v9496
        %v9528 = vmul.f32 %v9428, %v9496
        %v9529 = vmul.f32 %v9429, %v9496
        %v9530 = vmul.f32 %v9430, %v9496
        %v9531 = vmul.f32 %v9431, %v9506
        %v9532 = vmul.f32 %v9432, %v9506
        %v9533 = vmul.f32 %v9433, %v9506
        %v9534 = vmul.f32 %v9434, %v9506
        %v9535 = vmul.f32 %v9435, %v9516
        %v9536 = vmul.f32 %v9436, %v9516
        %v9537 = vmul.f32 %v9437, %v9516
        %v9538 = vmul.f32 %v9438, %v9516
        %v9539 = vmul.f32 %v9439, %v9526
        %v9540 = vmul.f32 %v9440, %v9526
        %v9541 = vmul.f32 %v9441, %v9526
        %v9542 = vmul.f32 %v9442, %v9526
        %v9543 = vperm.slane %v4522, 4
        %v9544 = vperm.slane %v4523, 4
        %v9545 = vperm.slane %v4524, 4
        %v9546 = vperm.slane %v4525, 4
        %v9547 = vmul.f32 %v9527, %v9543
        %v9548 = vmul.f32 %v9528, %v9544
        %v9549 = vmul.f32 %v9529, %v9545
        %v9550 = vmul.f32 %v9530, %v9546
        %v9551 = vmul.f32 %v9531, %v9543
        %v9552 = vmul.f32 %v9532, %v9544
        %v9553 = vmul.f32 %v9533, %v9545
        %v9554 = vmul.f32 %v9534, %v9546
        %v9555 = vmul.f32 %v9535, %v9543
        %v9556 = vmul.f32 %v9536, %v9544
        %v9557 = vmul.f32 %v9537, %v9545
        %v9558 = vmul.f32 %v9538, %v9546
        %v9559 = vmul.f32 %v9539, %v9543
        %v9560 = vmul.f32 %v9540, %v9544
        %v9561 = vmul.f32 %v9541, %v9545
        %v9562 = vmul.f32 %v9542, %v9546
        %v9563 = vperm.slane %v4522, 5
        %v9564 = vperm.slane %v4523, 5
        %v9565 = vperm.slane %v4524, 5
        %v9566 = vperm.slane %v4525, 5
        %v9567 = vadd.f32 %v9547, %v9563
        %v9568 = vadd.f32 %v9548, %v9564
        %v9569 = vadd.f32 %v9549, %v9565
        %v9570 = vadd.f32 %v9550, %v9566
        %v9571 = vadd.f32 %v9551, %v9563
        %v9572 = vadd.f32 %v9552, %v9564
        %v9573 = vadd.f32 %v9553, %v9565
        %v9574 = vadd.f32 %v9554, %v9566
        %v9575 = vadd.f32 %v9555, %v9563
        %v9576 = vadd.f32 %v9556, %v9564
        %v9577 = vadd.f32 %v9557, %v9565
        %v9578 = vadd.f32 %v9558, %v9566
        %v9579 = vadd.f32 %v9559, %v9563
        %v9580 = vadd.f32 %v9560, %v9564
        %v9581 = vadd.f32 %v9561, %v9565
        %v9582 = vadd.f32 %v9562, %v9566
        %9583 = vst [vmem:[#allocation2] sm:$0xff] %v9567
        %9584 = vst [vmem:[#allocation2 + $0x8] sm:$0xff] %v9568
        %9585 = vst [vmem:[#allocation2 + $0x10] sm:$0xff] %v9569
        %9586 = vst [vmem:[#allocation2 + $0x18] sm:$0xff] %v9570
        %9587 = vst [vmem:[#allocation2 + $0x20] sm:$0xff] %v9571
        %9588 = vst [vmem:[#allocation2 + $0x28] sm:$0xff] %v9572
        %9589 = vst [vmem:[#allocation2 + $0x30] sm:$0xff] %v9573
        %9590 = vst [vmem:[#allocation2 + $0x38] sm:$0xff] %v9574
        %9591 = vst [vmem:[#allocation2 + $0x40] sm:$0xff] %v9575
        %9592 = vst [vmem:[#allocation2 + $0x48] sm:$0xff] %v9576
        %9593 = vst [vmem:[#allocation2 + $0x50] sm:$0xff] %v9577
        %9594 = vst [vmem:[#allocation2 + $0x58] sm:$0xff] %v9578
        %9595 = vst [vmem:[#allocation2 + $0x60] sm:$0xff] %v9579
        %9596 = vst [vmem:[#allocation2 + $0x68] sm:$0xff] %v9580
        %9597 = vst [vmem:[#allocation2 + $0x70] sm:$0xff] %v9581
        %9598 = vst [vmem:[#allocation2 + $0x78] sm:$0xff] %v9582
        %p9599 = scmp.eq.s32.totalorder %s32, 1
        // Predicated region
        $region85: #{transformer_lm_forward.2} parent=55 // pred_check
          %p9600 = pneg %p9599
        $region86: #{transformer_lm_forward.2} parent=55 // pred_check_branch
          %9602 = sbr.rel (%p9600) target = $region88
        $region87: #{transformer_lm_forward.2} parent=55 // pred_region
          %v9603 = vpack.c.bf16 %v9568, %v9567
          %v9604 = vpack.c.bf16 %v9570, %v9569
          %v9605 = vpack.c.bf16 %v9572, %v9571
          %v9606 = vpack.c.bf16 %v9574, %v9573
          %v9607 = vpack.c.bf16 %v9576, %v9575
          %v9608 = vpack.c.bf16 %v9578, %v9577
          %v9609 = vpack.c.bf16 %v9580, %v9579
          %v9610 = vpack.c.bf16 %v9582, %v9581
          %9611 = vst [vmem:[%s9] sm:$0xff] %v9603
          %9612 = vst [vmem:[%s9 + $0x8] sm:$0xff] %v9604
          %9613 = vst [vmem:[%s9 + $0x10] sm:$0xff] %v9605
          %9614 = vst [vmem:[%s9 + $0x18] sm:$0xff] %v9606
          %9615 = vst [vmem:[%s9 + $0x20] sm:$0xff] %v9607
          %9616 = vst [vmem:[%s9 + $0x28] sm:$0xff] %v9608
          %9617 = vst [vmem:[%s9 + $0x30] sm:$0xff] %v9609
          %9618 = vst [vmem:[%s9 + $0x38] sm:$0xff] %v9610
        $region88: #{transformer_lm_forward.2} parent=55 // pred_fallthru
          _
        // Predicated region
        $region89: #{transformer_lm_forward.2} parent=55 // pred_check
          %p9619 = pneg %p269
        $region90: #{transformer_lm_forward.2} parent=55 // pred_check_branch
          %9621 = sbr.rel (%p9619) target = $region92
        $region91: #{transformer_lm_forward.2} parent=55 // pred_region
          _
        $region92: #{transformer_lm_forward.2} parent=55 // pred_fallthru
          _
        // Predicated region
        $region93: #{transformer_lm_forward.2} parent=55 // pred_check
          %p9622 = pneg %p269
        $region94: #{transformer_lm_forward.2} parent=55 // pred_check_branch
          %9624 = sbr.rel (%p9622) target = $region96
        $region95: #{transformer_lm_forward.2} parent=55 // pred_region
          _
        $region96: #{transformer_lm_forward.2} parent=55 // pred_fallthru
          _
      $region56: #{transformer_lm_forward.2} parent=5 // pred_fallthru
        _
      %p9625 = scmp.le.s32.totalorder 2, %s27
      // Predicated region
      $region97: #{transformer_lm_forward.2} parent=5 // pred_check
        %p9626 = pneg %p9625
      $region98: #{transformer_lm_forward.2} parent=5 // pred_check_branch
        %9628 = sbr.rel (%p9626) target = $region100
      $region99: #{transformer_lm_forward.2} parent=5 // pred_region
        %s9629 = ssub.s32 %s27, 2
      $region100: #{transformer_lm_forward.2} parent=5 // pred_fallthru
        _
    $region6: #{transformer_lm_forward.2} parent=1 // loop_footer
      %s31 = sadd.s32 1, %s27
    $region7: #{transformer_lm_forward.2} parent=1 // loop_footer_branch
      %26 = sbr.rel target = $region3
    $region8: #{transformer_lm_forward.2} parent=1 // loop_exit
      _
    %9630 = vsyncpa [#allocation4], 1
    %s9631 = scalar_lea.sflag [#allocation4], 1
    %9632 = vsyncpa %s9631, 1
    %9633 = vsyncpa [#allocation6], 1
    %s9634 = scalar_lea.sflag [#allocation6], 1
    %9635 = vsyncpa %s9634, 1
    %9636 = vsyncpa [#allocation9], 1
    %s9637 = scalar_lea.sflag [#allocation9], 1
    %9638 = vsyncpa %s9637, 1
    %9639 = vsyncpa [#allocation12], 1
    %s9640 = scalar_lea.sflag [#allocation12], 1
    %9641 = vsyncpa %s9640, 1

</llo_original>
